<compile_context>
chip_gen: v7x
topology: tpu7x:2x2x1
jax: 0.10.0
libtpu: 0.0.40
codegen_flags: <defaults>
</compile_context>

<pallas_src>
import functools

import jax
import jax.numpy as jnp
from jax import lax
from jax.experimental import pallas as pl
from jax.experimental.pallas import tpu as pltpu

_EPS = 1e-5
_LANES = 128


def _round_up(x, m):
    return (x + m - 1) // m * m


def _vmem_limit_bytes():
    """Scoped-VMEM limit derived from hardware (v5e/v6e: 128 MiB, v7x: 64 MiB)."""
    try:
        cap = pltpu.get_tpu_info().vmem_capacity_bytes
        return int(min(cap * 3 // 4, 96 * 1024 * 1024))
    except Exception:  # older jax / info unavailable -> conservative default
        return 32 * 1024 * 1024


# ----------------------------- Pallas kernels ------------------------------ #

def _conv_bn_kernel(x_ref, bn_ref, w_ref, b_ref, o_ref, stats_ref,
                    pad_ref, col_ref, *, H, W, apply_bn_relu):
    """[optional BN-apply + ReLU] -> 3x3 'same' conv + bias -> per-image BN sums.

    x_ref:     (H, W, Cin)          one image (NHWC; Cin is the real / stored width)
    bn_ref:    (2, Cin)             rows = [scale, shift] of the *input* BN
    w_ref:     (9*Cin, Cout_p)      conv weights, row = tap*Cin + ci (compute dtype)
    b_ref:     (1, Cout_p)          conv bias (f32)
    o_ref:     (H, W, Cout_p)       raw (pre-BN) conv output (compute dtype)
    stats_ref: (2, Cout_p)          rows = [sum, sum_of_squares] over this image (f32)
    pad_ref:   (H+2, W+2, Cin)      VMEM scratch: zero-bordered canvas (compute dtype)
    col_ref:   (H*W, 9*Cin)         VMEM scratch: im2col slab (compute dtype)
    """
    cin = x_ref.shape[-1]
    cout = o_ref.shape[-1]
    cdt = pad_ref.dtype

    x = x_ref[...].astype(jnp.float32)
    if apply_bn_relu:
        x = jnp.maximum(x * bn_ref[0:1, :] + bn_ref[1:2, :], 0.0)

    # Zero only the 1-pixel halo border; the interior is fully overwritten below.
    # Re-done every step so it is megacore-safe (scratch is per-core).
    pad_ref[0:1, :, :] = jnp.zeros((1, W + 2, cin), cdt)
    pad_ref[H + 1:H + 2, :, :] = jnp.zeros((1, W + 2, cin), cdt)
    pad_ref[:, 0:1, :] = jnp.zeros((H + 2, 1, cin), cdt)
    pad_ref[:, W + 1:W + 2, :] = jnp.zeros((H + 2, 1, cin), cdt)
    pad_ref[1:H + 1, 1:W + 1, :] = x.astype(cdt)

    # im2col slab: 9 shifted copies of the canvas, then ONE big MXU matmul.
    for k in range(9):                                  # fully unrolled
        ky, kx = divmod(k, 3)
        col_ref[:, k * cin:(k + 1) * cin] = (
            pad_ref[ky:ky + H, kx:kx + W, :].reshape(H * W, cin))

    out = jnp.dot(col_ref[...], w_ref[...],
                  preferred_element_type=jnp.float32)   # (H*W, Cout_p), f32 acc
    out = out + b_ref[...].astype(jnp.float32)
    o_ref[...] = out.reshape(H, W, cout).astype(o_ref.dtype)

    # Per-image BN partial sums in f32 (before the narrow store).
    s = jnp.sum(out, axis=0, keepdims=True)             # (1, Cout_p)
    ss = jnp.sum(out * out, axis=0, keepdims=True)      # (1, Cout_p)
    stats_ref[...] = jnp.concatenate([s, ss], axis=0)


def _bn_relu_pool_kernel(h_ref, bn_ref, x_ref, p_ref, *, c_p, cout):
    """BN-apply + ReLU -> x ; fused 2x2 max-pool -> p (lane/sublane-dense blocks).

    h_ref:  (Ho, 2, Wo, 2*C_p)   h2 re-viewed with the W-pair merged into lanes
    bn_ref: (2, 2*C_p)           [scale, shift] tiled twice over the W pair
    x_ref:  (Ho, 2, Wo, 2*cout)  BN+ReLU output at the real channel count
    p_ref:  (Ho, Wo, cout)       pooled output at the real channel count
    """
    y = jnp.maximum(h_ref[...].astype(jnp.float32) * bn_ref[0:1, :]
                    + bn_ref[1:2, :], 0.0)              # (Ho, 2, Wo, 2*C_p)

    if cout == c_p:
        x_ref[...] = y.astype(x_ref.dtype)
    else:
        x_ref[...] = jnp.concatenate(
            [y[..., :cout], y[..., c_p:c_p + cout]], axis=-1).astype(x_ref.dtype)

    mw = jnp.maximum(y[..., :c_p], y[..., c_p:])        # max over the W pair (lanes)
    m = jnp.maximum(mw[:, 0], mw[:, 1])                 # max over the H pair
    p_ref[...] = m[..., :cout].astype(p_ref.dtype)


# ------------------------------ pallas_call wrappers ------------------------ #

def _conv_layer(x, bn, w, b, *, apply_bn_relu, compute_dtype, vmem_limit):
    """One fused [BN+ReLU]->conv3x3+bias layer on a (N, H, W, Cin) input."""
    n, H, W, cin = x.shape
    cout = w.shape[-1]
    kernel = functools.partial(_conv_bn_kernel, H=H, W=W,
                               apply_bn_relu=apply_bn_relu)
    out_shape = (jax.ShapeDtypeStruct((n, H, W, cout), compute_dtype),
                 jax.ShapeDtypeStruct((n, 2, cout), jnp.float32))
    return pl.pallas_call(
        kernel,
        out_shape=out_shape,
        grid=(n,),
        in_specs=[
            pl.BlockSpec((None, H, W, cin), lambda i: (i, 0, 0, 0)),
            pl.BlockSpec((2, cin), lambda i: (0, 0)),
            pl.BlockSpec((9 * cin, cout), lambda i: (0, 0)),
            pl.BlockSpec((1, cout), lambda i: (0, 0)),
        ],
        out_specs=(
            pl.BlockSpec((None, H, W, cout), lambda i: (i, 0, 0, 0)),
            pl.BlockSpec((None, 2, cout), lambda i: (i, 0, 0)),
        ),
        scratch_shapes=[
            pltpu.VMEM((H + 2, W + 2, cin), compute_dtype),   # padded canvas
            pltpu.VMEM((H * W, 9 * cin), compute_dtype),      # im2col slab
        ],
        compiler_params=pltpu.CompilerParams(
            dimension_semantics=("parallel",),
            vmem_limit_bytes=vmem_limit),
    )(x, bn, w, b)


def _bn_relu_pool(h, bn, cout, *, vmem_limit):
    n, H, W, c_p = h.shape
    ho, wo = H // 2, W // 2
    # Free row-major re-view: merge the W-pair into the lane dim -> dense blocks.
    h5 = h.reshape(n, ho, 2, wo, 2 * c_p)
    bn_t = jnp.concatenate([bn, bn], axis=1)            # (2, 2*C_p)
    kernel = functools.partial(_bn_relu_pool_kernel, c_p=c_p, cout=cout)
    x5, p = pl.pallas_call(
        kernel,
        out_shape=(jax.ShapeDtypeStruct((n, ho, 2, wo, 2 * cout), jnp.float32),
                   jax.ShapeDtypeStruct((n, ho, wo, cout), jnp.float32)),
        grid=(n,),
        in_specs=[
            pl.BlockSpec((None, ho, 2, wo, 2 * c_p), lambda i: (i, 0, 0, 0, 0)),
            pl.BlockSpec((2, 2 * c_p), lambda i: (0, 0)),
        ],
        out_specs=(
            pl.BlockSpec((None, ho, 2, wo, 2 * cout), lambda i: (i, 0, 0, 0, 0)),
            pl.BlockSpec((None, ho, wo, cout), lambda i: (i, 0, 0, 0)),
        ),
        compiler_params=pltpu.CompilerParams(
            dimension_semantics=("parallel",),
            vmem_limit_bytes=vmem_limit),
    )(h5, bn_t)
    return x5.reshape(n, H, W, cout), p


# ------------------------------ parameter plumbing -------------------------- #

def _pad_last(a, target):
    a = a.astype(jnp.float32)
    pad = target - a.shape[-1]
    if pad == 0:
        return a
    widths = [(0, 0)] * (a.ndim - 1) + [(0, pad)]
    return jnp.pad(a, widths)


def _pack_conv_weight(w_oihw, cin_p, cout_p, dtype):
    """PyTorch (O, I, 3, 3) -> (9*cin_p, cout_p); row = (ky*3+kx)*cin_p + ci."""
    o, i = w_oihw.shape[0], w_oihw.shape[1]
    w = jnp.transpose(w_oihw.astype(jnp.float32), (2, 3, 1, 0))      # (3,3,I,O)
    w = jnp.pad(w, ((0, 0), (0, 0), (0, cin_p - i), (0, cout_p - o)))
    return w.reshape(9 * cin_p, cout_p).astype(dtype)


def _finalize_bn(partial_stats, gamma_p, beta_p, m_count):
    """(N, 2, C_p) per-image [sum, sumsq] -> (2, C_p) [scale, shift] (train-mode BN)."""
    # Single-pass E[x^2]-E[x]^2 in f32 (values are O(1) here); clamp at 0.
    sums = jnp.sum(partial_stats, axis=0)                    # (2, C_p)
    mean = sums[0] / m_count
    var = jnp.maximum(sums[1] / m_count - mean * mean, 0.0)  # biased variance
    scale = gamma_p * lax.rsqrt(var + _EPS)
    shift = beta_p - mean * scale
    return jnp.stack([scale, shift], axis=0)


# ------------------------------ public forward ------------------------------ #

def encoder_block_forward(x_nchw, params, *, compute_dtype=jnp.bfloat16):
    """Pallas equivalent of encoder_block.forward; returns (x, p) in NCHW (f32).

    compute_dtype: dtype of the MXU operands and of the h1/h2 intermediates
    (bf16 default for v5e/v6e/v7x throughput; f32 matches PyTorch numerics).
    """
    # TODO(synk): BatchNorm running_mean/running_var in-place updates (training-
    # mode module state side effect) are not modeled; the forward math is
    # PyTorch training-mode BN (batch mean, biased batch var, eps=1e-5).
    n, cin, H, W = x_nchw.shape
    cout = params["w1"].shape[0]
    cout_p = _round_up(cout, _LANES)
    vmem_limit = _vmem_limit_bytes()

    # NCHW -> NHWC at the REAL channel count (no HBM lane padding of the input).
    x = jnp.transpose(x_nchw, (0, 2, 3, 1)).astype(jnp.float32)

    w1 = _pack_conv_weight(params["w1"], cin, cout_p, compute_dtype)
    w2 = _pack_conv_weight(params["w2"], cout_p, cout_p, compute_dtype)
    b1 = _pad_last(params["b1"].reshape(1, -1), cout_p)
    b2 = _pad_last(params["b2"].reshape(1, -1), cout_p)
    g1, be1 = _pad_last(params["gamma1"], cout_p), _pad_last(params["beta1"], cout_p)
    g2, be2 = _pad_last(params["gamma2"], cout_p), _pad_last(params["beta2"], cout_p)

    m_count = n * H * W
    bn_dummy = jnp.zeros((2, cin), jnp.float32)          # unused by kernel 1

    h1, st1 = _conv_layer(x, bn_dummy, w1, b1, apply_bn_relu=False,
                          compute_dtype=compute_dtype, vmem_limit=vmem_limit)
    bn1 = _finalize_bn(st1, g1, be1, m_count)

    h2, st2 = _conv_layer(h1, bn1, w2, b2, apply_bn_relu=True,
                          compute_dtype=compute_dtype, vmem_limit=vmem_limit)
    bn2 = _finalize_bn(st2, g2, be2, m_count)

    x_nhwc, p_nhwc = _bn_relu_pool(h2, bn2, cout, vmem_limit=vmem_limit)
    x_out = jnp.transpose(x_nhwc, (0, 3, 1, 2))          # NHWC -> NCHW
    p_out = jnp.transpose(p_nhwc, (0, 3, 1, 2))
    return x_out, p_out


def init_params(key, in_c, out_c):
    k1, k2, k3, k4 = jax.random.split(key, 4)
    s1 = 1.0 / jnp.sqrt(in_c * 9.0)
    s2 = 1.0 / jnp.sqrt(out_c * 9.0)
    return {
        "w1": jax.random.uniform(k1, (out_c, in_c, 3, 3), jnp.float32, -s1, s1),
        "b1": jax.random.uniform(k2, (out_c,), jnp.float32, -s1, s1),
        "w2": jax.random.uniform(k3, (out_c, out_c, 3, 3), jnp.float32, -s2, s2),
        "b2": jax.random.uniform(k4, (out_c,), jnp.float32, -s2, s2),
        "gamma1": jnp.ones((out_c,), jnp.float32),
        "beta1": jnp.zeros((out_c,), jnp.float32),
        "gamma2": jnp.ones((out_c,), jnp.float32),
        "beta2": jnp.zeros((out_c,), jnp.float32),
    }


# ------------------------------ reference (XLA) ----------------------------- #

def _reference_forward(x_nchw, params):
    x = jnp.transpose(x_nchw, (0, 2, 3, 1)).astype(jnp.float32)

    def conv(h, w, b):
        return lax.conv_general_dilated(
            h, jnp.transpose(w, (2, 3, 1, 0)), (1, 1), "SAME",
            dimension_numbers=("NHWC", "HWIO", "NHWC"),
            precision=lax.Precision.HIGHEST) + b

    def bn_relu(h, g, b):
        m = jnp.mean(h, axis=(0, 1, 2))
        v = jnp.mean(jnp.square(h - m), axis=(0, 1, 2))
        return jnp.maximum((h - m) * lax.rsqrt(v + _EPS) * g + b, 0.0)

    h = bn_relu(conv(x, params["w1"], params["b1"]),
                params["gamma1"], params["beta1"])
    h = bn_relu(conv(h, params["w2"], params["b2"]),
                params["gamma2"], params["beta2"])
    n, H, W, c = h.shape
    p = jnp.max(h.reshape(n, H // 2, 2, W // 2, 2, c), axis=(2, 4))
    return jnp.transpose(h, (0, 3, 1, 2)), jnp.transpose(p, (0, 3, 1, 2))


if __name__ == "__main__":
    key = jax.random.PRNGKey(0)
    k_x, k_p = jax.random.split(key)

    N, in_c, out_c, H, W = 2, 4, 8, 16, 16
    x = jax.random.normal(k_x, (N, in_c, H, W), jnp.float32)   # NCHW like PyTorch
    params = init_params(k_p, in_c, out_c)

    x_ref, p_ref = _reference_forward(x, params)

    # Default fast path: bf16 MXU operands + bf16 intermediates (f32 accumulate).
    fwd = jax.jit(encoder_block_forward)
    x_out, p_out = fwd(x, params)
    jax.block_until_ready(x_out)
    jax.block_until_ready(p_out)

    assert x_out.shape == (N, out_c, H, W)
    assert p_out.shape == (N, out_c, H // 2, W // 2)
    err_x = float(jnp.max(jnp.abs(x_out - x_ref)))
    err_p = float(jnp.max(jnp.abs(p_out - p_ref)))
    # Coarse sanity bound for bf16 operand/storage numerics; tight check is below.
    assert err_x < 1e-1 and err_p < 1e-1, (err_x, err_p)

    # Exact mode (f32 operands + f32 intermediates) must match the reference tightly.
    fwd_f32 = jax.jit(functools.partial(encoder_block_forward,
                                        compute_dtype=jnp.float32))
    x32, p32 = fwd_f32(x, params)
    jax.block_until_ready(x32)
    jax.block_until_ready(p32)
    err_x32 = float(jnp.max(jnp.abs(x32 - x_ref)))
    err_p32 = float(jnp.max(jnp.abs(p32 - p_ref)))
    assert err_x32 < 2e-3 and err_p32 < 2e-3, (err_x32, err_p32)

    print("KERNEL_OK")
</pallas_src>

<mosaic_0001>
module attributes {stable_mosaic.version = 11 : i64} {
  func.func @_conv_bn_kernel(%arg0: i32, %arg1: memref<1x16x16x4xf32, #tpu.memory_space<vmem>>, %arg2: memref<2x4xf32, #tpu.memory_space<vmem>>, %arg3: memref<36x128xbf16, #tpu.memory_space<vmem>>, %arg4: memref<1x128xf32, #tpu.memory_space<vmem>>, %arg5: memref<1x16x16x128xbf16, #tpu.memory_space<vmem>>, %arg6: memref<1x2x128xf32, #tpu.memory_space<vmem>>, %arg7: memref<18x18x4xbf16, #tpu.memory_space<vmem>>, %arg8: memref<256x36xbf16, #tpu.memory_space<vmem>>) attributes {dimension_semantics = [#tpu.dimension_semantics<parallel>], iteration_bounds = array<i64: 2>, scalar_prefetch = 0 : i64, scratch_operands = 2 : i64, tpu.core_type = #tpu.core_type<tc>, window_params = [{transform_indices = @transform_0, window_bounds = array<i64: 1, 16, 16, 4>}, {pipeline_mode = #tpu.pipeline_mode<synchronous>, transform_indices = @transform_1, window_bounds = array<i64: 2, 4>}, {pipeline_mode = #tpu.pipeline_mode<synchronous>, transform_indices = @transform_2, window_bounds = array<i64: 36, 128>}, {pipeline_mode = #tpu.pipeline_mode<synchronous>, transform_indices = @transform_3, window_bounds = array<i64: 1, 128>}, {transform_indices = @transform_4, window_bounds = array<i64: 1, 16, 16, 128>}, {transform_indices = @transform_5, window_bounds = array<i64: 1, 2, 128>}]} {
    %c0 = arith.constant 0 : index
    %c0_0 = arith.constant 0 : index
    %c0_1 = arith.constant 0 : index
    %c0_2 = arith.constant 0 : index
    %0 = vector.load %arg1[%c0, %c0_0, %c0_1, %c0_2] : memref<1x16x16x4xf32, #tpu.memory_space<vmem>>, vector<1x16x16x4xf32>
    %1 = vector.shape_cast %0 : vector<1x16x16x4xf32> to vector<16x16x4xf32>
    %cst = arith.constant 0.000000e+00 : bf16
    %2 = vector.broadcast %cst : bf16 to vector<1x18x4xbf16>
    %c0_3 = arith.constant 0 : index
    %c0_4 = arith.constant 0 : index
    %c0_5 = arith.constant 0 : index
    %3 = vector.load %arg7[%c0_3, %c0_4, %c0_5] : memref<18x18x4xbf16, #tpu.memory_space<vmem>>, vector<1x18x4xbf16>
    tpu.vector_store %arg7[%c0_3, %c0_4, %c0_5], %2 {strides = array<i32>} : memref<18x18x4xbf16, #tpu.memory_space<vmem>>, vector<1x18x4xbf16>,
    %cst_6 = arith.constant 0.000000e+00 : bf16
    %4 = vector.broadcast %cst_6 : bf16 to vector<1x18x4xbf16>
    %c17 = arith.constant 17 : index
    %c0_7 = arith.constant 0 : index
    %c0_8 = arith.constant 0 : index
    %5 = vector.load %arg7[%c17, %c0_7, %c0_8] : memref<18x18x4xbf16, #tpu.memory_space<vmem>>, vector<1x18x4xbf16>
    tpu.vector_store %arg7[%c17, %c0_7, %c0_8], %4 {strides = array<i32>} : memref<18x18x4xbf16, #tpu.memory_space<vmem>>, vector<1x18x4xbf16>,
    %cst_9 = arith.constant 0.000000e+00 : bf16
    %6 = vector.broadcast %cst_9 : bf16 to vector<18x1x4xbf16>
    %c0_10 = arith.constant 0 : index
    %c0_11 = arith.constant 0 : index
    %c0_12 = arith.constant 0 : index
    %7 = vector.load %arg7[%c0_10, %c0_11, %c0_12] : memref<18x18x4xbf16, #tpu.memory_space<vmem>>, vector<18x1x4xbf16>
    tpu.vector_store %arg7[%c0_10, %c0_11, %c0_12], %6 {strides = array<i32>} : memref<18x18x4xbf16, #tpu.memory_space<vmem>>, vector<18x1x4xbf16>,
    %cst_13 = arith.constant 0.000000e+00 : bf16
    %8 = vector.broadcast %cst_13 : bf16 to vector<18x1x4xbf16>
    %c0_14 = arith.constant 0 : index
    %c17_15 = arith.constant 17 : index
    %c0_16 = arith.constant 0 : index
    %9 = vector.load %arg7[%c0_14, %c17_15, %c0_16] : memref<18x18x4xbf16, #tpu.memory_space<vmem>>, vector<18x1x4xbf16>
    tpu.vector_store %arg7[%c0_14, %c17_15, %c0_16], %8 {strides = array<i32>} : memref<18x18x4xbf16, #tpu.memory_space<vmem>>, vector<18x1x4xbf16>,
    %10 = arith.truncf %1 : vector<16x16x4xf32> to vector<16x16x4xbf16>
    %c1 = arith.constant 1 : index
    %c1_17 = arith.constant 1 : index
    %c0_18 = arith.constant 0 : index
    %11 = vector.load %arg7[%c1, %c1_17, %c0_18] : memref<18x18x4xbf16, #tpu.memory_space<vmem>>, vector<16x16x4xbf16>
    tpu.vector_store %arg7[%c1, %c1_17, %c0_18], %10 {strides = array<i32>} : memref<18x18x4xbf16, #tpu.memory_space<vmem>>, vector<16x16x4xbf16>,
    %c0_19 = arith.constant 0 : index
    %c0_20 = arith.constant 0 : index
    %c0_21 = arith.constant 0 : index
    %12 = vector.load %arg7[%c0_19, %c0_20, %c0_21] : memref<18x18x4xbf16, #tpu.memory_space<vmem>>, vector<16x16x4xbf16>
    %13 = vector.shape_cast %12 : vector<16x16x4xbf16> to vector<256x4xbf16>
    %c0_22 = arith.constant 0 : index
    %c0_23 = arith.constant 0 : index
    %14 = vector.load %arg8[%c0_22, %c0_23] : memref<256x36xbf16, #tpu.memory_space<vmem>>, vector<256x4xbf16>
    tpu.vector_store %arg8[%c0_22, %c0_23], %13 {strides = array<i32>} : memref<256x36xbf16, #tpu.memory_space<vmem>>, vector<256x4xbf16>,
    %c0_24 = arith.constant 0 : index
    %c1_25 = arith.constant 1 : index
    %c0_26 = arith.constant 0 : index
    %15 = vector.load %arg7[%c0_24, %c1_25, %c0_26] : memref<18x18x4xbf16, #tpu.memory_space<vmem>>, vector<16x16x4xbf16>
    %16 = vector.shape_cast %15 : vector<16x16x4xbf16> to vector<256x4xbf16>
    %c0_27 = arith.constant 0 : index
    %c4 = arith.constant 4 : index
    %17 = vector.load %arg8[%c0_27, %c4] : memref<256x36xbf16, #tpu.memory_space<vmem>>, vector<256x4xbf16>
    tpu.vector_store %arg8[%c0_27, %c4], %16 {strides = array<i32>} : memref<256x36xbf16, #tpu.memory_space<vmem>>, vector<256x4xbf16>,
    %c0_28 = arith.constant 0 : index
    %c2 = arith.constant 2 : index
    %c0_29 = arith.constant 0 : index
    %18 = vector.load %arg7[%c0_28, %c2, %c0_29] : memref<18x18x4xbf16, #tpu.memory_space<vmem>>, vector<16x16x4xbf16>
    %19 = vector.shape_cast %18 : vector<16x16x4xbf16> to vector<256x4xbf16>
    %c0_30 = arith.constant 0 : index
    %c8 = arith.constant 8 : index
    %20 = vector.load %arg8[%c0_30, %c8] : memref<256x36xbf16, #tpu.memory_space<vmem>>, vector<256x4xbf16>
    tpu.vector_store %arg8[%c0_30, %c8], %19 {strides = array<i32>} : memref<256x36xbf16, #tpu.memory_space<vmem>>, vector<256x4xbf16>,
    %c1_31 = arith.constant 1 : index
    %c0_32 = arith.constant 0 : index
    %c0_33 = arith.constant 0 : index
    %21 = vector.load %arg7[%c1_31, %c0_32, %c0_33] : memref<18x18x4xbf16, #tpu.memory_space<vmem>>, vector<16x16x4xbf16>
    %22 = vector.shape_cast %21 : vector<16x16x4xbf16> to vector<256x4xbf16>
    %c0_34 = arith.constant 0 : index
    %c12 = arith.constant 12 : index
    %23 = vector.load %arg8[%c0_34, %c12] : memref<256x36xbf16, #tpu.memory_space<vmem>>, vector<256x4xbf16>
    tpu.vector_store %arg8[%c0_34, %c12], %22 {strides = array<i32>} : memref<256x36xbf16, #tpu.memory_space<vmem>>, vector<256x4xbf16>,
    %c1_35 = arith.constant 1 : index
    %c1_36 = arith.constant 1 : index
    %c0_37 = arith.constant 0 : index
    %24 = vector.load %arg7[%c1_35, %c1_36, %c0_37] : memref<18x18x4xbf16, #tpu.memory_space<vmem>>, vector<16x16x4xbf16>
    %25 = vector.shape_cast %24 : vector<16x16x4xbf16> to vector<256x4xbf16>
    %c0_38 = arith.constant 0 : index
    %c16 = arith.constant 16 : index
    %26 = vector.load %arg8[%c0_38, %c16] : memref<256x36xbf16, #tpu.memory_space<vmem>>, vector<256x4xbf16>
    tpu.vector_store %arg8[%c0_38, %c16], %25 {strides = array<i32>} : memref<256x36xbf16, #tpu.memory_space<vmem>>, vector<256x4xbf16>,
    %c1_39 = arith.constant 1 : index
    %c2_40 = arith.constant 2 : index
    %c0_41 = arith.constant 0 : index
    %27 = vector.load %arg7[%c1_39, %c2_40, %c0_41] : memref<18x18x4xbf16, #tpu.memory_space<vmem>>, vector<16x16x4xbf16>
    %28 = vector.shape_cast %27 : vector<16x16x4xbf16> to vector<256x4xbf16>
    %c0_42 = arith.constant 0 : index
    %c20 = arith.constant 20 : index
    %29 = vector.load %arg8[%c0_42, %c20] : memref<256x36xbf16, #tpu.memory_space<vmem>>, vector<256x4xbf16>
    tpu.vector_store %arg8[%c0_42, %c20], %28 {strides = array<i32>} : memref<256x36xbf16, #tpu.memory_space<vmem>>, vector<256x4xbf16>,
    %c2_43 = arith.constant 2 : index
    %c0_44 = arith.constant 0 : index
    %c0_45 = arith.constant 0 : index
    %30 = vector.load %arg7[%c2_43, %c0_44, %c0_45] : memref<18x18x4xbf16, #tpu.memory_space<vmem>>, vector<16x16x4xbf16>
    %31 = vector.shape_cast %30 : vector<16x16x4xbf16> to vector<256x4xbf16>
    %c0_46 = arith.constant 0 : index
    %c24 = arith.constant 24 : index
    %32 = vector.load %arg8[%c0_46, %c24] : memref<256x36xbf16, #tpu.memory_space<vmem>>, vector<256x4xbf16>
    tpu.vector_store %arg8[%c0_46, %c24], %31 {strides = array<i32>} : memref<256x36xbf16, #tpu.memory_space<vmem>>, vector<256x4xbf16>,
    %c2_47 = arith.constant 2 : index
    %c1_48 = arith.constant 1 : index
    %c0_49 = arith.constant 0 : index
    %33 = vector.load %arg7[%c2_47, %c1_48, %c0_49] : memref<18x18x4xbf16, #tpu.memory_space<vmem>>, vector<16x16x4xbf16>
    %34 = vector.shape_cast %33 : vector<16x16x4xbf16> to vector<256x4xbf16>
    %c0_50 = arith.constant 0 : index
    %c28 = arith.constant 28 : index
    %35 = vector.load %arg8[%c0_50, %c28] : memref<256x36xbf16, #tpu.memory_space<vmem>>, vector<256x4xbf16>
    tpu.vector_store %arg8[%c0_50, %c28], %34 {strides = array<i32>} : memref<256x36xbf16, #tpu.memory_space<vmem>>, vector<256x4xbf16>,
    %c2_51 = arith.constant 2 : index
    %c2_52 = arith.constant 2 : index
    %c0_53 = arith.constant 0 : index
    %36 = vector.load %arg7[%c2_51, %c2_52, %c0_53] : memref<18x18x4xbf16, #tpu.memory_space<vmem>>, vector<16x16x4xbf16>
    %37 = vector.shape_cast %36 : vector<16x16x4xbf16> to vector<256x4xbf16>
    %c0_54 = arith.constant 0 : index
    %c32 = arith.constant 32 : index
    %38 = vector.load %arg8[%c0_54, %c32] : memref<256x36xbf16, #tpu.memory_space<vmem>>, vector<256x4xbf16>
    tpu.vector_store %arg8[%c0_54, %c32], %37 {strides = array<i32>} : memref<256x36xbf16, #tpu.memory_space<vmem>>, vector<256x4xbf16>,
    %c0_55 = arith.constant 0 : index
    %c0_56 = arith.constant 0 : index
    %39 = vector.load %arg8[%c0_55, %c0_56] : memref<256x36xbf16, #tpu.memory_space<vmem>>, vector<256x36xbf16>
    %c0_57 = arith.constant 0 : index
    %c0_58 = arith.constant 0 : index
    %40 = vector.load %arg3[%c0_57, %c0_58] : memref<36x128xbf16, #tpu.memory_space<vmem>>, vector<36x128xbf16>
    %cst_59 = arith.constant dense<0.000000e+00> : vector<256x128xf32>
    %41 = tpu.matmul %39, %40, %cst_59 {dimension_numbers = #tpu.dot_dimension_numbers<[1], [0], [0], [1], [0, 0, 1, 1], [], []>} : vector<256x36xbf16>, vector<36x128xbf16>, vector<256x128xf32> -> vector<256x128xf32>
    %c0_60 = arith.constant 0 : index
    %c0_61 = arith.constant 0 : index
    %42 = vector.load %arg4[%c0_60, %c0_61] : memref<1x128xf32, #tpu.memory_space<vmem>>, vector<1x128xf32>
    %43 = vector.broadcast %42 : vector<1x128xf32> to vector<256x128xf32>
    %44 = arith.addf %41, %43 : vector<256x128xf32>
    %45 = vector.shape_cast %44 : vector<256x128xf32> to vector<16x16x128xf32>
    %46 = arith.truncf %45 : vector<16x16x128xf32> to vector<16x16x128xbf16>
    %c0_62 = arith.constant 0 : index
    %c0_63 = arith.constant 0 : index
    %c0_64 = arith.constant 0 : index
    %c0_65 = arith.constant 0 : index
    %47 = vector.load %arg5[%c0_62, %c0_63, %c0_64, %c0_65] : memref<1x16x16x128xbf16, #tpu.memory_space<vmem>>, vector<1x16x16x128xbf16>
    %48 = vector.shape_cast %47 : vector<1x16x16x128xbf16> to vector<16x16x128xbf16>
    %49 = vector.shape_cast %46 : vector<16x16x128xbf16> to vector<1x16x16x128xbf16>
    tpu.vector_store %arg5[%c0_62, %c0_63, %c0_64, %c0_65], %49 {strides = array<i32>} : memref<1x16x16x128xbf16, #tpu.memory_space<vmem>>, vector<1x16x16x128xbf16>,
    %cst_66 = arith.constant dense<0.000000e+00> : vector<128xf32>
    %50 = vector.multi_reduction <add>, %44, %cst_66 [0] : vector<256x128xf32> to vector<128xf32>
    %51 = vector.shape_cast %50 : vector<128xf32> to vector<1x128xf32>
    %52 = arith.mulf %44, %44 : vector<256x128xf32>
    %cst_67 = arith.constant dense<0.000000e+00> : vector<128xf32>
    %53 = vector.multi_reduction <add>, %52, %cst_67 [0] : vector<256x128xf32> to vector<128xf32>
    %54 = vector.shape_cast %53 : vector<128xf32> to vector<1x128xf32>
    %55 = tpu.concatenate %51, %54 in 0 : vector<1x128xf32>, vector<1x128xf32> -> vector<2x128xf32>
    %c0_68 = arith.constant 0 : index
    %c0_69 = arith.constant 0 : index
    %c0_70 = arith.constant 0 : index
    %56 = vector.load %arg6[%c0_68, %c0_69, %c0_70] : memref<1x2x128xf32, #tpu.memory_space<vmem>>, vector<1x2x128xf32>
    %57 = vector.shape_cast %56 : vector<1x2x128xf32> to vector<2x128xf32>
    %58 = vector.shape_cast %55 : vector<2x128xf32> to vector<1x2x128xf32>
    tpu.vector_store %arg6[%c0_68, %c0_69, %c0_70], %58 {strides = array<i32>} : memref<1x2x128xf32, #tpu.memory_space<vmem>>, vector<1x2x128xf32>,
    return
  }
  func.func @transform_0(%arg0: i32) -> (i32, i32, i32, i32) {
    %c0_i32 = arith.constant 0 : i32
    %c0_i32_0 = arith.constant 0 : i32
    %c0_i32_1 = arith.constant 0 : i32
    %c0_i32_2 = arith.constant 0 : i32
    return %arg0, %c0_i32, %c0_i32_0, %c0_i32_1 : i32, i32, i32, i32
  }
  func.func @transform_1(%arg0: i32) -> (i32, i32) {
    %c0_i32 = arith.constant 0 : i32
    %c0_i32_0 = arith.constant 0 : i32
    %c0_i32_1 = arith.constant 0 : i32
    return %c0_i32, %c0_i32_0 : i32, i32
  }
  func.func @transform_2(%arg0: i32) -> (i32, i32) {
    %c0_i32 = arith.constant 0 : i32
    %c0_i32_0 = arith.constant 0 : i32
    %c0_i32_1 = arith.constant 0 : i32
    return %c0_i32, %c0_i32_0 : i32, i32
  }
  func.func @transform_3(%arg0: i32) -> (i32, i32) {
    %c0_i32 = arith.constant 0 : i32
    %c0_i32_0 = arith.constant 0 : i32
    %c0_i32_1 = arith.constant 0 : i32
    return %c0_i32, %c0_i32_0 : i32, i32
  }
  func.func @transform_4(%arg0: i32) -> (i32, i32, i32, i32) {
    %c0_i32 = arith.constant 0 : i32
    %c0_i32_0 = arith.constant 0 : i32
    %c0_i32_1 = arith.constant 0 : i32
    %c0_i32_2 = arith.constant 0 : i32
    return %arg0, %c0_i32, %c0_i32_0, %c0_i32_1 : i32, i32, i32, i32
  }
  func.func @transform_5(%arg0: i32) -> (i32, i32, i32) {
    %c0_i32 = arith.constant 0 : i32
    %c0_i32_0 = arith.constant 0 : i32
    %c0_i32_1 = arith.constant 0 : i32
    return %arg0, %c0_i32, %c0_i32_0 : i32, i32, i32
  }
}

module attributes {stable_mosaic.version = 11 : i64} {
  func.func @_conv_bn_kernel(%arg0: i32, %arg1: memref<1x16x16x128xbf16, #tpu.memory_space<vmem>>, %arg2: memref<2x128xf32, #tpu.memory_space<vmem>>, %arg3: memref<1152x128xbf16, #tpu.memory_space<vmem>>, %arg4: memref<1x128xf32, #tpu.memory_space<vmem>>, %arg5: memref<1x16x16x128xbf16, #tpu.memory_space<vmem>>, %arg6: memref<1x2x128xf32, #tpu.memory_space<vmem>>, %arg7: memref<18x18x128xbf16, #tpu.memory_space<vmem>>, %arg8: memref<256x1152xbf16, #tpu.memory_space<vmem>>) attributes {dimension_semantics = [#tpu.dimension_semantics<parallel>], iteration_bounds = array<i64: 2>, scalar_prefetch = 0 : i64, scratch_operands = 2 : i64, tpu.core_type = #tpu.core_type<tc>, window_params = [{transform_indices = @transform_0, window_bounds = array<i64: 1, 16, 16, 128>}, {pipeline_mode = #tpu.pipeline_mode<synchronous>, transform_indices = @transform_1, window_bounds = array<i64: 2, 128>}, {pipeline_mode = #tpu.pipeline_mode<synchronous>, transform_indices = @transform_2, window_bounds = array<i64: 1152, 128>}, {pipeline_mode = #tpu.pipeline_mode<synchronous>, transform_indices = @transform_3, window_bounds = array<i64: 1, 128>}, {transform_indices = @transform_4, window_bounds = array<i64: 1, 16, 16, 128>}, {transform_indices = @transform_5, window_bounds = array<i64: 1, 2, 128>}]} {
    %c0 = arith.constant 0 : index
    %c0_0 = arith.constant 0 : index
    %c0_1 = arith.constant 0 : index
    %c0_2 = arith.constant 0 : index
    %0 = vector.load %arg1[%c0, %c0_0, %c0_1, %c0_2] : memref<1x16x16x128xbf16, #tpu.memory_space<vmem>>, vector<1x16x16x128xbf16>
    %1 = vector.shape_cast %0 : vector<1x16x16x128xbf16> to vector<16x16x128xbf16>
    %2 = arith.extf %1 : vector<16x16x128xbf16> to vector<16x16x128xf32>
    %c0_3 = arith.constant 0 : index
    %c0_4 = arith.constant 0 : index
    %3 = vector.load %arg2[%c0_3, %c0_4] : memref<2x128xf32, #tpu.memory_space<vmem>>, vector<1x128xf32>
    %4 = vector.shape_cast %3 : vector<1x128xf32> to vector<1x1x128xf32>
    %5 = vector.broadcast %4 : vector<1x1x128xf32> to vector<16x16x128xf32>
    %6 = arith.mulf %2, %5 : vector<16x16x128xf32>
    %c1 = arith.constant 1 : index
    %c0_5 = arith.constant 0 : index
    %7 = vector.load %arg2[%c1, %c0_5] : memref<2x128xf32, #tpu.memory_space<vmem>>, vector<1x128xf32>
    %8 = vector.shape_cast %7 : vector<1x128xf32> to vector<1x1x128xf32>
    %9 = vector.broadcast %8 : vector<1x1x128xf32> to vector<16x16x128xf32>
    %10 = arith.addf %6, %9 : vector<16x16x128xf32>
    %cst = arith.constant 0.000000e+00 : f32
    %11 = vector.broadcast %cst : f32 to vector<16x16x128xf32>
    %12 = arith.maximumf %10, %11 : vector<16x16x128xf32>
    %cst_6 = arith.constant 0.000000e+00 : bf16
    %13 = vector.broadcast %cst_6 : bf16 to vector<1x18x128xbf16>
    %c0_7 = arith.constant 0 : index
    %c0_8 = arith.constant 0 : index
    %c0_9 = arith.constant 0 : index
    %14 = vector.load %arg7[%c0_7, %c0_8, %c0_9] : memref<18x18x128xbf16, #tpu.memory_space<vmem>>, vector<1x18x128xbf16>
    tpu.vector_store %arg7[%c0_7, %c0_8, %c0_9], %13 {strides = array<i32>} : memref<18x18x128xbf16, #tpu.memory_space<vmem>>, vector<1x18x128xbf16>,
    %cst_10 = arith.constant 0.000000e+00 : bf16
    %15 = vector.broadcast %cst_10 : bf16 to vector<1x18x128xbf16>
    %c17 = arith.constant 17 : index
    %c0_11 = arith.constant 0 : index
    %c0_12 = arith.constant 0 : index
    %16 = vector.load %arg7[%c17, %c0_11, %c0_12] : memref<18x18x128xbf16, #tpu.memory_space<vmem>>, vector<1x18x128xbf16>
    tpu.vector_store %arg7[%c17, %c0_11, %c0_12], %15 {strides = array<i32>} : memref<18x18x128xbf16, #tpu.memory_space<vmem>>, vector<1x18x128xbf16>,
    %cst_13 = arith.constant 0.000000e+00 : bf16
    %17 = vector.broadcast %cst_13 : bf16 to vector<18x1x128xbf16>
    %c0_14 = arith.constant 0 : index
    %c0_15 = arith.constant 0 : index
    %c0_16 = arith.constant 0 : index
    %18 = vector.load %arg7[%c0_14, %c0_15, %c0_16] : memref<18x18x128xbf16, #tpu.memory_space<vmem>>, vector<18x1x128xbf16>
    tpu.vector_store %arg7[%c0_14, %c0_15, %c0_16], %17 {strides = array<i32>} : memref<18x18x128xbf16, #tpu.memory_space<vmem>>, vector<18x1x128xbf16>,
    %cst_17 = arith.constant 0.000000e+00 : bf16
    %19 = vector.broadcast %cst_17 : bf16 to vector<18x1x128xbf16>
    %c0_18 = arith.constant 0 : index
    %c17_19 = arith.constant 17 : index
    %c0_20 = arith.constant 0 : index
    %20 = vector.load %arg7[%c0_18, %c17_19, %c0_20] : memref<18x18x128xbf16, #tpu.memory_space<vmem>>, vector<18x1x128xbf16>
    tpu.vector_store %arg7[%c0_18, %c17_19, %c0_20], %19 {strides = array<i32>} : memref<18x18x128xbf16, #tpu.memory_space<vmem>>, vector<18x1x128xbf16>,
    %21 = arith.truncf %12 : vector<16x16x128xf32> to vector<16x16x128xbf16>
    %c1_21 = arith.constant 1 : index
    %c1_22 = arith.constant 1 : index
    %c0_23 = arith.constant 0 : index
    %22 = vector.load %arg7[%c1_21, %c1_22, %c0_23] : memref<18x18x128xbf16, #tpu.memory_space<vmem>>, vector<16x16x128xbf16>
    tpu.vector_store %arg7[%c1_21, %c1_22, %c0_23], %21 {strides = array<i32>} : memref<18x18x128xbf16, #tpu.memory_space<vmem>>, vector<16x16x128xbf16>,
    %c0_24 = arith.constant 0 : index
    %c0_25 = arith.constant 0 : index
    %c0_26 = arith.constant 0 : index
    %23 = vector.load %arg7[%c0_24, %c0_25, %c0_26] : memref<18x18x128xbf16, #tpu.memory_space<vmem>>, vector<16x16x128xbf16>
    %24 = vector.shape_cast %23 : vector<16x16x128xbf16> to vector<256x128xbf16>
    %c0_27 = arith.constant 0 : index
    %c0_28 = arith.constant 0 : index
    %25 = vector.load %arg8[%c0_27, %c0_28] : memref<256x1152xbf16, #tpu.memory_space<vmem>>, vector<256x128xbf16>
    tpu.vector_store %arg8[%c0_27, %c0_28], %24 {strides = array<i32>} : memref<256x1152xbf16, #tpu.memory_space<vmem>>, vector<256x128xbf16>,
    %c0_29 = arith.constant 0 : index
    %c1_30 = arith.constant 1 : index
    %c0_31 = arith.constant 0 : index
    %26 = vector.load %arg7[%c0_29, %c1_30, %c0_31] : memref<18x18x128xbf16, #tpu.memory_space<vmem>>, vector<16x16x128xbf16>
    %27 = vector.shape_cast %26 : vector<16x16x128xbf16> to vector<256x128xbf16>
    %c0_32 = arith.constant 0 : index
    %c128 = arith.constant 128 : index
    %28 = vector.load %arg8[%c0_32, %c128] : memref<256x1152xbf16, #tpu.memory_space<vmem>>, vector<256x128xbf16>
    tpu.vector_store %arg8[%c0_32, %c128], %27 {strides = array<i32>} : memref<256x1152xbf16, #tpu.memory_space<vmem>>, vector<256x128xbf16>,
    %c0_33 = arith.constant 0 : index
    %c2 = arith.constant 2 : index
    %c0_34 = arith.constant 0 : index
    %29 = vector.load %arg7[%c0_33, %c2, %c0_34] : memref<18x18x128xbf16, #tpu.memory_space<vmem>>, vector<16x16x128xbf16>
    %30 = vector.shape_cast %29 : vector<16x16x128xbf16> to vector<256x128xbf16>
    %c0_35 = arith.constant 0 : index
    %c256 = arith.constant 256 : index
    %31 = vector.load %arg8[%c0_35, %c256] : memref<256x1152xbf16, #tpu.memory_space<vmem>>, vector<256x128xbf16>
    tpu.vector_store %arg8[%c0_35, %c256], %30 {strides = array<i32>} : memref<256x1152xbf16, #tpu.memory_space<vmem>>, vector<256x128xbf16>,
    %c1_36 = arith.constant 1 : index
    %c0_37 = arith.constant 0 : index
    %c0_38 = arith.constant 0 : index
    %32 = vector.load %arg7[%c1_36, %c0_37, %c0_38] : memref<18x18x128xbf16, #tpu.memory_space<vmem>>, vector<16x16x128xbf16>
    %33 = vector.shape_cast %32 : vector<16x16x128xbf16> to vector<256x128xbf16>
    %c0_39 = arith.constant 0 : index
    %c384 = arith.constant 384 : index
    %34 = vector.load %arg8[%c0_39, %c384] : memref<256x1152xbf16, #tpu.memory_space<vmem>>, vector<256x128xbf16>
    tpu.vector_store %arg8[%c0_39, %c384], %33 {strides = array<i32>} : memref<256x1152xbf16, #tpu.memory_space<vmem>>, vector<256x128xbf16>,
    %c1_40 = arith.constant 1 : index
    %c1_41 = arith.constant 1 : index
    %c0_42 = arith.constant 0 : index
    %35 = vector.load %arg7[%c1_40, %c1_41, %c0_42] : memref<18x18x128xbf16, #tpu.memory_space<vmem>>, vector<16x16x128xbf16>
    %36 = vector.shape_cast %35 : vector<16x16x128xbf16> to vector<256x128xbf16>
    %c0_43 = arith.constant 0 : index
    %c512 = arith.constant 512 : index
    %37 = vector.load %arg8[%c0_43, %c512] : memref<256x1152xbf16, #tpu.memory_space<vmem>>, vector<256x128xbf16>
    tpu.vector_store %arg8[%c0_43, %c512], %36 {strides = array<i32>} : memref<256x1152xbf16, #tpu.memory_space<vmem>>, vector<256x128xbf16>,
    %c1_44 = arith.constant 1 : index
    %c2_45 = arith.constant 2 : index
    %c0_46 = arith.constant 0 : index
    %38 = vector.load %arg7[%c1_44, %c2_45, %c0_46] : memref<18x18x128xbf16, #tpu.memory_space<vmem>>, vector<16x16x128xbf16>
    %39 = vector.shape_cast %38 : vector<16x16x128xbf16> to vector<256x128xbf16>
    %c0_47 = arith.constant 0 : index
    %c640 = arith.constant 640 : index
    %40 = vector.load %arg8[%c0_47, %c640] : memref<256x1152xbf16, #tpu.memory_space<vmem>>, vector<256x128xbf16>
    tpu.vector_store %arg8[%c0_47, %c640], %39 {strides = array<i32>} : memref<256x1152xbf16, #tpu.memory_space<vmem>>, vector<256x128xbf16>,
    %c2_48 = arith.constant 2 : index
    %c0_49 = arith.constant 0 : index
    %c0_50 = arith.constant 0 : index
    %41 = vector.load %arg7[%c2_48, %c0_49, %c0_50] : memref<18x18x128xbf16, #tpu.memory_space<vmem>>, vector<16x16x128xbf16>
    %42 = vector.shape_cast %41 : vector<16x16x128xbf16> to vector<256x128xbf16>
    %c0_51 = arith.constant 0 : index
    %c768 = arith.constant 768 : index
    %43 = vector.load %arg8[%c0_51, %c768] : memref<256x1152xbf16, #tpu.memory_space<vmem>>, vector<256x128xbf16>
    tpu.vector_store %arg8[%c0_51, %c768], %42 {strides = array<i32>} : memref<256x1152xbf16, #tpu.memory_space<vmem>>, vector<256x128xbf16>,
    %c2_52 = arith.constant 2 : index
    %c1_53 = arith.constant 1 : index
    %c0_54 = arith.constant 0 : index
    %44 = vector.load %arg7[%c2_52, %c1_53, %c0_54] : memref<18x18x128xbf16, #tpu.memory_space<vmem>>, vector<16x16x128xbf16>
    %45 = vector.shape_cast %44 : vector<16x16x128xbf16> to vector<256x128xbf16>
    %c0_55 = arith.constant 0 : index
    %c896 = arith.constant 896 : index
    %46 = vector.load %arg8[%c0_55, %c896] : memref<256x1152xbf16, #tpu.memory_space<vmem>>, vector<256x128xbf16>
    tpu.vector_store %arg8[%c0_55, %c896], %45 {strides = array<i32>} : memref<256x1152xbf16, #tpu.memory_space<vmem>>, vector<256x128xbf16>,
    %c2_56 = arith.constant 2 : index
    %c2_57 = arith.constant 2 : index
    %c0_58 = arith.constant 0 : index
    %47 = vector.load %arg7[%c2_56, %c2_57, %c0_58] : memref<18x18x128xbf16, #tpu.memory_space<vmem>>, vector<16x16x128xbf16>
    %48 = vector.shape_cast %47 : vector<16x16x128xbf16> to vector<256x128xbf16>
    %c0_59 = arith.constant 0 : index
    %c1024 = arith.constant 1024 : index
    %49 = vector.load %arg8[%c0_59, %c1024] : memref<256x1152xbf16, #tpu.memory_space<vmem>>, vector<256x128xbf16>
    tpu.vector_store %arg8[%c0_59, %c1024], %48 {strides = array<i32>} : memref<256x1152xbf16, #tpu.memory_space<vmem>>, vector<256x128xbf16>,
    %c0_60 = arith.constant 0 : index
    %c0_61 = arith.constant 0 : index
    %50 = vector.load %arg8[%c0_60, %c0_61] : memref<256x1152xbf16, #tpu.memory_space<vmem>>, vector<256x1152xbf16>
    %c0_62 = arith.constant 0 : index
    %c0_63 = arith.constant 0 : index
    %51 = vector.load %arg3[%c0_62, %c0_63] : memref<1152x128xbf16, #tpu.memory_space<vmem>>, vector<1152x128xbf16>
    %cst_64 = arith.constant dense<0.000000e+00> : vector<256x128xf32>
    %52 = tpu.matmul %50, %51, %cst_64 {dimension_numbers = #tpu.dot_dimension_numbers<[1], [0], [0], [1], [0, 0, 1, 1], [], []>} : vector<256x1152xbf16>, vector<1152x128xbf16>, vector<256x128xf32> -> vector<256x128xf32>
    %c0_65 = arith.constant 0 : index
    %c0_66 = arith.constant 0 : index
    %53 = vector.load %arg4[%c0_65, %c0_66] : memref<1x128xf32, #tpu.memory_space<vmem>>, vector<1x128xf32>
    %54 = vector.broadcast %53 : vector<1x128xf32> to vector<256x128xf32>
    %55 = arith.addf %52, %54 : vector<256x128xf32>
    %56 = vector.shape_cast %55 : vector<256x128xf32> to vector<16x16x128xf32>
    %57 = arith.truncf %56 : vector<16x16x128xf32> to vector<16x16x128xbf16>
    %c0_67 = arith.constant 0 : index
    %c0_68 = arith.constant 0 : index
    %c0_69 = arith.constant 0 : index
    %c0_70 = arith.constant 0 : index
    %58 = vector.load %arg5[%c0_67, %c0_68, %c0_69, %c0_70] : memref<1x16x16x128xbf16, #tpu.memory_space<vmem>>, vector<1x16x16x128xbf16>
    %59 = vector.shape_cast %58 : vector<1x16x16x128xbf16> to vector<16x16x128xbf16>
    %60 = vector.shape_cast %57 : vector<16x16x128xbf16> to vector<1x16x16x128xbf16>
    tpu.vector_store %arg5[%c0_67, %c0_68, %c0_69, %c0_70], %60 {strides = array<i32>} : memref<1x16x16x128xbf16, #tpu.memory_space<vmem>>, vector<1x16x16x128xbf16>,
    %cst_71 = arith.constant dense<0.000000e+00> : vector<128xf32>
    %61 = vector.multi_reduction <add>, %55, %cst_71 [0] : vector<256x128xf32> to vector<128xf32>
    %62 = vector.shape_cast %61 : vector<128xf32> to vector<1x128xf32>
    %63 = arith.mulf %55, %55 : vector<256x128xf32>
    %cst_72 = arith.constant dense<0.000000e+00> : vector<128xf32>
    %64 = vector.multi_reduction <add>, %63, %cst_72 [0] : vector<256x128xf32> to vector<128xf32>
    %65 = vector.shape_cast %64 : vector<128xf32> to vector<1x128xf32>
    %66 = tpu.concatenate %62, %65 in 0 : vector<1x128xf32>, vector<1x128xf32> -> vector<2x128xf32>
    %c0_73 = arith.constant 0 : index
    %c0_74 = arith.constant 0 : index
    %c0_75 = arith.constant 0 : index
    %67 = vector.load %arg6[%c0_73, %c0_74, %c0_75] : memref<1x2x128xf32, #tpu.memory_space<vmem>>, vector<1x2x128xf32>
    %68 = vector.shape_cast %67 : vector<1x2x128xf32> to vector<2x128xf32>
    %69 = vector.shape_cast %66 : vector<2x128xf32> to vector<1x2x128xf32>
    tpu.vector_store %arg6[%c0_73, %c0_74, %c0_75], %69 {strides = array<i32>} : memref<1x2x128xf32, #tpu.memory_space<vmem>>, vector<1x2x128xf32>,
    return
  }
  func.func @transform_0(%arg0: i32) -> (i32, i32, i32, i32) {
    %c0_i32 = arith.constant 0 : i32
    %c0_i32_0 = arith.constant 0 : i32
    %c0_i32_1 = arith.constant 0 : i32
    %c0_i32_2 = arith.constant 0 : i32
    return %arg0, %c0_i32, %c0_i32_0, %c0_i32_1 : i32, i32, i32, i32
  }
  func.func @transform_1(%arg0: i32) -> (i32, i32) {
    %c0_i32 = arith.constant 0 : i32
    %c0_i32_0 = arith.constant 0 : i32
    %c0_i32_1 = arith.constant 0 : i32
    return %c0_i32, %c0_i32_0 : i32, i32
  }
  func.func @transform_2(%arg0: i32) -> (i32, i32) {
    %c0_i32 = arith.constant 0 : i32
    %c0_i32_0 = arith.constant 0 : i32
    %c0_i32_1 = arith.constant 0 : i32
    return %c0_i32, %c0_i32_0 : i32, i32
  }
  func.func @transform_3(%arg0: i32) -> (i32, i32) {
    %c0_i32 = arith.constant 0 : i32
    %c0_i32_0 = arith.constant 0 : i32
    %c0_i32_1 = arith.constant 0 : i32
    return %c0_i32, %c0_i32_0 : i32, i32
  }
  func.func @transform_4(%arg0: i32) -> (i32, i32, i32, i32) {
    %c0_i32 = arith.constant 0 : i32
    %c0_i32_0 = arith.constant 0 : i32
    %c0_i32_1 = arith.constant 0 : i32
    %c0_i32_2 = arith.constant 0 : i32
    return %arg0, %c0_i32, %c0_i32_0, %c0_i32_1 : i32, i32, i32, i32
  }
  func.func @transform_5(%arg0: i32) -> (i32, i32, i32) {
    %c0_i32 = arith.constant 0 : i32
    %c0_i32_0 = arith.constant 0 : i32
    %c0_i32_1 = arith.constant 0 : i32
    return %arg0, %c0_i32, %c0_i32_0 : i32, i32, i32
  }
}

module attributes {stable_mosaic.version = 11 : i64} {
  func.func @_bn_relu_pool_kernel(%arg0: i32, %arg1: memref<1x8x2x8x256xbf16, #tpu.memory_space<vmem>>, %arg2: memref<2x256xf32, #tpu.memory_space<vmem>>, %arg3: memref<1x8x2x8x16xf32, #tpu.memory_space<vmem>>, %arg4: memref<1x8x8x8xf32, #tpu.memory_space<vmem>>) attributes {dimension_semantics = [#tpu.dimension_semantics<parallel>], iteration_bounds = array<i64: 2>, scalar_prefetch = 0 : i64, scratch_operands = 0 : i64, tpu.core_type = #tpu.core_type<tc>, window_params = [{transform_indices = @transform_0, window_bounds = array<i64: 1, 8, 2, 8, 256>}, {pipeline_mode = #tpu.pipeline_mode<synchronous>, transform_indices = @transform_1, window_bounds = array<i64: 2, 256>}, {transform_indices = @transform_2, window_bounds = array<i64: 1, 8, 2, 8, 16>}, {transform_indices = @transform_3, window_bounds = array<i64: 1, 8, 8, 8>}]} {
    %c0 = arith.constant 0 : index
    %c0_0 = arith.constant 0 : index
    %c0_1 = arith.constant 0 : index
    %c0_2 = arith.constant 0 : index
    %c0_3 = arith.constant 0 : index
    %0 = vector.load %arg1[%c0, %c0_0, %c0_1, %c0_2, %c0_3] : memref<1x8x2x8x256xbf16, #tpu.memory_space<vmem>>, vector<1x8x2x8x256xbf16>
    %1 = vector.shape_cast %0 : vector<1x8x2x8x256xbf16> to vector<8x2x8x256xbf16>
    %2 = arith.extf %1 : vector<8x2x8x256xbf16> to vector<8x2x8x256xf32>
    %c0_4 = arith.constant 0 : index
    %c0_5 = arith.constant 0 : index
    %3 = vector.load %arg2[%c0_4, %c0_5] : memref<2x256xf32, #tpu.memory_space<vmem>>, vector<1x256xf32>
    %4 = vector.shape_cast %3 : vector<1x256xf32> to vector<1x1x1x256xf32>
    %5 = vector.broadcast %4 : vector<1x1x1x256xf32> to vector<8x2x8x256xf32>
    %6 = arith.mulf %2, %5 : vector<8x2x8x256xf32>
    %c1 = arith.constant 1 : index
    %c0_6 = arith.constant 0 : index
    %7 = vector.load %arg2[%c1, %c0_6] : memref<2x256xf32, #tpu.memory_space<vmem>>, vector<1x256xf32>
    %8 = vector.shape_cast %7 : vector<1x256xf32> to vector<1x1x1x256xf32>
    %9 = vector.broadcast %8 : vector<1x1x1x256xf32> to vector<8x2x8x256xf32>
    %10 = arith.addf %6, %9 : vector<8x2x8x256xf32>
    %cst = arith.constant 0.000000e+00 : f32
    %11 = vector.broadcast %cst : f32 to vector<8x2x8x256xf32>
    %12 = arith.maximumf %10, %11 : vector<8x2x8x256xf32>
    %13 = vector.extract_strided_slice %12 {offsets = [0, 0, 0, 0], sizes = [8, 2, 8, 8], strides = [1, 1, 1, 1]} : vector<8x2x8x256xf32> to vector<8x2x8x8xf32>
    %14 = vector.extract_strided_slice %12 {offsets = [0, 0, 0, 128], sizes = [8, 2, 8, 8], strides = [1, 1, 1, 1]} : vector<8x2x8x256xf32> to vector<8x2x8x8xf32>
    %15 = tpu.concatenate %13, %14 in 3 : vector<8x2x8x8xf32>, vector<8x2x8x8xf32> -> vector<8x2x8x16xf32>
    %c0_7 = arith.constant 0 : index
    %c0_8 = arith.constant 0 : index
    %c0_9 = arith.constant 0 : index
    %c0_10 = arith.constant 0 : index
    %c0_11 = arith.constant 0 : index
    %16 = vector.load %arg3[%c0_7, %c0_8, %c0_9, %c0_10, %c0_11] : memref<1x8x2x8x16xf32, #tpu.memory_space<vmem>>, vector<1x8x2x8x16xf32>
    %17 = vector.shape_cast %16 : vector<1x8x2x8x16xf32> to vector<8x2x8x16xf32>
    %18 = vector.shape_cast %15 : vector<8x2x8x16xf32> to vector<1x8x2x8x16xf32>
    tpu.vector_store %arg3[%c0_7, %c0_8, %c0_9, %c0_10, %c0_11], %18 {strides = array<i32>} : memref<1x8x2x8x16xf32, #tpu.memory_space<vmem>>, vector<1x8x2x8x16xf32>,
    %19 = vector.extract_strided_slice %12 {offsets = [0, 0, 0, 0], sizes = [8, 2, 8, 128], strides = [1, 1, 1, 1]} : vector<8x2x8x256xf32> to vector<8x2x8x128xf32>
    %20 = vector.extract_strided_slice %12 {offsets = [0, 0, 0, 128], sizes = [8, 2, 8, 128], strides = [1, 1, 1, 1]} : vector<8x2x8x256xf32> to vector<8x2x8x128xf32>
    %21 = arith.maximumf %19, %20 : vector<8x2x8x128xf32>
    %22 = vector.extract_strided_slice %21 {offsets = [0, 0, 0, 0], sizes = [8, 1, 8, 128], strides = [1, 1, 1, 1]} : vector<8x2x8x128xf32> to vector<8x1x8x128xf32>
    %23 = vector.shape_cast %22 : vector<8x1x8x128xf32> to vector<8x8x128xf32>
    %24 = vector.extract_strided_slice %21 {offsets = [0, 1, 0, 0], sizes = [8, 1, 8, 128], strides = [1, 1, 1, 1]} : vector<8x2x8x128xf32> to vector<8x1x8x128xf32>
    %25 = vector.shape_cast %24 : vector<8x1x8x128xf32> to vector<8x8x128xf32>
    %26 = arith.maximumf %23, %25 : vector<8x8x128xf32>
    %27 = vector.extract_strided_slice %26 {offsets = [0, 0, 0], sizes = [8, 8, 8], strides = [1, 1, 1]} : vector<8x8x128xf32> to vector<8x8x8xf32>
    %c0_12 = arith.constant 0 : index
    %c0_13 = arith.constant 0 : index
    %c0_14 = arith.constant 0 : index
    %c0_15 = arith.constant 0 : index
    %28 = vector.load %arg4[%c0_12, %c0_13, %c0_14, %c0_15] : memref<1x8x8x8xf32, #tpu.memory_space<vmem>>, vector<1x8x8x8xf32>
    %29 = vector.shape_cast %28 : vector<1x8x8x8xf32> to vector<8x8x8xf32>
    %30 = vector.shape_cast %27 : vector<8x8x8xf32> to vector<1x8x8x8xf32>
    tpu.vector_store %arg4[%c0_12, %c0_13, %c0_14, %c0_15], %30 {strides = array<i32>} : memref<1x8x8x8xf32, #tpu.memory_space<vmem>>, vector<1x8x8x8xf32>,
    return
  }
  func.func @transform_0(%arg0: i32) -> (i32, i32, i32, i32, i32) {
    %c0_i32 = arith.constant 0 : i32
    %c0_i32_0 = arith.constant 0 : i32
    %c0_i32_1 = arith.constant 0 : i32
    %c0_i32_2 = arith.constant 0 : i32
    %c0_i32_3 = arith.constant 0 : i32
    return %arg0, %c0_i32, %c0_i32_0, %c0_i32_1, %c0_i32_2 : i32, i32, i32, i32, i32
  }
  func.func @transform_1(%arg0: i32) -> (i32, i32) {
    %c0_i32 = arith.constant 0 : i32
    %c0_i32_0 = arith.constant 0 : i32
    %c0_i32_1 = arith.constant 0 : i32
    return %c0_i32, %c0_i32_0 : i32, i32
  }
  func.func @transform_2(%arg0: i32) -> (i32, i32, i32, i32, i32) {
    %c0_i32 = arith.constant 0 : i32
    %c0_i32_0 = arith.constant 0 : i32
    %c0_i32_1 = arith.constant 0 : i32
    %c0_i32_2 = arith.constant 0 : i32
    %c0_i32_3 = arith.constant 0 : i32
    return %arg0, %c0_i32, %c0_i32_0, %c0_i32_1, %c0_i32_2 : i32, i32, i32, i32, i32
  }
  func.func @transform_3(%arg0: i32) -> (i32, i32, i32, i32) {
    %c0_i32 = arith.constant 0 : i32
    %c0_i32_0 = arith.constant 0 : i32
    %c0_i32_1 = arith.constant 0 : i32
    %c0_i32_2 = arith.constant 0 : i32
    return %arg0, %c0_i32, %c0_i32_0, %c0_i32_1 : i32, i32, i32, i32
  }
}

</mosaic_0001>

<llo_original>
// kernel: encoder_block_forward.5
$region0: #{encoder_block_forward.5}
  #allocation0 [shape = 'u32[]', space=smem, size = 0x4, offset = 0x4, fixed_abs, tag = 'smem constant byte address 0x4 - core index']
  #allocation1 [shape = 'u32[144,128]{1,0:T(1,128)}', space=vmem, size = 0x12000, scoped, tag = 'internal scratch']
  %s0 = inlined_call_operand.vmem [shape: bf16[2,8,2,8,256], index: 0, kind: input, shape index: {}]
  %s1 = inlined_call_operand.vmem [shape: f32[2,256], index: 1, kind: input, shape index: {}]
  %s2 = inlined_call_operand.vmem [shape: f32[2,8,2,8,16], index: 2, kind: output, shape index: {0}]
  %s3 = inlined_call_operand.vmem [shape: f32[2,8,8,8], index: 3, kind: output, shape index: {1}]
  %4 = xla_tuple %s2, %s3
  %s5 = sld [smem:[#allocation0]]
  $region49: #{encoder_block_forward.5} parent=0
    _
  %s7 = ssub.s32 1, %s5
  %s8 = scalar_select 0, %s7, %s5
  loop: start=0, step=1, limit=4
  $region2: #{encoder_block_forward.5} parent=0 // loop_pre_header
    _
  $region3: #{encoder_block_forward.5} parent=0 // loop_header
    %s10 = sphi 0, %s14
    %p11 = scmp.ge.s32.totalorder %s10, 4
    %s20 = sphi 0, %s22
    %s23 = sphi 0, %s20
    %s24 = sphi 0, %s23
    %s40 = sphi 0, %s24
    %s44 = sphi 0, %s44
    %s46 = sphi 0, %s44
    %s47 = sphi 0, %s46
    %s61 = sphi 0, %s47
    %s67 = sphi 0, %s69
    %s70 = sphi 0, %s67
    %s71 = sphi 0, %s70
    %s87 = sphi 0, %s71
    %s93 = sphi 0, %s95
    %s96 = sphi 0, %s93
    %s97 = sphi 0, %s96
    %s113 = sphi 0, %s97
  $region4: #{encoder_block_forward.5} parent=0 // loop_header_branch
    %13 = sbr.rel (%p11) target = $region8
  $region5: #{encoder_block_forward.5} parent=0 // loop_body
    %s15 = ssub.s32 %s10, 1
    %s16 = ssub.s32 %s10, 2
    %s17 = sadd.s32 %s10, 1
    %s18 = ssub.s32 %s10, %s17
    %p19 = scmp.eq.s32.totalorder %s18, 0
    %s21 = sadd.s32 %s20, 1
    %s22 = scalar_select %p19, %s20, %s21
    %p25 = pneg %p19
    %p26 = scmp.eq.s32.totalorder %s10, 1
    %p27 = por %p25, %p26
    %p28 = scmp.ne.s32.totalorder %s20, %s23
    %p29 = scmp.eq.s32.totalorder %s10, 0
    %p30 = por %p28, %p29
    %p31 = scmp.ne.s32.totalorder %s20, %s23
    %p32 = scmp.eq.s32.totalorder %s15, 1
    %p33 = por %p31, %p32
    %p34 = scmp.ne.s32.totalorder %s23, %s24
    %p35 = scmp.eq.s32.totalorder %s15, 0
    %p36 = por %p34, %p35
    %p37 = scmp.ne.s32.totalorder %s23, %s24
    %p38 = scmp.eq.s32.totalorder %s16, 1
    %p39 = por %p37, %p38
    %p41 = scmp.ne.s32.totalorder %s24, %s40
    %p42 = scmp.eq.s32.totalorder %s16, 0
    %p43 = por %p41, %p42
    %s45 = sadd.s32 %s44, 1
    %p48 = scmp.eq.s32.totalorder %s10, 1
    %p49 = scmp.ne.s32.totalorder %s44, %s46
    %p50 = scmp.eq.s32.totalorder %s10, 0
    %p51 = por %p49, %p50
    %p52 = scmp.ne.s32.totalorder %s44, %s46
    %p53 = scmp.eq.s32.totalorder %s15, 1
    %p54 = por %p52, %p53
    %p55 = scmp.ne.s32.totalorder %s46, %s47
    %p56 = scmp.eq.s32.totalorder %s15, 0
    %p57 = por %p55, %p56
    %p58 = scmp.ne.s32.totalorder %s46, %s47
    %p59 = scmp.eq.s32.totalorder %s16, 1
    %p60 = por %p58, %p59
    %p62 = scmp.ne.s32.totalorder %s47, %s61
    %p63 = scmp.eq.s32.totalorder %s16, 0
    %p64 = por %p62, %p63
    %s65 = ssub.s32 %s10, %s17
    %p66 = scmp.eq.s32.totalorder %s65, 0
    %s68 = sadd.s32 %s67, 1
    %s69 = scalar_select %p66, %s67, %s68
    %p72 = pneg %p66
    %p73 = scmp.eq.s32.totalorder %s10, 1
    %p74 = por %p72, %p73
    %p75 = scmp.ne.s32.totalorder %s67, %s70
    %p76 = scmp.eq.s32.totalorder %s10, 0
    %p77 = por %p75, %p76
    %p78 = scmp.ne.s32.totalorder %s67, %s70
    %p79 = scmp.eq.s32.totalorder %s15, 1
    %p80 = por %p78, %p79
    %p81 = scmp.ne.s32.totalorder %s70, %s71
    %p82 = scmp.eq.s32.totalorder %s15, 0
    %p83 = por %p81, %p82
    %p84 = scmp.ne.s32.totalorder %s70, %s71
    %p85 = scmp.eq.s32.totalorder %s16, 1
    %p86 = por %p84, %p85
    %p88 = scmp.ne.s32.totalorder %s71, %s87
    %p89 = scmp.eq.s32.totalorder %s16, 0
    %p90 = por %p88, %p89
    %s91 = ssub.s32 %s10, %s17
    %p92 = scmp.eq.s32.totalorder %s91, 0
    %s94 = sadd.s32 %s93, 1
    %s95 = scalar_select %p92, %s93, %s94
    %p98 = pneg %p92
    %p99 = scmp.eq.s32.totalorder %s10, 1
    %p100 = por %p98, %p99
    %p101 = scmp.ne.s32.totalorder %s93, %s96
    %p102 = scmp.eq.s32.totalorder %s10, 0
    %p103 = por %p101, %p102
    %p104 = scmp.ne.s32.totalorder %s93, %s96
    %p105 = scmp.eq.s32.totalorder %s15, 1
    %p106 = por %p104, %p105
    %p107 = scmp.ne.s32.totalorder %s96, %s97
    %p108 = scmp.eq.s32.totalorder %s15, 0
    %p109 = por %p107, %p108
    %p110 = scmp.ne.s32.totalorder %s96, %s97
    %p111 = scmp.eq.s32.totalorder %s16, 1
    %p112 = por %p110, %p111
    %p114 = scmp.ne.s32.totalorder %s97, %s113
    %p115 = scmp.eq.s32.totalorder %s16, 0
    %p116 = por %p114, %p115
    %p117 = scmp.le.s32.totalorder 1, %s10
    %p118 = scmp.lt.s32.totalorder %s10, 3
    %p119 = pnand %p117, %p118
    %p120 = pneg %p119
    // Predicated region
    $region9: #{encoder_block_forward.5} parent=5 // pred_check
      _
    $region10: #{encoder_block_forward.5} parent=5 // pred_check_branch
      %122 = sbr.rel (%p119) target = $region12
    $region11: #{encoder_block_forward.5} parent=5 // pred_region
      %s123 = ssub.s32 %s10, 1
      // Predicated region
      $region13: #{encoder_block_forward.5} parent=11 // pred_check
        %p124 = pneg %p57
      $region14: #{encoder_block_forward.5} parent=11 // pred_check_branch
        %126 = sbr.rel (%p124) target = $region16
      $region15: #{encoder_block_forward.5} parent=11 // pred_region
        _
      $region16: #{encoder_block_forward.5} parent=11 // pred_fallthru
        _
    $region12: #{encoder_block_forward.5} parent=5 // pred_fallthru
      _
    %p127 = scmp.lt.s32.totalorder %s10, 2
    // Predicated region
    $region17: #{encoder_block_forward.5} parent=5 // pred_check
      %p128 = pneg %p127
    $region18: #{encoder_block_forward.5} parent=5 // pred_check_branch
      %130 = sbr.rel (%p128) target = $region20
    $region19: #{encoder_block_forward.5} parent=5 // pred_region
      // Predicated region
      $region21: #{encoder_block_forward.5} parent=19 // pred_check
        %p131 = pneg %p30
      $region22: #{encoder_block_forward.5} parent=19 // pred_check_branch
        %133 = sbr.rel (%p131) target = $region24
      $region23: #{encoder_block_forward.5} parent=19 // pred_region
        %p134 = scmp.lt.s32.totalorder %s10, 1
        %s135 = scalar_select %p134, %s10, 1
        %s136 = smul.addr %s135, 32
        %s137 = smul.addr %s136, 4
        %s138 = scalar_lea.vmem %s0, %s137
      $region24: #{encoder_block_forward.5} parent=19 // pred_fallthru
        _
    $region20: #{encoder_block_forward.5} parent=5 // pred_fallthru
      _
    %p139 = scmp.le.s32.totalorder 1, %s10
    %p140 = scmp.lt.s32.totalorder %s10, 3
    %p141 = pnand %p139, %p140
    %p142 = pneg %p141
    // Predicated region
    $region25: #{encoder_block_forward.5} parent=5 // pred_check
      _
    $region26: #{encoder_block_forward.5} parent=5 // pred_check_branch
      %144 = sbr.rel (%p141) target = $region28
    $region27: #{encoder_block_forward.5} parent=5 // pred_region
      %s145 = ssub.s32 %s10, 1
      %p146 = scmp.lt.s32.totalorder %s15, 1
      %s147 = scalar_select %p146, %s15, 1
      %s148 = smul.addr %s147, 32
      %s149 = smul.addr %s148, 4
      %s150 = scalar_lea.vmem %s0, %s149
      %p151 = pneg %p36
      %p152 = pneg %p33
      %p153 = pneg %p57
      %p154 = pneg %p54
      %p155 = pneg %p83
      %p156 = pneg %p80
      %p157 = scmp.lt.s32.totalorder %s15, 1
      %s158 = scalar_select %p157, %s15, 1
      %s159 = smul.addr %s158, 16
      %s160 = smul.addr %s159, 8
      %s161 = scalar_lea.vmem %s2, %s160
      %p162 = pneg %p109
      %p163 = pneg %p106
      %p164 = scmp.lt.s32.totalorder %s15, 1
      %s165 = scalar_select %p164, %s15, 1
      %s166 = smul.addr %s165, 8
      %s167 = smul.addr %s166, 8
      %s168 = scalar_lea.vmem %s3, %s167
      %p169 = scmp.lt.s32.totalorder %s15, 1
      %s170 = scalar_select %p169, %s15, 1
      %s171 = smul.addr %s170, 32
      %s172 = smul.addr %s171, 4
      %s173 = scalar_lea.vmem %s0, %s172
      %p174 = scmp.lt.s32.totalorder %s15, 1
      %s175 = scalar_select %p174, %s15, 1
      %s176 = smul.addr %s175, 16
      %s177 = smul.addr %s176, 8
      %s178 = scalar_lea.vmem %s2, %s177
      %p179 = scmp.lt.s32.totalorder %s15, 1
      %s180 = scalar_select %p179, %s15, 1
      %s181 = smul.addr %s180, 8
      %s182 = smul.addr %s181, 8
      %s183 = scalar_lea.vmem %s3, %s182
      %v184 = vld [vmem:[%s173] sm:$0xff]
      %v185 = vld [vmem:[%s173 + $0x8] sm:$0xff]
      %v186 = vld [vmem:[%s173 + $0x10] sm:$0xff]
      %v187 = vld [vmem:[%s173 + $0x18] sm:$0xff]
      %v188 = vld [vmem:[%s173 + $0x20] sm:$0xff]
      %v189 = vld [vmem:[%s173 + $0x28] sm:$0xff]
      %v190 = vld [vmem:[%s173 + $0x30] sm:$0xff]
      %v191 = vld [vmem:[%s173 + $0x38] sm:$0xff]
      %v192 = vld [vmem:[%s173 + $0x40] sm:$0xff]
      %v193 = vld [vmem:[%s173 + $0x48] sm:$0xff]
      %v194 = vld [vmem:[%s173 + $0x50] sm:$0xff]
      %v195 = vld [vmem:[%s173 + $0x58] sm:$0xff]
      %v196 = vld [vmem:[%s173 + $0x60] sm:$0xff]
      %v197 = vld [vmem:[%s173 + $0x68] sm:$0xff]
      %v198 = vld [vmem:[%s173 + $0x70] sm:$0xff]
      %v199 = vld [vmem:[%s173 + $0x78] sm:$0xff]
      %v200 = vunpack.c.l.bf16 %v184
      %v201 = vunpack.c.h.bf16 %v184
      %v202 = vunpack.c.l.bf16 %v185
      %v203 = vunpack.c.h.bf16 %v185
      %v204 = vunpack.c.l.bf16 %v186
      %v205 = vunpack.c.h.bf16 %v186
      %v206 = vunpack.c.l.bf16 %v187
      %v207 = vunpack.c.h.bf16 %v187
      %v208 = vunpack.c.l.bf16 %v188
      %v209 = vunpack.c.h.bf16 %v188
      %v210 = vunpack.c.l.bf16 %v189
      %v211 = vunpack.c.h.bf16 %v189
      %v212 = vunpack.c.l.bf16 %v190
      %v213 = vunpack.c.h.bf16 %v190
      %v214 = vunpack.c.l.bf16 %v191
      %v215 = vunpack.c.h.bf16 %v191
      %v216 = vunpack.c.l.bf16 %v192
      %v217 = vunpack.c.h.bf16 %v192
      %v218 = vunpack.c.l.bf16 %v193
      %v219 = vunpack.c.h.bf16 %v193
      %v220 = vunpack.c.l.bf16 %v194
      %v221 = vunpack.c.h.bf16 %v194
      %v222 = vunpack.c.l.bf16 %v195
      %v223 = vunpack.c.h.bf16 %v195
      %v224 = vunpack.c.l.bf16 %v196
      %v225 = vunpack.c.h.bf16 %v196
      %v226 = vunpack.c.l.bf16 %v197
      %v227 = vunpack.c.h.bf16 %v197
      %v228 = vunpack.c.l.bf16 %v198
      %v229 = vunpack.c.h.bf16 %v198
      %v230 = vunpack.c.l.bf16 %v199
      %v231 = vunpack.c.h.bf16 %v199
      %v232 = vld [vmem:[%s1] ss:$2 sm:$0x3]
      %v234 = vlaneseq
      %v235 = vshrl.u32 %v234, 7
      %v236 = vsub.s32 0, %v235
      %v237 = vrot.slane %v232, %v236
      %v238 = vlaneseq
      %v239 = vshrl.u32 %v238, 7
      %v240 = vsub.s32 1, %v239
      %v241 = vrot.slane %v232, %v240
      %v244 = vmul.f32 %v200, %v237
      %v245 = vmul.f32 %v201, %v241
      %v246 = vmul.f32 %v202, %v237
      %v247 = vmul.f32 %v203, %v241
      %v248 = vmul.f32 %v204, %v237
      %v249 = vmul.f32 %v205, %v241
      %v250 = vmul.f32 %v206, %v237
      %v251 = vmul.f32 %v207, %v241
      %v252 = vmul.f32 %v208, %v237
      %v253 = vmul.f32 %v209, %v241
      %v254 = vmul.f32 %v210, %v237
      %v255 = vmul.f32 %v211, %v241
      %v256 = vmul.f32 %v212, %v237
      %v257 = vmul.f32 %v213, %v241
      %v258 = vmul.f32 %v214, %v237
      %v259 = vmul.f32 %v215, %v241
      %v260 = vmul.f32 %v216, %v237
      %v261 = vmul.f32 %v217, %v241
      %v262 = vmul.f32 %v218, %v237
      %v263 = vmul.f32 %v219, %v241
      %v264 = vmul.f32 %v220, %v237
      %v265 = vmul.f32 %v221, %v241
      %v266 = vmul.f32 %v222, %v237
      %v267 = vmul.f32 %v223, %v241
      %v268 = vmul.f32 %v224, %v237
      %v269 = vmul.f32 %v225, %v241
      %v270 = vmul.f32 %v226, %v237
      %v271 = vmul.f32 %v227, %v241
      %v272 = vmul.f32 %v228, %v237
      %v273 = vmul.f32 %v229, %v241
      %v274 = vmul.f32 %v230, %v237
      %v275 = vmul.f32 %v231, %v241
      %s276 = scalar_lea.vmem %s1, 1
      %v277 = vld [vmem:[%s276] ss:$2 sm:$0x3]
      %v279 = vlaneseq
      %v280 = vshrl.u32 %v279, 7
      %v281 = vsub.s32 0, %v280
      %v282 = vrot.slane %v277, %v281
      %v283 = vlaneseq
      %v284 = vshrl.u32 %v283, 7
      %v285 = vsub.s32 1, %v284
      %v286 = vrot.slane %v277, %v285
      %v289 = vadd.f32 %v244, %v282
      %v290 = vadd.f32 %v245, %v286
      %v291 = vadd.f32 %v246, %v282
      %v292 = vadd.f32 %v247, %v286
      %v293 = vadd.f32 %v248, %v282
      %v294 = vadd.f32 %v249, %v286
      %v295 = vadd.f32 %v250, %v282
      %v296 = vadd.f32 %v251, %v286
      %v297 = vadd.f32 %v252, %v282
      %v298 = vadd.f32 %v253, %v286
      %v299 = vadd.f32 %v254, %v282
      %v300 = vadd.f32 %v255, %v286
      %v301 = vadd.f32 %v256, %v282
      %v302 = vadd.f32 %v257, %v286
      %v303 = vadd.f32 %v258, %v282
      %v304 = vadd.f32 %v259, %v286
      %v305 = vadd.f32 %v260, %v282
      %v306 = vadd.f32 %v261, %v286
      %v307 = vadd.f32 %v262, %v282
      %v308 = vadd.f32 %v263, %v286
      %v309 = vadd.f32 %v264, %v282
      %v310 = vadd.f32 %v265, %v286
      %v311 = vadd.f32 %v266, %v282
      %v312 = vadd.f32 %v267, %v286
      %v313 = vadd.f32 %v268, %v282
      %v314 = vadd.f32 %v269, %v286
      %v315 = vadd.f32 %v270, %v282
      %v316 = vadd.f32 %v271, %v286
      %v317 = vadd.f32 %v272, %v282
      %v318 = vadd.f32 %v273, %v286
      %v319 = vadd.f32 %v274, %v282
      %v320 = vadd.f32 %v275, %v286
      %v321 = vmax.f32 %v289, 0.0
      %v322 = vmax.f32 %v290, 0.0
      %v323 = vmax.f32 %v291, 0.0
      %v324 = vmax.f32 %v292, 0.0
      %v325 = vmax.f32 %v293, 0.0
      %v326 = vmax.f32 %v294, 0.0
      %v327 = vmax.f32 %v295, 0.0
      %v328 = vmax.f32 %v296, 0.0
      %v329 = vmax.f32 %v297, 0.0
      %v330 = vmax.f32 %v298, 0.0
      %v331 = vmax.f32 %v299, 0.0
      %v332 = vmax.f32 %v300, 0.0
      %v333 = vmax.f32 %v301, 0.0
      %v334 = vmax.f32 %v302, 0.0
      %v335 = vmax.f32 %v303, 0.0
      %v336 = vmax.f32 %v304, 0.0
      %v337 = vmax.f32 %v305, 0.0
      %v338 = vmax.f32 %v306, 0.0
      %v339 = vmax.f32 %v307, 0.0
      %v340 = vmax.f32 %v308, 0.0
      %v341 = vmax.f32 %v309, 0.0
      %v342 = vmax.f32 %v310, 0.0
      %v343 = vmax.f32 %v311, 0.0
      %v344 = vmax.f32 %v312, 0.0
      %v345 = vmax.f32 %v313, 0.0
      %v346 = vmax.f32 %v314, 0.0
      %v347 = vmax.f32 %v315, 0.0
      %v348 = vmax.f32 %v316, 0.0
      %v349 = vmax.f32 %v317, 0.0
      %v350 = vmax.f32 %v318, 0.0
      %v351 = vmax.f32 %v319, 0.0
      %v352 = vmax.f32 %v320, 0.0
      %369 = vrot.lane.b32.xlu0 %v322, 8
      %v370 = vpop.permute.xlu0 %369
      %371 = vrot.lane.b32.xlu0 %v324, 8
      %v372 = vpop.permute.xlu0 %371
      %373 = vrot.lane.b32.xlu0 %v326, 8
      %v374 = vpop.permute.xlu0 %373
      %375 = vrot.lane.b32.xlu0 %v328, 8
      %v376 = vpop.permute.xlu0 %375
      %377 = vrot.lane.b32.xlu0 %v330, 8
      %v378 = vpop.permute.xlu0 %377
      %379 = vrot.lane.b32.xlu0 %v332, 8
      %v380 = vpop.permute.xlu0 %379
      %381 = vrot.lane.b32.xlu0 %v334, 8
      %v382 = vpop.permute.xlu0 %381
      %383 = vrot.lane.b32.xlu0 %v336, 8
      %v384 = vpop.permute.xlu0 %383
      %385 = vrot.lane.b32.xlu0 %v338, 8
      %v386 = vpop.permute.xlu0 %385
      %387 = vrot.lane.b32.xlu0 %v340, 8
      %v388 = vpop.permute.xlu0 %387
      %389 = vrot.lane.b32.xlu0 %v342, 8
      %v390 = vpop.permute.xlu0 %389
      %391 = vrot.lane.b32.xlu0 %v344, 8
      %v392 = vpop.permute.xlu0 %391
      %393 = vrot.lane.b32.xlu0 %v346, 8
      %v394 = vpop.permute.xlu0 %393
      %395 = vrot.lane.b32.xlu0 %v348, 8
      %v396 = vpop.permute.xlu0 %395
      %397 = vrot.lane.b32.xlu0 %v350, 8
      %v398 = vpop.permute.xlu0 %397
      %399 = vrot.lane.b32.xlu0 %v352, 8
      %v400 = vpop.permute.xlu0 %399
      %vm417 = vcmask 64512
      %v418 = vsel %vm417, %v321, %v370
      %v419 = vsel %vm417, %v323, %v372
      %v420 = vsel %vm417, %v325, %v374
      %v421 = vsel %vm417, %v327, %v376
      %v422 = vsel %vm417, %v329, %v378
      %v423 = vsel %vm417, %v331, %v380
      %v424 = vsel %vm417, %v333, %v382
      %v425 = vsel %vm417, %v335, %v384
      %v426 = vsel %vm417, %v337, %v386
      %v427 = vsel %vm417, %v339, %v388
      %v428 = vsel %vm417, %v341, %v390
      %v429 = vsel %vm417, %v343, %v392
      %v430 = vsel %vm417, %v345, %v394
      %v431 = vsel %vm417, %v347, %v396
      %v432 = vsel %vm417, %v349, %v398
      %v433 = vsel %vm417, %v351, %v400
      %vm434 = vcmask 130048
      %435 = vst.msk [vmem:[%s178] sm:$0xff] %vm434, %v418
      %436 = vst.msk [vmem:[%s178 + $0x8] sm:$0xff] %vm434, %v419
      %437 = vst.msk [vmem:[%s178 + $0x10] sm:$0xff] %vm434, %v420
      %438 = vst.msk [vmem:[%s178 + $0x18] sm:$0xff] %vm434, %v421
      %439 = vst.msk [vmem:[%s178 + $0x20] sm:$0xff] %vm434, %v422
      %440 = vst.msk [vmem:[%s178 + $0x28] sm:$0xff] %vm434, %v423
      %441 = vst.msk [vmem:[%s178 + $0x30] sm:$0xff] %vm434, %v424
      %442 = vst.msk [vmem:[%s178 + $0x38] sm:$0xff] %vm434, %v425
      %443 = vst.msk [vmem:[%s178 + $0x40] sm:$0xff] %vm434, %v426
      %444 = vst.msk [vmem:[%s178 + $0x48] sm:$0xff] %vm434, %v427
      %445 = vst.msk [vmem:[%s178 + $0x50] sm:$0xff] %vm434, %v428
      %446 = vst.msk [vmem:[%s178 + $0x58] sm:$0xff] %vm434, %v429
      %447 = vst.msk [vmem:[%s178 + $0x60] sm:$0xff] %vm434, %v430
      %448 = vst.msk [vmem:[%s178 + $0x68] sm:$0xff] %vm434, %v431
      %449 = vst.msk [vmem:[%s178 + $0x70] sm:$0xff] %vm434, %v432
      %450 = vst.msk [vmem:[%s178 + $0x78] sm:$0xff] %vm434, %v433
      %v451 = vmax.f32 %v321, %v322
      %v452 = vmax.f32 %v323, %v324
      %v453 = vmax.f32 %v325, %v326
      %v454 = vmax.f32 %v327, %v328
      %v455 = vmax.f32 %v329, %v330
      %v456 = vmax.f32 %v331, %v332
      %v457 = vmax.f32 %v333, %v334
      %v458 = vmax.f32 %v335, %v336
      %v459 = vmax.f32 %v337, %v338
      %v460 = vmax.f32 %v339, %v340
      %v461 = vmax.f32 %v341, %v342
      %v462 = vmax.f32 %v343, %v344
      %v463 = vmax.f32 %v345, %v346
      %v464 = vmax.f32 %v347, %v348
      %v465 = vmax.f32 %v349, %v350
      %v466 = vmax.f32 %v351, %v352
      %v467 = vmax.f32 %v451, %v452
      %v468 = vmax.f32 %v453, %v454
      %v469 = vmax.f32 %v455, %v456
      %v470 = vmax.f32 %v457, %v458
      %v471 = vmax.f32 %v459, %v460
      %v472 = vmax.f32 %v461, %v462
      %v473 = vmax.f32 %v463, %v464
      %v474 = vmax.f32 %v465, %v466
      %475 = vst.msk [vmem:[%s183] sm:$0xff] %vm417, %v467
      %476 = vst.msk [vmem:[%s183 + $0x8] sm:$0xff] %vm417, %v468
      %477 = vst.msk [vmem:[%s183 + $0x10] sm:$0xff] %vm417, %v469
      %478 = vst.msk [vmem:[%s183 + $0x18] sm:$0xff] %vm417, %v470
      %479 = vst.msk [vmem:[%s183 + $0x20] sm:$0xff] %vm417, %v471
      %480 = vst.msk [vmem:[%s183 + $0x28] sm:$0xff] %vm417, %v472
      %481 = vst.msk [vmem:[%s183 + $0x30] sm:$0xff] %vm417, %v473
      %482 = vst.msk [vmem:[%s183 + $0x38] sm:$0xff] %vm417, %v474
      %p483 = scmp.lt.s32.totalorder %s15, 1
      %s484 = scalar_select %p483, %s15, 1
      %s485 = smul.addr %s484, 16
      %s486 = smul.addr %s485, 8
      %s487 = scalar_lea.vmem %s2, %s486
      %p488 = scmp.lt.s32.totalorder %s15, 1
      %s489 = scalar_select %p488, %s15, 1
      %s490 = smul.addr %s489, 8
      %s491 = smul.addr %s490, 8
      %s492 = scalar_lea.vmem %s3, %s491
      // Predicated region
      $region29: #{encoder_block_forward.5} parent=27 // pred_check
        %p493 = pneg %p80
      $region30: #{encoder_block_forward.5} parent=27 // pred_check_branch
        %495 = sbr.rel (%p493) target = $region32
      $region31: #{encoder_block_forward.5} parent=27 // pred_region
        _
      $region32: #{encoder_block_forward.5} parent=27 // pred_fallthru
        _
      // Predicated region
      $region33: #{encoder_block_forward.5} parent=27 // pred_check
        %p496 = pneg %p106
      $region34: #{encoder_block_forward.5} parent=27 // pred_check_branch
        %498 = sbr.rel (%p496) target = $region36
      $region35: #{encoder_block_forward.5} parent=27 // pred_region
        _
      $region36: #{encoder_block_forward.5} parent=27 // pred_fallthru
        _
    $region28: #{encoder_block_forward.5} parent=5 // pred_fallthru
      _
    %p499 = scmp.le.s32.totalorder 2, %s10
    // Predicated region
    $region37: #{encoder_block_forward.5} parent=5 // pred_check
      %p500 = pneg %p499
    $region38: #{encoder_block_forward.5} parent=5 // pred_check_branch
      %502 = sbr.rel (%p500) target = $region40
    $region39: #{encoder_block_forward.5} parent=5 // pred_region
      %s503 = ssub.s32 %s10, 2
      // Predicated region
      $region41: #{encoder_block_forward.5} parent=39 // pred_check
        %p504 = pneg %p86
      $region42: #{encoder_block_forward.5} parent=39 // pred_check_branch
        %506 = sbr.rel (%p504) target = $region44
      $region43: #{encoder_block_forward.5} parent=39 // pred_region
        %p507 = scmp.lt.s32.totalorder %s16, 1
        %s508 = scalar_select %p507, %s16, 1
        %s509 = smul.addr %s508, 16
        %s510 = smul.addr %s509, 8
        %s511 = scalar_lea.vmem %s2, %s510
      $region44: #{encoder_block_forward.5} parent=39 // pred_fallthru
        _
      // Predicated region
      $region45: #{encoder_block_forward.5} parent=39 // pred_check
        %p512 = pneg %p112
      $region46: #{encoder_block_forward.5} parent=39 // pred_check_branch
        %514 = sbr.rel (%p512) target = $region48
      $region47: #{encoder_block_forward.5} parent=39 // pred_region
        %p515 = scmp.lt.s32.totalorder %s16, 1
        %s516 = scalar_select %p515, %s16, 1
        %s517 = smul.addr %s516, 8
        %s518 = smul.addr %s517, 8
        %s519 = scalar_lea.vmem %s3, %s518
      $region48: #{encoder_block_forward.5} parent=39 // pred_fallthru
        _
    $region40: #{encoder_block_forward.5} parent=5 // pred_fallthru
      _
  $region6: #{encoder_block_forward.5} parent=0 // loop_footer
    %s14 = sadd.s32 1, %s10
  $region7: #{encoder_block_forward.5} parent=0 // loop_footer_branch
    %9 = sbr.rel target = $region3
  $region8: #{encoder_block_forward.5} parent=0 // loop_exit
    _

// kernel: encoder_block_forward.3
$region0: #{encoder_block_forward.3}
  #allocation0 [shape = 'u32[]', space=smem, size = 0x4, offset = 0x4, fixed_abs, tag = 'smem constant byte address 0x4 - core index']
  #allocation1 [shape = 'u32[144,128]{1,0:T(1,128)}', space=vmem, size = 0x12000, scoped, tag = 'internal scratch']
  #allocation2 [shape = 'bf16[18,18,4]{2,1,0:T(8,128)(2,1)}', space=vmem, size = 0x1b000, scoped, tag = 'scratch operand']
  #allocation3 [shape = 'bf16[256,36]{1,0:T(16,128)(2,1)}', space=vmem, size = 0x10000, scoped, tag = 'scratch operand']
  %s0 = inlined_call_operand.vmem [shape: f32[2,16,16,4], index: 0, kind: input, shape index: {}]
  %s1 = inlined_call_operand.vmem [shape: f32[2,4], index: 1, kind: input, shape index: {}]
  %s2 = inlined_call_operand.vmem [shape: bf16[36,128], index: 2, kind: input, shape index: {}]
  %s3 = inlined_call_operand.vmem [shape: f32[1,128], index: 3, kind: input, shape index: {}]
  %s4 = inlined_call_operand.vmem [shape: bf16[2,16,16,128], index: 4, kind: output, shape index: {0}]
  %s5 = inlined_call_operand.vmem [shape: f32[2,2,128], index: 5, kind: output, shape index: {1}]
  %6 = xla_tuple %s4, %s5
  %s7 = sld [smem:[#allocation0]]
  $region57: #{encoder_block_forward.3} parent=0
    _
  %s9 = ssub.s32 1, %s7
  %s10 = scalar_select 0, %s9, %s7
  loop: start=0, step=1, limit=4
  $region2: #{encoder_block_forward.3} parent=0 // loop_pre_header
    _
  $region3: #{encoder_block_forward.3} parent=0 // loop_header
    %s12 = sphi 0, %s16
    %p13 = scmp.ge.s32.totalorder %s12, 4
    %s22 = sphi 0, %s24
    %s25 = sphi 0, %s22
    %s26 = sphi 0, %s25
    %s42 = sphi 0, %s26
    %s46 = sphi 0, %s46
    %s48 = sphi 0, %s46
    %s49 = sphi 0, %s48
    %s63 = sphi 0, %s49
    %s67 = sphi 0, %s67
    %s69 = sphi 0, %s67
    %s70 = sphi 0, %s69
    %s84 = sphi 0, %s70
    %s88 = sphi 0, %s88
    %s90 = sphi 0, %s88
    %s91 = sphi 0, %s90
    %s105 = sphi 0, %s91
    %s111 = sphi 0, %s113
    %s114 = sphi 0, %s111
    %s115 = sphi 0, %s114
    %s131 = sphi 0, %s115
    %s137 = sphi 0, %s139
    %s140 = sphi 0, %s137
    %s141 = sphi 0, %s140
    %s157 = sphi 0, %s141
  $region4: #{encoder_block_forward.3} parent=0 // loop_header_branch
    %15 = sbr.rel (%p13) target = $region8
  $region5: #{encoder_block_forward.3} parent=0 // loop_body
    %s17 = ssub.s32 %s12, 1
    %s18 = ssub.s32 %s12, 2
    %s19 = sadd.s32 %s12, 1
    %s20 = ssub.s32 %s12, %s19
    %p21 = scmp.eq.s32.totalorder %s20, 0
    %s23 = sadd.s32 %s22, 1
    %s24 = scalar_select %p21, %s22, %s23
    %p27 = pneg %p21
    %p28 = scmp.eq.s32.totalorder %s12, 1
    %p29 = por %p27, %p28
    %p30 = scmp.ne.s32.totalorder %s22, %s25
    %p31 = scmp.eq.s32.totalorder %s12, 0
    %p32 = por %p30, %p31
    %p33 = scmp.ne.s32.totalorder %s22, %s25
    %p34 = scmp.eq.s32.totalorder %s17, 1
    %p35 = por %p33, %p34
    %p36 = scmp.ne.s32.totalorder %s25, %s26
    %p37 = scmp.eq.s32.totalorder %s17, 0
    %p38 = por %p36, %p37
    %p39 = scmp.ne.s32.totalorder %s25, %s26
    %p40 = scmp.eq.s32.totalorder %s18, 1
    %p41 = por %p39, %p40
    %p43 = scmp.ne.s32.totalorder %s26, %s42
    %p44 = scmp.eq.s32.totalorder %s18, 0
    %p45 = por %p43, %p44
    %s47 = sadd.s32 %s46, 1
    %p50 = scmp.eq.s32.totalorder %s12, 1
    %p51 = scmp.ne.s32.totalorder %s46, %s48
    %p52 = scmp.eq.s32.totalorder %s12, 0
    %p53 = por %p51, %p52
    %p54 = scmp.ne.s32.totalorder %s46, %s48
    %p55 = scmp.eq.s32.totalorder %s17, 1
    %p56 = por %p54, %p55
    %p57 = scmp.ne.s32.totalorder %s48, %s49
    %p58 = scmp.eq.s32.totalorder %s17, 0
    %p59 = por %p57, %p58
    %p60 = scmp.ne.s32.totalorder %s48, %s49
    %p61 = scmp.eq.s32.totalorder %s18, 1
    %p62 = por %p60, %p61
    %p64 = scmp.ne.s32.totalorder %s49, %s63
    %p65 = scmp.eq.s32.totalorder %s18, 0
    %p66 = por %p64, %p65
    %s68 = sadd.s32 %s67, 1
    %p71 = scmp.eq.s32.totalorder %s12, 1
    %p72 = scmp.ne.s32.totalorder %s67, %s69
    %p73 = scmp.eq.s32.totalorder %s12, 0
    %p74 = por %p72, %p73
    %p75 = scmp.ne.s32.totalorder %s67, %s69
    %p76 = scmp.eq.s32.totalorder %s17, 1
    %p77 = por %p75, %p76
    %p78 = scmp.ne.s32.totalorder %s69, %s70
    %p79 = scmp.eq.s32.totalorder %s17, 0
    %p80 = por %p78, %p79
    %p81 = scmp.ne.s32.totalorder %s69, %s70
    %p82 = scmp.eq.s32.totalorder %s18, 1
    %p83 = por %p81, %p82
    %p85 = scmp.ne.s32.totalorder %s70, %s84
    %p86 = scmp.eq.s32.totalorder %s18, 0
    %p87 = por %p85, %p86
    %s89 = sadd.s32 %s88, 1
    %p92 = scmp.eq.s32.totalorder %s12, 1
    %p93 = scmp.ne.s32.totalorder %s88, %s90
    %p94 = scmp.eq.s32.totalorder %s12, 0
    %p95 = por %p93, %p94
    %p96 = scmp.ne.s32.totalorder %s88, %s90
    %p97 = scmp.eq.s32.totalorder %s17, 1
    %p98 = por %p96, %p97
    %p99 = scmp.ne.s32.totalorder %s90, %s91
    %p100 = scmp.eq.s32.totalorder %s17, 0
    %p101 = por %p99, %p100
    %p102 = scmp.ne.s32.totalorder %s90, %s91
    %p103 = scmp.eq.s32.totalorder %s18, 1
    %p104 = por %p102, %p103
    %p106 = scmp.ne.s32.totalorder %s91, %s105
    %p107 = scmp.eq.s32.totalorder %s18, 0
    %p108 = por %p106, %p107
    %s109 = ssub.s32 %s12, %s19
    %p110 = scmp.eq.s32.totalorder %s109, 0
    %s112 = sadd.s32 %s111, 1
    %s113 = scalar_select %p110, %s111, %s112
    %p116 = pneg %p110
    %p117 = scmp.eq.s32.totalorder %s12, 1
    %p118 = por %p116, %p117
    %p119 = scmp.ne.s32.totalorder %s111, %s114
    %p120 = scmp.eq.s32.totalorder %s12, 0
    %p121 = por %p119, %p120
    %p122 = scmp.ne.s32.totalorder %s111, %s114
    %p123 = scmp.eq.s32.totalorder %s17, 1
    %p124 = por %p122, %p123
    %p125 = scmp.ne.s32.totalorder %s114, %s115
    %p126 = scmp.eq.s32.totalorder %s17, 0
    %p127 = por %p125, %p126
    %p128 = scmp.ne.s32.totalorder %s114, %s115
    %p129 = scmp.eq.s32.totalorder %s18, 1
    %p130 = por %p128, %p129
    %p132 = scmp.ne.s32.totalorder %s115, %s131
    %p133 = scmp.eq.s32.totalorder %s18, 0
    %p134 = por %p132, %p133
    %s135 = ssub.s32 %s12, %s19
    %p136 = scmp.eq.s32.totalorder %s135, 0
    %s138 = sadd.s32 %s137, 1
    %s139 = scalar_select %p136, %s137, %s138
    %p142 = pneg %p136
    %p143 = scmp.eq.s32.totalorder %s12, 1
    %p144 = por %p142, %p143
    %p145 = scmp.ne.s32.totalorder %s137, %s140
    %p146 = scmp.eq.s32.totalorder %s12, 0
    %p147 = por %p145, %p146
    %p148 = scmp.ne.s32.totalorder %s137, %s140
    %p149 = scmp.eq.s32.totalorder %s17, 1
    %p150 = por %p148, %p149
    %p151 = scmp.ne.s32.totalorder %s140, %s141
    %p152 = scmp.eq.s32.totalorder %s17, 0
    %p153 = por %p151, %p152
    %p154 = scmp.ne.s32.totalorder %s140, %s141
    %p155 = scmp.eq.s32.totalorder %s18, 1
    %p156 = por %p154, %p155
    %p158 = scmp.ne.s32.totalorder %s141, %s157
    %p159 = scmp.eq.s32.totalorder %s18, 0
    %p160 = por %p158, %p159
    %p161 = scmp.le.s32.totalorder 1, %s12
    %p162 = scmp.lt.s32.totalorder %s12, 3
    %p163 = pnand %p161, %p162
    %p164 = pneg %p163
    // Predicated region
    $region9: #{encoder_block_forward.3} parent=5 // pred_check
      _
    $region10: #{encoder_block_forward.3} parent=5 // pred_check_branch
      %166 = sbr.rel (%p163) target = $region12
    $region11: #{encoder_block_forward.3} parent=5 // pred_region
      %s167 = ssub.s32 %s12, 1
      // Predicated region
      $region13: #{encoder_block_forward.3} parent=11 // pred_check
        %p168 = pneg %p59
      $region14: #{encoder_block_forward.3} parent=11 // pred_check_branch
        %170 = sbr.rel (%p168) target = $region16
      $region15: #{encoder_block_forward.3} parent=11 // pred_region
        _
      $region16: #{encoder_block_forward.3} parent=11 // pred_fallthru
        _
      // Predicated region
      $region17: #{encoder_block_forward.3} parent=11 // pred_check
        %p171 = pneg %p80
      $region18: #{encoder_block_forward.3} parent=11 // pred_check_branch
        %173 = sbr.rel (%p171) target = $region20
      $region19: #{encoder_block_forward.3} parent=11 // pred_region
        _
      $region20: #{encoder_block_forward.3} parent=11 // pred_fallthru
        _
      // Predicated region
      $region21: #{encoder_block_forward.3} parent=11 // pred_check
        %p174 = pneg %p101
      $region22: #{encoder_block_forward.3} parent=11 // pred_check_branch
        %176 = sbr.rel (%p174) target = $region24
      $region23: #{encoder_block_forward.3} parent=11 // pred_region
        _
      $region24: #{encoder_block_forward.3} parent=11 // pred_fallthru
        _
    $region12: #{encoder_block_forward.3} parent=5 // pred_fallthru
      _
    %p177 = scmp.lt.s32.totalorder %s12, 2
    // Predicated region
    $region25: #{encoder_block_forward.3} parent=5 // pred_check
      %p178 = pneg %p177
    $region26: #{encoder_block_forward.3} parent=5 // pred_check_branch
      %180 = sbr.rel (%p178) target = $region28
    $region27: #{encoder_block_forward.3} parent=5 // pred_region
      // Predicated region
      $region29: #{encoder_block_forward.3} parent=27 // pred_check
        %p181 = pneg %p32
      $region30: #{encoder_block_forward.3} parent=27 // pred_check_branch
        %183 = sbr.rel (%p181) target = $region32
      $region31: #{encoder_block_forward.3} parent=27 // pred_region
        %p184 = scmp.lt.s32.totalorder %s12, 1
        %s185 = scalar_select %p184, %s12, 1
        %s186 = smul.addr %s185, 32
        %s187 = smul.addr %s186, 8
        %s188 = scalar_lea.vmem %s0, %s187
      $region32: #{encoder_block_forward.3} parent=27 // pred_fallthru
        _
    $region28: #{encoder_block_forward.3} parent=5 // pred_fallthru
      _
    %p189 = scmp.le.s32.totalorder 1, %s12
    %p190 = scmp.lt.s32.totalorder %s12, 3
    %p191 = pnand %p189, %p190
    %p192 = pneg %p191
    // Predicated region
    $region33: #{encoder_block_forward.3} parent=5 // pred_check
      _
    $region34: #{encoder_block_forward.3} parent=5 // pred_check_branch
      %194 = sbr.rel (%p191) target = $region36
    $region35: #{encoder_block_forward.3} parent=5 // pred_region
      %s195 = ssub.s32 %s12, 1
      %p196 = scmp.lt.s32.totalorder %s17, 1
      %s197 = scalar_select %p196, %s17, 1
      %s198 = smul.addr %s197, 32
      %s199 = smul.addr %s198, 8
      %s200 = scalar_lea.vmem %s0, %s199
      %p201 = pneg %p38
      %p202 = pneg %p35
      %p203 = pneg %p59
      %p204 = pneg %p56
      %p205 = pneg %p80
      %p206 = pneg %p77
      %p207 = pneg %p101
      %p208 = pneg %p98
      %p209 = pneg %p127
      %p210 = pneg %p124
      %p211 = scmp.lt.s32.totalorder %s17, 1
      %s212 = scalar_select %p211, %s17, 1
      %s213 = smul.addr %s212, 32
      %s214 = smul.addr %s213, 4
      %s215 = scalar_lea.vmem %s4, %s214
      %p216 = pneg %p153
      %p217 = pneg %p150
      %p218 = scmp.lt.s32.totalorder %s17, 1
      %s219 = scalar_select %p218, %s17, 1
      %s220 = smul.addr %s219, 2
      %s221 = scalar_lea.vmem %s5, %s220
      %p222 = scmp.lt.s32.totalorder %s17, 1
      %s223 = scalar_select %p222, %s17, 1
      %s224 = smul.addr %s223, 32
      %s225 = smul.addr %s224, 8
      %s226 = scalar_lea.vmem %s0, %s225
      %p227 = scmp.lt.s32.totalorder %s17, 1
      %s228 = scalar_select %p227, %s17, 1
      %s229 = smul.addr %s228, 32
      %s230 = smul.addr %s229, 4
      %s231 = scalar_lea.vmem %s4, %s230
      %p232 = scmp.lt.s32.totalorder %s17, 1
      %s233 = scalar_select %p232, %s17, 1
      %s234 = smul.addr %s233, 2
      %s235 = scalar_lea.vmem %s5, %s234
      %v237 = vld [vmem:[%s226] sm:$0xff]
      %v238 = vld [vmem:[%s226 + $0x8] sm:$0xff]
      %v239 = vld [vmem:[%s226 + $0x10] sm:$0xff]
      %v240 = vld [vmem:[%s226 + $0x18] sm:$0xff]
      %v241 = vld [vmem:[%s226 + $0x20] sm:$0xff]
      %v242 = vld [vmem:[%s226 + $0x28] sm:$0xff]
      %v243 = vld [vmem:[%s226 + $0x30] sm:$0xff]
      %v244 = vld [vmem:[%s226 + $0x38] sm:$0xff]
      %v245 = vld [vmem:[%s226 + $0x40] sm:$0xff]
      %v246 = vld [vmem:[%s226 + $0x48] sm:$0xff]
      %v247 = vld [vmem:[%s226 + $0x50] sm:$0xff]
      %v248 = vld [vmem:[%s226 + $0x58] sm:$0xff]
      %v249 = vld [vmem:[%s226 + $0x60] sm:$0xff]
      %v250 = vld [vmem:[%s226 + $0x68] sm:$0xff]
      %v251 = vld [vmem:[%s226 + $0x70] sm:$0xff]
      %v252 = vld [vmem:[%s226 + $0x78] sm:$0xff]
      %v253 = vld [vmem:[%s226 + $0x80] sm:$0xff]
      %v254 = vld [vmem:[%s226 + $0x88] sm:$0xff]
      %v255 = vld [vmem:[%s226 + $0x90] sm:$0xff]
      %v256 = vld [vmem:[%s226 + $0x98] sm:$0xff]
      %v257 = vld [vmem:[%s226 + $0xa0] sm:$0xff]
      %v258 = vld [vmem:[%s226 + $0xa8] sm:$0xff]
      %v259 = vld [vmem:[%s226 + $0xb0] sm:$0xff]
      %v260 = vld [vmem:[%s226 + $0xb8] sm:$0xff]
      %v261 = vld [vmem:[%s226 + $0xc0] sm:$0xff]
      %v262 = vld [vmem:[%s226 + $0xc8] sm:$0xff]
      %v263 = vld [vmem:[%s226 + $0xd0] sm:$0xff]
      %v264 = vld [vmem:[%s226 + $0xd8] sm:$0xff]
      %v265 = vld [vmem:[%s226 + $0xe0] sm:$0xff]
      %v266 = vld [vmem:[%s226 + $0xe8] sm:$0xff]
      %v267 = vld [vmem:[%s226 + $0xf0] sm:$0xff]
      %v268 = vld [vmem:[%s226 + $0xf8] sm:$0xff]
      %vm269 = vcmask 27648
      %270 = vst.msk [vmem:[#allocation2] sm:$0xf] %vm269, 0
      %271 = vst.msk [vmem:[#allocation2 + $0x4] sm:$0xf] %vm269, 0
      %vm272 = vcmask 24576
      %273 = vst.msk [vmem:[#allocation2 + $0x8] sm:$0x1] %vm272, 0
      %s274 = scalar_lea.vmem [#allocation2], 204
      %275 = vst.msk [vmem:[%s274] sm:$0xf] %vm269, 0
      %276 = vst.msk [vmem:[%s274 + $0x4] sm:$0xf] %vm269, 0
      %277 = vst.msk [vmem:[%s274 + $0x8] sm:$0x1] %vm272, 0
      %vm278 = vcmask 24576
      %vm279 = vsmask.f32 256
      %vm280 = vmand %vm278, %vm279
      %v281 = vld [vmem:[#allocation2] sm:$0x1]
      %v282 = vsel %vm280, 0, %v281
      %283 = vst [vmem:[#allocation2] sm:$0x1] %v282
      %v284 = vld [vmem:[#allocation2 + $0xc] sm:$0x1]
      %v285 = vsel %vm280, 0, %v284
      %286 = vst [vmem:[#allocation2 + $0xc] sm:$0x1] %v285
      %v287 = vld [vmem:[#allocation2 + $0x18] sm:$0x1]
      %v288 = vsel %vm280, 0, %v287
      %289 = vst [vmem:[#allocation2 + $0x18] sm:$0x1] %v288
      %v290 = vld [vmem:[#allocation2 + $0x24] sm:$0x1]
      %v291 = vsel %vm280, 0, %v290
      %292 = vst [vmem:[#allocation2 + $0x24] sm:$0x1] %v291
      %v293 = vld [vmem:[#allocation2 + $0x30] sm:$0x1]
      %v294 = vsel %vm280, 0, %v293
      %295 = vst [vmem:[#allocation2 + $0x30] sm:$0x1] %v294
      %v296 = vld [vmem:[#allocation2 + $0x3c] sm:$0x1]
      %v297 = vsel %vm280, 0, %v296
      %298 = vst [vmem:[#allocation2 + $0x3c] sm:$0x1] %v297
      %v299 = vld [vmem:[#allocation2 + $0x48] sm:$0x1]
      %v300 = vsel %vm280, 0, %v299
      %301 = vst [vmem:[#allocation2 + $0x48] sm:$0x1] %v300
      %v302 = vld [vmem:[#allocation2 + $0x54] sm:$0x1]
      %v303 = vsel %vm280, 0, %v302
      %304 = vst [vmem:[#allocation2 + $0x54] sm:$0x1] %v303
      %v305 = vld [vmem:[#allocation2 + $0x60] sm:$0x1]
      %v306 = vsel %vm280, 0, %v305
      %307 = vst [vmem:[#allocation2 + $0x60] sm:$0x1] %v306
      %v308 = vld [vmem:[#allocation2 + $0x6c] sm:$0x1]
      %v309 = vsel %vm280, 0, %v308
      %310 = vst [vmem:[#allocation2 + $0x6c] sm:$0x1] %v309
      %v311 = vld [vmem:[#allocation2 + $0x78] sm:$0x1]
      %v312 = vsel %vm280, 0, %v311
      %313 = vst [vmem:[#allocation2 + $0x78] sm:$0x1] %v312
      %v314 = vld [vmem:[#allocation2 + $0x84] sm:$0x1]
      %v315 = vsel %vm280, 0, %v314
      %316 = vst [vmem:[#allocation2 + $0x84] sm:$0x1] %v315
      %v317 = vld [vmem:[#allocation2 + $0x90] sm:$0x1]
      %v318 = vsel %vm280, 0, %v317
      %319 = vst [vmem:[#allocation2 + $0x90] sm:$0x1] %v318
      %v320 = vld [vmem:[#allocation2 + $0x9c] sm:$0x1]
      %v321 = vsel %vm280, 0, %v320
      %322 = vst [vmem:[#allocation2 + $0x9c] sm:$0x1] %v321
      %v323 = vld [vmem:[#allocation2 + $0xa8] sm:$0x1]
      %v324 = vsel %vm280, 0, %v323
      %325 = vst [vmem:[#allocation2 + $0xa8] sm:$0x1] %v324
      %v326 = vld [vmem:[#allocation2 + $0xb4] sm:$0x1]
      %v327 = vsel %vm280, 0, %v326
      %328 = vst [vmem:[#allocation2 + $0xb4] sm:$0x1] %v327
      %v329 = vld [vmem:[#allocation2 + $0xc0] sm:$0x1]
      %v330 = vsel %vm280, 0, %v329
      %331 = vst [vmem:[#allocation2 + $0xc0] sm:$0x1] %v330
      %v332 = vld [vmem:[#allocation2 + $0xcc] sm:$0x1]
      %v333 = vsel %vm280, 0, %v332
      %334 = vst [vmem:[#allocation2 + $0xcc] sm:$0x1] %v333
      %vm335 = vsmask.f32 7938
      %vm336 = vmand %vm278, %vm335
      %v337 = vld [vmem:[#allocation2 + $0x8] sm:$0x1]
      %v338 = vsel %vm336, 0, %v337
      %339 = vst [vmem:[#allocation2 + $0x8] sm:$0x1] %v338
      %v340 = vld [vmem:[#allocation2 + $0x14] sm:$0x1]
      %v341 = vsel %vm336, 0, %v340
      %342 = vst [vmem:[#allocation2 + $0x14] sm:$0x1] %v341
      %v343 = vld [vmem:[#allocation2 + $0x20] sm:$0x1]
      %v344 = vsel %vm336, 0, %v343
      %345 = vst [vmem:[#allocation2 + $0x20] sm:$0x1] %v344
      %v346 = vld [vmem:[#allocation2 + $0x2c] sm:$0x1]
      %v347 = vsel %vm336, 0, %v346
      %348 = vst [vmem:[#allocation2 + $0x2c] sm:$0x1] %v347
      %v349 = vld [vmem:[#allocation2 + $0x38] sm:$0x1]
      %v350 = vsel %vm336, 0, %v349
      %351 = vst [vmem:[#allocation2 + $0x38] sm:$0x1] %v350
      %v352 = vld [vmem:[#allocation2 + $0x44] sm:$0x1]
      %v353 = vsel %vm336, 0, %v352
      %354 = vst [vmem:[#allocation2 + $0x44] sm:$0x1] %v353
      %v355 = vld [vmem:[#allocation2 + $0x50] sm:$0x1]
      %v356 = vsel %vm336, 0, %v355
      %357 = vst [vmem:[#allocation2 + $0x50] sm:$0x1] %v356
      %v358 = vld [vmem:[#allocation2 + $0x5c] sm:$0x1]
      %v359 = vsel %vm336, 0, %v358
      %360 = vst [vmem:[#allocation2 + $0x5c] sm:$0x1] %v359
      %v361 = vld [vmem:[#allocation2 + $0x68] sm:$0x1]
      %v362 = vsel %vm336, 0, %v361
      %363 = vst [vmem:[#allocation2 + $0x68] sm:$0x1] %v362
      %v364 = vld [vmem:[#allocation2 + $0x74] sm:$0x1]
      %v365 = vsel %vm336, 0, %v364
      %366 = vst [vmem:[#allocation2 + $0x74] sm:$0x1] %v365
      %v367 = vld [vmem:[#allocation2 + $0x80] sm:$0x1]
      %v368 = vsel %vm336, 0, %v367
      %369 = vst [vmem:[#allocation2 + $0x80] sm:$0x1] %v368
      %v370 = vld [vmem:[#allocation2 + $0x8c] sm:$0x1]
      %v371 = vsel %vm336, 0, %v370
      %372 = vst [vmem:[#allocation2 + $0x8c] sm:$0x1] %v371
      %v373 = vld [vmem:[#allocation2 + $0x98] sm:$0x1]
      %v374 = vsel %vm336, 0, %v373
      %375 = vst [vmem:[#allocation2 + $0x98] sm:$0x1] %v374
      %v376 = vld [vmem:[#allocation2 + $0xa4] sm:$0x1]
      %v377 = vsel %vm336, 0, %v376
      %378 = vst [vmem:[#allocation2 + $0xa4] sm:$0x1] %v377
      %v379 = vld [vmem:[#allocation2 + $0xb0] sm:$0x1]
      %v380 = vsel %vm336, 0, %v379
      %381 = vst [vmem:[#allocation2 + $0xb0] sm:$0x1] %v380
      %v382 = vld [vmem:[#allocation2 + $0xbc] sm:$0x1]
      %v383 = vsel %vm336, 0, %v382
      %384 = vst [vmem:[#allocation2 + $0xbc] sm:$0x1] %v383
      %v385 = vld [vmem:[#allocation2 + $0xc8] sm:$0x1]
      %v386 = vsel %vm336, 0, %v385
      %387 = vst [vmem:[#allocation2 + $0xc8] sm:$0x1] %v386
      %v388 = vld [vmem:[#allocation2 + $0xd4] sm:$0x1]
      %v389 = vsel %vm336, 0, %v388
      %390 = vst [vmem:[#allocation2 + $0xd4] sm:$0x1] %v389
      %v391 = vpack.c.bf16 %v238, %v237
      %v392 = vpack.c.bf16 %v240, %v239
      %v393 = vpack.c.bf16 %v242, %v241
      %v394 = vpack.c.bf16 %v244, %v243
      %v395 = vpack.c.bf16 %v246, %v245
      %v396 = vpack.c.bf16 %v248, %v247
      %v397 = vpack.c.bf16 %v250, %v249
      %v398 = vpack.c.bf16 %v252, %v251
      %v399 = vpack.c.bf16 %v254, %v253
      %v400 = vpack.c.bf16 %v256, %v255
      %v401 = vpack.c.bf16 %v258, %v257
      %v402 = vpack.c.bf16 %v260, %v259
      %v403 = vpack.c.bf16 %v262, %v261
      %v404 = vpack.c.bf16 %v264, %v263
      %v405 = vpack.c.bf16 %v266, %v265
      %v406 = vpack.c.bf16 %v268, %v267
      %v423 = vunpack.c.l.b16 %v391
      %v424 = vunpack.c.h.b16 %v391
      %v425 = vunpack.c.l.b16 %v392
      %v426 = vunpack.c.h.b16 %v392
      %v427 = vunpack.c.l.b16 %v393
      %v428 = vunpack.c.h.b16 %v393
      %v429 = vunpack.c.l.b16 %v394
      %v430 = vunpack.c.h.b16 %v394
      %v431 = vunpack.c.l.b16 %v395
      %v432 = vunpack.c.h.b16 %v395
      %v433 = vunpack.c.l.b16 %v396
      %v434 = vunpack.c.h.b16 %v396
      %v435 = vunpack.c.l.b16 %v397
      %v436 = vunpack.c.h.b16 %v397
      %v437 = vunpack.c.l.b16 %v398
      %v438 = vunpack.c.h.b16 %v398
      %v439 = vunpack.c.l.b16 %v399
      %v440 = vunpack.c.h.b16 %v399
      %v441 = vunpack.c.l.b16 %v400
      %v442 = vunpack.c.h.b16 %v400
      %v443 = vunpack.c.l.b16 %v401
      %v444 = vunpack.c.h.b16 %v401
      %v445 = vunpack.c.l.b16 %v402
      %v446 = vunpack.c.h.b16 %v402
      %v447 = vunpack.c.l.b16 %v403
      %v448 = vunpack.c.h.b16 %v403
      %v449 = vunpack.c.l.b16 %v404
      %v450 = vunpack.c.h.b16 %v404
      %v451 = vunpack.c.l.b16 %v405
      %v452 = vunpack.c.h.b16 %v405
      %v453 = vunpack.c.l.b16 %v406
      %v454 = vunpack.c.h.b16 %v406
      %v455 = vpack.c.b16 %v423, %v423
      %v456 = vpack.c.b16 %v424, %v424
      %v457 = vpack.c.b16 %v425, %v425
      %v458 = vpack.c.b16 %v426, %v426
      %v459 = vpack.c.b16 %v427, %v427
      %v460 = vpack.c.b16 %v428, %v428
      %v461 = vpack.c.b16 %v429, %v429
      %v462 = vpack.c.b16 %v430, %v430
      %v463 = vpack.c.b16 %v431, %v431
      %v464 = vpack.c.b16 %v432, %v432
      %v465 = vpack.c.b16 %v433, %v433
      %v466 = vpack.c.b16 %v434, %v434
      %v467 = vpack.c.b16 %v435, %v435
      %v468 = vpack.c.b16 %v436, %v436
      %v469 = vpack.c.b16 %v437, %v437
      %v470 = vpack.c.b16 %v438, %v438
      %v471 = vpack.c.b16 %v439, %v439
      %v472 = vpack.c.b16 %v440, %v440
      %v473 = vpack.c.b16 %v441, %v441
      %v474 = vpack.c.b16 %v442, %v442
      %v475 = vpack.c.b16 %v443, %v443
      %v476 = vpack.c.b16 %v444, %v444
      %v477 = vpack.c.b16 %v445, %v445
      %v478 = vpack.c.b16 %v446, %v446
      %v479 = vpack.c.b16 %v447, %v447
      %v480 = vpack.c.b16 %v448, %v448
      %v481 = vpack.c.b16 %v449, %v449
      %v482 = vpack.c.b16 %v450, %v450
      %v483 = vpack.c.b16 %v451, %v451
      %v484 = vpack.c.b16 %v452, %v452
      %v485 = vpack.c.b16 %v453, %v453
      %v486 = vpack.c.b16 %v454, %v454
      %vm487 = vsmask.f32 4368
      %vm488 = vmor %vm279, %vm487
      %v490 = vshrl.u32 %v455, 16
      %v492 = vrot.slane %v490, 7
      %v493 = vshll.u32 %v455, 16
      %v495 = vor.u32 %v492, %v493
      %v496 = vrot.slane %v492, 4
      %v498 = vshrl.u32 %v456, 16
      %v500 = vrot.slane %v498, 7
      %v501 = vshll.u32 %v456, 16
      %v503 = vor.u32 %v500, %v501
      %v504 = vsel %vm488, %v496, %v503
      %v505 = vrot.slane %v500, 4
      %v507 = vshrl.u32 %v457, 16
      %v509 = vrot.slane %v507, 7
      %v510 = vshll.u32 %v457, 16
      %v512 = vor.u32 %v509, %v510
      %v513 = vrot.slane %v509, 4
      %v515 = vshrl.u32 %v458, 16
      %v517 = vrot.slane %v515, 7
      %v518 = vshll.u32 %v458, 16
      %v520 = vor.u32 %v517, %v518
      %v521 = vsel %vm488, %v513, %v520
      %v522 = vrot.slane %v517, 4
      %v524 = vshrl.u32 %v459, 16
      %v526 = vrot.slane %v524, 7
      %v527 = vshll.u32 %v459, 16
      %v529 = vor.u32 %v526, %v527
      %v530 = vrot.slane %v526, 4
      %v532 = vshrl.u32 %v460, 16
      %v534 = vrot.slane %v532, 7
      %v535 = vshll.u32 %v460, 16
      %v537 = vor.u32 %v534, %v535
      %v538 = vsel %vm488, %v530, %v537
      %v539 = vrot.slane %v534, 4
      %v541 = vshrl.u32 %v461, 16
      %v543 = vrot.slane %v541, 7
      %v544 = vshll.u32 %v461, 16
      %v546 = vor.u32 %v543, %v544
      %v547 = vrot.slane %v543, 4
      %v549 = vshrl.u32 %v462, 16
      %v551 = vrot.slane %v549, 7
      %v552 = vshll.u32 %v462, 16
      %v554 = vor.u32 %v551, %v552
      %v555 = vsel %vm488, %v547, %v554
      %v556 = vrot.slane %v551, 4
      %v558 = vshrl.u32 %v463, 16
      %v560 = vrot.slane %v558, 7
      %v561 = vshll.u32 %v463, 16
      %v563 = vor.u32 %v560, %v561
      %v564 = vrot.slane %v560, 4
      %v566 = vshrl.u32 %v464, 16
      %v568 = vrot.slane %v566, 7
      %v569 = vshll.u32 %v464, 16
      %v571 = vor.u32 %v568, %v569
      %v572 = vsel %vm488, %v564, %v571
      %v573 = vrot.slane %v568, 4
      %v575 = vshrl.u32 %v465, 16
      %v577 = vrot.slane %v575, 7
      %v578 = vshll.u32 %v465, 16
      %v580 = vor.u32 %v577, %v578
      %v581 = vrot.slane %v577, 4
      %v583 = vshrl.u32 %v466, 16
      %v585 = vrot.slane %v583, 7
      %v586 = vshll.u32 %v466, 16
      %v588 = vor.u32 %v585, %v586
      %v589 = vsel %vm488, %v581, %v588
      %v590 = vrot.slane %v585, 4
      %v592 = vshrl.u32 %v467, 16
      %v594 = vrot.slane %v592, 7
      %v595 = vshll.u32 %v467, 16
      %v597 = vor.u32 %v594, %v595
      %v598 = vrot.slane %v594, 4
      %v600 = vshrl.u32 %v468, 16
      %v602 = vrot.slane %v600, 7
      %v603 = vshll.u32 %v468, 16
      %v605 = vor.u32 %v602, %v603
      %v606 = vsel %vm488, %v598, %v605
      %v607 = vrot.slane %v602, 4
      %v609 = vshrl.u32 %v469, 16
      %v611 = vrot.slane %v609, 7
      %v612 = vshll.u32 %v469, 16
      %v614 = vor.u32 %v611, %v612
      %v615 = vrot.slane %v611, 4
      %v617 = vshrl.u32 %v470, 16
      %v619 = vrot.slane %v617, 7
      %v620 = vshll.u32 %v470, 16
      %v622 = vor.u32 %v619, %v620
      %v623 = vsel %vm488, %v615, %v622
      %v624 = vrot.slane %v619, 4
      %v626 = vshrl.u32 %v471, 16
      %v628 = vrot.slane %v626, 7
      %v629 = vshll.u32 %v471, 16
      %v631 = vor.u32 %v628, %v629
      %v632 = vrot.slane %v628, 4
      %v634 = vshrl.u32 %v472, 16
      %v636 = vrot.slane %v634, 7
      %v637 = vshll.u32 %v472, 16
      %v639 = vor.u32 %v636, %v637
      %v640 = vsel %vm488, %v632, %v639
      %v641 = vrot.slane %v636, 4
      %v643 = vshrl.u32 %v473, 16
      %v645 = vrot.slane %v643, 7
      %v646 = vshll.u32 %v473, 16
      %v648 = vor.u32 %v645, %v646
      %v649 = vrot.slane %v645, 4
      %v651 = vshrl.u32 %v474, 16
      %v653 = vrot.slane %v651, 7
      %v654 = vshll.u32 %v474, 16
      %v656 = vor.u32 %v653, %v654
      %v657 = vsel %vm488, %v649, %v656
      %v658 = vrot.slane %v653, 4
      %v660 = vshrl.u32 %v475, 16
      %v662 = vrot.slane %v660, 7
      %v663 = vshll.u32 %v475, 16
      %v665 = vor.u32 %v662, %v663
      %v666 = vrot.slane %v662, 4
      %v668 = vshrl.u32 %v476, 16
      %v670 = vrot.slane %v668, 7
      %v671 = vshll.u32 %v476, 16
      %v673 = vor.u32 %v670, %v671
      %v674 = vsel %vm488, %v666, %v673
      %v675 = vrot.slane %v670, 4
      %v677 = vshrl.u32 %v477, 16
      %v679 = vrot.slane %v677, 7
      %v680 = vshll.u32 %v477, 16
      %v682 = vor.u32 %v679, %v680
      %v683 = vrot.slane %v679, 4
      %v685 = vshrl.u32 %v478, 16
      %v687 = vrot.slane %v685, 7
      %v688 = vshll.u32 %v478, 16
      %v690 = vor.u32 %v687, %v688
      %v691 = vsel %vm488, %v683, %v690
      %v692 = vrot.slane %v687, 4
      %v694 = vshrl.u32 %v479, 16
      %v696 = vrot.slane %v694, 7
      %v697 = vshll.u32 %v479, 16
      %v699 = vor.u32 %v696, %v697
      %v700 = vrot.slane %v696, 4
      %v702 = vshrl.u32 %v480, 16
      %v704 = vrot.slane %v702, 7
      %v705 = vshll.u32 %v480, 16
      %v707 = vor.u32 %v704, %v705
      %v708 = vsel %vm488, %v700, %v707
      %v709 = vrot.slane %v704, 4
      %v711 = vshrl.u32 %v481, 16
      %v713 = vrot.slane %v711, 7
      %v714 = vshll.u32 %v481, 16
      %v716 = vor.u32 %v713, %v714
      %v717 = vrot.slane %v713, 4
      %v719 = vshrl.u32 %v482, 16
      %v721 = vrot.slane %v719, 7
      %v722 = vshll.u32 %v482, 16
      %v724 = vor.u32 %v721, %v722
      %v725 = vsel %vm488, %v717, %v724
      %v726 = vrot.slane %v721, 4
      %v728 = vshrl.u32 %v483, 16
      %v730 = vrot.slane %v728, 7
      %v731 = vshll.u32 %v483, 16
      %v733 = vor.u32 %v730, %v731
      %v734 = vrot.slane %v730, 4
      %v736 = vshrl.u32 %v484, 16
      %v738 = vrot.slane %v736, 7
      %v739 = vshll.u32 %v484, 16
      %v741 = vor.u32 %v738, %v739
      %v742 = vsel %vm488, %v734, %v741
      %v743 = vrot.slane %v738, 4
      %v745 = vshrl.u32 %v485, 16
      %v747 = vrot.slane %v745, 7
      %v748 = vshll.u32 %v485, 16
      %v750 = vor.u32 %v747, %v748
      %v751 = vrot.slane %v747, 4
      %v753 = vshrl.u32 %v486, 16
      %v755 = vrot.slane %v753, 7
      %v756 = vshll.u32 %v486, 16
      %v758 = vor.u32 %v755, %v756
      %v759 = vsel %vm488, %v751, %v758
      %v760 = vrot.slane %v755, 4
      %s809 = scalar_lea.vmem [#allocation2], 12
      %vm810 = vcmask 27648
      %vm811 = vmand %vm810, %vm335
      %v812 = vld [vmem:[%s809] sm:$0xf]
      %v813 = vsel %vm811, %v495, %v812
      %814 = vst [vmem:[%s809] sm:$0xf] %v813
      %815 = vst.msk [vmem:[%s809 + $0x4] sm:$0xf] %vm269, %v504
      %v816 = vld [vmem:[%s809 + $0x8] sm:$0x1]
      %v817 = vsel %vm280, %v505, %v816
      %818 = vst [vmem:[%s809 + $0x8] sm:$0x1] %v817
      %v819 = vld [vmem:[%s809 + $0xc] sm:$0xf]
      %v820 = vsel %vm811, %v512, %v819
      %821 = vst [vmem:[%s809 + $0xc] sm:$0xf] %v820
      %822 = vst.msk [vmem:[%s809 + $0x10] sm:$0xf] %vm269, %v521
      %v823 = vld [vmem:[%s809 + $0x14] sm:$0x1]
      %v824 = vsel %vm280, %v522, %v823
      %825 = vst [vmem:[%s809 + $0x14] sm:$0x1] %v824
      %v826 = vld [vmem:[%s809 + $0x18] sm:$0xf]
      %v827 = vsel %vm811, %v529, %v826
      %828 = vst [vmem:[%s809 + $0x18] sm:$0xf] %v827
      %829 = vst.msk [vmem:[%s809 + $0x1c] sm:$0xf] %vm269, %v538
      %v830 = vld [vmem:[%s809 + $0x20] sm:$0x1]
      %v831 = vsel %vm280, %v539, %v830
      %832 = vst [vmem:[%s809 + $0x20] sm:$0x1] %v831
      %v833 = vld [vmem:[%s809 + $0x24] sm:$0xf]
      %v834 = vsel %vm811, %v546, %v833
      %835 = vst [vmem:[%s809 + $0x24] sm:$0xf] %v834
      %836 = vst.msk [vmem:[%s809 + $0x28] sm:$0xf] %vm269, %v555
      %v837 = vld [vmem:[%s809 + $0x2c] sm:$0x1]
      %v838 = vsel %vm280, %v556, %v837
      %839 = vst [vmem:[%s809 + $0x2c] sm:$0x1] %v838
      %v840 = vld [vmem:[%s809 + $0x30] sm:$0xf]
      %v841 = vsel %vm811, %v563, %v840
      %842 = vst [vmem:[%s809 + $0x30] sm:$0xf] %v841
      %843 = vst.msk [vmem:[%s809 + $0x34] sm:$0xf] %vm269, %v572
      %v844 = vld [vmem:[%s809 + $0x38] sm:$0x1]
      %v845 = vsel %vm280, %v573, %v844
      %846 = vst [vmem:[%s809 + $0x38] sm:$0x1] %v845
      %v847 = vld [vmem:[%s809 + $0x3c] sm:$0xf]
      %v848 = vsel %vm811, %v580, %v847
      %849 = vst [vmem:[%s809 + $0x3c] sm:$0xf] %v848
      %850 = vst.msk [vmem:[%s809 + $0x40] sm:$0xf] %vm269, %v589
      %v851 = vld [vmem:[%s809 + $0x44] sm:$0x1]
      %v852 = vsel %vm280, %v590, %v851
      %853 = vst [vmem:[%s809 + $0x44] sm:$0x1] %v852
      %v854 = vld [vmem:[%s809 + $0x48] sm:$0xf]
      %v855 = vsel %vm811, %v597, %v854
      %856 = vst [vmem:[%s809 + $0x48] sm:$0xf] %v855
      %857 = vst.msk [vmem:[%s809 + $0x4c] sm:$0xf] %vm269, %v606
      %v858 = vld [vmem:[%s809 + $0x50] sm:$0x1]
      %v859 = vsel %vm280, %v607, %v858
      %860 = vst [vmem:[%s809 + $0x50] sm:$0x1] %v859
      %v861 = vld [vmem:[%s809 + $0x54] sm:$0xf]
      %v862 = vsel %vm811, %v614, %v861
      %863 = vst [vmem:[%s809 + $0x54] sm:$0xf] %v862
      %864 = vst.msk [vmem:[%s809 + $0x58] sm:$0xf] %vm269, %v623
      %v865 = vld [vmem:[%s809 + $0x5c] sm:$0x1]
      %v866 = vsel %vm280, %v624, %v865
      %867 = vst [vmem:[%s809 + $0x5c] sm:$0x1] %v866
      %v868 = vld [vmem:[%s809 + $0x60] sm:$0xf]
      %v869 = vsel %vm811, %v631, %v868
      %870 = vst [vmem:[%s809 + $0x60] sm:$0xf] %v869
      %871 = vst.msk [vmem:[%s809 + $0x64] sm:$0xf] %vm269, %v640
      %v872 = vld [vmem:[%s809 + $0x68] sm:$0x1]
      %v873 = vsel %vm280, %v641, %v872
      %874 = vst [vmem:[%s809 + $0x68] sm:$0x1] %v873
      %v875 = vld [vmem:[%s809 + $0x6c] sm:$0xf]
      %v876 = vsel %vm811, %v648, %v875
      %877 = vst [vmem:[%s809 + $0x6c] sm:$0xf] %v876
      %878 = vst.msk [vmem:[%s809 + $0x70] sm:$0xf] %vm269, %v657
      %v879 = vld [vmem:[%s809 + $0x74] sm:$0x1]
      %v880 = vsel %vm280, %v658, %v879
      %881 = vst [vmem:[%s809 + $0x74] sm:$0x1] %v880
      %v882 = vld [vmem:[%s809 + $0x78] sm:$0xf]
      %v883 = vsel %vm811, %v665, %v882
      %884 = vst [vmem:[%s809 + $0x78] sm:$0xf] %v883
      %885 = vst.msk [vmem:[%s809 + $0x7c] sm:$0xf] %vm269, %v674
      %v886 = vld [vmem:[%s809 + $0x80] sm:$0x1]
      %v887 = vsel %vm280, %v675, %v886
      %888 = vst [vmem:[%s809 + $0x80] sm:$0x1] %v887
      %v889 = vld [vmem:[%s809 + $0x84] sm:$0xf]
      %v890 = vsel %vm811, %v682, %v889
      %891 = vst [vmem:[%s809 + $0x84] sm:$0xf] %v890
      %892 = vst.msk [vmem:[%s809 + $0x88] sm:$0xf] %vm269, %v691
      %v893 = vld [vmem:[%s809 + $0x8c] sm:$0x1]
      %v894 = vsel %vm280, %v692, %v893
      %895 = vst [vmem:[%s809 + $0x8c] sm:$0x1] %v894
      %v896 = vld [vmem:[%s809 + $0x90] sm:$0xf]
      %v897 = vsel %vm811, %v699, %v896
      %898 = vst [vmem:[%s809 + $0x90] sm:$0xf] %v897
      %899 = vst.msk [vmem:[%s809 + $0x94] sm:$0xf] %vm269, %v708
      %v900 = vld [vmem:[%s809 + $0x98] sm:$0x1]
      %v901 = vsel %vm280, %v709, %v900
      %902 = vst [vmem:[%s809 + $0x98] sm:$0x1] %v901
      %v903 = vld [vmem:[%s809 + $0x9c] sm:$0xf]
      %v904 = vsel %vm811, %v716, %v903
      %905 = vst [vmem:[%s809 + $0x9c] sm:$0xf] %v904
      %906 = vst.msk [vmem:[%s809 + $0xa0] sm:$0xf] %vm269, %v725
      %v907 = vld [vmem:[%s809 + $0xa4] sm:$0x1]
      %v908 = vsel %vm280, %v726, %v907
      %909 = vst [vmem:[%s809 + $0xa4] sm:$0x1] %v908
      %v910 = vld [vmem:[%s809 + $0xa8] sm:$0xf]
      %v911 = vsel %vm811, %v733, %v910
      %912 = vst [vmem:[%s809 + $0xa8] sm:$0xf] %v911
      %913 = vst.msk [vmem:[%s809 + $0xac] sm:$0xf] %vm269, %v742
      %v914 = vld [vmem:[%s809 + $0xb0] sm:$0x1]
      %v915 = vsel %vm280, %v743, %v914
      %916 = vst [vmem:[%s809 + $0xb0] sm:$0x1] %v915
      %v917 = vld [vmem:[%s809 + $0xb4] sm:$0xf]
      %v918 = vsel %vm811, %v750, %v917
      %919 = vst [vmem:[%s809 + $0xb4] sm:$0xf] %v918
      %920 = vst.msk [vmem:[%s809 + $0xb8] sm:$0xf] %vm269, %v759
      %v921 = vld [vmem:[%s809 + $0xbc] sm:$0x1]
      %v922 = vsel %vm280, %v760, %v921
      %923 = vst [vmem:[%s809 + $0xbc] sm:$0x1] %v922
      %v924 = vld [vmem:[#allocation2] sm:$0xf]
      %v925 = vld [vmem:[#allocation2 + $0x4] sm:$0xf]
      %v926 = vld [vmem:[#allocation2 + $0xc] sm:$0xf]
      %v927 = vld [vmem:[#allocation2 + $0x10] sm:$0xf]
      %v928 = vld [vmem:[#allocation2 + $0x18] sm:$0xf]
      %v929 = vld [vmem:[#allocation2 + $0x1c] sm:$0xf]
      %v930 = vld [vmem:[#allocation2 + $0x24] sm:$0xf]
      %v931 = vld [vmem:[#allocation2 + $0x28] sm:$0xf]
      %v932 = vld [vmem:[#allocation2 + $0x30] sm:$0xf]
      %v933 = vld [vmem:[#allocation2 + $0x34] sm:$0xf]
      %v934 = vld [vmem:[#allocation2 + $0x3c] sm:$0xf]
      %v935 = vld [vmem:[#allocation2 + $0x40] sm:$0xf]
      %v936 = vld [vmem:[#allocation2 + $0x48] sm:$0xf]
      %v937 = vld [vmem:[#allocation2 + $0x4c] sm:$0xf]
      %v938 = vld [vmem:[#allocation2 + $0x54] sm:$0xf]
      %v939 = vld [vmem:[#allocation2 + $0x58] sm:$0xf]
      %v940 = vld [vmem:[#allocation2 + $0x60] sm:$0xf]
      %v941 = vld [vmem:[#allocation2 + $0x64] sm:$0xf]
      %v942 = vld [vmem:[#allocation2 + $0x6c] sm:$0xf]
      %v943 = vld [vmem:[#allocation2 + $0x70] sm:$0xf]
      %v944 = vld [vmem:[#allocation2 + $0x78] sm:$0xf]
      %v945 = vld [vmem:[#allocation2 + $0x7c] sm:$0xf]
      %v946 = vld [vmem:[#allocation2 + $0x84] sm:$0xf]
      %v947 = vld [vmem:[#allocation2 + $0x88] sm:$0xf]
      %v948 = vld [vmem:[#allocation2 + $0x90] sm:$0xf]
      %v949 = vld [vmem:[#allocation2 + $0x94] sm:$0xf]
      %v950 = vld [vmem:[#allocation2 + $0x9c] sm:$0xf]
      %v951 = vld [vmem:[#allocation2 + $0xa0] sm:$0xf]
      %v952 = vld [vmem:[#allocation2 + $0xa8] sm:$0xf]
      %v953 = vld [vmem:[#allocation2 + $0xac] sm:$0xf]
      %v954 = vld [vmem:[#allocation2 + $0xb4] sm:$0xf]
      %v955 = vld [vmem:[#allocation2 + $0xb8] sm:$0xf]
      %v988 = vunpack.c.l.b16 %v924
      %v989 = vunpack.c.l.b16 %v925
      %v990 = vunpack.c.l.b16 %v926
      %v991 = vunpack.c.l.b16 %v927
      %v992 = vunpack.c.l.b16 %v928
      %v993 = vunpack.c.l.b16 %v929
      %v994 = vunpack.c.l.b16 %v930
      %v995 = vunpack.c.l.b16 %v931
      %v996 = vunpack.c.l.b16 %v932
      %v997 = vunpack.c.l.b16 %v933
      %v998 = vunpack.c.l.b16 %v934
      %v999 = vunpack.c.l.b16 %v935
      %v1000 = vunpack.c.l.b16 %v936
      %v1001 = vunpack.c.l.b16 %v937
      %v1002 = vunpack.c.l.b16 %v938
      %v1003 = vunpack.c.l.b16 %v939
      %v1004 = vunpack.c.l.b16 %v940
      %v1005 = vunpack.c.l.b16 %v941
      %v1006 = vunpack.c.l.b16 %v942
      %v1007 = vunpack.c.l.b16 %v943
      %v1008 = vunpack.c.l.b16 %v944
      %v1009 = vunpack.c.l.b16 %v945
      %v1010 = vunpack.c.l.b16 %v946
      %v1011 = vunpack.c.l.b16 %v947
      %v1012 = vunpack.c.l.b16 %v948
      %v1013 = vunpack.c.l.b16 %v949
      %v1014 = vunpack.c.l.b16 %v950
      %v1015 = vunpack.c.l.b16 %v951
      %v1016 = vunpack.c.l.b16 %v952
      %v1017 = vunpack.c.l.b16 %v953
      %v1018 = vunpack.c.l.b16 %v954
      %v1019 = vunpack.c.l.b16 %v955
      %v1020 = vpack.c.b16 %v989, %v988
      %v1021 = vpack.c.b16 %v991, %v990
      %v1022 = vpack.c.b16 %v993, %v992
      %v1023 = vpack.c.b16 %v995, %v994
      %v1024 = vpack.c.b16 %v997, %v996
      %v1025 = vpack.c.b16 %v999, %v998
      %v1026 = vpack.c.b16 %v1001, %v1000
      %v1027 = vpack.c.b16 %v1003, %v1002
      %v1028 = vpack.c.b16 %v1005, %v1004
      %v1029 = vpack.c.b16 %v1007, %v1006
      %v1030 = vpack.c.b16 %v1009, %v1008
      %v1031 = vpack.c.b16 %v1011, %v1010
      %v1032 = vpack.c.b16 %v1013, %v1012
      %v1033 = vpack.c.b16 %v1015, %v1014
      %v1034 = vpack.c.b16 %v1017, %v1016
      %v1035 = vpack.c.b16 %v1019, %v1018
      %vm1052 = vcmask 31744
      %1053 = vst.msk [vmem:[#allocation3] sm:$0xff] %vm1052, %v1020
      %1054 = vst.msk [vmem:[#allocation3 + $0x8] sm:$0xff] %vm1052, %v1021
      %1055 = vst.msk [vmem:[#allocation3 + $0x10] sm:$0xff] %vm1052, %v1022
      %1056 = vst.msk [vmem:[#allocation3 + $0x18] sm:$0xff] %vm1052, %v1023
      %1057 = vst.msk [vmem:[#allocation3 + $0x20] sm:$0xff] %vm1052, %v1024
      %1058 = vst.msk [vmem:[#allocation3 + $0x28] sm:$0xff] %vm1052, %v1025
      %1059 = vst.msk [vmem:[#allocation3 + $0x30] sm:$0xff] %vm1052, %v1026
      %1060 = vst.msk [vmem:[#allocation3 + $0x38] sm:$0xff] %vm1052, %v1027
      %1061 = vst.msk [vmem:[#allocation3 + $0x40] sm:$0xff] %vm1052, %v1028
      %1062 = vst.msk [vmem:[#allocation3 + $0x48] sm:$0xff] %vm1052, %v1029
      %1063 = vst.msk [vmem:[#allocation3 + $0x50] sm:$0xff] %vm1052, %v1030
      %1064 = vst.msk [vmem:[#allocation3 + $0x58] sm:$0xff] %vm1052, %v1031
      %1065 = vst.msk [vmem:[#allocation3 + $0x60] sm:$0xff] %vm1052, %v1032
      %1066 = vst.msk [vmem:[#allocation3 + $0x68] sm:$0xff] %vm1052, %v1033
      %1067 = vst.msk [vmem:[#allocation3 + $0x70] sm:$0xff] %vm1052, %v1034
      %1068 = vst.msk [vmem:[#allocation3 + $0x78] sm:$0xff] %vm1052, %v1035
      %v1069 = vld [vmem:[#allocation2] sm:$0xf]
      %v1070 = vld [vmem:[#allocation2 + $0x4] sm:$0xf]
      %v1071 = vld [vmem:[#allocation2 + $0x8] sm:$0x1]
      %v1072 = vld [vmem:[#allocation2 + $0xc] sm:$0xf]
      %v1073 = vld [vmem:[#allocation2 + $0x10] sm:$0xf]
      %v1074 = vld [vmem:[#allocation2 + $0x14] sm:$0x1]
      %v1075 = vld [vmem:[#allocation2 + $0x18] sm:$0xf]
      %v1076 = vld [vmem:[#allocation2 + $0x1c] sm:$0xf]
      %v1077 = vld [vmem:[#allocation2 + $0x20] sm:$0x1]
      %v1078 = vld [vmem:[#allocation2 + $0x24] sm:$0xf]
      %v1079 = vld [vmem:[#allocation2 + $0x28] sm:$0xf]
      %v1080 = vld [vmem:[#allocation2 + $0x2c] sm:$0x1]
      %v1081 = vld [vmem:[#allocation2 + $0x30] sm:$0xf]
      %v1082 = vld [vmem:[#allocation2 + $0x34] sm:$0xf]
      %v1083 = vld [vmem:[#allocation2 + $0x38] sm:$0x1]
      %v1084 = vld [vmem:[#allocation2 + $0x3c] sm:$0xf]
      %v1085 = vld [vmem:[#allocation2 + $0x40] sm:$0xf]
      %v1086 = vld [vmem:[#allocation2 + $0x44] sm:$0x1]
      %v1087 = vld [vmem:[#allocation2 + $0x48] sm:$0xf]
      %v1088 = vld [vmem:[#allocation2 + $0x4c] sm:$0xf]
      %v1089 = vld [vmem:[#allocation2 + $0x50] sm:$0x1]
      %v1090 = vld [vmem:[#allocation2 + $0x54] sm:$0xf]
      %v1091 = vld [vmem:[#allocation2 + $0x58] sm:$0xf]
      %v1092 = vld [vmem:[#allocation2 + $0x5c] sm:$0x1]
      %v1093 = vld [vmem:[#allocation2 + $0x60] sm:$0xf]
      %v1094 = vld [vmem:[#allocation2 + $0x64] sm:$0xf]
      %v1095 = vld [vmem:[#allocation2 + $0x68] sm:$0x1]
      %v1096 = vld [vmem:[#allocation2 + $0x6c] sm:$0xf]
      %v1097 = vld [vmem:[#allocation2 + $0x70] sm:$0xf]
      %v1098 = vld [vmem:[#allocation2 + $0x74] sm:$0x1]
      %v1099 = vld [vmem:[#allocation2 + $0x78] sm:$0xf]
      %v1100 = vld [vmem:[#allocation2 + $0x7c] sm:$0xf]
      %v1101 = vld [vmem:[#allocation2 + $0x80] sm:$0x1]
      %v1102 = vld [vmem:[#allocation2 + $0x84] sm:$0xf]
      %v1103 = vld [vmem:[#allocation2 + $0x88] sm:$0xf]
      %v1104 = vld [vmem:[#allocation2 + $0x8c] sm:$0x1]
      %v1105 = vld [vmem:[#allocation2 + $0x90] sm:$0xf]
      %v1106 = vld [vmem:[#allocation2 + $0x94] sm:$0xf]
      %v1107 = vld [vmem:[#allocation2 + $0x98] sm:$0x1]
      %v1108 = vld [vmem:[#allocation2 + $0x9c] sm:$0xf]
      %v1109 = vld [vmem:[#allocation2 + $0xa0] sm:$0xf]
      %v1110 = vld [vmem:[#allocation2 + $0xa4] sm:$0x1]
      %v1111 = vld [vmem:[#allocation2 + $0xa8] sm:$0xf]
      %v1112 = vld [vmem:[#allocation2 + $0xac] sm:$0xf]
      %v1113 = vld [vmem:[#allocation2 + $0xb0] sm:$0x1]
      %v1114 = vld [vmem:[#allocation2 + $0xb4] sm:$0xf]
      %v1115 = vld [vmem:[#allocation2 + $0xb8] sm:$0xf]
      %v1116 = vld [vmem:[#allocation2 + $0xbc] sm:$0x1]
      %vm1117 = vsmask.f32 3328
      %vm1118 = vsmask.f32 7440
      %vm1119 = vmor %vm1117, %vm1118
      %v1121 = vshrl.u32 %v1069, 16
      %v1123 = vrot.slane %v1121, 4
      %v1124 = vshll.u32 %v1069, 16
      %v1126 = vrot.slane %v1124, 5
      %v1127 = vor.u32 %v1123, %v1126
      %v1128 = vrot.slane %v1127, 4
      %v1130 = vshll.u32 %v1070, 16
      %v1132 = vrot.slane %v1130, 5
      %v1133 = vsel %vm1119, %v1128, %v1132
      %v1134 = vshrl.u32 %v1070, 16
      %v1136 = vrot.slane %v1134, 4
      %v1137 = vor.u32 %v1136, %v1132
      %v1138 = vrot.slane %v1137, 4
      %v1140 = vshll.u32 %v1071, 16
      %v1142 = vrot.slane %v1140, 5
      %v1143 = vsel %vm1119, %v1138, %v1142
      %v1145 = vshrl.u32 %v1072, 16
      %v1147 = vrot.slane %v1145, 4
      %v1148 = vshll.u32 %v1072, 16
      %v1150 = vrot.slane %v1148, 5
      %v1151 = vor.u32 %v1147, %v1150
      %v1152 = vrot.slane %v1151, 4
      %v1154 = vshll.u32 %v1073, 16
      %v1156 = vrot.slane %v1154, 5
      %v1157 = vsel %vm1119, %v1152, %v1156
      %v1158 = vshrl.u32 %v1073, 16
      %v1160 = vrot.slane %v1158, 4
      %v1161 = vor.u32 %v1160, %v1156
      %v1162 = vrot.slane %v1161, 4
      %v1164 = vshll.u32 %v1074, 16
      %v1166 = vrot.slane %v1164, 5
      %v1167 = vsel %vm1119, %v1162, %v1166
      %v1169 = vshrl.u32 %v1075, 16
      %v1171 = vrot.slane %v1169, 4
      %v1172 = vshll.u32 %v1075, 16
      %v1174 = vrot.slane %v1172, 5
      %v1175 = vor.u32 %v1171, %v1174
      %v1176 = vrot.slane %v1175, 4
      %v1178 = vshll.u32 %v1076, 16
      %v1180 = vrot.slane %v1178, 5
      %v1181 = vsel %vm1119, %v1176, %v1180
      %v1182 = vshrl.u32 %v1076, 16
      %v1184 = vrot.slane %v1182, 4
      %v1185 = vor.u32 %v1184, %v1180
      %v1186 = vrot.slane %v1185, 4
      %v1188 = vshll.u32 %v1077, 16
      %v1190 = vrot.slane %v1188, 5
      %v1191 = vsel %vm1119, %v1186, %v1190
      %v1193 = vshrl.u32 %v1078, 16
      %v1195 = vrot.slane %v1193, 4
      %v1196 = vshll.u32 %v1078, 16
      %v1198 = vrot.slane %v1196, 5
      %v1199 = vor.u32 %v1195, %v1198
      %v1200 = vrot.slane %v1199, 4
      %v1202 = vshll.u32 %v1079, 16
      %v1204 = vrot.slane %v1202, 5
      %v1205 = vsel %vm1119, %v1200, %v1204
      %v1206 = vshrl.u32 %v1079, 16
      %v1208 = vrot.slane %v1206, 4
      %v1209 = vor.u32 %v1208, %v1204
      %v1210 = vrot.slane %v1209, 4
      %v1212 = vshll.u32 %v1080, 16
      %v1214 = vrot.slane %v1212, 5
      %v1215 = vsel %vm1119, %v1210, %v1214
      %v1217 = vshrl.u32 %v1081, 16
      %v1219 = vrot.slane %v1217, 4
      %v1220 = vshll.u32 %v1081, 16
      %v1222 = vrot.slane %v1220, 5
      %v1223 = vor.u32 %v1219, %v1222
      %v1224 = vrot.slane %v1223, 4
      %v1226 = vshll.u32 %v1082, 16
      %v1228 = vrot.slane %v1226, 5
      %v1229 = vsel %vm1119, %v1224, %v1228
      %v1230 = vshrl.u32 %v1082, 16
      %v1232 = vrot.slane %v1230, 4
      %v1233 = vor.u32 %v1232, %v1228
      %v1234 = vrot.slane %v1233, 4
      %v1236 = vshll.u32 %v1083, 16
      %v1238 = vrot.slane %v1236, 5
      %v1239 = vsel %vm1119, %v1234, %v1238
      %v1241 = vshrl.u32 %v1084, 16
      %v1243 = vrot.slane %v1241, 4
      %v1244 = vshll.u32 %v1084, 16
      %v1246 = vrot.slane %v1244, 5
      %v1247 = vor.u32 %v1243, %v1246
      %v1248 = vrot.slane %v1247, 4
      %v1250 = vshll.u32 %v1085, 16
      %v1252 = vrot.slane %v1250, 5
      %v1253 = vsel %vm1119, %v1248, %v1252
      %v1254 = vshrl.u32 %v1085, 16
      %v1256 = vrot.slane %v1254, 4
      %v1257 = vor.u32 %v1256, %v1252
      %v1258 = vrot.slane %v1257, 4
      %v1260 = vshll.u32 %v1086, 16
      %v1262 = vrot.slane %v1260, 5
      %v1263 = vsel %vm1119, %v1258, %v1262
      %v1265 = vshrl.u32 %v1087, 16
      %v1267 = vrot.slane %v1265, 4
      %v1268 = vshll.u32 %v1087, 16
      %v1270 = vrot.slane %v1268, 5
      %v1271 = vor.u32 %v1267, %v1270
      %v1272 = vrot.slane %v1271, 4
      %v1274 = vshll.u32 %v1088, 16
      %v1276 = vrot.slane %v1274, 5
      %v1277 = vsel %vm1119, %v1272, %v1276
      %v1278 = vshrl.u32 %v1088, 16
      %v1280 = vrot.slane %v1278, 4
      %v1281 = vor.u32 %v1280, %v1276
      %v1282 = vrot.slane %v1281, 4
      %v1284 = vshll.u32 %v1089, 16
      %v1286 = vrot.slane %v1284, 5
      %v1287 = vsel %vm1119, %v1282, %v1286
      %v1289 = vshrl.u32 %v1090, 16
      %v1291 = vrot.slane %v1289, 4
      %v1292 = vshll.u32 %v1090, 16
      %v1294 = vrot.slane %v1292, 5
      %v1295 = vor.u32 %v1291, %v1294
      %v1296 = vrot.slane %v1295, 4
      %v1298 = vshll.u32 %v1091, 16
      %v1300 = vrot.slane %v1298, 5
      %v1301 = vsel %vm1119, %v1296, %v1300
      %v1302 = vshrl.u32 %v1091, 16
      %v1304 = vrot.slane %v1302, 4
      %v1305 = vor.u32 %v1304, %v1300
      %v1306 = vrot.slane %v1305, 4
      %v1308 = vshll.u32 %v1092, 16
      %v1310 = vrot.slane %v1308, 5
      %v1311 = vsel %vm1119, %v1306, %v1310
      %v1313 = vshrl.u32 %v1093, 16
      %v1315 = vrot.slane %v1313, 4
      %v1316 = vshll.u32 %v1093, 16
      %v1318 = vrot.slane %v1316, 5
      %v1319 = vor.u32 %v1315, %v1318
      %v1320 = vrot.slane %v1319, 4
      %v1322 = vshll.u32 %v1094, 16
      %v1324 = vrot.slane %v1322, 5
      %v1325 = vsel %vm1119, %v1320, %v1324
      %v1326 = vshrl.u32 %v1094, 16
      %v1328 = vrot.slane %v1326, 4
      %v1329 = vor.u32 %v1328, %v1324
      %v1330 = vrot.slane %v1329, 4
      %v1332 = vshll.u32 %v1095, 16
      %v1334 = vrot.slane %v1332, 5
      %v1335 = vsel %vm1119, %v1330, %v1334
      %v1337 = vshrl.u32 %v1096, 16
      %v1339 = vrot.slane %v1337, 4
      %v1340 = vshll.u32 %v1096, 16
      %v1342 = vrot.slane %v1340, 5
      %v1343 = vor.u32 %v1339, %v1342
      %v1344 = vrot.slane %v1343, 4
      %v1346 = vshll.u32 %v1097, 16
      %v1348 = vrot.slane %v1346, 5
      %v1349 = vsel %vm1119, %v1344, %v1348
      %v1350 = vshrl.u32 %v1097, 16
      %v1352 = vrot.slane %v1350, 4
      %v1353 = vor.u32 %v1352, %v1348
      %v1354 = vrot.slane %v1353, 4
      %v1356 = vshll.u32 %v1098, 16
      %v1358 = vrot.slane %v1356, 5
      %v1359 = vsel %vm1119, %v1354, %v1358
      %v1361 = vshrl.u32 %v1099, 16
      %v1363 = vrot.slane %v1361, 4
      %v1364 = vshll.u32 %v1099, 16
      %v1366 = vrot.slane %v1364, 5
      %v1367 = vor.u32 %v1363, %v1366
      %v1368 = vrot.slane %v1367, 4
      %v1370 = vshll.u32 %v1100, 16
      %v1372 = vrot.slane %v1370, 5
      %v1373 = vsel %vm1119, %v1368, %v1372
      %v1374 = vshrl.u32 %v1100, 16
      %v1376 = vrot.slane %v1374, 4
      %v1377 = vor.u32 %v1376, %v1372
      %v1378 = vrot.slane %v1377, 4
      %v1380 = vshll.u32 %v1101, 16
      %v1382 = vrot.slane %v1380, 5
      %v1383 = vsel %vm1119, %v1378, %v1382
      %v1385 = vshrl.u32 %v1102, 16
      %v1387 = vrot.slane %v1385, 4
      %v1388 = vshll.u32 %v1102, 16
      %v1390 = vrot.slane %v1388, 5
      %v1391 = vor.u32 %v1387, %v1390
      %v1392 = vrot.slane %v1391, 4
      %v1394 = vshll.u32 %v1103, 16
      %v1396 = vrot.slane %v1394, 5
      %v1397 = vsel %vm1119, %v1392, %v1396
      %v1398 = vshrl.u32 %v1103, 16
      %v1400 = vrot.slane %v1398, 4
      %v1401 = vor.u32 %v1400, %v1396
      %v1402 = vrot.slane %v1401, 4
      %v1404 = vshll.u32 %v1104, 16
      %v1406 = vrot.slane %v1404, 5
      %v1407 = vsel %vm1119, %v1402, %v1406
      %v1409 = vshrl.u32 %v1105, 16
      %v1411 = vrot.slane %v1409, 4
      %v1412 = vshll.u32 %v1105, 16
      %v1414 = vrot.slane %v1412, 5
      %v1415 = vor.u32 %v1411, %v1414
      %v1416 = vrot.slane %v1415, 4
      %v1418 = vshll.u32 %v1106, 16
      %v1420 = vrot.slane %v1418, 5
      %v1421 = vsel %vm1119, %v1416, %v1420
      %v1422 = vshrl.u32 %v1106, 16
      %v1424 = vrot.slane %v1422, 4
      %v1425 = vor.u32 %v1424, %v1420
      %v1426 = vrot.slane %v1425, 4
      %v1428 = vshll.u32 %v1107, 16
      %v1430 = vrot.slane %v1428, 5
      %v1431 = vsel %vm1119, %v1426, %v1430
      %v1433 = vshrl.u32 %v1108, 16
      %v1435 = vrot.slane %v1433, 4
      %v1436 = vshll.u32 %v1108, 16
      %v1438 = vrot.slane %v1436, 5
      %v1439 = vor.u32 %v1435, %v1438
      %v1440 = vrot.slane %v1439, 4
      %v1442 = vshll.u32 %v1109, 16
      %v1444 = vrot.slane %v1442, 5
      %v1445 = vsel %vm1119, %v1440, %v1444
      %v1446 = vshrl.u32 %v1109, 16
      %v1448 = vrot.slane %v1446, 4
      %v1449 = vor.u32 %v1448, %v1444
      %v1450 = vrot.slane %v1449, 4
      %v1452 = vshll.u32 %v1110, 16
      %v1454 = vrot.slane %v1452, 5
      %v1455 = vsel %vm1119, %v1450, %v1454
      %v1457 = vshrl.u32 %v1111, 16
      %v1459 = vrot.slane %v1457, 4
      %v1460 = vshll.u32 %v1111, 16
      %v1462 = vrot.slane %v1460, 5
      %v1463 = vor.u32 %v1459, %v1462
      %v1464 = vrot.slane %v1463, 4
      %v1466 = vshll.u32 %v1112, 16
      %v1468 = vrot.slane %v1466, 5
      %v1469 = vsel %vm1119, %v1464, %v1468
      %v1470 = vshrl.u32 %v1112, 16
      %v1472 = vrot.slane %v1470, 4
      %v1473 = vor.u32 %v1472, %v1468
      %v1474 = vrot.slane %v1473, 4
      %v1476 = vshll.u32 %v1113, 16
      %v1478 = vrot.slane %v1476, 5
      %v1479 = vsel %vm1119, %v1474, %v1478
      %v1481 = vshrl.u32 %v1114, 16
      %v1483 = vrot.slane %v1481, 4
      %v1484 = vshll.u32 %v1114, 16
      %v1486 = vrot.slane %v1484, 5
      %v1487 = vor.u32 %v1483, %v1486
      %v1488 = vrot.slane %v1487, 4
      %v1490 = vshll.u32 %v1115, 16
      %v1492 = vrot.slane %v1490, 5
      %v1493 = vsel %vm1119, %v1488, %v1492
      %v1494 = vshrl.u32 %v1115, 16
      %v1496 = vrot.slane %v1494, 4
      %v1497 = vor.u32 %v1496, %v1492
      %v1498 = vrot.slane %v1497, 4
      %v1500 = vshll.u32 %v1116, 16
      %v1502 = vrot.slane %v1500, 5
      %v1503 = vsel %vm1119, %v1498, %v1502
      %v1504 = vunpack.c.l.b16 %v1133
      %v1505 = vunpack.c.l.b16 %v1143
      %v1506 = vunpack.c.l.b16 %v1157
      %v1507 = vunpack.c.l.b16 %v1167
      %v1508 = vunpack.c.l.b16 %v1181
      %v1509 = vunpack.c.l.b16 %v1191
      %v1510 = vunpack.c.l.b16 %v1205
      %v1511 = vunpack.c.l.b16 %v1215
      %v1512 = vunpack.c.l.b16 %v1229
      %v1513 = vunpack.c.l.b16 %v1239
      %v1514 = vunpack.c.l.b16 %v1253
      %v1515 = vunpack.c.l.b16 %v1263
      %v1516 = vunpack.c.l.b16 %v1277
      %v1517 = vunpack.c.l.b16 %v1287
      %v1518 = vunpack.c.l.b16 %v1301
      %v1519 = vunpack.c.l.b16 %v1311
      %v1520 = vunpack.c.l.b16 %v1325
      %v1521 = vunpack.c.l.b16 %v1335
      %v1522 = vunpack.c.l.b16 %v1349
      %v1523 = vunpack.c.l.b16 %v1359
      %v1524 = vunpack.c.l.b16 %v1373
      %v1525 = vunpack.c.l.b16 %v1383
      %v1526 = vunpack.c.l.b16 %v1397
      %v1527 = vunpack.c.l.b16 %v1407
      %v1528 = vunpack.c.l.b16 %v1421
      %v1529 = vunpack.c.l.b16 %v1431
      %v1530 = vunpack.c.l.b16 %v1445
      %v1531 = vunpack.c.l.b16 %v1455
      %v1532 = vunpack.c.l.b16 %v1469
      %v1533 = vunpack.c.l.b16 %v1479
      %v1534 = vunpack.c.l.b16 %v1493
      %v1535 = vunpack.c.l.b16 %v1503
      %v1536 = vpack.c.b16 %v1505, %v1504
      %v1537 = vpack.c.b16 %v1507, %v1506
      %v1538 = vpack.c.b16 %v1509, %v1508
      %v1539 = vpack.c.b16 %v1511, %v1510
      %v1540 = vpack.c.b16 %v1513, %v1512
      %v1541 = vpack.c.b16 %v1515, %v1514
      %v1542 = vpack.c.b16 %v1517, %v1516
      %v1543 = vpack.c.b16 %v1519, %v1518
      %v1544 = vpack.c.b16 %v1521, %v1520
      %v1545 = vpack.c.b16 %v1523, %v1522
      %v1546 = vpack.c.b16 %v1525, %v1524
      %v1547 = vpack.c.b16 %v1527, %v1526
      %v1548 = vpack.c.b16 %v1529, %v1528
      %v1549 = vpack.c.b16 %v1531, %v1530
      %v1550 = vpack.c.b16 %v1533, %v1532
      %v1551 = vpack.c.b16 %v1535, %v1534
      %1552 = vrot.lane.b32.xlu0 %v1536, 4
      %v1553 = vpop.permute.xlu0 %1552
      %1554 = vrot.lane.b32.xlu0 %v1537, 4
      %v1555 = vpop.permute.xlu0 %1554
      %1556 = vrot.lane.b32.xlu0 %v1538, 4
      %v1557 = vpop.permute.xlu0 %1556
      %1558 = vrot.lane.b32.xlu0 %v1539, 4
      %v1559 = vpop.permute.xlu0 %1558
      %1560 = vrot.lane.b32.xlu0 %v1540, 4
      %v1561 = vpop.permute.xlu0 %1560
      %1562 = vrot.lane.b32.xlu0 %v1541, 4
      %v1563 = vpop.permute.xlu0 %1562
      %1564 = vrot.lane.b32.xlu0 %v1542, 4
      %v1565 = vpop.permute.xlu0 %1564
      %1566 = vrot.lane.b32.xlu0 %v1543, 4
      %v1567 = vpop.permute.xlu0 %1566
      %1568 = vrot.lane.b32.xlu0 %v1544, 4
      %v1569 = vpop.permute.xlu0 %1568
      %1570 = vrot.lane.b32.xlu0 %v1545, 4
      %v1571 = vpop.permute.xlu0 %1570
      %1572 = vrot.lane.b32.xlu0 %v1546, 4
      %v1573 = vpop.permute.xlu0 %1572
      %1574 = vrot.lane.b32.xlu0 %v1547, 4
      %v1575 = vpop.permute.xlu0 %1574
      %1576 = vrot.lane.b32.xlu0 %v1548, 4
      %v1577 = vpop.permute.xlu0 %1576
      %1578 = vrot.lane.b32.xlu0 %v1549, 4
      %v1579 = vpop.permute.xlu0 %1578
      %1580 = vrot.lane.b32.xlu0 %v1550, 4
      %v1581 = vpop.permute.xlu0 %1580
      %1582 = vrot.lane.b32.xlu0 %v1551, 4
      %v1583 = vpop.permute.xlu0 %1582
      %vm1600 = vcmask 64544
      %1601 = vst.msk [vmem:[#allocation3] sm:$0xff] %vm1600, %v1553
      %1602 = vst.msk [vmem:[#allocation3 + $0x8] sm:$0xff] %vm1600, %v1555
      %1603 = vst.msk [vmem:[#allocation3 + $0x10] sm:$0xff] %vm1600, %v1557
      %1604 = vst.msk [vmem:[#allocation3 + $0x18] sm:$0xff] %vm1600, %v1559
      %1605 = vst.msk [vmem:[#allocation3 + $0x20] sm:$0xff] %vm1600, %v1561
      %1606 = vst.msk [vmem:[#allocation3 + $0x28] sm:$0xff] %vm1600, %v1563
      %1607 = vst.msk [vmem:[#allocation3 + $0x30] sm:$0xff] %vm1600, %v1565
      %1608 = vst.msk [vmem:[#allocation3 + $0x38] sm:$0xff] %vm1600, %v1567
      %1609 = vst.msk [vmem:[#allocation3 + $0x40] sm:$0xff] %vm1600, %v1569
      %1610 = vst.msk [vmem:[#allocation3 + $0x48] sm:$0xff] %vm1600, %v1571
      %1611 = vst.msk [vmem:[#allocation3 + $0x50] sm:$0xff] %vm1600, %v1573
      %1612 = vst.msk [vmem:[#allocation3 + $0x58] sm:$0xff] %vm1600, %v1575
      %1613 = vst.msk [vmem:[#allocation3 + $0x60] sm:$0xff] %vm1600, %v1577
      %1614 = vst.msk [vmem:[#allocation3 + $0x68] sm:$0xff] %vm1600, %v1579
      %1615 = vst.msk [vmem:[#allocation3 + $0x70] sm:$0xff] %vm1600, %v1581
      %1616 = vst.msk [vmem:[#allocation3 + $0x78] sm:$0xff] %vm1600, %v1583
      %v1617 = vld [vmem:[#allocation2] sm:$0xe]
      %v1618 = vld [vmem:[#allocation2 + $0x4] sm:$0xf]
      %v1619 = vld [vmem:[#allocation2 + $0x8] sm:$0x1]
      %v1620 = vld [vmem:[#allocation2 + $0xc] sm:$0xe]
      %v1621 = vld [vmem:[#allocation2 + $0x10] sm:$0xf]
      %v1622 = vld [vmem:[#allocation2 + $0x14] sm:$0x1]
      %v1623 = vld [vmem:[#allocation2 + $0x18] sm:$0xe]
      %v1624 = vld [vmem:[#allocation2 + $0x1c] sm:$0xf]
      %v1625 = vld [vmem:[#allocation2 + $0x20] sm:$0x1]
      %v1626 = vld [vmem:[#allocation2 + $0x24] sm:$0xe]
      %v1627 = vld [vmem:[#allocation2 + $0x28] sm:$0xf]
      %v1628 = vld [vmem:[#allocation2 + $0x2c] sm:$0x1]
      %v1629 = vld [vmem:[#allocation2 + $0x30] sm:$0xe]
      %v1630 = vld [vmem:[#allocation2 + $0x34] sm:$0xf]
      %v1631 = vld [vmem:[#allocation2 + $0x38] sm:$0x1]
      %v1632 = vld [vmem:[#allocation2 + $0x3c] sm:$0xe]
      %v1633 = vld [vmem:[#allocation2 + $0x40] sm:$0xf]
      %v1634 = vld [vmem:[#allocation2 + $0x44] sm:$0x1]
      %v1635 = vld [vmem:[#allocation2 + $0x48] sm:$0xe]
      %v1636 = vld [vmem:[#allocation2 + $0x4c] sm:$0xf]
      %v1637 = vld [vmem:[#allocation2 + $0x50] sm:$0x1]
      %v1638 = vld [vmem:[#allocation2 + $0x54] sm:$0xe]
      %v1639 = vld [vmem:[#allocation2 + $0x58] sm:$0xf]
      %v1640 = vld [vmem:[#allocation2 + $0x5c] sm:$0x1]
      %v1641 = vld [vmem:[#allocation2 + $0x60] sm:$0xe]
      %v1642 = vld [vmem:[#allocation2 + $0x64] sm:$0xf]
      %v1643 = vld [vmem:[#allocation2 + $0x68] sm:$0x1]
      %v1644 = vld [vmem:[#allocation2 + $0x6c] sm:$0xe]
      %v1645 = vld [vmem:[#allocation2 + $0x70] sm:$0xf]
      %v1646 = vld [vmem:[#allocation2 + $0x74] sm:$0x1]
      %v1647 = vld [vmem:[#allocation2 + $0x78] sm:$0xe]
      %v1648 = vld [vmem:[#allocation2 + $0x7c] sm:$0xf]
      %v1649 = vld [vmem:[#allocation2 + $0x80] sm:$0x1]
      %v1650 = vld [vmem:[#allocation2 + $0x84] sm:$0xe]
      %v1651 = vld [vmem:[#allocation2 + $0x88] sm:$0xf]
      %v1652 = vld [vmem:[#allocation2 + $0x8c] sm:$0x1]
      %v1653 = vld [vmem:[#allocation2 + $0x90] sm:$0xe]
      %v1654 = vld [vmem:[#allocation2 + $0x94] sm:$0xf]
      %v1655 = vld [vmem:[#allocation2 + $0x98] sm:$0x1]
      %v1656 = vld [vmem:[#allocation2 + $0x9c] sm:$0xe]
      %v1657 = vld [vmem:[#allocation2 + $0xa0] sm:$0xf]
      %v1658 = vld [vmem:[#allocation2 + $0xa4] sm:$0x1]
      %v1659 = vld [vmem:[#allocation2 + $0xa8] sm:$0xe]
      %v1660 = vld [vmem:[#allocation2 + $0xac] sm:$0xf]
      %v1661 = vld [vmem:[#allocation2 + $0xb0] sm:$0x1]
      %v1662 = vld [vmem:[#allocation2 + $0xb4] sm:$0xe]
      %v1663 = vld [vmem:[#allocation2 + $0xb8] sm:$0xf]
      %v1664 = vld [vmem:[#allocation2 + $0xbc] sm:$0x1]
      %vm1713 = vcmask 1042432
      %vm1714 = vcmask 1046532
      %vm1715 = vmor %vm1713, %vm1714
      %v1716 = vrot.slane %v1617, 5
      %v1717 = vrot.slane %v1716, 4
      %v1718 = vrot.slane %v1618, 5
      %v1719 = vsel %vm1715, %v1717, %v1718
      %v1720 = vrot.slane %v1718, 4
      %v1721 = vrot.slane %v1619, 5
      %v1722 = vsel %vm1715, %v1720, %v1721
      %v1723 = vrot.slane %v1620, 5
      %v1724 = vrot.slane %v1723, 4
      %v1725 = vrot.slane %v1621, 5
      %v1726 = vsel %vm1715, %v1724, %v1725
      %v1727 = vrot.slane %v1725, 4
      %v1728 = vrot.slane %v1622, 5
      %v1729 = vsel %vm1715, %v1727, %v1728
      %v1730 = vrot.slane %v1623, 5
      %v1731 = vrot.slane %v1730, 4
      %v1732 = vrot.slane %v1624, 5
      %v1733 = vsel %vm1715, %v1731, %v1732
      %v1734 = vrot.slane %v1732, 4
      %v1735 = vrot.slane %v1625, 5
      %v1736 = vsel %vm1715, %v1734, %v1735
      %v1737 = vrot.slane %v1626, 5
      %v1738 = vrot.slane %v1737, 4
      %v1739 = vrot.slane %v1627, 5
      %v1740 = vsel %vm1715, %v1738, %v1739
      %v1741 = vrot.slane %v1739, 4
      %v1742 = vrot.slane %v1628, 5
      %v1743 = vsel %vm1715, %v1741, %v1742
      %v1744 = vrot.slane %v1629, 5
      %v1745 = vrot.slane %v1744, 4
      %v1746 = vrot.slane %v1630, 5
      %v1747 = vsel %vm1715, %v1745, %v1746
      %v1748 = vrot.slane %v1746, 4
      %v1749 = vrot.slane %v1631, 5
      %v1750 = vsel %vm1715, %v1748, %v1749
      %v1751 = vrot.slane %v1632, 5
      %v1752 = vrot.slane %v1751, 4
      %v1753 = vrot.slane %v1633, 5
      %v1754 = vsel %vm1715, %v1752, %v1753
      %v1755 = vrot.slane %v1753, 4
      %v1756 = vrot.slane %v1634, 5
      %v1757 = vsel %vm1715, %v1755, %v1756
      %v1758 = vrot.slane %v1635, 5
      %v1759 = vrot.slane %v1758, 4
      %v1760 = vrot.slane %v1636, 5
      %v1761 = vsel %vm1715, %v1759, %v1760
      %v1762 = vrot.slane %v1760, 4
      %v1763 = vrot.slane %v1637, 5
      %v1764 = vsel %vm1715, %v1762, %v1763
      %v1765 = vrot.slane %v1638, 5
      %v1766 = vrot.slane %v1765, 4
      %v1767 = vrot.slane %v1639, 5
      %v1768 = vsel %vm1715, %v1766, %v1767
      %v1769 = vrot.slane %v1767, 4
      %v1770 = vrot.slane %v1640, 5
      %v1771 = vsel %vm1715, %v1769, %v1770
      %v1772 = vrot.slane %v1641, 5
      %v1773 = vrot.slane %v1772, 4
      %v1774 = vrot.slane %v1642, 5
      %v1775 = vsel %vm1715, %v1773, %v1774
      %v1776 = vrot.slane %v1774, 4
      %v1777 = vrot.slane %v1643, 5
      %v1778 = vsel %vm1715, %v1776, %v1777
      %v1779 = vrot.slane %v1644, 5
      %v1780 = vrot.slane %v1779, 4
      %v1781 = vrot.slane %v1645, 5
      %v1782 = vsel %vm1715, %v1780, %v1781
      %v1783 = vrot.slane %v1781, 4
      %v1784 = vrot.slane %v1646, 5
      %v1785 = vsel %vm1715, %v1783, %v1784
      %v1786 = vrot.slane %v1647, 5
      %v1787 = vrot.slane %v1786, 4
      %v1788 = vrot.slane %v1648, 5
      %v1789 = vsel %vm1715, %v1787, %v1788
      %v1790 = vrot.slane %v1788, 4
      %v1791 = vrot.slane %v1649, 5
      %v1792 = vsel %vm1715, %v1790, %v1791
      %v1793 = vrot.slane %v1650, 5
      %v1794 = vrot.slane %v1793, 4
      %v1795 = vrot.slane %v1651, 5
      %v1796 = vsel %vm1715, %v1794, %v1795
      %v1797 = vrot.slane %v1795, 4
      %v1798 = vrot.slane %v1652, 5
      %v1799 = vsel %vm1715, %v1797, %v1798
      %v1800 = vrot.slane %v1653, 5
      %v1801 = vrot.slane %v1800, 4
      %v1802 = vrot.slane %v1654, 5
      %v1803 = vsel %vm1715, %v1801, %v1802
      %v1804 = vrot.slane %v1802, 4
      %v1805 = vrot.slane %v1655, 5
      %v1806 = vsel %vm1715, %v1804, %v1805
      %v1807 = vrot.slane %v1656, 5
      %v1808 = vrot.slane %v1807, 4
      %v1809 = vrot.slane %v1657, 5
      %v1810 = vsel %vm1715, %v1808, %v1809
      %v1811 = vrot.slane %v1809, 4
      %v1812 = vrot.slane %v1658, 5
      %v1813 = vsel %vm1715, %v1811, %v1812
      %v1814 = vrot.slane %v1659, 5
      %v1815 = vrot.slane %v1814, 4
      %v1816 = vrot.slane %v1660, 5
      %v1817 = vsel %vm1715, %v1815, %v1816
      %v1818 = vrot.slane %v1816, 4
      %v1819 = vrot.slane %v1661, 5
      %v1820 = vsel %vm1715, %v1818, %v1819
      %v1821 = vrot.slane %v1662, 5
      %v1822 = vrot.slane %v1821, 4
      %v1823 = vrot.slane %v1663, 5
      %v1824 = vsel %vm1715, %v1822, %v1823
      %v1825 = vrot.slane %v1823, 4
      %v1826 = vrot.slane %v1664, 5
      %v1827 = vsel %vm1715, %v1825, %v1826
      %v1828 = vunpack.c.l.b16 %v1719
      %v1829 = vunpack.c.l.b16 %v1722
      %v1830 = vunpack.c.l.b16 %v1726
      %v1831 = vunpack.c.l.b16 %v1729
      %v1832 = vunpack.c.l.b16 %v1733
      %v1833 = vunpack.c.l.b16 %v1736
      %v1834 = vunpack.c.l.b16 %v1740
      %v1835 = vunpack.c.l.b16 %v1743
      %v1836 = vunpack.c.l.b16 %v1747
      %v1837 = vunpack.c.l.b16 %v1750
      %v1838 = vunpack.c.l.b16 %v1754
      %v1839 = vunpack.c.l.b16 %v1757
      %v1840 = vunpack.c.l.b16 %v1761
      %v1841 = vunpack.c.l.b16 %v1764
      %v1842 = vunpack.c.l.b16 %v1768
      %v1843 = vunpack.c.l.b16 %v1771
      %v1844 = vunpack.c.l.b16 %v1775
      %v1845 = vunpack.c.l.b16 %v1778
      %v1846 = vunpack.c.l.b16 %v1782
      %v1847 = vunpack.c.l.b16 %v1785
      %v1848 = vunpack.c.l.b16 %v1789
      %v1849 = vunpack.c.l.b16 %v1792
      %v1850 = vunpack.c.l.b16 %v1796
      %v1851 = vunpack.c.l.b16 %v1799
      %v1852 = vunpack.c.l.b16 %v1803
      %v1853 = vunpack.c.l.b16 %v1806
      %v1854 = vunpack.c.l.b16 %v1810
      %v1855 = vunpack.c.l.b16 %v1813
      %v1856 = vunpack.c.l.b16 %v1817
      %v1857 = vunpack.c.l.b16 %v1820
      %v1858 = vunpack.c.l.b16 %v1824
      %v1859 = vunpack.c.l.b16 %v1827
      %v1860 = vpack.c.b16 %v1829, %v1828
      %v1861 = vpack.c.b16 %v1831, %v1830
      %v1862 = vpack.c.b16 %v1833, %v1832
      %v1863 = vpack.c.b16 %v1835, %v1834
      %v1864 = vpack.c.b16 %v1837, %v1836
      %v1865 = vpack.c.b16 %v1839, %v1838
      %v1866 = vpack.c.b16 %v1841, %v1840
      %v1867 = vpack.c.b16 %v1843, %v1842
      %v1868 = vpack.c.b16 %v1845, %v1844
      %v1869 = vpack.c.b16 %v1847, %v1846
      %v1870 = vpack.c.b16 %v1849, %v1848
      %v1871 = vpack.c.b16 %v1851, %v1850
      %v1872 = vpack.c.b16 %v1853, %v1852
      %v1873 = vpack.c.b16 %v1855, %v1854
      %v1874 = vpack.c.b16 %v1857, %v1856
      %v1875 = vpack.c.b16 %v1859, %v1858
      %1876 = vrot.lane.b32.xlu0 %v1860, 8
      %v1877 = vpop.permute.xlu0 %1876
      %1878 = vrot.lane.b32.xlu0 %v1861, 8
      %v1879 = vpop.permute.xlu0 %1878
      %1880 = vrot.lane.b32.xlu0 %v1862, 8
      %v1881 = vpop.permute.xlu0 %1880
      %1882 = vrot.lane.b32.xlu0 %v1863, 8
      %v1883 = vpop.permute.xlu0 %1882
      %1884 = vrot.lane.b32.xlu0 %v1864, 8
      %v1885 = vpop.permute.xlu0 %1884
      %1886 = vrot.lane.b32.xlu0 %v1865, 8
      %v1887 = vpop.permute.xlu0 %1886
      %1888 = vrot.lane.b32.xlu0 %v1866, 8
      %v1889 = vpop.permute.xlu0 %1888
      %1890 = vrot.lane.b32.xlu0 %v1867, 8
      %v1891 = vpop.permute.xlu0 %1890
      %1892 = vrot.lane.b32.xlu0 %v1868, 8
      %v1893 = vpop.permute.xlu0 %1892
      %1894 = vrot.lane.b32.xlu0 %v1869, 8
      %v1895 = vpop.permute.xlu0 %1894
      %1896 = vrot.lane.b32.xlu0 %v1870, 8
      %v1897 = vpop.permute.xlu0 %1896
      %1898 = vrot.lane.b32.xlu0 %v1871, 8
      %v1899 = vpop.permute.xlu0 %1898
      %1900 = vrot.lane.b32.xlu0 %v1872, 8
      %v1901 = vpop.permute.xlu0 %1900
      %1902 = vrot.lane.b32.xlu0 %v1873, 8
      %v1903 = vpop.permute.xlu0 %1902
      %1904 = vrot.lane.b32.xlu0 %v1874, 8
      %v1905 = vpop.permute.xlu0 %1904
      %1906 = vrot.lane.b32.xlu0 %v1875, 8
      %v1907 = vpop.permute.xlu0 %1906
      %vm1924 = vcmask 97344
      %1925 = vst.msk [vmem:[#allocation3] sm:$0xff] %vm1924, %v1877
      %1926 = vst.msk [vmem:[#allocation3 + $0x8] sm:$0xff] %vm1924, %v1879
      %1927 = vst.msk [vmem:[#allocation3 + $0x10] sm:$0xff] %vm1924, %v1881
      %1928 = vst.msk [vmem:[#allocation3 + $0x18] sm:$0xff] %vm1924, %v1883
      %1929 = vst.msk [vmem:[#allocation3 + $0x20] sm:$0xff] %vm1924, %v1885
      %1930 = vst.msk [vmem:[#allocation3 + $0x28] sm:$0xff] %vm1924, %v1887
      %1931 = vst.msk [vmem:[#allocation3 + $0x30] sm:$0xff] %vm1924, %v1889
      %1932 = vst.msk [vmem:[#allocation3 + $0x38] sm:$0xff] %vm1924, %v1891
      %1933 = vst.msk [vmem:[#allocation3 + $0x40] sm:$0xff] %vm1924, %v1893
      %1934 = vst.msk [vmem:[#allocation3 + $0x48] sm:$0xff] %vm1924, %v1895
      %1935 = vst.msk [vmem:[#allocation3 + $0x50] sm:$0xff] %vm1924, %v1897
      %1936 = vst.msk [vmem:[#allocation3 + $0x58] sm:$0xff] %vm1924, %v1899
      %1937 = vst.msk [vmem:[#allocation3 + $0x60] sm:$0xff] %vm1924, %v1901
      %1938 = vst.msk [vmem:[#allocation3 + $0x68] sm:$0xff] %vm1924, %v1903
      %1939 = vst.msk [vmem:[#allocation3 + $0x70] sm:$0xff] %vm1924, %v1905
      %1940 = vst.msk [vmem:[#allocation3 + $0x78] sm:$0xff] %vm1924, %v1907
      %v1941 = vld [vmem:[%s809] sm:$0xf]
      %v1942 = vld [vmem:[%s809 + $0x4] sm:$0xf]
      %v1943 = vld [vmem:[%s809 + $0xc] sm:$0xf]
      %v1944 = vld [vmem:[%s809 + $0x10] sm:$0xf]
      %v1945 = vld [vmem:[%s809 + $0x18] sm:$0xf]
      %v1946 = vld [vmem:[%s809 + $0x1c] sm:$0xf]
      %v1947 = vld [vmem:[%s809 + $0x24] sm:$0xf]
      %v1948 = vld [vmem:[%s809 + $0x28] sm:$0xf]
      %v1949 = vld [vmem:[%s809 + $0x30] sm:$0xf]
      %v1950 = vld [vmem:[%s809 + $0x34] sm:$0xf]
      %v1951 = vld [vmem:[%s809 + $0x3c] sm:$0xf]
      %v1952 = vld [vmem:[%s809 + $0x40] sm:$0xf]
      %v1953 = vld [vmem:[%s809 + $0x48] sm:$0xf]
      %v1954 = vld [vmem:[%s809 + $0x4c] sm:$0xf]
      %v1955 = vld [vmem:[%s809 + $0x54] sm:$0xf]
      %v1956 = vld [vmem:[%s809 + $0x58] sm:$0xf]
      %v1957 = vld [vmem:[%s809 + $0x60] sm:$0xf]
      %v1958 = vld [vmem:[%s809 + $0x64] sm:$0xf]
      %v1959 = vld [vmem:[%s809 + $0x6c] sm:$0xf]
      %v1960 = vld [vmem:[%s809 + $0x70] sm:$0xf]
      %v1961 = vld [vmem:[%s809 + $0x78] sm:$0xf]
      %v1962 = vld [vmem:[%s809 + $0x7c] sm:$0xf]
      %v1963 = vld [vmem:[%s809 + $0x84] sm:$0xf]
      %v1964 = vld [vmem:[%s809 + $0x88] sm:$0xf]
      %v1965 = vld [vmem:[%s809 + $0x90] sm:$0xf]
      %v1966 = vld [vmem:[%s809 + $0x94] sm:$0xf]
      %v1967 = vld [vmem:[%s809 + $0x9c] sm:$0xf]
      %v1968 = vld [vmem:[%s809 + $0xa0] sm:$0xf]
      %v1969 = vld [vmem:[%s809 + $0xa8] sm:$0xf]
      %v1970 = vld [vmem:[%s809 + $0xac] sm:$0xf]
      %v1971 = vld [vmem:[%s809 + $0xb4] sm:$0xf]
      %v1972 = vld [vmem:[%s809 + $0xb8] sm:$0xf]
      %v2005 = vunpack.c.l.b16 %v1941
      %v2006 = vunpack.c.l.b16 %v1942
      %v2007 = vunpack.c.l.b16 %v1943
      %v2008 = vunpack.c.l.b16 %v1944
      %v2009 = vunpack.c.l.b16 %v1945
      %v2010 = vunpack.c.l.b16 %v1946
      %v2011 = vunpack.c.l.b16 %v1947
      %v2012 = vunpack.c.l.b16 %v1948
      %v2013 = vunpack.c.l.b16 %v1949
      %v2014 = vunpack.c.l.b16 %v1950
      %v2015 = vunpack.c.l.b16 %v1951
      %v2016 = vunpack.c.l.b16 %v1952
      %v2017 = vunpack.c.l.b16 %v1953
      %v2018 = vunpack.c.l.b16 %v1954
      %v2019 = vunpack.c.l.b16 %v1955
      %v2020 = vunpack.c.l.b16 %v1956
      %v2021 = vunpack.c.l.b16 %v1957
      %v2022 = vunpack.c.l.b16 %v1958
      %v2023 = vunpack.c.l.b16 %v1959
      %v2024 = vunpack.c.l.b16 %v1960
      %v2025 = vunpack.c.l.b16 %v1961
      %v2026 = vunpack.c.l.b16 %v1962
      %v2027 = vunpack.c.l.b16 %v1963
      %v2028 = vunpack.c.l.b16 %v1964
      %v2029 = vunpack.c.l.b16 %v1965
      %v2030 = vunpack.c.l.b16 %v1966
      %v2031 = vunpack.c.l.b16 %v1967
      %v2032 = vunpack.c.l.b16 %v1968
      %v2033 = vunpack.c.l.b16 %v1969
      %v2034 = vunpack.c.l.b16 %v1970
      %v2035 = vunpack.c.l.b16 %v1971
      %v2036 = vunpack.c.l.b16 %v1972
      %v2037 = vpack.c.b16 %v2006, %v2005
      %v2038 = vpack.c.b16 %v2008, %v2007
      %v2039 = vpack.c.b16 %v2010, %v2009
      %v2040 = vpack.c.b16 %v2012, %v2011
      %v2041 = vpack.c.b16 %v2014, %v2013
      %v2042 = vpack.c.b16 %v2016, %v2015
      %v2043 = vpack.c.b16 %v2018, %v2017
      %v2044 = vpack.c.b16 %v2020, %v2019
      %v2045 = vpack.c.b16 %v2022, %v2021
      %v2046 = vpack.c.b16 %v2024, %v2023
      %v2047 = vpack.c.b16 %v2026, %v2025
      %v2048 = vpack.c.b16 %v2028, %v2027
      %v2049 = vpack.c.b16 %v2030, %v2029
      %v2050 = vpack.c.b16 %v2032, %v2031
      %v2051 = vpack.c.b16 %v2034, %v2033
      %v2052 = vpack.c.b16 %v2036, %v2035
      %2053 = vrot.lane.b32.xlu0 %v2037, 12
      %v2054 = vpop.permute.xlu0 %2053
      %2055 = vrot.lane.b32.xlu0 %v2038, 12
      %v2056 = vpop.permute.xlu0 %2055
      %2057 = vrot.lane.b32.xlu0 %v2039, 12
      %v2058 = vpop.permute.xlu0 %2057
      %2059 = vrot.lane.b32.xlu0 %v2040, 12
      %v2060 = vpop.permute.xlu0 %2059
      %2061 = vrot.lane.b32.xlu0 %v2041, 12
      %v2062 = vpop.permute.xlu0 %2061
      %2063 = vrot.lane.b32.xlu0 %v2042, 12
      %v2064 = vpop.permute.xlu0 %2063
      %2065 = vrot.lane.b32.xlu0 %v2043, 12
      %v2066 = vpop.permute.xlu0 %2065
      %2067 = vrot.lane.b32.xlu0 %v2044, 12
      %v2068 = vpop.permute.xlu0 %2067
      %2069 = vrot.lane.b32.xlu0 %v2045, 12
      %v2070 = vpop.permute.xlu0 %2069
      %2071 = vrot.lane.b32.xlu0 %v2046, 12
      %v2072 = vpop.permute.xlu0 %2071
      %2073 = vrot.lane.b32.xlu0 %v2047, 12
      %v2074 = vpop.permute.xlu0 %2073
      %2075 = vrot.lane.b32.xlu0 %v2048, 12
      %v2076 = vpop.permute.xlu0 %2075
      %2077 = vrot.lane.b32.xlu0 %v2049, 12
      %v2078 = vpop.permute.xlu0 %2077
      %2079 = vrot.lane.b32.xlu0 %v2050, 12
      %v2080 = vpop.permute.xlu0 %2079
      %2081 = vrot.lane.b32.xlu0 %v2051, 12
      %v2082 = vpop.permute.xlu0 %2081
      %2083 = vrot.lane.b32.xlu0 %v2052, 12
      %v2084 = vpop.permute.xlu0 %2083
      %vm2101 = vcmask 130144
      %2102 = vst.msk [vmem:[#allocation3] sm:$0xff] %vm2101, %v2054
      %2103 = vst.msk [vmem:[#allocation3 + $0x8] sm:$0xff] %vm2101, %v2056
      %2104 = vst.msk [vmem:[#allocation3 + $0x10] sm:$0xff] %vm2101, %v2058
      %2105 = vst.msk [vmem:[#allocation3 + $0x18] sm:$0xff] %vm2101, %v2060
      %2106 = vst.msk [vmem:[#allocation3 + $0x20] sm:$0xff] %vm2101, %v2062
      %2107 = vst.msk [vmem:[#allocation3 + $0x28] sm:$0xff] %vm2101, %v2064
      %2108 = vst.msk [vmem:[#allocation3 + $0x30] sm:$0xff] %vm2101, %v2066
      %2109 = vst.msk [vmem:[#allocation3 + $0x38] sm:$0xff] %vm2101, %v2068
      %2110 = vst.msk [vmem:[#allocation3 + $0x40] sm:$0xff] %vm2101, %v2070
      %2111 = vst.msk [vmem:[#allocation3 + $0x48] sm:$0xff] %vm2101, %v2072
      %2112 = vst.msk [vmem:[#allocation3 + $0x50] sm:$0xff] %vm2101, %v2074
      %2113 = vst.msk [vmem:[#allocation3 + $0x58] sm:$0xff] %vm2101, %v2076
      %2114 = vst.msk [vmem:[#allocation3 + $0x60] sm:$0xff] %vm2101, %v2078
      %2115 = vst.msk [vmem:[#allocation3 + $0x68] sm:$0xff] %vm2101, %v2080
      %2116 = vst.msk [vmem:[#allocation3 + $0x70] sm:$0xff] %vm2101, %v2082
      %2117 = vst.msk [vmem:[#allocation3 + $0x78] sm:$0xff] %vm2101, %v2084
      %v2118 = vld [vmem:[%s809] sm:$0xf]
      %v2119 = vld [vmem:[%s809 + $0x4] sm:$0xf]
      %v2120 = vld [vmem:[%s809 + $0x8] sm:$0x1]
      %v2121 = vld [vmem:[%s809 + $0xc] sm:$0xf]
      %v2122 = vld [vmem:[%s809 + $0x10] sm:$0xf]
      %v2123 = vld [vmem:[%s809 + $0x14] sm:$0x1]
      %v2124 = vld [vmem:[%s809 + $0x18] sm:$0xf]
      %v2125 = vld [vmem:[%s809 + $0x1c] sm:$0xf]
      %v2126 = vld [vmem:[%s809 + $0x20] sm:$0x1]
      %v2127 = vld [vmem:[%s809 + $0x24] sm:$0xf]
      %v2128 = vld [vmem:[%s809 + $0x28] sm:$0xf]
      %v2129 = vld [vmem:[%s809 + $0x2c] sm:$0x1]
      %v2130 = vld [vmem:[%s809 + $0x30] sm:$0xf]
      %v2131 = vld [vmem:[%s809 + $0x34] sm:$0xf]
      %v2132 = vld [vmem:[%s809 + $0x38] sm:$0x1]
      %v2133 = vld [vmem:[%s809 + $0x3c] sm:$0xf]
      %v2134 = vld [vmem:[%s809 + $0x40] sm:$0xf]
      %v2135 = vld [vmem:[%s809 + $0x44] sm:$0x1]
      %v2136 = vld [vmem:[%s809 + $0x48] sm:$0xf]
      %v2137 = vld [vmem:[%s809 + $0x4c] sm:$0xf]
      %v2138 = vld [vmem:[%s809 + $0x50] sm:$0x1]
      %v2139 = vld [vmem:[%s809 + $0x54] sm:$0xf]
      %v2140 = vld [vmem:[%s809 + $0x58] sm:$0xf]
      %v2141 = vld [vmem:[%s809 + $0x5c] sm:$0x1]
      %v2142 = vld [vmem:[%s809 + $0x60] sm:$0xf]
      %v2143 = vld [vmem:[%s809 + $0x64] sm:$0xf]
      %v2144 = vld [vmem:[%s809 + $0x68] sm:$0x1]
      %v2145 = vld [vmem:[%s809 + $0x6c] sm:$0xf]
      %v2146 = vld [vmem:[%s809 + $0x70] sm:$0xf]
      %v2147 = vld [vmem:[%s809 + $0x74] sm:$0x1]
      %v2148 = vld [vmem:[%s809 + $0x78] sm:$0xf]
      %v2149 = vld [vmem:[%s809 + $0x7c] sm:$0xf]
      %v2150 = vld [vmem:[%s809 + $0x80] sm:$0x1]
      %v2151 = vld [vmem:[%s809 + $0x84] sm:$0xf]
      %v2152 = vld [vmem:[%s809 + $0x88] sm:$0xf]
      %v2153 = vld [vmem:[%s809 + $0x8c] sm:$0x1]
      %v2154 = vld [vmem:[%s809 + $0x90] sm:$0xf]
      %v2155 = vld [vmem:[%s809 + $0x94] sm:$0xf]
      %v2156 = vld [vmem:[%s809 + $0x98] sm:$0x1]
      %v2157 = vld [vmem:[%s809 + $0x9c] sm:$0xf]
      %v2158 = vld [vmem:[%s809 + $0xa0] sm:$0xf]
      %v2159 = vld [vmem:[%s809 + $0xa4] sm:$0x1]
      %v2160 = vld [vmem:[%s809 + $0xa8] sm:$0xf]
      %v2161 = vld [vmem:[%s809 + $0xac] sm:$0xf]
      %v2162 = vld [vmem:[%s809 + $0xb0] sm:$0x1]
      %v2163 = vld [vmem:[%s809 + $0xb4] sm:$0xf]
      %v2164 = vld [vmem:[%s809 + $0xb8] sm:$0xf]
      %v2165 = vld [vmem:[%s809 + $0xbc] sm:$0x1]
      %v2167 = vshrl.u32 %v2118, 16
      %v2169 = vrot.slane %v2167, 4
      %v2170 = vshll.u32 %v2118, 16
      %v2172 = vrot.slane %v2170, 5
      %v2173 = vor.u32 %v2169, %v2172
      %v2174 = vrot.slane %v2173, 4
      %v2176 = vshll.u32 %v2119, 16
      %v2178 = vrot.slane %v2176, 5
      %v2179 = vsel %vm1119, %v2174, %v2178
      %v2180 = vshrl.u32 %v2119, 16
      %v2182 = vrot.slane %v2180, 4
      %v2183 = vor.u32 %v2182, %v2178
      %v2184 = vrot.slane %v2183, 4
      %v2186 = vshll.u32 %v2120, 16
      %v2188 = vrot.slane %v2186, 5
      %v2189 = vsel %vm1119, %v2184, %v2188
      %v2191 = vshrl.u32 %v2121, 16
      %v2193 = vrot.slane %v2191, 4
      %v2194 = vshll.u32 %v2121, 16
      %v2196 = vrot.slane %v2194, 5
      %v2197 = vor.u32 %v2193, %v2196
      %v2198 = vrot.slane %v2197, 4
      %v2200 = vshll.u32 %v2122, 16
      %v2202 = vrot.slane %v2200, 5
      %v2203 = vsel %vm1119, %v2198, %v2202
      %v2204 = vshrl.u32 %v2122, 16
      %v2206 = vrot.slane %v2204, 4
      %v2207 = vor.u32 %v2206, %v2202
      %v2208 = vrot.slane %v2207, 4
      %v2210 = vshll.u32 %v2123, 16
      %v2212 = vrot.slane %v2210, 5
      %v2213 = vsel %vm1119, %v2208, %v2212
      %v2215 = vshrl.u32 %v2124, 16
      %v2217 = vrot.slane %v2215, 4
      %v2218 = vshll.u32 %v2124, 16
      %v2220 = vrot.slane %v2218, 5
      %v2221 = vor.u32 %v2217, %v2220
      %v2222 = vrot.slane %v2221, 4
      %v2224 = vshll.u32 %v2125, 16
      %v2226 = vrot.slane %v2224, 5
      %v2227 = vsel %vm1119, %v2222, %v2226
      %v2228 = vshrl.u32 %v2125, 16
      %v2230 = vrot.slane %v2228, 4
      %v2231 = vor.u32 %v2230, %v2226
      %v2232 = vrot.slane %v2231, 4
      %v2234 = vshll.u32 %v2126, 16
      %v2236 = vrot.slane %v2234, 5
      %v2237 = vsel %vm1119, %v2232, %v2236
      %v2239 = vshrl.u32 %v2127, 16
      %v2241 = vrot.slane %v2239, 4
      %v2242 = vshll.u32 %v2127, 16
      %v2244 = vrot.slane %v2242, 5
      %v2245 = vor.u32 %v2241, %v2244
      %v2246 = vrot.slane %v2245, 4
      %v2248 = vshll.u32 %v2128, 16
      %v2250 = vrot.slane %v2248, 5
      %v2251 = vsel %vm1119, %v2246, %v2250
      %v2252 = vshrl.u32 %v2128, 16
      %v2254 = vrot.slane %v2252, 4
      %v2255 = vor.u32 %v2254, %v2250
      %v2256 = vrot.slane %v2255, 4
      %v2258 = vshll.u32 %v2129, 16
      %v2260 = vrot.slane %v2258, 5
      %v2261 = vsel %vm1119, %v2256, %v2260
      %v2263 = vshrl.u32 %v2130, 16
      %v2265 = vrot.slane %v2263, 4
      %v2266 = vshll.u32 %v2130, 16
      %v2268 = vrot.slane %v2266, 5
      %v2269 = vor.u32 %v2265, %v2268
      %v2270 = vrot.slane %v2269, 4
      %v2272 = vshll.u32 %v2131, 16
      %v2274 = vrot.slane %v2272, 5
      %v2275 = vsel %vm1119, %v2270, %v2274
      %v2276 = vshrl.u32 %v2131, 16
      %v2278 = vrot.slane %v2276, 4
      %v2279 = vor.u32 %v2278, %v2274
      %v2280 = vrot.slane %v2279, 4
      %v2282 = vshll.u32 %v2132, 16
      %v2284 = vrot.slane %v2282, 5
      %v2285 = vsel %vm1119, %v2280, %v2284
      %v2287 = vshrl.u32 %v2133, 16
      %v2289 = vrot.slane %v2287, 4
      %v2290 = vshll.u32 %v2133, 16
      %v2292 = vrot.slane %v2290, 5
      %v2293 = vor.u32 %v2289, %v2292
      %v2294 = vrot.slane %v2293, 4
      %v2296 = vshll.u32 %v2134, 16
      %v2298 = vrot.slane %v2296, 5
      %v2299 = vsel %vm1119, %v2294, %v2298
      %v2300 = vshrl.u32 %v2134, 16
      %v2302 = vrot.slane %v2300, 4
      %v2303 = vor.u32 %v2302, %v2298
      %v2304 = vrot.slane %v2303, 4
      %v2306 = vshll.u32 %v2135, 16
      %v2308 = vrot.slane %v2306, 5
      %v2309 = vsel %vm1119, %v2304, %v2308
      %v2311 = vshrl.u32 %v2136, 16
      %v2313 = vrot.slane %v2311, 4
      %v2314 = vshll.u32 %v2136, 16
      %v2316 = vrot.slane %v2314, 5
      %v2317 = vor.u32 %v2313, %v2316
      %v2318 = vrot.slane %v2317, 4
      %v2320 = vshll.u32 %v2137, 16
      %v2322 = vrot.slane %v2320, 5
      %v2323 = vsel %vm1119, %v2318, %v2322
      %v2324 = vshrl.u32 %v2137, 16
      %v2326 = vrot.slane %v2324, 4
      %v2327 = vor.u32 %v2326, %v2322
      %v2328 = vrot.slane %v2327, 4
      %v2330 = vshll.u32 %v2138, 16
      %v2332 = vrot.slane %v2330, 5
      %v2333 = vsel %vm1119, %v2328, %v2332
      %v2335 = vshrl.u32 %v2139, 16
      %v2337 = vrot.slane %v2335, 4
      %v2338 = vshll.u32 %v2139, 16
      %v2340 = vrot.slane %v2338, 5
      %v2341 = vor.u32 %v2337, %v2340
      %v2342 = vrot.slane %v2341, 4
      %v2344 = vshll.u32 %v2140, 16
      %v2346 = vrot.slane %v2344, 5
      %v2347 = vsel %vm1119, %v2342, %v2346
      %v2348 = vshrl.u32 %v2140, 16
      %v2350 = vrot.slane %v2348, 4
      %v2351 = vor.u32 %v2350, %v2346
      %v2352 = vrot.slane %v2351, 4
      %v2354 = vshll.u32 %v2141, 16
      %v2356 = vrot.slane %v2354, 5
      %v2357 = vsel %vm1119, %v2352, %v2356
      %v2359 = vshrl.u32 %v2142, 16
      %v2361 = vrot.slane %v2359, 4
      %v2362 = vshll.u32 %v2142, 16
      %v2364 = vrot.slane %v2362, 5
      %v2365 = vor.u32 %v2361, %v2364
      %v2366 = vrot.slane %v2365, 4
      %v2368 = vshll.u32 %v2143, 16
      %v2370 = vrot.slane %v2368, 5
      %v2371 = vsel %vm1119, %v2366, %v2370
      %v2372 = vshrl.u32 %v2143, 16
      %v2374 = vrot.slane %v2372, 4
      %v2375 = vor.u32 %v2374, %v2370
      %v2376 = vrot.slane %v2375, 4
      %v2378 = vshll.u32 %v2144, 16
      %v2380 = vrot.slane %v2378, 5
      %v2381 = vsel %vm1119, %v2376, %v2380
      %v2383 = vshrl.u32 %v2145, 16
      %v2385 = vrot.slane %v2383, 4
      %v2386 = vshll.u32 %v2145, 16
      %v2388 = vrot.slane %v2386, 5
      %v2389 = vor.u32 %v2385, %v2388
      %v2390 = vrot.slane %v2389, 4
      %v2392 = vshll.u32 %v2146, 16
      %v2394 = vrot.slane %v2392, 5
      %v2395 = vsel %vm1119, %v2390, %v2394
      %v2396 = vshrl.u32 %v2146, 16
      %v2398 = vrot.slane %v2396, 4
      %v2399 = vor.u32 %v2398, %v2394
      %v2400 = vrot.slane %v2399, 4
      %v2402 = vshll.u32 %v2147, 16
      %v2404 = vrot.slane %v2402, 5
      %v2405 = vsel %vm1119, %v2400, %v2404
      %v2407 = vshrl.u32 %v2148, 16
      %v2409 = vrot.slane %v2407, 4
      %v2410 = vshll.u32 %v2148, 16
      %v2412 = vrot.slane %v2410, 5
      %v2413 = vor.u32 %v2409, %v2412
      %v2414 = vrot.slane %v2413, 4
      %v2416 = vshll.u32 %v2149, 16
      %v2418 = vrot.slane %v2416, 5
      %v2419 = vsel %vm1119, %v2414, %v2418
      %v2420 = vshrl.u32 %v2149, 16
      %v2422 = vrot.slane %v2420, 4
      %v2423 = vor.u32 %v2422, %v2418
      %v2424 = vrot.slane %v2423, 4
      %v2426 = vshll.u32 %v2150, 16
      %v2428 = vrot.slane %v2426, 5
      %v2429 = vsel %vm1119, %v2424, %v2428
      %v2431 = vshrl.u32 %v2151, 16
      %v2433 = vrot.slane %v2431, 4
      %v2434 = vshll.u32 %v2151, 16
      %v2436 = vrot.slane %v2434, 5
      %v2437 = vor.u32 %v2433, %v2436
      %v2438 = vrot.slane %v2437, 4
      %v2440 = vshll.u32 %v2152, 16
      %v2442 = vrot.slane %v2440, 5
      %v2443 = vsel %vm1119, %v2438, %v2442
      %v2444 = vshrl.u32 %v2152, 16
      %v2446 = vrot.slane %v2444, 4
      %v2447 = vor.u32 %v2446, %v2442
      %v2448 = vrot.slane %v2447, 4
      %v2450 = vshll.u32 %v2153, 16
      %v2452 = vrot.slane %v2450, 5
      %v2453 = vsel %vm1119, %v2448, %v2452
      %v2455 = vshrl.u32 %v2154, 16
      %v2457 = vrot.slane %v2455, 4
      %v2458 = vshll.u32 %v2154, 16
      %v2460 = vrot.slane %v2458, 5
      %v2461 = vor.u32 %v2457, %v2460
      %v2462 = vrot.slane %v2461, 4
      %v2464 = vshll.u32 %v2155, 16
      %v2466 = vrot.slane %v2464, 5
      %v2467 = vsel %vm1119, %v2462, %v2466
      %v2468 = vshrl.u32 %v2155, 16
      %v2470 = vrot.slane %v2468, 4
      %v2471 = vor.u32 %v2470, %v2466
      %v2472 = vrot.slane %v2471, 4
      %v2474 = vshll.u32 %v2156, 16
      %v2476 = vrot.slane %v2474, 5
      %v2477 = vsel %vm1119, %v2472, %v2476
      %v2479 = vshrl.u32 %v2157, 16
      %v2481 = vrot.slane %v2479, 4
      %v2482 = vshll.u32 %v2157, 16
      %v2484 = vrot.slane %v2482, 5
      %v2485 = vor.u32 %v2481, %v2484
      %v2486 = vrot.slane %v2485, 4
      %v2488 = vshll.u32 %v2158, 16
      %v2490 = vrot.slane %v2488, 5
      %v2491 = vsel %vm1119, %v2486, %v2490
      %v2492 = vshrl.u32 %v2158, 16
      %v2494 = vrot.slane %v2492, 4
      %v2495 = vor.u32 %v2494, %v2490
      %v2496 = vrot.slane %v2495, 4
      %v2498 = vshll.u32 %v2159, 16
      %v2500 = vrot.slane %v2498, 5
      %v2501 = vsel %vm1119, %v2496, %v2500
      %v2503 = vshrl.u32 %v2160, 16
      %v2505 = vrot.slane %v2503, 4
      %v2506 = vshll.u32 %v2160, 16
      %v2508 = vrot.slane %v2506, 5
      %v2509 = vor.u32 %v2505, %v2508
      %v2510 = vrot.slane %v2509, 4
      %v2512 = vshll.u32 %v2161, 16
      %v2514 = vrot.slane %v2512, 5
      %v2515 = vsel %vm1119, %v2510, %v2514
      %v2516 = vshrl.u32 %v2161, 16
      %v2518 = vrot.slane %v2516, 4
      %v2519 = vor.u32 %v2518, %v2514
      %v2520 = vrot.slane %v2519, 4
      %v2522 = vshll.u32 %v2162, 16
      %v2524 = vrot.slane %v2522, 5
      %v2525 = vsel %vm1119, %v2520, %v2524
      %v2527 = vshrl.u32 %v2163, 16
      %v2529 = vrot.slane %v2527, 4
      %v2530 = vshll.u32 %v2163, 16
      %v2532 = vrot.slane %v2530, 5
      %v2533 = vor.u32 %v2529, %v2532
      %v2534 = vrot.slane %v2533, 4
      %v2536 = vshll.u32 %v2164, 16
      %v2538 = vrot.slane %v2536, 5
      %v2539 = vsel %vm1119, %v2534, %v2538
      %v2540 = vshrl.u32 %v2164, 16
      %v2542 = vrot.slane %v2540, 4
      %v2543 = vor.u32 %v2542, %v2538
      %v2544 = vrot.slane %v2543, 4
      %v2546 = vshll.u32 %v2165, 16
      %v2548 = vrot.slane %v2546, 5
      %v2549 = vsel %vm1119, %v2544, %v2548
      %v2550 = vunpack.c.l.b16 %v2179
      %v2551 = vunpack.c.l.b16 %v2189
      %v2552 = vunpack.c.l.b16 %v2203
      %v2553 = vunpack.c.l.b16 %v2213
      %v2554 = vunpack.c.l.b16 %v2227
      %v2555 = vunpack.c.l.b16 %v2237
      %v2556 = vunpack.c.l.b16 %v2251
      %v2557 = vunpack.c.l.b16 %v2261
      %v2558 = vunpack.c.l.b16 %v2275
      %v2559 = vunpack.c.l.b16 %v2285
      %v2560 = vunpack.c.l.b16 %v2299
      %v2561 = vunpack.c.l.b16 %v2309
      %v2562 = vunpack.c.l.b16 %v2323
      %v2563 = vunpack.c.l.b16 %v2333
      %v2564 = vunpack.c.l.b16 %v2347
      %v2565 = vunpack.c.l.b16 %v2357
      %v2566 = vunpack.c.l.b16 %v2371
      %v2567 = vunpack.c.l.b16 %v2381
      %v2568 = vunpack.c.l.b16 %v2395
      %v2569 = vunpack.c.l.b16 %v2405
      %v2570 = vunpack.c.l.b16 %v2419
      %v2571 = vunpack.c.l.b16 %v2429
      %v2572 = vunpack.c.l.b16 %v2443
      %v2573 = vunpack.c.l.b16 %v2453
      %v2574 = vunpack.c.l.b16 %v2467
      %v2575 = vunpack.c.l.b16 %v2477
      %v2576 = vunpack.c.l.b16 %v2491
      %v2577 = vunpack.c.l.b16 %v2501
      %v2578 = vunpack.c.l.b16 %v2515
      %v2579 = vunpack.c.l.b16 %v2525
      %v2580 = vunpack.c.l.b16 %v2539
      %v2581 = vunpack.c.l.b16 %v2549
      %v2582 = vpack.c.b16 %v2551, %v2550
      %v2583 = vpack.c.b16 %v2553, %v2552
      %v2584 = vpack.c.b16 %v2555, %v2554
      %v2585 = vpack.c.b16 %v2557, %v2556
      %v2586 = vpack.c.b16 %v2559, %v2558
      %v2587 = vpack.c.b16 %v2561, %v2560
      %v2588 = vpack.c.b16 %v2563, %v2562
      %v2589 = vpack.c.b16 %v2565, %v2564
      %v2590 = vpack.c.b16 %v2567, %v2566
      %v2591 = vpack.c.b16 %v2569, %v2568
      %v2592 = vpack.c.b16 %v2571, %v2570
      %v2593 = vpack.c.b16 %v2573, %v2572
      %v2594 = vpack.c.b16 %v2575, %v2574
      %v2595 = vpack.c.b16 %v2577, %v2576
      %v2596 = vpack.c.b16 %v2579, %v2578
      %v2597 = vpack.c.b16 %v2581, %v2580
      %2598 = vrot.lane.b32.xlu0 %v2582, 16
      %v2599 = vpop.permute.xlu0 %2598
      %2600 = vrot.lane.b32.xlu0 %v2583, 16
      %v2601 = vpop.permute.xlu0 %2600
      %2602 = vrot.lane.b32.xlu0 %v2584, 16
      %v2603 = vpop.permute.xlu0 %2602
      %2604 = vrot.lane.b32.xlu0 %v2585, 16
      %v2605 = vpop.permute.xlu0 %2604
      %2606 = vrot.lane.b32.xlu0 %v2586, 16
      %v2607 = vpop.permute.xlu0 %2606
      %2608 = vrot.lane.b32.xlu0 %v2587, 16
      %v2609 = vpop.permute.xlu0 %2608
      %2610 = vrot.lane.b32.xlu0 %v2588, 16
      %v2611 = vpop.permute.xlu0 %2610
      %2612 = vrot.lane.b32.xlu0 %v2589, 16
      %v2613 = vpop.permute.xlu0 %2612
      %2614 = vrot.lane.b32.xlu0 %v2590, 16
      %v2615 = vpop.permute.xlu0 %2614
      %2616 = vrot.lane.b32.xlu0 %v2591, 16
      %v2617 = vpop.permute.xlu0 %2616
      %2618 = vrot.lane.b32.xlu0 %v2592, 16
      %v2619 = vpop.permute.xlu0 %2618
      %2620 = vrot.lane.b32.xlu0 %v2593, 16
      %v2621 = vpop.permute.xlu0 %2620
      %2622 = vrot.lane.b32.xlu0 %v2594, 16
      %v2623 = vpop.permute.xlu0 %2622
      %2624 = vrot.lane.b32.xlu0 %v2595, 16
      %v2625 = vpop.permute.xlu0 %2624
      %2626 = vrot.lane.b32.xlu0 %v2596, 16
      %v2627 = vpop.permute.xlu0 %2626
      %2628 = vrot.lane.b32.xlu0 %v2597, 16
      %v2629 = vpop.permute.xlu0 %2628
      %vm2646 = vcmask 162944
      %2647 = vst.msk [vmem:[#allocation3] sm:$0xff] %vm2646, %v2599
      %2648 = vst.msk [vmem:[#allocation3 + $0x8] sm:$0xff] %vm2646, %v2601
      %2649 = vst.msk [vmem:[#allocation3 + $0x10] sm:$0xff] %vm2646, %v2603
      %2650 = vst.msk [vmem:[#allocation3 + $0x18] sm:$0xff] %vm2646, %v2605
      %2651 = vst.msk [vmem:[#allocation3 + $0x20] sm:$0xff] %vm2646, %v2607
      %2652 = vst.msk [vmem:[#allocation3 + $0x28] sm:$0xff] %vm2646, %v2609
      %2653 = vst.msk [vmem:[#allocation3 + $0x30] sm:$0xff] %vm2646, %v2611
      %2654 = vst.msk [vmem:[#allocation3 + $0x38] sm:$0xff] %vm2646, %v2613
      %2655 = vst.msk [vmem:[#allocation3 + $0x40] sm:$0xff] %vm2646, %v2615
      %2656 = vst.msk [vmem:[#allocation3 + $0x48] sm:$0xff] %vm2646, %v2617
      %2657 = vst.msk [vmem:[#allocation3 + $0x50] sm:$0xff] %vm2646, %v2619
      %2658 = vst.msk [vmem:[#allocation3 + $0x58] sm:$0xff] %vm2646, %v2621
      %2659 = vst.msk [vmem:[#allocation3 + $0x60] sm:$0xff] %vm2646, %v2623
      %2660 = vst.msk [vmem:[#allocation3 + $0x68] sm:$0xff] %vm2646, %v2625
      %2661 = vst.msk [vmem:[#allocation3 + $0x70] sm:$0xff] %vm2646, %v2627
      %2662 = vst.msk [vmem:[#allocation3 + $0x78] sm:$0xff] %vm2646, %v2629
      %v2663 = vld [vmem:[%s809] sm:$0xe]
      %v2664 = vld [vmem:[%s809 + $0x4] sm:$0xf]
      %v2665 = vld [vmem:[%s809 + $0x8] sm:$0x1]
      %v2666 = vld [vmem:[%s809 + $0xc] sm:$0xe]
      %v2667 = vld [vmem:[%s809 + $0x10] sm:$0xf]
      %v2668 = vld [vmem:[%s809 + $0x14] sm:$0x1]
      %v2669 = vld [vmem:[%s809 + $0x18] sm:$0xe]
      %v2670 = vld [vmem:[%s809 + $0x1c] sm:$0xf]
      %v2671 = vld [vmem:[%s809 + $0x20] sm:$0x1]
      %v2672 = vld [vmem:[%s809 + $0x24] sm:$0xe]
      %v2673 = vld [vmem:[%s809 + $0x28] sm:$0xf]
      %v2674 = vld [vmem:[%s809 + $0x2c] sm:$0x1]
      %v2675 = vld [vmem:[%s809 + $0x30] sm:$0xe]
      %v2676 = vld [vmem:[%s809 + $0x34] sm:$0xf]
      %v2677 = vld [vmem:[%s809 + $0x38] sm:$0x1]
      %v2678 = vld [vmem:[%s809 + $0x3c] sm:$0xe]
      %v2679 = vld [vmem:[%s809 + $0x40] sm:$0xf]
      %v2680 = vld [vmem:[%s809 + $0x44] sm:$0x1]
      %v2681 = vld [vmem:[%s809 + $0x48] sm:$0xe]
      %v2682 = vld [vmem:[%s809 + $0x4c] sm:$0xf]
      %v2683 = vld [vmem:[%s809 + $0x50] sm:$0x1]
      %v2684 = vld [vmem:[%s809 + $0x54] sm:$0xe]
      %v2685 = vld [vmem:[%s809 + $0x58] sm:$0xf]
      %v2686 = vld [vmem:[%s809 + $0x5c] sm:$0x1]
      %v2687 = vld [vmem:[%s809 + $0x60] sm:$0xe]
      %v2688 = vld [vmem:[%s809 + $0x64] sm:$0xf]
      %v2689 = vld [vmem:[%s809 + $0x68] sm:$0x1]
      %v2690 = vld [vmem:[%s809 + $0x6c] sm:$0xe]
      %v2691 = vld [vmem:[%s809 + $0x70] sm:$0xf]
      %v2692 = vld [vmem:[%s809 + $0x74] sm:$0x1]
      %v2693 = vld [vmem:[%s809 + $0x78] sm:$0xe]
      %v2694 = vld [vmem:[%s809 + $0x7c] sm:$0xf]
      %v2695 = vld [vmem:[%s809 + $0x80] sm:$0x1]
      %v2696 = vld [vmem:[%s809 + $0x84] sm:$0xe]
      %v2697 = vld [vmem:[%s809 + $0x88] sm:$0xf]
      %v2698 = vld [vmem:[%s809 + $0x8c] sm:$0x1]
      %v2699 = vld [vmem:[%s809 + $0x90] sm:$0xe]
      %v2700 = vld [vmem:[%s809 + $0x94] sm:$0xf]
      %v2701 = vld [vmem:[%s809 + $0x98] sm:$0x1]
      %v2702 = vld [vmem:[%s809 + $0x9c] sm:$0xe]
      %v2703 = vld [vmem:[%s809 + $0xa0] sm:$0xf]
      %v2704 = vld [vmem:[%s809 + $0xa4] sm:$0x1]
      %v2705 = vld [vmem:[%s809 + $0xa8] sm:$0xe]
      %v2706 = vld [vmem:[%s809 + $0xac] sm:$0xf]
      %v2707 = vld [vmem:[%s809 + $0xb0] sm:$0x1]
      %v2708 = vld [vmem:[%s809 + $0xb4] sm:$0xe]
      %v2709 = vld [vmem:[%s809 + $0xb8] sm:$0xf]
      %v2710 = vld [vmem:[%s809 + $0xbc] sm:$0x1]
      %v2759 = vrot.slane %v2663, 5
      %v2760 = vrot.slane %v2759, 4
      %v2761 = vrot.slane %v2664, 5
      %v2762 = vsel %vm1715, %v2760, %v2761
      %v2763 = vrot.slane %v2761, 4
      %v2764 = vrot.slane %v2665, 5
      %v2765 = vsel %vm1715, %v2763, %v2764
      %v2766 = vrot.slane %v2666, 5
      %v2767 = vrot.slane %v2766, 4
      %v2768 = vrot.slane %v2667, 5
      %v2769 = vsel %vm1715, %v2767, %v2768
      %v2770 = vrot.slane %v2768, 4
      %v2771 = vrot.slane %v2668, 5
      %v2772 = vsel %vm1715, %v2770, %v2771
      %v2773 = vrot.slane %v2669, 5
      %v2774 = vrot.slane %v2773, 4
      %v2775 = vrot.slane %v2670, 5
      %v2776 = vsel %vm1715, %v2774, %v2775
      %v2777 = vrot.slane %v2775, 4
      %v2778 = vrot.slane %v2671, 5
      %v2779 = vsel %vm1715, %v2777, %v2778
      %v2780 = vrot.slane %v2672, 5
      %v2781 = vrot.slane %v2780, 4
      %v2782 = vrot.slane %v2673, 5
      %v2783 = vsel %vm1715, %v2781, %v2782
      %v2784 = vrot.slane %v2782, 4
      %v2785 = vrot.slane %v2674, 5
      %v2786 = vsel %vm1715, %v2784, %v2785
      %v2787 = vrot.slane %v2675, 5
      %v2788 = vrot.slane %v2787, 4
      %v2789 = vrot.slane %v2676, 5
      %v2790 = vsel %vm1715, %v2788, %v2789
      %v2791 = vrot.slane %v2789, 4
      %v2792 = vrot.slane %v2677, 5
      %v2793 = vsel %vm1715, %v2791, %v2792
      %v2794 = vrot.slane %v2678, 5
      %v2795 = vrot.slane %v2794, 4
      %v2796 = vrot.slane %v2679, 5
      %v2797 = vsel %vm1715, %v2795, %v2796
      %v2798 = vrot.slane %v2796, 4
      %v2799 = vrot.slane %v2680, 5
      %v2800 = vsel %vm1715, %v2798, %v2799
      %v2801 = vrot.slane %v2681, 5
      %v2802 = vrot.slane %v2801, 4
      %v2803 = vrot.slane %v2682, 5
      %v2804 = vsel %vm1715, %v2802, %v2803
      %v2805 = vrot.slane %v2803, 4
      %v2806 = vrot.slane %v2683, 5
      %v2807 = vsel %vm1715, %v2805, %v2806
      %v2808 = vrot.slane %v2684, 5
      %v2809 = vrot.slane %v2808, 4
      %v2810 = vrot.slane %v2685, 5
      %v2811 = vsel %vm1715, %v2809, %v2810
      %v2812 = vrot.slane %v2810, 4
      %v2813 = vrot.slane %v2686, 5
      %v2814 = vsel %vm1715, %v2812, %v2813
      %v2815 = vrot.slane %v2687, 5
      %v2816 = vrot.slane %v2815, 4
      %v2817 = vrot.slane %v2688, 5
      %v2818 = vsel %vm1715, %v2816, %v2817
      %v2819 = vrot.slane %v2817, 4
      %v2820 = vrot.slane %v2689, 5
      %v2821 = vsel %vm1715, %v2819, %v2820
      %v2822 = vrot.slane %v2690, 5
      %v2823 = vrot.slane %v2822, 4
      %v2824 = vrot.slane %v2691, 5
      %v2825 = vsel %vm1715, %v2823, %v2824
      %v2826 = vrot.slane %v2824, 4
      %v2827 = vrot.slane %v2692, 5
      %v2828 = vsel %vm1715, %v2826, %v2827
      %v2829 = vrot.slane %v2693, 5
      %v2830 = vrot.slane %v2829, 4
      %v2831 = vrot.slane %v2694, 5
      %v2832 = vsel %vm1715, %v2830, %v2831
      %v2833 = vrot.slane %v2831, 4
      %v2834 = vrot.slane %v2695, 5
      %v2835 = vsel %vm1715, %v2833, %v2834
      %v2836 = vrot.slane %v2696, 5
      %v2837 = vrot.slane %v2836, 4
      %v2838 = vrot.slane %v2697, 5
      %v2839 = vsel %vm1715, %v2837, %v2838
      %v2840 = vrot.slane %v2838, 4
      %v2841 = vrot.slane %v2698, 5
      %v2842 = vsel %vm1715, %v2840, %v2841
      %v2843 = vrot.slane %v2699, 5
      %v2844 = vrot.slane %v2843, 4
      %v2845 = vrot.slane %v2700, 5
      %v2846 = vsel %vm1715, %v2844, %v2845
      %v2847 = vrot.slane %v2845, 4
      %v2848 = vrot.slane %v2701, 5
      %v2849 = vsel %vm1715, %v2847, %v2848
      %v2850 = vrot.slane %v2702, 5
      %v2851 = vrot.slane %v2850, 4
      %v2852 = vrot.slane %v2703, 5
      %v2853 = vsel %vm1715, %v2851, %v2852
      %v2854 = vrot.slane %v2852, 4
      %v2855 = vrot.slane %v2704, 5
      %v2856 = vsel %vm1715, %v2854, %v2855
      %v2857 = vrot.slane %v2705, 5
      %v2858 = vrot.slane %v2857, 4
      %v2859 = vrot.slane %v2706, 5
      %v2860 = vsel %vm1715, %v2858, %v2859
      %v2861 = vrot.slane %v2859, 4
      %v2862 = vrot.slane %v2707, 5
      %v2863 = vsel %vm1715, %v2861, %v2862
      %v2864 = vrot.slane %v2708, 5
      %v2865 = vrot.slane %v2864, 4
      %v2866 = vrot.slane %v2709, 5
      %v2867 = vsel %vm1715, %v2865, %v2866
      %v2868 = vrot.slane %v2866, 4
      %v2869 = vrot.slane %v2710, 5
      %v2870 = vsel %vm1715, %v2868, %v2869
      %v2871 = vunpack.c.l.b16 %v2762
      %v2872 = vunpack.c.l.b16 %v2765
      %v2873 = vunpack.c.l.b16 %v2769
      %v2874 = vunpack.c.l.b16 %v2772
      %v2875 = vunpack.c.l.b16 %v2776
      %v2876 = vunpack.c.l.b16 %v2779
      %v2877 = vunpack.c.l.b16 %v2783
      %v2878 = vunpack.c.l.b16 %v2786
      %v2879 = vunpack.c.l.b16 %v2790
      %v2880 = vunpack.c.l.b16 %v2793
      %v2881 = vunpack.c.l.b16 %v2797
      %v2882 = vunpack.c.l.b16 %v2800
      %v2883 = vunpack.c.l.b16 %v2804
      %v2884 = vunpack.c.l.b16 %v2807
      %v2885 = vunpack.c.l.b16 %v2811
      %v2886 = vunpack.c.l.b16 %v2814
      %v2887 = vunpack.c.l.b16 %v2818
      %v2888 = vunpack.c.l.b16 %v2821
      %v2889 = vunpack.c.l.b16 %v2825
      %v2890 = vunpack.c.l.b16 %v2828
      %v2891 = vunpack.c.l.b16 %v2832
      %v2892 = vunpack.c.l.b16 %v2835
      %v2893 = vunpack.c.l.b16 %v2839
      %v2894 = vunpack.c.l.b16 %v2842
      %v2895 = vunpack.c.l.b16 %v2846
      %v2896 = vunpack.c.l.b16 %v2849
      %v2897 = vunpack.c.l.b16 %v2853
      %v2898 = vunpack.c.l.b16 %v2856
      %v2899 = vunpack.c.l.b16 %v2860
      %v2900 = vunpack.c.l.b16 %v2863
      %v2901 = vunpack.c.l.b16 %v2867
      %v2902 = vunpack.c.l.b16 %v2870
      %v2903 = vpack.c.b16 %v2872, %v2871
      %v2904 = vpack.c.b16 %v2874, %v2873
      %v2905 = vpack.c.b16 %v2876, %v2875
      %v2906 = vpack.c.b16 %v2878, %v2877
      %v2907 = vpack.c.b16 %v2880, %v2879
      %v2908 = vpack.c.b16 %v2882, %v2881
      %v2909 = vpack.c.b16 %v2884, %v2883
      %v2910 = vpack.c.b16 %v2886, %v2885
      %v2911 = vpack.c.b16 %v2888, %v2887
      %v2912 = vpack.c.b16 %v2890, %v2889
      %v2913 = vpack.c.b16 %v2892, %v2891
      %v2914 = vpack.c.b16 %v2894, %v2893
      %v2915 = vpack.c.b16 %v2896, %v2895
      %v2916 = vpack.c.b16 %v2898, %v2897
      %v2917 = vpack.c.b16 %v2900, %v2899
      %v2918 = vpack.c.b16 %v2902, %v2901
      %2919 = vrot.lane.b32.xlu0 %v2903, 20
      %v2920 = vpop.permute.xlu0 %2919
      %2921 = vrot.lane.b32.xlu0 %v2904, 20
      %v2922 = vpop.permute.xlu0 %2921
      %2923 = vrot.lane.b32.xlu0 %v2905, 20
      %v2924 = vpop.permute.xlu0 %2923
      %2925 = vrot.lane.b32.xlu0 %v2906, 20
      %v2926 = vpop.permute.xlu0 %2925
      %2927 = vrot.lane.b32.xlu0 %v2907, 20
      %v2928 = vpop.permute.xlu0 %2927
      %2929 = vrot.lane.b32.xlu0 %v2908, 20
      %v2930 = vpop.permute.xlu0 %2929
      %2931 = vrot.lane.b32.xlu0 %v2909, 20
      %v2932 = vpop.permute.xlu0 %2931
      %2933 = vrot.lane.b32.xlu0 %v2910, 20
      %v2934 = vpop.permute.xlu0 %2933
      %2935 = vrot.lane.b32.xlu0 %v2911, 20
      %v2936 = vpop.permute.xlu0 %2935
      %2937 = vrot.lane.b32.xlu0 %v2912, 20
      %v2938 = vpop.permute.xlu0 %2937
      %2939 = vrot.lane.b32.xlu0 %v2913, 20
      %v2940 = vpop.permute.xlu0 %2939
      %2941 = vrot.lane.b32.xlu0 %v2914, 20
      %v2942 = vpop.permute.xlu0 %2941
      %2943 = vrot.lane.b32.xlu0 %v2915, 20
      %v2944 = vpop.permute.xlu0 %2943
      %2945 = vrot.lane.b32.xlu0 %v2916, 20
      %v2946 = vpop.permute.xlu0 %2945
      %2947 = vrot.lane.b32.xlu0 %v2917, 20
      %v2948 = vpop.permute.xlu0 %2947
      %2949 = vrot.lane.b32.xlu0 %v2918, 20
      %v2950 = vpop.permute.xlu0 %2949
      %vm2967 = vcmask 195744
      %2968 = vst.msk [vmem:[#allocation3] sm:$0xff] %vm2967, %v2920
      %2969 = vst.msk [vmem:[#allocation3 + $0x8] sm:$0xff] %vm2967, %v2922
      %2970 = vst.msk [vmem:[#allocation3 + $0x10] sm:$0xff] %vm2967, %v2924
      %2971 = vst.msk [vmem:[#allocation3 + $0x18] sm:$0xff] %vm2967, %v2926
      %2972 = vst.msk [vmem:[#allocation3 + $0x20] sm:$0xff] %vm2967, %v2928
      %2973 = vst.msk [vmem:[#allocation3 + $0x28] sm:$0xff] %vm2967, %v2930
      %2974 = vst.msk [vmem:[#allocation3 + $0x30] sm:$0xff] %vm2967, %v2932
      %2975 = vst.msk [vmem:[#allocation3 + $0x38] sm:$0xff] %vm2967, %v2934
      %2976 = vst.msk [vmem:[#allocation3 + $0x40] sm:$0xff] %vm2967, %v2936
      %2977 = vst.msk [vmem:[#allocation3 + $0x48] sm:$0xff] %vm2967, %v2938
      %2978 = vst.msk [vmem:[#allocation3 + $0x50] sm:$0xff] %vm2967, %v2940
      %2979 = vst.msk [vmem:[#allocation3 + $0x58] sm:$0xff] %vm2967, %v2942
      %2980 = vst.msk [vmem:[#allocation3 + $0x60] sm:$0xff] %vm2967, %v2944
      %2981 = vst.msk [vmem:[#allocation3 + $0x68] sm:$0xff] %vm2967, %v2946
      %2982 = vst.msk [vmem:[#allocation3 + $0x70] sm:$0xff] %vm2967, %v2948
      %2983 = vst.msk [vmem:[#allocation3 + $0x78] sm:$0xff] %vm2967, %v2950
      %s2984 = scalar_lea.vmem [#allocation2], 24
      %v2985 = vld [vmem:[%s2984] sm:$0xf]
      %v2986 = vld [vmem:[%s2984 + $0x4] sm:$0xf]
      %v2987 = vld [vmem:[%s2984 + $0xc] sm:$0xf]
      %v2988 = vld [vmem:[%s2984 + $0x10] sm:$0xf]
      %v2989 = vld [vmem:[%s2984 + $0x18] sm:$0xf]
      %v2990 = vld [vmem:[%s2984 + $0x1c] sm:$0xf]
      %v2991 = vld [vmem:[%s2984 + $0x24] sm:$0xf]
      %v2992 = vld [vmem:[%s2984 + $0x28] sm:$0xf]
      %v2993 = vld [vmem:[%s2984 + $0x30] sm:$0xf]
      %v2994 = vld [vmem:[%s2984 + $0x34] sm:$0xf]
      %v2995 = vld [vmem:[%s2984 + $0x3c] sm:$0xf]
      %v2996 = vld [vmem:[%s2984 + $0x40] sm:$0xf]
      %v2997 = vld [vmem:[%s2984 + $0x48] sm:$0xf]
      %v2998 = vld [vmem:[%s2984 + $0x4c] sm:$0xf]
      %v2999 = vld [vmem:[%s2984 + $0x54] sm:$0xf]
      %v3000 = vld [vmem:[%s2984 + $0x58] sm:$0xf]
      %v3001 = vld [vmem:[%s2984 + $0x60] sm:$0xf]
      %v3002 = vld [vmem:[%s2984 + $0x64] sm:$0xf]
      %v3003 = vld [vmem:[%s2984 + $0x6c] sm:$0xf]
      %v3004 = vld [vmem:[%s2984 + $0x70] sm:$0xf]
      %v3005 = vld [vmem:[%s2984 + $0x78] sm:$0xf]
      %v3006 = vld [vmem:[%s2984 + $0x7c] sm:$0xf]
      %v3007 = vld [vmem:[%s2984 + $0x84] sm:$0xf]
      %v3008 = vld [vmem:[%s2984 + $0x88] sm:$0xf]
      %v3009 = vld [vmem:[%s2984 + $0x90] sm:$0xf]
      %v3010 = vld [vmem:[%s2984 + $0x94] sm:$0xf]
      %v3011 = vld [vmem:[%s2984 + $0x9c] sm:$0xf]
      %v3012 = vld [vmem:[%s2984 + $0xa0] sm:$0xf]
      %v3013 = vld [vmem:[%s2984 + $0xa8] sm:$0xf]
      %v3014 = vld [vmem:[%s2984 + $0xac] sm:$0xf]
      %v3015 = vld [vmem:[%s2984 + $0xb4] sm:$0xf]
      %v3016 = vld [vmem:[%s2984 + $0xb8] sm:$0xf]
      %v3049 = vunpack.c.l.b16 %v2985
      %v3050 = vunpack.c.l.b16 %v2986
      %v3051 = vunpack.c.l.b16 %v2987
      %v3052 = vunpack.c.l.b16 %v2988
      %v3053 = vunpack.c.l.b16 %v2989
      %v3054 = vunpack.c.l.b16 %v2990
      %v3055 = vunpack.c.l.b16 %v2991
      %v3056 = vunpack.c.l.b16 %v2992
      %v3057 = vunpack.c.l.b16 %v2993
      %v3058 = vunpack.c.l.b16 %v2994
      %v3059 = vunpack.c.l.b16 %v2995
      %v3060 = vunpack.c.l.b16 %v2996
      %v3061 = vunpack.c.l.b16 %v2997
      %v3062 = vunpack.c.l.b16 %v2998
      %v3063 = vunpack.c.l.b16 %v2999
      %v3064 = vunpack.c.l.b16 %v3000
      %v3065 = vunpack.c.l.b16 %v3001
      %v3066 = vunpack.c.l.b16 %v3002
      %v3067 = vunpack.c.l.b16 %v3003
      %v3068 = vunpack.c.l.b16 %v3004
      %v3069 = vunpack.c.l.b16 %v3005
      %v3070 = vunpack.c.l.b16 %v3006
      %v3071 = vunpack.c.l.b16 %v3007
      %v3072 = vunpack.c.l.b16 %v3008
      %v3073 = vunpack.c.l.b16 %v3009
      %v3074 = vunpack.c.l.b16 %v3010
      %v3075 = vunpack.c.l.b16 %v3011
      %v3076 = vunpack.c.l.b16 %v3012
      %v3077 = vunpack.c.l.b16 %v3013
      %v3078 = vunpack.c.l.b16 %v3014
      %v3079 = vunpack.c.l.b16 %v3015
      %v3080 = vunpack.c.l.b16 %v3016
      %v3081 = vpack.c.b16 %v3050, %v3049
      %v3082 = vpack.c.b16 %v3052, %v3051
      %v3083 = vpack.c.b16 %v3054, %v3053
      %v3084 = vpack.c.b16 %v3056, %v3055
      %v3085 = vpack.c.b16 %v3058, %v3057
      %v3086 = vpack.c.b16 %v3060, %v3059
      %v3087 = vpack.c.b16 %v3062, %v3061
      %v3088 = vpack.c.b16 %v3064, %v3063
      %v3089 = vpack.c.b16 %v3066, %v3065
      %v3090 = vpack.c.b16 %v3068, %v3067
      %v3091 = vpack.c.b16 %v3070, %v3069
      %v3092 = vpack.c.b16 %v3072, %v3071
      %v3093 = vpack.c.b16 %v3074, %v3073
      %v3094 = vpack.c.b16 %v3076, %v3075
      %v3095 = vpack.c.b16 %v3078, %v3077
      %v3096 = vpack.c.b16 %v3080, %v3079
      %3097 = vrot.lane.b32.xlu0 %v3081, 24
      %v3098 = vpop.permute.xlu0 %3097
      %3099 = vrot.lane.b32.xlu0 %v3082, 24
      %v3100 = vpop.permute.xlu0 %3099
      %3101 = vrot.lane.b32.xlu0 %v3083, 24
      %v3102 = vpop.permute.xlu0 %3101
      %3103 = vrot.lane.b32.xlu0 %v3084, 24
      %v3104 = vpop.permute.xlu0 %3103
      %3105 = vrot.lane.b32.xlu0 %v3085, 24
      %v3106 = vpop.permute.xlu0 %3105
      %3107 = vrot.lane.b32.xlu0 %v3086, 24
      %v3108 = vpop.permute.xlu0 %3107
      %3109 = vrot.lane.b32.xlu0 %v3087, 24
      %v3110 = vpop.permute.xlu0 %3109
      %3111 = vrot.lane.b32.xlu0 %v3088, 24
      %v3112 = vpop.permute.xlu0 %3111
      %3113 = vrot.lane.b32.xlu0 %v3089, 24
      %v3114 = vpop.permute.xlu0 %3113
      %3115 = vrot.lane.b32.xlu0 %v3090, 24
      %v3116 = vpop.permute.xlu0 %3115
      %3117 = vrot.lane.b32.xlu0 %v3091, 24
      %v3118 = vpop.permute.xlu0 %3117
      %3119 = vrot.lane.b32.xlu0 %v3092, 24
      %v3120 = vpop.permute.xlu0 %3119
      %3121 = vrot.lane.b32.xlu0 %v3093, 24
      %v3122 = vpop.permute.xlu0 %3121
      %3123 = vrot.lane.b32.xlu0 %v3094, 24
      %v3124 = vpop.permute.xlu0 %3123
      %3125 = vrot.lane.b32.xlu0 %v3095, 24
      %v3126 = vpop.permute.xlu0 %3125
      %3127 = vrot.lane.b32.xlu0 %v3096, 24
      %v3128 = vpop.permute.xlu0 %3127
      %vm3145 = vcmask 228544
      %3146 = vst.msk [vmem:[#allocation3] sm:$0xff] %vm3145, %v3098
      %3147 = vst.msk [vmem:[#allocation3 + $0x8] sm:$0xff] %vm3145, %v3100
      %3148 = vst.msk [vmem:[#allocation3 + $0x10] sm:$0xff] %vm3145, %v3102
      %3149 = vst.msk [vmem:[#allocation3 + $0x18] sm:$0xff] %vm3145, %v3104
      %3150 = vst.msk [vmem:[#allocation3 + $0x20] sm:$0xff] %vm3145, %v3106
      %3151 = vst.msk [vmem:[#allocation3 + $0x28] sm:$0xff] %vm3145, %v3108
      %3152 = vst.msk [vmem:[#allocation3 + $0x30] sm:$0xff] %vm3145, %v3110
      %3153 = vst.msk [vmem:[#allocation3 + $0x38] sm:$0xff] %vm3145, %v3112
      %3154 = vst.msk [vmem:[#allocation3 + $0x40] sm:$0xff] %vm3145, %v3114
      %3155 = vst.msk [vmem:[#allocation3 + $0x48] sm:$0xff] %vm3145, %v3116
      %3156 = vst.msk [vmem:[#allocation3 + $0x50] sm:$0xff] %vm3145, %v3118
      %3157 = vst.msk [vmem:[#allocation3 + $0x58] sm:$0xff] %vm3145, %v3120
      %3158 = vst.msk [vmem:[#allocation3 + $0x60] sm:$0xff] %vm3145, %v3122
      %3159 = vst.msk [vmem:[#allocation3 + $0x68] sm:$0xff] %vm3145, %v3124
      %3160 = vst.msk [vmem:[#allocation3 + $0x70] sm:$0xff] %vm3145, %v3126
      %3161 = vst.msk [vmem:[#allocation3 + $0x78] sm:$0xff] %vm3145, %v3128
      %v3162 = vld [vmem:[%s2984] sm:$0xf]
      %v3163 = vld [vmem:[%s2984 + $0x4] sm:$0xf]
      %v3164 = vld [vmem:[%s2984 + $0x8] sm:$0x1]
      %v3165 = vld [vmem:[%s2984 + $0xc] sm:$0xf]
      %v3166 = vld [vmem:[%s2984 + $0x10] sm:$0xf]
      %v3167 = vld [vmem:[%s2984 + $0x14] sm:$0x1]
      %v3168 = vld [vmem:[%s2984 + $0x18] sm:$0xf]
      %v3169 = vld [vmem:[%s2984 + $0x1c] sm:$0xf]
      %v3170 = vld [vmem:[%s2984 + $0x20] sm:$0x1]
      %v3171 = vld [vmem:[%s2984 + $0x24] sm:$0xf]
      %v3172 = vld [vmem:[%s2984 + $0x28] sm:$0xf]
      %v3173 = vld [vmem:[%s2984 + $0x2c] sm:$0x1]
      %v3174 = vld [vmem:[%s2984 + $0x30] sm:$0xf]
      %v3175 = vld [vmem:[%s2984 + $0x34] sm:$0xf]
      %v3176 = vld [vmem:[%s2984 + $0x38] sm:$0x1]
      %v3177 = vld [vmem:[%s2984 + $0x3c] sm:$0xf]
      %v3178 = vld [vmem:[%s2984 + $0x40] sm:$0xf]
      %v3179 = vld [vmem:[%s2984 + $0x44] sm:$0x1]
      %v3180 = vld [vmem:[%s2984 + $0x48] sm:$0xf]
      %v3181 = vld [vmem:[%s2984 + $0x4c] sm:$0xf]
      %v3182 = vld [vmem:[%s2984 + $0x50] sm:$0x1]
      %v3183 = vld [vmem:[%s2984 + $0x54] sm:$0xf]
      %v3184 = vld [vmem:[%s2984 + $0x58] sm:$0xf]
      %v3185 = vld [vmem:[%s2984 + $0x5c] sm:$0x1]
      %v3186 = vld [vmem:[%s2984 + $0x60] sm:$0xf]
      %v3187 = vld [vmem:[%s2984 + $0x64] sm:$0xf]
      %v3188 = vld [vmem:[%s2984 + $0x68] sm:$0x1]
      %v3189 = vld [vmem:[%s2984 + $0x6c] sm:$0xf]
      %v3190 = vld [vmem:[%s2984 + $0x70] sm:$0xf]
      %v3191 = vld [vmem:[%s2984 + $0x74] sm:$0x1]
      %v3192 = vld [vmem:[%s2984 + $0x78] sm:$0xf]
      %v3193 = vld [vmem:[%s2984 + $0x7c] sm:$0xf]
      %v3194 = vld [vmem:[%s2984 + $0x80] sm:$0x1]
      %v3195 = vld [vmem:[%s2984 + $0x84] sm:$0xf]
      %v3196 = vld [vmem:[%s2984 + $0x88] sm:$0xf]
      %v3197 = vld [vmem:[%s2984 + $0x8c] sm:$0x1]
      %v3198 = vld [vmem:[%s2984 + $0x90] sm:$0xf]
      %v3199 = vld [vmem:[%s2984 + $0x94] sm:$0xf]
      %v3200 = vld [vmem:[%s2984 + $0x98] sm:$0x1]
      %v3201 = vld [vmem:[%s2984 + $0x9c] sm:$0xf]
      %v3202 = vld [vmem:[%s2984 + $0xa0] sm:$0xf]
      %v3203 = vld [vmem:[%s2984 + $0xa4] sm:$0x1]
      %v3204 = vld [vmem:[%s2984 + $0xa8] sm:$0xf]
      %v3205 = vld [vmem:[%s2984 + $0xac] sm:$0xf]
      %v3206 = vld [vmem:[%s2984 + $0xb0] sm:$0x1]
      %v3207 = vld [vmem:[%s2984 + $0xb4] sm:$0xf]
      %v3208 = vld [vmem:[%s2984 + $0xb8] sm:$0xf]
      %v3209 = vld [vmem:[%s2984 + $0xbc] sm:$0x1]
      %v3211 = vshrl.u32 %v3162, 16
      %v3213 = vrot.slane %v3211, 4
      %v3214 = vshll.u32 %v3162, 16
      %v3216 = vrot.slane %v3214, 5
      %v3217 = vor.u32 %v3213, %v3216
      %v3218 = vrot.slane %v3217, 4
      %v3220 = vshll.u32 %v3163, 16
      %v3222 = vrot.slane %v3220, 5
      %v3223 = vsel %vm1119, %v3218, %v3222
      %v3224 = vshrl.u32 %v3163, 16
      %v3226 = vrot.slane %v3224, 4
      %v3227 = vor.u32 %v3226, %v3222
      %v3228 = vrot.slane %v3227, 4
      %v3230 = vshll.u32 %v3164, 16
      %v3232 = vrot.slane %v3230, 5
      %v3233 = vsel %vm1119, %v3228, %v3232
      %v3235 = vshrl.u32 %v3165, 16
      %v3237 = vrot.slane %v3235, 4
      %v3238 = vshll.u32 %v3165, 16
      %v3240 = vrot.slane %v3238, 5
      %v3241 = vor.u32 %v3237, %v3240
      %v3242 = vrot.slane %v3241, 4
      %v3244 = vshll.u32 %v3166, 16
      %v3246 = vrot.slane %v3244, 5
      %v3247 = vsel %vm1119, %v3242, %v3246
      %v3248 = vshrl.u32 %v3166, 16
      %v3250 = vrot.slane %v3248, 4
      %v3251 = vor.u32 %v3250, %v3246
      %v3252 = vrot.slane %v3251, 4
      %v3254 = vshll.u32 %v3167, 16
      %v3256 = vrot.slane %v3254, 5
      %v3257 = vsel %vm1119, %v3252, %v3256
      %v3259 = vshrl.u32 %v3168, 16
      %v3261 = vrot.slane %v3259, 4
      %v3262 = vshll.u32 %v3168, 16
      %v3264 = vrot.slane %v3262, 5
      %v3265 = vor.u32 %v3261, %v3264
      %v3266 = vrot.slane %v3265, 4
      %v3268 = vshll.u32 %v3169, 16
      %v3270 = vrot.slane %v3268, 5
      %v3271 = vsel %vm1119, %v3266, %v3270
      %v3272 = vshrl.u32 %v3169, 16
      %v3274 = vrot.slane %v3272, 4
      %v3275 = vor.u32 %v3274, %v3270
      %v3276 = vrot.slane %v3275, 4
      %v3278 = vshll.u32 %v3170, 16
      %v3280 = vrot.slane %v3278, 5
      %v3281 = vsel %vm1119, %v3276, %v3280
      %v3283 = vshrl.u32 %v3171, 16
      %v3285 = vrot.slane %v3283, 4
      %v3286 = vshll.u32 %v3171, 16
      %v3288 = vrot.slane %v3286, 5
      %v3289 = vor.u32 %v3285, %v3288
      %v3290 = vrot.slane %v3289, 4
      %v3292 = vshll.u32 %v3172, 16
      %v3294 = vrot.slane %v3292, 5
      %v3295 = vsel %vm1119, %v3290, %v3294
      %v3296 = vshrl.u32 %v3172, 16
      %v3298 = vrot.slane %v3296, 4
      %v3299 = vor.u32 %v3298, %v3294
      %v3300 = vrot.slane %v3299, 4
      %v3302 = vshll.u32 %v3173, 16
      %v3304 = vrot.slane %v3302, 5
      %v3305 = vsel %vm1119, %v3300, %v3304
      %v3307 = vshrl.u32 %v3174, 16
      %v3309 = vrot.slane %v3307, 4
      %v3310 = vshll.u32 %v3174, 16
      %v3312 = vrot.slane %v3310, 5
      %v3313 = vor.u32 %v3309, %v3312
      %v3314 = vrot.slane %v3313, 4
      %v3316 = vshll.u32 %v3175, 16
      %v3318 = vrot.slane %v3316, 5
      %v3319 = vsel %vm1119, %v3314, %v3318
      %v3320 = vshrl.u32 %v3175, 16
      %v3322 = vrot.slane %v3320, 4
      %v3323 = vor.u32 %v3322, %v3318
      %v3324 = vrot.slane %v3323, 4
      %v3326 = vshll.u32 %v3176, 16
      %v3328 = vrot.slane %v3326, 5
      %v3329 = vsel %vm1119, %v3324, %v3328
      %v3331 = vshrl.u32 %v3177, 16
      %v3333 = vrot.slane %v3331, 4
      %v3334 = vshll.u32 %v3177, 16
      %v3336 = vrot.slane %v3334, 5
      %v3337 = vor.u32 %v3333, %v3336
      %v3338 = vrot.slane %v3337, 4
      %v3340 = vshll.u32 %v3178, 16
      %v3342 = vrot.slane %v3340, 5
      %v3343 = vsel %vm1119, %v3338, %v3342
      %v3344 = vshrl.u32 %v3178, 16
      %v3346 = vrot.slane %v3344, 4
      %v3347 = vor.u32 %v3346, %v3342
      %v3348 = vrot.slane %v3347, 4
      %v3350 = vshll.u32 %v3179, 16
      %v3352 = vrot.slane %v3350, 5
      %v3353 = vsel %vm1119, %v3348, %v3352
      %v3355 = vshrl.u32 %v3180, 16
      %v3357 = vrot.slane %v3355, 4
      %v3358 = vshll.u32 %v3180, 16
      %v3360 = vrot.slane %v3358, 5
      %v3361 = vor.u32 %v3357, %v3360
      %v3362 = vrot.slane %v3361, 4
      %v3364 = vshll.u32 %v3181, 16
      %v3366 = vrot.slane %v3364, 5
      %v3367 = vsel %vm1119, %v3362, %v3366
      %v3368 = vshrl.u32 %v3181, 16
      %v3370 = vrot.slane %v3368, 4
      %v3371 = vor.u32 %v3370, %v3366
      %v3372 = vrot.slane %v3371, 4
      %v3374 = vshll.u32 %v3182, 16
      %v3376 = vrot.slane %v3374, 5
      %v3377 = vsel %vm1119, %v3372, %v3376
      %v3379 = vshrl.u32 %v3183, 16
      %v3381 = vrot.slane %v3379, 4
      %v3382 = vshll.u32 %v3183, 16
      %v3384 = vrot.slane %v3382, 5
      %v3385 = vor.u32 %v3381, %v3384
      %v3386 = vrot.slane %v3385, 4
      %v3388 = vshll.u32 %v3184, 16
      %v3390 = vrot.slane %v3388, 5
      %v3391 = vsel %vm1119, %v3386, %v3390
      %v3392 = vshrl.u32 %v3184, 16
      %v3394 = vrot.slane %v3392, 4
      %v3395 = vor.u32 %v3394, %v3390
      %v3396 = vrot.slane %v3395, 4
      %v3398 = vshll.u32 %v3185, 16
      %v3400 = vrot.slane %v3398, 5
      %v3401 = vsel %vm1119, %v3396, %v3400
      %v3403 = vshrl.u32 %v3186, 16
      %v3405 = vrot.slane %v3403, 4
      %v3406 = vshll.u32 %v3186, 16
      %v3408 = vrot.slane %v3406, 5
      %v3409 = vor.u32 %v3405, %v3408
      %v3410 = vrot.slane %v3409, 4
      %v3412 = vshll.u32 %v3187, 16
      %v3414 = vrot.slane %v3412, 5
      %v3415 = vsel %vm1119, %v3410, %v3414
      %v3416 = vshrl.u32 %v3187, 16
      %v3418 = vrot.slane %v3416, 4
      %v3419 = vor.u32 %v3418, %v3414
      %v3420 = vrot.slane %v3419, 4
      %v3422 = vshll.u32 %v3188, 16
      %v3424 = vrot.slane %v3422, 5
      %v3425 = vsel %vm1119, %v3420, %v3424
      %v3427 = vshrl.u32 %v3189, 16
      %v3429 = vrot.slane %v3427, 4
      %v3430 = vshll.u32 %v3189, 16
      %v3432 = vrot.slane %v3430, 5
      %v3433 = vor.u32 %v3429, %v3432
      %v3434 = vrot.slane %v3433, 4
      %v3436 = vshll.u32 %v3190, 16
      %v3438 = vrot.slane %v3436, 5
      %v3439 = vsel %vm1119, %v3434, %v3438
      %v3440 = vshrl.u32 %v3190, 16
      %v3442 = vrot.slane %v3440, 4
      %v3443 = vor.u32 %v3442, %v3438
      %v3444 = vrot.slane %v3443, 4
      %v3446 = vshll.u32 %v3191, 16
      %v3448 = vrot.slane %v3446, 5
      %v3449 = vsel %vm1119, %v3444, %v3448
      %v3451 = vshrl.u32 %v3192, 16
      %v3453 = vrot.slane %v3451, 4
      %v3454 = vshll.u32 %v3192, 16
      %v3456 = vrot.slane %v3454, 5
      %v3457 = vor.u32 %v3453, %v3456
      %v3458 = vrot.slane %v3457, 4
      %v3460 = vshll.u32 %v3193, 16
      %v3462 = vrot.slane %v3460, 5
      %v3463 = vsel %vm1119, %v3458, %v3462
      %v3464 = vshrl.u32 %v3193, 16
      %v3466 = vrot.slane %v3464, 4
      %v3467 = vor.u32 %v3466, %v3462
      %v3468 = vrot.slane %v3467, 4
      %v3470 = vshll.u32 %v3194, 16
      %v3472 = vrot.slane %v3470, 5
      %v3473 = vsel %vm1119, %v3468, %v3472
      %v3475 = vshrl.u32 %v3195, 16
      %v3477 = vrot.slane %v3475, 4
      %v3478 = vshll.u32 %v3195, 16
      %v3480 = vrot.slane %v3478, 5
      %v3481 = vor.u32 %v3477, %v3480
      %v3482 = vrot.slane %v3481, 4
      %v3484 = vshll.u32 %v3196, 16
      %v3486 = vrot.slane %v3484, 5
      %v3487 = vsel %vm1119, %v3482, %v3486
      %v3488 = vshrl.u32 %v3196, 16
      %v3490 = vrot.slane %v3488, 4
      %v3491 = vor.u32 %v3490, %v3486
      %v3492 = vrot.slane %v3491, 4
      %v3494 = vshll.u32 %v3197, 16
      %v3496 = vrot.slane %v3494, 5
      %v3497 = vsel %vm1119, %v3492, %v3496
      %v3499 = vshrl.u32 %v3198, 16
      %v3501 = vrot.slane %v3499, 4
      %v3502 = vshll.u32 %v3198, 16
      %v3504 = vrot.slane %v3502, 5
      %v3505 = vor.u32 %v3501, %v3504
      %v3506 = vrot.slane %v3505, 4
      %v3508 = vshll.u32 %v3199, 16
      %v3510 = vrot.slane %v3508, 5
      %v3511 = vsel %vm1119, %v3506, %v3510
      %v3512 = vshrl.u32 %v3199, 16
      %v3514 = vrot.slane %v3512, 4
      %v3515 = vor.u32 %v3514, %v3510
      %v3516 = vrot.slane %v3515, 4
      %v3518 = vshll.u32 %v3200, 16
      %v3520 = vrot.slane %v3518, 5
      %v3521 = vsel %vm1119, %v3516, %v3520
      %v3523 = vshrl.u32 %v3201, 16
      %v3525 = vrot.slane %v3523, 4
      %v3526 = vshll.u32 %v3201, 16
      %v3528 = vrot.slane %v3526, 5
      %v3529 = vor.u32 %v3525, %v3528
      %v3530 = vrot.slane %v3529, 4
      %v3532 = vshll.u32 %v3202, 16
      %v3534 = vrot.slane %v3532, 5
      %v3535 = vsel %vm1119, %v3530, %v3534
      %v3536 = vshrl.u32 %v3202, 16
      %v3538 = vrot.slane %v3536, 4
      %v3539 = vor.u32 %v3538, %v3534
      %v3540 = vrot.slane %v3539, 4
      %v3542 = vshll.u32 %v3203, 16
      %v3544 = vrot.slane %v3542, 5
      %v3545 = vsel %vm1119, %v3540, %v3544
      %v3547 = vshrl.u32 %v3204, 16
      %v3549 = vrot.slane %v3547, 4
      %v3550 = vshll.u32 %v3204, 16
      %v3552 = vrot.slane %v3550, 5
      %v3553 = vor.u32 %v3549, %v3552
      %v3554 = vrot.slane %v3553, 4
      %v3556 = vshll.u32 %v3205, 16
      %v3558 = vrot.slane %v3556, 5
      %v3559 = vsel %vm1119, %v3554, %v3558
      %v3560 = vshrl.u32 %v3205, 16
      %v3562 = vrot.slane %v3560, 4
      %v3563 = vor.u32 %v3562, %v3558
      %v3564 = vrot.slane %v3563, 4
      %v3566 = vshll.u32 %v3206, 16
      %v3568 = vrot.slane %v3566, 5
      %v3569 = vsel %vm1119, %v3564, %v3568
      %v3571 = vshrl.u32 %v3207, 16
      %v3573 = vrot.slane %v3571, 4
      %v3574 = vshll.u32 %v3207, 16
      %v3576 = vrot.slane %v3574, 5
      %v3577 = vor.u32 %v3573, %v3576
      %v3578 = vrot.slane %v3577, 4
      %v3580 = vshll.u32 %v3208, 16
      %v3582 = vrot.slane %v3580, 5
      %v3583 = vsel %vm1119, %v3578, %v3582
      %v3584 = vshrl.u32 %v3208, 16
      %v3586 = vrot.slane %v3584, 4
      %v3587 = vor.u32 %v3586, %v3582
      %v3588 = vrot.slane %v3587, 4
      %v3590 = vshll.u32 %v3209, 16
      %v3592 = vrot.slane %v3590, 5
      %v3593 = vsel %vm1119, %v3588, %v3592
      %v3594 = vunpack.c.l.b16 %v3223
      %v3595 = vunpack.c.l.b16 %v3233
      %v3596 = vunpack.c.l.b16 %v3247
      %v3597 = vunpack.c.l.b16 %v3257
      %v3598 = vunpack.c.l.b16 %v3271
      %v3599 = vunpack.c.l.b16 %v3281
      %v3600 = vunpack.c.l.b16 %v3295
      %v3601 = vunpack.c.l.b16 %v3305
      %v3602 = vunpack.c.l.b16 %v3319
      %v3603 = vunpack.c.l.b16 %v3329
      %v3604 = vunpack.c.l.b16 %v3343
      %v3605 = vunpack.c.l.b16 %v3353
      %v3606 = vunpack.c.l.b16 %v3367
      %v3607 = vunpack.c.l.b16 %v3377
      %v3608 = vunpack.c.l.b16 %v3391
      %v3609 = vunpack.c.l.b16 %v3401
      %v3610 = vunpack.c.l.b16 %v3415
      %v3611 = vunpack.c.l.b16 %v3425
      %v3612 = vunpack.c.l.b16 %v3439
      %v3613 = vunpack.c.l.b16 %v3449
      %v3614 = vunpack.c.l.b16 %v3463
      %v3615 = vunpack.c.l.b16 %v3473
      %v3616 = vunpack.c.l.b16 %v3487
      %v3617 = vunpack.c.l.b16 %v3497
      %v3618 = vunpack.c.l.b16 %v3511
      %v3619 = vunpack.c.l.b16 %v3521
      %v3620 = vunpack.c.l.b16 %v3535
      %v3621 = vunpack.c.l.b16 %v3545
      %v3622 = vunpack.c.l.b16 %v3559
      %v3623 = vunpack.c.l.b16 %v3569
      %v3624 = vunpack.c.l.b16 %v3583
      %v3625 = vunpack.c.l.b16 %v3593
      %v3626 = vpack.c.b16 %v3595, %v3594
      %v3627 = vpack.c.b16 %v3597, %v3596
      %v3628 = vpack.c.b16 %v3599, %v3598
      %v3629 = vpack.c.b16 %v3601, %v3600
      %v3630 = vpack.c.b16 %v3603, %v3602
      %v3631 = vpack.c.b16 %v3605, %v3604
      %v3632 = vpack.c.b16 %v3607, %v3606
      %v3633 = vpack.c.b16 %v3609, %v3608
      %v3634 = vpack.c.b16 %v3611, %v3610
      %v3635 = vpack.c.b16 %v3613, %v3612
      %v3636 = vpack.c.b16 %v3615, %v3614
      %v3637 = vpack.c.b16 %v3617, %v3616
      %v3638 = vpack.c.b16 %v3619, %v3618
      %v3639 = vpack.c.b16 %v3621, %v3620
      %v3640 = vpack.c.b16 %v3623, %v3622
      %v3641 = vpack.c.b16 %v3625, %v3624
      %3642 = vrot.lane.b32.xlu0 %v3626, 28
      %v3643 = vpop.permute.xlu0 %3642
      %3644 = vrot.lane.b32.xlu0 %v3627, 28
      %v3645 = vpop.permute.xlu0 %3644
      %3646 = vrot.lane.b32.xlu0 %v3628, 28
      %v3647 = vpop.permute.xlu0 %3646
      %3648 = vrot.lane.b32.xlu0 %v3629, 28
      %v3649 = vpop.permute.xlu0 %3648
      %3650 = vrot.lane.b32.xlu0 %v3630, 28
      %v3651 = vpop.permute.xlu0 %3650
      %3652 = vrot.lane.b32.xlu0 %v3631, 28
      %v3653 = vpop.permute.xlu0 %3652
      %3654 = vrot.lane.b32.xlu0 %v3632, 28
      %v3655 = vpop.permute.xlu0 %3654
      %3656 = vrot.lane.b32.xlu0 %v3633, 28
      %v3657 = vpop.permute.xlu0 %3656
      %3658 = vrot.lane.b32.xlu0 %v3634, 28
      %v3659 = vpop.permute.xlu0 %3658
      %3660 = vrot.lane.b32.xlu0 %v3635, 28
      %v3661 = vpop.permute.xlu0 %3660
      %3662 = vrot.lane.b32.xlu0 %v3636, 28
      %v3663 = vpop.permute.xlu0 %3662
      %3664 = vrot.lane.b32.xlu0 %v3637, 28
      %v3665 = vpop.permute.xlu0 %3664
      %3666 = vrot.lane.b32.xlu0 %v3638, 28
      %v3667 = vpop.permute.xlu0 %3666
      %3668 = vrot.lane.b32.xlu0 %v3639, 28
      %v3669 = vpop.permute.xlu0 %3668
      %3670 = vrot.lane.b32.xlu0 %v3640, 28
      %v3671 = vpop.permute.xlu0 %3670
      %3672 = vrot.lane.b32.xlu0 %v3641, 28
      %v3673 = vpop.permute.xlu0 %3672
      %vm3690 = vcmask 261344
      %3691 = vst.msk [vmem:[#allocation3] sm:$0xff] %vm3690, %v3643
      %3692 = vst.msk [vmem:[#allocation3 + $0x8] sm:$0xff] %vm3690, %v3645
      %3693 = vst.msk [vmem:[#allocation3 + $0x10] sm:$0xff] %vm3690, %v3647
      %3694 = vst.msk [vmem:[#allocation3 + $0x18] sm:$0xff] %vm3690, %v3649
      %3695 = vst.msk [vmem:[#allocation3 + $0x20] sm:$0xff] %vm3690, %v3651
      %3696 = vst.msk [vmem:[#allocation3 + $0x28] sm:$0xff] %vm3690, %v3653
      %3697 = vst.msk [vmem:[#allocation3 + $0x30] sm:$0xff] %vm3690, %v3655
      %3698 = vst.msk [vmem:[#allocation3 + $0x38] sm:$0xff] %vm3690, %v3657
      %3699 = vst.msk [vmem:[#allocation3 + $0x40] sm:$0xff] %vm3690, %v3659
      %3700 = vst.msk [vmem:[#allocation3 + $0x48] sm:$0xff] %vm3690, %v3661
      %3701 = vst.msk [vmem:[#allocation3 + $0x50] sm:$0xff] %vm3690, %v3663
      %3702 = vst.msk [vmem:[#allocation3 + $0x58] sm:$0xff] %vm3690, %v3665
      %3703 = vst.msk [vmem:[#allocation3 + $0x60] sm:$0xff] %vm3690, %v3667
      %3704 = vst.msk [vmem:[#allocation3 + $0x68] sm:$0xff] %vm3690, %v3669
      %3705 = vst.msk [vmem:[#allocation3 + $0x70] sm:$0xff] %vm3690, %v3671
      %3706 = vst.msk [vmem:[#allocation3 + $0x78] sm:$0xff] %vm3690, %v3673
      %v3707 = vld [vmem:[%s2984] sm:$0xe]
      %v3708 = vld [vmem:[%s2984 + $0x4] sm:$0xf]
      %v3709 = vld [vmem:[%s2984 + $0x8] sm:$0x1]
      %v3710 = vld [vmem:[%s2984 + $0xc] sm:$0xe]
      %v3711 = vld [vmem:[%s2984 + $0x10] sm:$0xf]
      %v3712 = vld [vmem:[%s2984 + $0x14] sm:$0x1]
      %v3713 = vld [vmem:[%s2984 + $0x18] sm:$0xe]
      %v3714 = vld [vmem:[%s2984 + $0x1c] sm:$0xf]
      %v3715 = vld [vmem:[%s2984 + $0x20] sm:$0x1]
      %v3716 = vld [vmem:[%s2984 + $0x24] sm:$0xe]
      %v3717 = vld [vmem:[%s2984 + $0x28] sm:$0xf]
      %v3718 = vld [vmem:[%s2984 + $0x2c] sm:$0x1]
      %v3719 = vld [vmem:[%s2984 + $0x30] sm:$0xe]
      %v3720 = vld [vmem:[%s2984 + $0x34] sm:$0xf]
      %v3721 = vld [vmem:[%s2984 + $0x38] sm:$0x1]
      %v3722 = vld [vmem:[%s2984 + $0x3c] sm:$0xe]
      %v3723 = vld [vmem:[%s2984 + $0x40] sm:$0xf]
      %v3724 = vld [vmem:[%s2984 + $0x44] sm:$0x1]
      %v3725 = vld [vmem:[%s2984 + $0x48] sm:$0xe]
      %v3726 = vld [vmem:[%s2984 + $0x4c] sm:$0xf]
      %v3727 = vld [vmem:[%s2984 + $0x50] sm:$0x1]
      %v3728 = vld [vmem:[%s2984 + $0x54] sm:$0xe]
      %v3729 = vld [vmem:[%s2984 + $0x58] sm:$0xf]
      %v3730 = vld [vmem:[%s2984 + $0x5c] sm:$0x1]
      %v3731 = vld [vmem:[%s2984 + $0x60] sm:$0xe]
      %v3732 = vld [vmem:[%s2984 + $0x64] sm:$0xf]
      %v3733 = vld [vmem:[%s2984 + $0x68] sm:$0x1]
      %v3734 = vld [vmem:[%s2984 + $0x6c] sm:$0xe]
      %v3735 = vld [vmem:[%s2984 + $0x70] sm:$0xf]
      %v3736 = vld [vmem:[%s2984 + $0x74] sm:$0x1]
      %v3737 = vld [vmem:[%s2984 + $0x78] sm:$0xe]
      %v3738 = vld [vmem:[%s2984 + $0x7c] sm:$0xf]
      %v3739 = vld [vmem:[%s2984 + $0x80] sm:$0x1]
      %v3740 = vld [vmem:[%s2984 + $0x84] sm:$0xe]
      %v3741 = vld [vmem:[%s2984 + $0x88] sm:$0xf]
      %v3742 = vld [vmem:[%s2984 + $0x8c] sm:$0x1]
      %v3743 = vld [vmem:[%s2984 + $0x90] sm:$0xe]
      %v3744 = vld [vmem:[%s2984 + $0x94] sm:$0xf]
      %v3745 = vld [vmem:[%s2984 + $0x98] sm:$0x1]
      %v3746 = vld [vmem:[%s2984 + $0x9c] sm:$0xe]
      %v3747 = vld [vmem:[%s2984 + $0xa0] sm:$0xf]
      %v3748 = vld [vmem:[%s2984 + $0xa4] sm:$0x1]
      %v3749 = vld [vmem:[%s2984 + $0xa8] sm:$0xe]
      %v3750 = vld [vmem:[%s2984 + $0xac] sm:$0xf]
      %v3751 = vld [vmem:[%s2984 + $0xb0] sm:$0x1]
      %v3752 = vld [vmem:[%s2984 + $0xb4] sm:$0xe]
      %v3753 = vld [vmem:[%s2984 + $0xb8] sm:$0xf]
      %v3754 = vld [vmem:[%s2984 + $0xbc] sm:$0x1]
      %v3803 = vrot.slane %v3707, 5
      %v3804 = vrot.slane %v3803, 4
      %v3805 = vrot.slane %v3708, 5
      %v3806 = vsel %vm1715, %v3804, %v3805
      %v3807 = vrot.slane %v3805, 4
      %v3808 = vrot.slane %v3709, 5
      %v3809 = vsel %vm1715, %v3807, %v3808
      %v3810 = vrot.slane %v3710, 5
      %v3811 = vrot.slane %v3810, 4
      %v3812 = vrot.slane %v3711, 5
      %v3813 = vsel %vm1715, %v3811, %v3812
      %v3814 = vrot.slane %v3812, 4
      %v3815 = vrot.slane %v3712, 5
      %v3816 = vsel %vm1715, %v3814, %v3815
      %v3817 = vrot.slane %v3713, 5
      %v3818 = vrot.slane %v3817, 4
      %v3819 = vrot.slane %v3714, 5
      %v3820 = vsel %vm1715, %v3818, %v3819
      %v3821 = vrot.slane %v3819, 4
      %v3822 = vrot.slane %v3715, 5
      %v3823 = vsel %vm1715, %v3821, %v3822
      %v3824 = vrot.slane %v3716, 5
      %v3825 = vrot.slane %v3824, 4
      %v3826 = vrot.slane %v3717, 5
      %v3827 = vsel %vm1715, %v3825, %v3826
      %v3828 = vrot.slane %v3826, 4
      %v3829 = vrot.slane %v3718, 5
      %v3830 = vsel %vm1715, %v3828, %v3829
      %v3831 = vrot.slane %v3719, 5
      %v3832 = vrot.slane %v3831, 4
      %v3833 = vrot.slane %v3720, 5
      %v3834 = vsel %vm1715, %v3832, %v3833
      %v3835 = vrot.slane %v3833, 4
      %v3836 = vrot.slane %v3721, 5
      %v3837 = vsel %vm1715, %v3835, %v3836
      %v3838 = vrot.slane %v3722, 5
      %v3839 = vrot.slane %v3838, 4
      %v3840 = vrot.slane %v3723, 5
      %v3841 = vsel %vm1715, %v3839, %v3840
      %v3842 = vrot.slane %v3840, 4
      %v3843 = vrot.slane %v3724, 5
      %v3844 = vsel %vm1715, %v3842, %v3843
      %v3845 = vrot.slane %v3725, 5
      %v3846 = vrot.slane %v3845, 4
      %v3847 = vrot.slane %v3726, 5
      %v3848 = vsel %vm1715, %v3846, %v3847
      %v3849 = vrot.slane %v3847, 4
      %v3850 = vrot.slane %v3727, 5
      %v3851 = vsel %vm1715, %v3849, %v3850
      %v3852 = vrot.slane %v3728, 5
      %v3853 = vrot.slane %v3852, 4
      %v3854 = vrot.slane %v3729, 5
      %v3855 = vsel %vm1715, %v3853, %v3854
      %v3856 = vrot.slane %v3854, 4
      %v3857 = vrot.slane %v3730, 5
      %v3858 = vsel %vm1715, %v3856, %v3857
      %v3859 = vrot.slane %v3731, 5
      %v3860 = vrot.slane %v3859, 4
      %v3861 = vrot.slane %v3732, 5
      %v3862 = vsel %vm1715, %v3860, %v3861
      %v3863 = vrot.slane %v3861, 4
      %v3864 = vrot.slane %v3733, 5
      %v3865 = vsel %vm1715, %v3863, %v3864
      %v3866 = vrot.slane %v3734, 5
      %v3867 = vrot.slane %v3866, 4
      %v3868 = vrot.slane %v3735, 5
      %v3869 = vsel %vm1715, %v3867, %v3868
      %v3870 = vrot.slane %v3868, 4
      %v3871 = vrot.slane %v3736, 5
      %v3872 = vsel %vm1715, %v3870, %v3871
      %v3873 = vrot.slane %v3737, 5
      %v3874 = vrot.slane %v3873, 4
      %v3875 = vrot.slane %v3738, 5
      %v3876 = vsel %vm1715, %v3874, %v3875
      %v3877 = vrot.slane %v3875, 4
      %v3878 = vrot.slane %v3739, 5
      %v3879 = vsel %vm1715, %v3877, %v3878
      %v3880 = vrot.slane %v3740, 5
      %v3881 = vrot.slane %v3880, 4
      %v3882 = vrot.slane %v3741, 5
      %v3883 = vsel %vm1715, %v3881, %v3882
      %v3884 = vrot.slane %v3882, 4
      %v3885 = vrot.slane %v3742, 5
      %v3886 = vsel %vm1715, %v3884, %v3885
      %v3887 = vrot.slane %v3743, 5
      %v3888 = vrot.slane %v3887, 4
      %v3889 = vrot.slane %v3744, 5
      %v3890 = vsel %vm1715, %v3888, %v3889
      %v3891 = vrot.slane %v3889, 4
      %v3892 = vrot.slane %v3745, 5
      %v3893 = vsel %vm1715, %v3891, %v3892
      %v3894 = vrot.slane %v3746, 5
      %v3895 = vrot.slane %v3894, 4
      %v3896 = vrot.slane %v3747, 5
      %v3897 = vsel %vm1715, %v3895, %v3896
      %v3898 = vrot.slane %v3896, 4
      %v3899 = vrot.slane %v3748, 5
      %v3900 = vsel %vm1715, %v3898, %v3899
      %v3901 = vrot.slane %v3749, 5
      %v3902 = vrot.slane %v3901, 4
      %v3903 = vrot.slane %v3750, 5
      %v3904 = vsel %vm1715, %v3902, %v3903
      %v3905 = vrot.slane %v3903, 4
      %v3906 = vrot.slane %v3751, 5
      %v3907 = vsel %vm1715, %v3905, %v3906
      %v3908 = vrot.slane %v3752, 5
      %v3909 = vrot.slane %v3908, 4
      %v3910 = vrot.slane %v3753, 5
      %v3911 = vsel %vm1715, %v3909, %v3910
      %v3912 = vrot.slane %v3910, 4
      %v3913 = vrot.slane %v3754, 5
      %v3914 = vsel %vm1715, %v3912, %v3913
      %v3915 = vunpack.c.l.b16 %v3806
      %v3916 = vunpack.c.l.b16 %v3809
      %v3917 = vunpack.c.l.b16 %v3813
      %v3918 = vunpack.c.l.b16 %v3816
      %v3919 = vunpack.c.l.b16 %v3820
      %v3920 = vunpack.c.l.b16 %v3823
      %v3921 = vunpack.c.l.b16 %v3827
      %v3922 = vunpack.c.l.b16 %v3830
      %v3923 = vunpack.c.l.b16 %v3834
      %v3924 = vunpack.c.l.b16 %v3837
      %v3925 = vunpack.c.l.b16 %v3841
      %v3926 = vunpack.c.l.b16 %v3844
      %v3927 = vunpack.c.l.b16 %v3848
      %v3928 = vunpack.c.l.b16 %v3851
      %v3929 = vunpack.c.l.b16 %v3855
      %v3930 = vunpack.c.l.b16 %v3858
      %v3931 = vunpack.c.l.b16 %v3862
      %v3932 = vunpack.c.l.b16 %v3865
      %v3933 = vunpack.c.l.b16 %v3869
      %v3934 = vunpack.c.l.b16 %v3872
      %v3935 = vunpack.c.l.b16 %v3876
      %v3936 = vunpack.c.l.b16 %v3879
      %v3937 = vunpack.c.l.b16 %v3883
      %v3938 = vunpack.c.l.b16 %v3886
      %v3939 = vunpack.c.l.b16 %v3890
      %v3940 = vunpack.c.l.b16 %v3893
      %v3941 = vunpack.c.l.b16 %v3897
      %v3942 = vunpack.c.l.b16 %v3900
      %v3943 = vunpack.c.l.b16 %v3904
      %v3944 = vunpack.c.l.b16 %v3907
      %v3945 = vunpack.c.l.b16 %v3911
      %v3946 = vunpack.c.l.b16 %v3914
      %v3947 = vpack.c.b16 %v3916, %v3915
      %v3948 = vpack.c.b16 %v3918, %v3917
      %v3949 = vpack.c.b16 %v3920, %v3919
      %v3950 = vpack.c.b16 %v3922, %v3921
      %v3951 = vpack.c.b16 %v3924, %v3923
      %v3952 = vpack.c.b16 %v3926, %v3925
      %v3953 = vpack.c.b16 %v3928, %v3927
      %v3954 = vpack.c.b16 %v3930, %v3929
      %v3955 = vpack.c.b16 %v3932, %v3931
      %v3956 = vpack.c.b16 %v3934, %v3933
      %v3957 = vpack.c.b16 %v3936, %v3935
      %v3958 = vpack.c.b16 %v3938, %v3937
      %v3959 = vpack.c.b16 %v3940, %v3939
      %v3960 = vpack.c.b16 %v3942, %v3941
      %v3961 = vpack.c.b16 %v3944, %v3943
      %v3962 = vpack.c.b16 %v3946, %v3945
      %3963 = vrot.lane.b32.xlu0 %v3947, 32
      %v3964 = vpop.permute.xlu0 %3963
      %3965 = vrot.lane.b32.xlu0 %v3948, 32
      %v3966 = vpop.permute.xlu0 %3965
      %3967 = vrot.lane.b32.xlu0 %v3949, 32
      %v3968 = vpop.permute.xlu0 %3967
      %3969 = vrot.lane.b32.xlu0 %v3950, 32
      %v3970 = vpop.permute.xlu0 %3969
      %3971 = vrot.lane.b32.xlu0 %v3951, 32
      %v3972 = vpop.permute.xlu0 %3971
      %3973 = vrot.lane.b32.xlu0 %v3952, 32
      %v3974 = vpop.permute.xlu0 %3973
      %3975 = vrot.lane.b32.xlu0 %v3953, 32
      %v3976 = vpop.permute.xlu0 %3975
      %3977 = vrot.lane.b32.xlu0 %v3954, 32
      %v3978 = vpop.permute.xlu0 %3977
      %3979 = vrot.lane.b32.xlu0 %v3955, 32
      %v3980 = vpop.permute.xlu0 %3979
      %3981 = vrot.lane.b32.xlu0 %v3956, 32
      %v3982 = vpop.permute.xlu0 %3981
      %3983 = vrot.lane.b32.xlu0 %v3957, 32
      %v3984 = vpop.permute.xlu0 %3983
      %3985 = vrot.lane.b32.xlu0 %v3958, 32
      %v3986 = vpop.permute.xlu0 %3985
      %3987 = vrot.lane.b32.xlu0 %v3959, 32
      %v3988 = vpop.permute.xlu0 %3987
      %3989 = vrot.lane.b32.xlu0 %v3960, 32
      %v3990 = vpop.permute.xlu0 %3989
      %3991 = vrot.lane.b32.xlu0 %v3961, 32
      %v3992 = vpop.permute.xlu0 %3991
      %3993 = vrot.lane.b32.xlu0 %v3962, 32
      %v3994 = vpop.permute.xlu0 %3993
      %vm4011 = vcmask 294144
      %4012 = vst.msk [vmem:[#allocation3] sm:$0xff] %vm4011, %v3964
      %4013 = vst.msk [vmem:[#allocation3 + $0x8] sm:$0xff] %vm4011, %v3966
      %4014 = vst.msk [vmem:[#allocation3 + $0x10] sm:$0xff] %vm4011, %v3968
      %4015 = vst.msk [vmem:[#allocation3 + $0x18] sm:$0xff] %vm4011, %v3970
      %4016 = vst.msk [vmem:[#allocation3 + $0x20] sm:$0xff] %vm4011, %v3972
      %4017 = vst.msk [vmem:[#allocation3 + $0x28] sm:$0xff] %vm4011, %v3974
      %4018 = vst.msk [vmem:[#allocation3 + $0x30] sm:$0xff] %vm4011, %v3976
      %4019 = vst.msk [vmem:[#allocation3 + $0x38] sm:$0xff] %vm4011, %v3978
      %4020 = vst.msk [vmem:[#allocation3 + $0x40] sm:$0xff] %vm4011, %v3980
      %4021 = vst.msk [vmem:[#allocation3 + $0x48] sm:$0xff] %vm4011, %v3982
      %4022 = vst.msk [vmem:[#allocation3 + $0x50] sm:$0xff] %vm4011, %v3984
      %4023 = vst.msk [vmem:[#allocation3 + $0x58] sm:$0xff] %vm4011, %v3986
      %4024 = vst.msk [vmem:[#allocation3 + $0x60] sm:$0xff] %vm4011, %v3988
      %4025 = vst.msk [vmem:[#allocation3 + $0x68] sm:$0xff] %vm4011, %v3990
      %4026 = vst.msk [vmem:[#allocation3 + $0x70] sm:$0xff] %vm4011, %v3992
      %4027 = vst.msk [vmem:[#allocation3 + $0x78] sm:$0xff] %vm4011, %v3994
      %v4028 = vld [vmem:[#allocation3] sm:$0xff]
      %v4029 = vld [vmem:[#allocation3 + $0x8] sm:$0xff]
      %v4030 = vld [vmem:[#allocation3 + $0x10] sm:$0xff]
      %v4031 = vld [vmem:[#allocation3 + $0x18] sm:$0xff]
      %v4032 = vld [vmem:[#allocation3 + $0x20] sm:$0xff]
      %v4033 = vld [vmem:[#allocation3 + $0x28] sm:$0xff]
      %v4034 = vld [vmem:[#allocation3 + $0x30] sm:$0xff]
      %v4035 = vld [vmem:[#allocation3 + $0x38] sm:$0xff]
      %v4036 = vld [vmem:[#allocation3 + $0x40] sm:$0xff]
      %v4037 = vld [vmem:[#allocation3 + $0x48] sm:$0xff]
      %v4038 = vld [vmem:[#allocation3 + $0x50] sm:$0xff]
      %v4039 = vld [vmem:[#allocation3 + $0x58] sm:$0xff]
      %v4040 = vld [vmem:[#allocation3 + $0x60] sm:$0xff]
      %v4041 = vld [vmem:[#allocation3 + $0x68] sm:$0xff]
      %v4042 = vld [vmem:[#allocation3 + $0x70] sm:$0xff]
      %v4043 = vld [vmem:[#allocation3 + $0x78] sm:$0xff]
      %v4044 = vld [vmem:[%s2] sm:$0xf]
      %v4045 = vld [vmem:[%s2 + $0x4] sm:$0xf]
      %v4046 = vld [vmem:[%s2 + $0x8] sm:$0xf]
      %v4047 = vld [vmem:[%s2 + $0xc] sm:$0xf]
      %v4048 = vld [vmem:[%s2 + $0x10] sm:$0x3]
      %v4049 = vld [vmem:[%s3] sm:$0x1]
      %v4051 = vlaneseq
      %v4052 = vshrl.u32 %v4051, 7
      %v4053 = vsub.s32 0, %v4052
      %v4054 = vrot.slane %v4049, %v4053
      %v4061 = vunpack.c.l.b16 %v4044
      %v4062 = vunpack.c.l.b16 %v4045
      %v4063 = vunpack.c.l.b16 %v4046
      %v4064 = vunpack.c.l.b16 %v4047
      %v4065 = vunpack.c.l.b16 %v4048
      %v4066 = vpack.c.b16 %v4062, %v4061
      %v4067 = vpack.c.b16 %v4064, %v4063
      %v4068 = vpack.c.b16 %v4065, %v4065
      %vm4071 = vcmask 293888
      %v4073 = vsel %vm4071, %v4028, 0
      %v4076 = vsel %vm4071, %v4029, 0
      %v4079 = vsel %vm4071, %v4030, 0
      %v4082 = vsel %vm4071, %v4031, 0
      %v4085 = vsel %vm4071, %v4032, 0
      %v4088 = vsel %vm4071, %v4033, 0
      %v4091 = vsel %vm4071, %v4034, 0
      %v4094 = vsel %vm4071, %v4035, 0
      %v4097 = vsel %vm4071, %v4036, 0
      %v4100 = vsel %vm4071, %v4037, 0
      %v4103 = vsel %vm4071, %v4038, 0
      %v4106 = vsel %vm4071, %v4039, 0
      %v4109 = vsel %vm4071, %v4040, 0
      %v4112 = vsel %vm4071, %v4041, 0
      %v4115 = vsel %vm4071, %v4042, 0
      %v4118 = vsel %vm4071, %v4043, 0
      %vm4120 = vcmask 1041408
      %v4122 = vsel %vm4120, %v4068, 0
      %4124 = vmatprep.subr.bf16.mxu0 0
      %4125 = vmatpush1.bf16.msra.mxu0 %v4066
      %4126 = vmatprep.subr.bf16.mxu0 0
      %4127 = vmatpush1.bf16.msra.mxu0 %v4067
      %4128 = vmatprep.subr.bf16.mxu0 0
      %4129 = vmatpush1.bf16.msra.mxu0 %v4122
      %4130 = vmatprep.subr.bf16.mxu0 0
      %4131 = vmatpush1.bf16.msra.mxu0 0
      %4132 = vmatprep.subr.bf16.mxu0 0
      %4133 = vmatpush1.bf16.msra.mxu0 0
      %4134 = vmatprep.subr.bf16.mxu0 0
      %4135 = vmatpush1.bf16.msra.mxu0 0
      %4136 = vmatprep.subr.bf16.mxu0 0
      %4137 = vmatpush1.bf16.msra.mxu0 0
      %4138 = vmatprep.subr.bf16.mxu0 0
      %4139 = vmatpush1.bf16.msra.mxu0 0
      %4140 = vmatprep.subr.bf16.mxu0 0
      %4141 = vmatpush1.bf16.msra.mxu0 0
      %4142 = vmatprep.subr.bf16.mxu0 0
      %4143 = vmatpush1.bf16.msra.mxu0 0
      %4144 = vmatprep.subr.bf16.mxu0 0
      %4145 = vmatpush1.bf16.msra.mxu0 0
      %4146 = vmatprep.subr.bf16.mxu0 0
      %4147 = vmatpush1.bf16.msra.mxu0 0
      %4148 = vmatprep.subr.bf16.mxu0 0
      %4149 = vmatpush1.bf16.msra.mxu0 0
      %4150 = vmatprep.subr.bf16.mxu0 0
      %4151 = vmatpush1.bf16.msra.mxu0 0
      %4152 = vmatprep.subr.bf16.mxu0 0
      %4153 = vmatpush1.bf16.msra.mxu0 0
      %4154 = vmatprep.subr.bf16.mxu0 0
      %4155 = vmatpush1.bf16.msra.mxu0 0
      %4156 = vmatprep.mubr.bf16.mxu0 0
      %4157 = vmatmul.mubr.bf16.gmra.mrb[0].mxu0 %v4073
      %v4158 = vpop.f32.mrb[0].mxu0
      %v4159 = vadd.f32 %v4054, %v4158
      %v4160 = vpop.f32.mrb[0].mxu0
      %v4161 = vpop.f32.mrb[0].mxu0
      %v4162 = vadd.f32 %v4054, %v4161
      %v4163 = vpop.f32.mrb[0].mxu0
      %4164 = vmatprep.mubr.bf16.mxu0 0
      %4165 = vmatmul.mubr.bf16.gmra.mrb[0].mxu0 %v4076
      %v4166 = vpop.f32.mrb[0].mxu0
      %v4167 = vadd.f32 %v4054, %v4166
      %v4168 = vpop.f32.mrb[0].mxu0
      %v4169 = vpop.f32.mrb[0].mxu0
      %v4170 = vadd.f32 %v4054, %v4169
      %v4171 = vpop.f32.mrb[0].mxu0
      %4172 = vmatprep.mubr.bf16.mxu0 0
      %4173 = vmatmul.mubr.bf16.gmra.mrb[0].mxu0 %v4079
      %v4174 = vpop.f32.mrb[0].mxu0
      %v4175 = vadd.f32 %v4054, %v4174
      %v4176 = vpop.f32.mrb[0].mxu0
      %v4177 = vpop.f32.mrb[0].mxu0
      %v4178 = vadd.f32 %v4054, %v4177
      %v4179 = vpop.f32.mrb[0].mxu0
      %4180 = vmatprep.mubr.bf16.mxu0 0
      %4181 = vmatmul.mubr.bf16.gmra.mrb[0].mxu0 %v4082
      %v4182 = vpop.f32.mrb[0].mxu0
      %v4183 = vadd.f32 %v4054, %v4182
      %v4184 = vpop.f32.mrb[0].mxu0
      %v4185 = vpop.f32.mrb[0].mxu0
      %v4186 = vadd.f32 %v4054, %v4185
      %v4187 = vpop.f32.mrb[0].mxu0
      %4188 = vmatprep.mubr.bf16.mxu0 0
      %4189 = vmatmul.mubr.bf16.gmra.mrb[0].mxu0 %v4085
      %v4190 = vpop.f32.mrb[0].mxu0
      %v4191 = vadd.f32 %v4054, %v4190
      %v4192 = vpop.f32.mrb[0].mxu0
      %v4193 = vpop.f32.mrb[0].mxu0
      %v4194 = vadd.f32 %v4054, %v4193
      %v4195 = vpop.f32.mrb[0].mxu0
      %4196 = vmatprep.mubr.bf16.mxu0 0
      %4197 = vmatmul.mubr.bf16.gmra.mrb[0].mxu0 %v4088
      %v4198 = vpop.f32.mrb[0].mxu0
      %v4199 = vadd.f32 %v4054, %v4198
      %v4200 = vpop.f32.mrb[0].mxu0
      %v4201 = vpop.f32.mrb[0].mxu0
      %v4202 = vadd.f32 %v4054, %v4201
      %v4203 = vpop.f32.mrb[0].mxu0
      %4204 = vmatprep.mubr.bf16.mxu0 0
      %4205 = vmatmul.mubr.bf16.gmra.mrb[0].mxu0 %v4091
      %v4206 = vpop.f32.mrb[0].mxu0
      %v4207 = vadd.f32 %v4054, %v4206
      %v4208 = vpop.f32.mrb[0].mxu0
      %v4209 = vpop.f32.mrb[0].mxu0
      %v4210 = vadd.f32 %v4054, %v4209
      %v4211 = vpop.f32.mrb[0].mxu0
      %4212 = vmatprep.mubr.bf16.mxu0 0
      %4213 = vmatmul.mubr.bf16.gmra.mrb[0].mxu0 %v4094
      %v4214 = vpop.f32.mrb[0].mxu0
      %v4215 = vadd.f32 %v4054, %v4214
      %v4216 = vpop.f32.mrb[0].mxu0
      %v4217 = vpop.f32.mrb[0].mxu0
      %v4218 = vadd.f32 %v4054, %v4217
      %v4219 = vpop.f32.mrb[0].mxu0
      %4220 = vmatprep.mubr.bf16.mxu0 0
      %4221 = vmatmul.mubr.bf16.gmra.mrb[0].mxu0 %v4097
      %v4222 = vpop.f32.mrb[0].mxu0
      %v4223 = vadd.f32 %v4054, %v4222
      %v4224 = vpop.f32.mrb[0].mxu0
      %v4225 = vpop.f32.mrb[0].mxu0
      %v4226 = vadd.f32 %v4054, %v4225
      %v4227 = vpop.f32.mrb[0].mxu0
      %4228 = vmatprep.mubr.bf16.mxu0 0
      %4229 = vmatmul.mubr.bf16.gmra.mrb[0].mxu0 %v4100
      %v4230 = vpop.f32.mrb[0].mxu0
      %v4231 = vadd.f32 %v4054, %v4230
      %v4232 = vpop.f32.mrb[0].mxu0
      %v4233 = vpop.f32.mrb[0].mxu0
      %v4234 = vadd.f32 %v4054, %v4233
      %v4235 = vpop.f32.mrb[0].mxu0
      %4236 = vmatprep.mubr.bf16.mxu0 0
      %4237 = vmatmul.mubr.bf16.gmra.mrb[0].mxu0 %v4103
      %v4238 = vpop.f32.mrb[0].mxu0
      %v4239 = vadd.f32 %v4054, %v4238
      %v4240 = vpop.f32.mrb[0].mxu0
      %v4241 = vpop.f32.mrb[0].mxu0
      %v4242 = vadd.f32 %v4054, %v4241
      %v4243 = vpop.f32.mrb[0].mxu0
      %4244 = vmatprep.mubr.bf16.mxu0 0
      %4245 = vmatmul.mubr.bf16.gmra.mrb[0].mxu0 %v4106
      %v4246 = vpop.f32.mrb[0].mxu0
      %v4247 = vadd.f32 %v4054, %v4246
      %v4248 = vpop.f32.mrb[0].mxu0
      %v4249 = vpop.f32.mrb[0].mxu0
      %v4250 = vadd.f32 %v4054, %v4249
      %v4251 = vpop.f32.mrb[0].mxu0
      %4252 = vmatprep.mubr.bf16.mxu0 0
      %4253 = vmatmul.mubr.bf16.gmra.mrb[0].mxu0 %v4109
      %v4254 = vpop.f32.mrb[0].mxu0
      %v4255 = vadd.f32 %v4054, %v4254
      %v4256 = vpop.f32.mrb[0].mxu0
      %v4257 = vpop.f32.mrb[0].mxu0
      %v4258 = vadd.f32 %v4054, %v4257
      %v4259 = vpop.f32.mrb[0].mxu0
      %4260 = vmatprep.mubr.bf16.mxu0 0
      %4261 = vmatmul.mubr.bf16.gmra.mrb[0].mxu0 %v4112
      %v4262 = vpop.f32.mrb[0].mxu0
      %v4263 = vadd.f32 %v4054, %v4262
      %v4264 = vpop.f32.mrb[0].mxu0
      %v4265 = vpop.f32.mrb[0].mxu0
      %v4266 = vadd.f32 %v4054, %v4265
      %v4267 = vpop.f32.mrb[0].mxu0
      %4268 = vmatprep.mubr.bf16.mxu0 0
      %4269 = vmatmul.mubr.bf16.gmra.mrb[0].mxu0 %v4115
      %v4270 = vpop.f32.mrb[0].mxu0
      %v4271 = vadd.f32 %v4054, %v4270
      %v4272 = vpop.f32.mrb[0].mxu0
      %v4273 = vpop.f32.mrb[0].mxu0
      %v4274 = vadd.f32 %v4054, %v4273
      %v4275 = vpop.f32.mrb[0].mxu0
      %4276 = vmatprep.mubr.bf16.mxu0 0
      %4277 = vmatmul.mubr.bf16.gmra.mrb[0].mxu0 %v4118
      %v4278 = vpop.f32.mrb[0].mxu0
      %v4279 = vadd.f32 %v4054, %v4278
      %v4280 = vpop.f32.mrb[0].mxu0
      %v4281 = vpop.f32.mrb[0].mxu0
      %v4282 = vadd.f32 %v4054, %v4281
      %v4283 = vpop.f32.mrb[0].mxu0
      %4284 = vdwg.mxu0
      %v4285 = vpack.c.bf16 %v4162, %v4159
      %v4286 = vpack.c.bf16 %v4170, %v4167
      %v4287 = vpack.c.bf16 %v4178, %v4175
      %v4288 = vpack.c.bf16 %v4186, %v4183
      %v4289 = vpack.c.bf16 %v4194, %v4191
      %v4290 = vpack.c.bf16 %v4202, %v4199
      %v4291 = vpack.c.bf16 %v4210, %v4207
      %v4292 = vpack.c.bf16 %v4218, %v4215
      %v4293 = vpack.c.bf16 %v4226, %v4223
      %v4294 = vpack.c.bf16 %v4234, %v4231
      %v4295 = vpack.c.bf16 %v4242, %v4239
      %v4296 = vpack.c.bf16 %v4250, %v4247
      %v4297 = vpack.c.bf16 %v4258, %v4255
      %v4298 = vpack.c.bf16 %v4266, %v4263
      %v4299 = vpack.c.bf16 %v4274, %v4271
      %v4300 = vpack.c.bf16 %v4282, %v4279
      %v4317 = vunpack.c.l.b16 %v4285
      %v4318 = vunpack.c.h.b16 %v4285
      %v4319 = vunpack.c.l.b16 %v4286
      %v4320 = vunpack.c.h.b16 %v4286
      %v4321 = vunpack.c.l.b16 %v4287
      %v4322 = vunpack.c.h.b16 %v4287
      %v4323 = vunpack.c.l.b16 %v4288
      %v4324 = vunpack.c.h.b16 %v4288
      %v4325 = vunpack.c.l.b16 %v4289
      %v4326 = vunpack.c.h.b16 %v4289
      %v4327 = vunpack.c.l.b16 %v4290
      %v4328 = vunpack.c.h.b16 %v4290
      %v4329 = vunpack.c.l.b16 %v4291
      %v4330 = vunpack.c.h.b16 %v4291
      %v4331 = vunpack.c.l.b16 %v4292
      %v4332 = vunpack.c.h.b16 %v4292
      %v4333 = vunpack.c.l.b16 %v4293
      %v4334 = vunpack.c.h.b16 %v4293
      %v4335 = vunpack.c.l.b16 %v4294
      %v4336 = vunpack.c.h.b16 %v4294
      %v4337 = vunpack.c.l.b16 %v4295
      %v4338 = vunpack.c.h.b16 %v4295
      %v4339 = vunpack.c.l.b16 %v4296
      %v4340 = vunpack.c.h.b16 %v4296
      %v4341 = vunpack.c.l.b16 %v4297
      %v4342 = vunpack.c.h.b16 %v4297
      %v4343 = vunpack.c.l.b16 %v4298
      %v4344 = vunpack.c.h.b16 %v4298
      %v4345 = vunpack.c.l.b16 %v4299
      %v4346 = vunpack.c.h.b16 %v4299
      %v4347 = vunpack.c.l.b16 %v4300
      %v4348 = vunpack.c.h.b16 %v4300
      %v4349 = vpack.c.b16 %v4317, %v4317
      %v4350 = vpack.c.b16 %v4318, %v4318
      %v4351 = vpack.c.b16 %v4319, %v4319
      %v4352 = vpack.c.b16 %v4320, %v4320
      %v4353 = vpack.c.b16 %v4321, %v4321
      %v4354 = vpack.c.b16 %v4322, %v4322
      %v4355 = vpack.c.b16 %v4323, %v4323
      %v4356 = vpack.c.b16 %v4324, %v4324
      %v4357 = vpack.c.b16 %v4325, %v4325
      %v4358 = vpack.c.b16 %v4326, %v4326
      %v4359 = vpack.c.b16 %v4327, %v4327
      %v4360 = vpack.c.b16 %v4328, %v4328
      %v4361 = vpack.c.b16 %v4329, %v4329
      %v4362 = vpack.c.b16 %v4330, %v4330
      %v4363 = vpack.c.b16 %v4331, %v4331
      %v4364 = vpack.c.b16 %v4332, %v4332
      %v4365 = vpack.c.b16 %v4333, %v4333
      %v4366 = vpack.c.b16 %v4334, %v4334
      %v4367 = vpack.c.b16 %v4335, %v4335
      %v4368 = vpack.c.b16 %v4336, %v4336
      %v4369 = vpack.c.b16 %v4337, %v4337
      %v4370 = vpack.c.b16 %v4338, %v4338
      %v4371 = vpack.c.b16 %v4339, %v4339
      %v4372 = vpack.c.b16 %v4340, %v4340
      %v4373 = vpack.c.b16 %v4341, %v4341
      %v4374 = vpack.c.b16 %v4342, %v4342
      %v4375 = vpack.c.b16 %v4343, %v4343
      %v4376 = vpack.c.b16 %v4344, %v4344
      %v4377 = vpack.c.b16 %v4345, %v4345
      %v4378 = vpack.c.b16 %v4346, %v4346
      %v4379 = vpack.c.b16 %v4347, %v4347
      %v4380 = vpack.c.b16 %v4348, %v4348
      %4413 = vst [vmem:[%s231] sm:$0xf] %v4349
      %4414 = vst [vmem:[%s231 + $0x4] sm:$0xf] %v4350
      %4415 = vst [vmem:[%s231 + $0x8] sm:$0xf] %v4351
      %4416 = vst [vmem:[%s231 + $0xc] sm:$0xf] %v4352
      %4417 = vst [vmem:[%s231 + $0x10] sm:$0xf] %v4353
      %4418 = vst [vmem:[%s231 + $0x14] sm:$0xf] %v4354
      %4419 = vst [vmem:[%s231 + $0x18] sm:$0xf] %v4355
      %4420 = vst [vmem:[%s231 + $0x1c] sm:$0xf] %v4356
      %4421 = vst [vmem:[%s231 + $0x20] sm:$0xf] %v4357
      %4422 = vst [vmem:[%s231 + $0x24] sm:$0xf] %v4358
      %4423 = vst [vmem:[%s231 + $0x28] sm:$0xf] %v4359
      %4424 = vst [vmem:[%s231 + $0x2c] sm:$0xf] %v4360
      %4425 = vst [vmem:[%s231 + $0x30] sm:$0xf] %v4361
      %4426 = vst [vmem:[%s231 + $0x34] sm:$0xf] %v4362
      %4427 = vst [vmem:[%s231 + $0x38] sm:$0xf] %v4363
      %4428 = vst [vmem:[%s231 + $0x3c] sm:$0xf] %v4364
      %4429 = vst [vmem:[%s231 + $0x40] sm:$0xf] %v4365
      %4430 = vst [vmem:[%s231 + $0x44] sm:$0xf] %v4366
      %4431 = vst [vmem:[%s231 + $0x48] sm:$0xf] %v4367
      %4432 = vst [vmem:[%s231 + $0x4c] sm:$0xf] %v4368
      %4433 = vst [vmem:[%s231 + $0x50] sm:$0xf] %v4369
      %4434 = vst [vmem:[%s231 + $0x54] sm:$0xf] %v4370
      %4435 = vst [vmem:[%s231 + $0x58] sm:$0xf] %v4371
      %4436 = vst [vmem:[%s231 + $0x5c] sm:$0xf] %v4372
      %4437 = vst [vmem:[%s231 + $0x60] sm:$0xf] %v4373
      %4438 = vst [vmem:[%s231 + $0x64] sm:$0xf] %v4374
      %4439 = vst [vmem:[%s231 + $0x68] sm:$0xf] %v4375
      %4440 = vst [vmem:[%s231 + $0x6c] sm:$0xf] %v4376
      %4441 = vst [vmem:[%s231 + $0x70] sm:$0xf] %v4377
      %4442 = vst [vmem:[%s231 + $0x74] sm:$0xf] %v4378
      %4443 = vst [vmem:[%s231 + $0x78] sm:$0xf] %v4379
      %4444 = vst [vmem:[%s231 + $0x7c] sm:$0xf] %v4380
      %v4445 = vadd.f32 %v4159, %v4162
      %v4446 = vadd.f32 %v4445, %v4167
      %v4447 = vadd.f32 %v4446, %v4170
      %v4448 = vadd.f32 %v4447, %v4175
      %v4449 = vadd.f32 %v4448, %v4178
      %v4450 = vadd.f32 %v4449, %v4183
      %v4451 = vadd.f32 %v4450, %v4186
      %v4452 = vadd.f32 %v4451, %v4191
      %v4453 = vadd.f32 %v4452, %v4194
      %v4454 = vadd.f32 %v4453, %v4199
      %v4455 = vadd.f32 %v4454, %v4202
      %v4456 = vadd.f32 %v4455, %v4207
      %v4457 = vadd.f32 %v4456, %v4210
      %v4458 = vadd.f32 %v4457, %v4215
      %v4459 = vadd.f32 %v4458, %v4218
      %v4460 = vadd.f32 %v4459, %v4223
      %v4461 = vadd.f32 %v4460, %v4226
      %v4462 = vadd.f32 %v4461, %v4231
      %v4463 = vadd.f32 %v4462, %v4234
      %v4464 = vadd.f32 %v4463, %v4239
      %v4465 = vadd.f32 %v4464, %v4242
      %v4466 = vadd.f32 %v4465, %v4247
      %v4467 = vadd.f32 %v4466, %v4250
      %v4468 = vadd.f32 %v4467, %v4255
      %v4469 = vadd.f32 %v4468, %v4258
      %v4470 = vadd.f32 %v4469, %v4263
      %v4471 = vadd.f32 %v4470, %v4266
      %v4472 = vadd.f32 %v4471, %v4271
      %v4473 = vadd.f32 %v4472, %v4274
      %v4474 = vadd.f32 %v4473, %v4279
      %v4475 = vadd.f32 %v4474, %v4282
      %v4476 = vrot.slane %v4475, 4
      %v4477 = vadd.f32 %v4475, %v4476
      %v4478 = vrot.slane %v4477, 2
      %v4479 = vadd.f32 %v4477, %v4478
      %v4480 = vrot.slane %v4479, 1
      %v4481 = vadd.f32 %v4479, %v4480
      %v4482 = vmul.f32 %v4159, %v4159
      %v4483 = vmul.f32 %v4162, %v4162
      %v4484 = vmul.f32 %v4167, %v4167
      %v4485 = vmul.f32 %v4170, %v4170
      %v4486 = vmul.f32 %v4175, %v4175
      %v4487 = vmul.f32 %v4178, %v4178
      %v4488 = vmul.f32 %v4183, %v4183
      %v4489 = vmul.f32 %v4186, %v4186
      %v4490 = vmul.f32 %v4191, %v4191
      %v4491 = vmul.f32 %v4194, %v4194
      %v4492 = vmul.f32 %v4199, %v4199
      %v4493 = vmul.f32 %v4202, %v4202
      %v4494 = vmul.f32 %v4207, %v4207
      %v4495 = vmul.f32 %v4210, %v4210
      %v4496 = vmul.f32 %v4215, %v4215
      %v4497 = vmul.f32 %v4218, %v4218
      %v4498 = vmul.f32 %v4223, %v4223
      %v4499 = vmul.f32 %v4226, %v4226
      %v4500 = vmul.f32 %v4231, %v4231
      %v4501 = vmul.f32 %v4234, %v4234
      %v4502 = vmul.f32 %v4239, %v4239
      %v4503 = vmul.f32 %v4242, %v4242
      %v4504 = vmul.f32 %v4247, %v4247
      %v4505 = vmul.f32 %v4250, %v4250
      %v4506 = vmul.f32 %v4255, %v4255
      %v4507 = vmul.f32 %v4258, %v4258
      %v4508 = vmul.f32 %v4263, %v4263
      %v4509 = vmul.f32 %v4266, %v4266
      %v4510 = vmul.f32 %v4271, %v4271
      %v4511 = vmul.f32 %v4274, %v4274
      %v4512 = vmul.f32 %v4279, %v4279
      %v4513 = vmul.f32 %v4282, %v4282
      %v4514 = vadd.f32 %v4482, %v4483
      %v4515 = vadd.f32 %v4514, %v4484
      %v4516 = vadd.f32 %v4515, %v4485
      %v4517 = vadd.f32 %v4516, %v4486
      %v4518 = vadd.f32 %v4517, %v4487
      %v4519 = vadd.f32 %v4518, %v4488
      %v4520 = vadd.f32 %v4519, %v4489
      %v4521 = vadd.f32 %v4520, %v4490
      %v4522 = vadd.f32 %v4521, %v4491
      %v4523 = vadd.f32 %v4522, %v4492
      %v4524 = vadd.f32 %v4523, %v4493
      %v4525 = vadd.f32 %v4524, %v4494
      %v4526 = vadd.f32 %v4525, %v4495
      %v4527 = vadd.f32 %v4526, %v4496
      %v4528 = vadd.f32 %v4527, %v4497
      %v4529 = vadd.f32 %v4528, %v4498
      %v4530 = vadd.f32 %v4529, %v4499
      %v4531 = vadd.f32 %v4530, %v4500
      %v4532 = vadd.f32 %v4531, %v4501
      %v4533 = vadd.f32 %v4532, %v4502
      %v4534 = vadd.f32 %v4533, %v4503
      %v4535 = vadd.f32 %v4534, %v4504
      %v4536 = vadd.f32 %v4535, %v4505
      %v4537 = vadd.f32 %v4536, %v4506
      %v4538 = vadd.f32 %v4537, %v4507
      %v4539 = vadd.f32 %v4538, %v4508
      %v4540 = vadd.f32 %v4539, %v4509
      %v4541 = vadd.f32 %v4540, %v4510
      %v4542 = vadd.f32 %v4541, %v4511
      %v4543 = vadd.f32 %v4542, %v4512
      %v4544 = vadd.f32 %v4543, %v4513
      %v4545 = vrot.slane %v4544, 4
      %v4546 = vadd.f32 %v4544, %v4545
      %v4547 = vrot.slane %v4546, 2
      %v4548 = vadd.f32 %v4546, %v4547
      %v4549 = vrot.slane %v4548, 1
      %v4550 = vadd.f32 %v4548, %v4549
      %vm4551 = vcmask 1040384
      %v4552 = vsel %vm4551, %v4481, %v4550
      %4553 = vst [vmem:[%s235] sm:$0x3] %v4552
      %p4554 = scmp.lt.s32.totalorder %s17, 1
      %s4555 = scalar_select %p4554, %s17, 1
      %s4556 = smul.addr %s4555, 32
      %s4557 = smul.addr %s4556, 4
      %s4558 = scalar_lea.vmem %s4, %s4557
      %p4559 = scmp.lt.s32.totalorder %s17, 1
      %s4560 = scalar_select %p4559, %s17, 1
      %s4561 = smul.addr %s4560, 2
      %s4562 = scalar_lea.vmem %s5, %s4561
      // Predicated region
      $region37: #{encoder_block_forward.3} parent=35 // pred_check
        %p4563 = pneg %p124
      $region38: #{encoder_block_forward.3} parent=35 // pred_check_branch
        %4565 = sbr.rel (%p4563) target = $region40
      $region39: #{encoder_block_forward.3} parent=35 // pred_region
        _
      $region40: #{encoder_block_forward.3} parent=35 // pred_fallthru
        _
      // Predicated region
      $region41: #{encoder_block_forward.3} parent=35 // pred_check
        %p4566 = pneg %p150
      $region42: #{encoder_block_forward.3} parent=35 // pred_check_branch
        %4568 = sbr.rel (%p4566) target = $region44
      $region43: #{encoder_block_forward.3} parent=35 // pred_region
        _
      $region44: #{encoder_block_forward.3} parent=35 // pred_fallthru
        _
    $region36: #{encoder_block_forward.3} parent=5 // pred_fallthru
      _
    %p4569 = scmp.le.s32.totalorder 2, %s12
    // Predicated region
    $region45: #{encoder_block_forward.3} parent=5 // pred_check
      %p4570 = pneg %p4569
    $region46: #{encoder_block_forward.3} parent=5 // pred_check_branch
      %4572 = sbr.rel (%p4570) target = $region48
    $region47: #{encoder_block_forward.3} parent=5 // pred_region
      %s4573 = ssub.s32 %s12, 2
      // Predicated region
      $region49: #{encoder_block_forward.3} parent=47 // pred_check
        %p4574 = pneg %p130
      $region50: #{encoder_block_forward.3} parent=47 // pred_check_branch
        %4576 = sbr.rel (%p4574) target = $region52
      $region51: #{encoder_block_forward.3} parent=47 // pred_region
        %p4577 = scmp.lt.s32.totalorder %s18, 1
        %s4578 = scalar_select %p4577, %s18, 1
        %s4579 = smul.addr %s4578, 32
        %s4580 = smul.addr %s4579, 4
        %s4581 = scalar_lea.vmem %s4, %s4580
      $region52: #{encoder_block_forward.3} parent=47 // pred_fallthru
        _
      // Predicated region
      $region53: #{encoder_block_forward.3} parent=47 // pred_check
        %p4582 = pneg %p156
      $region54: #{encoder_block_forward.3} parent=47 // pred_check_branch
        %4584 = sbr.rel (%p4582) target = $region56
      $region55: #{encoder_block_forward.3} parent=47 // pred_region
        %p4585 = scmp.lt.s32.totalorder %s18, 1
        %s4586 = scalar_select %p4585, %s18, 1
        %s4587 = smul.addr %s4586, 2
        %s4588 = scalar_lea.vmem %s5, %s4587
      $region56: #{encoder_block_forward.3} parent=47 // pred_fallthru
        _
    $region48: #{encoder_block_forward.3} parent=5 // pred_fallthru
      _
  $region6: #{encoder_block_forward.3} parent=0 // loop_footer
    %s16 = sadd.s32 1, %s12
  $region7: #{encoder_block_forward.3} parent=0 // loop_footer_branch
    %11 = sbr.rel target = $region3
  $region8: #{encoder_block_forward.3} parent=0 // loop_exit
    _

// kernel: encoder_block_forward.4
$region0: #{encoder_block_forward.4}
  #allocation0 [shape = 'u32[]', space=smem, size = 0x4, offset = 0x4, fixed_abs, tag = 'smem constant byte address 0x4 - core index']
  #allocation1 [shape = 'u32[144,128]{1,0:T(1,128)}', space=vmem, size = 0x12000, scoped, tag = 'internal scratch']
  #allocation2 [shape = 'bf16[18,18,128]{2,1,0:T(8,128)(2,1)}', space=vmem, size = 0x1b000, scoped, tag = 'scratch operand']
  #allocation3 [shape = 'bf16[256,1152]{1,0:T(16,128)(2,1)}', space=vmem, size = 0x90000, scoped, tag = 'scratch operand']
  %s0 = inlined_call_operand.vmem [shape: bf16[2,16,16,128], index: 0, kind: input, shape index: {}]
  %s1 = inlined_call_operand.vmem [shape: f32[2,128], index: 1, kind: input, shape index: {}]
  %s2 = inlined_call_operand.vmem [shape: bf16[1152,128], index: 2, kind: input, shape index: {}]
  %s3 = inlined_call_operand.vmem [shape: f32[1,128], index: 3, kind: input, shape index: {}]
  %s4 = inlined_call_operand.vmem [shape: bf16[2,16,16,128], index: 4, kind: output, shape index: {0}]
  %s5 = inlined_call_operand.vmem [shape: f32[2,2,128], index: 5, kind: output, shape index: {1}]
  %6 = xla_tuple %s4, %s5
  %s7 = sld [smem:[#allocation0]]
  $region57: #{encoder_block_forward.4} parent=0
    _
  %s9 = ssub.s32 1, %s7
  %s10 = scalar_select 0, %s9, %s7
  loop: start=0, step=1, limit=4
  $region2: #{encoder_block_forward.4} parent=0 // loop_pre_header
    _
  $region3: #{encoder_block_forward.4} parent=0 // loop_header
    %s12 = sphi 0, %s16
    %p13 = scmp.ge.s32.totalorder %s12, 4
    %s22 = sphi 0, %s24
    %s25 = sphi 0, %s22
    %s26 = sphi 0, %s25
    %s42 = sphi 0, %s26
    %s46 = sphi 0, %s46
    %s48 = sphi 0, %s46
    %s49 = sphi 0, %s48
    %s63 = sphi 0, %s49
    %s67 = sphi 0, %s67
    %s69 = sphi 0, %s67
    %s70 = sphi 0, %s69
    %s84 = sphi 0, %s70
    %s88 = sphi 0, %s88
    %s90 = sphi 0, %s88
    %s91 = sphi 0, %s90
    %s105 = sphi 0, %s91
    %s111 = sphi 0, %s113
    %s114 = sphi 0, %s111
    %s115 = sphi 0, %s114
    %s131 = sphi 0, %s115
    %s137 = sphi 0, %s139
    %s140 = sphi 0, %s137
    %s141 = sphi 0, %s140
    %s157 = sphi 0, %s141
  $region4: #{encoder_block_forward.4} parent=0 // loop_header_branch
    %15 = sbr.rel (%p13) target = $region8
  $region5: #{encoder_block_forward.4} parent=0 // loop_body
    %s17 = ssub.s32 %s12, 1
    %s18 = ssub.s32 %s12, 2
    %s19 = sadd.s32 %s12, 1
    %s20 = ssub.s32 %s12, %s19
    %p21 = scmp.eq.s32.totalorder %s20, 0
    %s23 = sadd.s32 %s22, 1
    %s24 = scalar_select %p21, %s22, %s23
    %p27 = pneg %p21
    %p28 = scmp.eq.s32.totalorder %s12, 1
    %p29 = por %p27, %p28
    %p30 = scmp.ne.s32.totalorder %s22, %s25
    %p31 = scmp.eq.s32.totalorder %s12, 0
    %p32 = por %p30, %p31
    %p33 = scmp.ne.s32.totalorder %s22, %s25
    %p34 = scmp.eq.s32.totalorder %s17, 1
    %p35 = por %p33, %p34
    %p36 = scmp.ne.s32.totalorder %s25, %s26
    %p37 = scmp.eq.s32.totalorder %s17, 0
    %p38 = por %p36, %p37
    %p39 = scmp.ne.s32.totalorder %s25, %s26
    %p40 = scmp.eq.s32.totalorder %s18, 1
    %p41 = por %p39, %p40
    %p43 = scmp.ne.s32.totalorder %s26, %s42
    %p44 = scmp.eq.s32.totalorder %s18, 0
    %p45 = por %p43, %p44
    %s47 = sadd.s32 %s46, 1
    %p50 = scmp.eq.s32.totalorder %s12, 1
    %p51 = scmp.ne.s32.totalorder %s46, %s48
    %p52 = scmp.eq.s32.totalorder %s12, 0
    %p53 = por %p51, %p52
    %p54 = scmp.ne.s32.totalorder %s46, %s48
    %p55 = scmp.eq.s32.totalorder %s17, 1
    %p56 = por %p54, %p55
    %p57 = scmp.ne.s32.totalorder %s48, %s49
    %p58 = scmp.eq.s32.totalorder %s17, 0
    %p59 = por %p57, %p58
    %p60 = scmp.ne.s32.totalorder %s48, %s49
    %p61 = scmp.eq.s32.totalorder %s18, 1
    %p62 = por %p60, %p61
    %p64 = scmp.ne.s32.totalorder %s49, %s63
    %p65 = scmp.eq.s32.totalorder %s18, 0
    %p66 = por %p64, %p65
    %s68 = sadd.s32 %s67, 1
    %p71 = scmp.eq.s32.totalorder %s12, 1
    %p72 = scmp.ne.s32.totalorder %s67, %s69
    %p73 = scmp.eq.s32.totalorder %s12, 0
    %p74 = por %p72, %p73
    %p75 = scmp.ne.s32.totalorder %s67, %s69
    %p76 = scmp.eq.s32.totalorder %s17, 1
    %p77 = por %p75, %p76
    %p78 = scmp.ne.s32.totalorder %s69, %s70
    %p79 = scmp.eq.s32.totalorder %s17, 0
    %p80 = por %p78, %p79
    %p81 = scmp.ne.s32.totalorder %s69, %s70
    %p82 = scmp.eq.s32.totalorder %s18, 1
    %p83 = por %p81, %p82
    %p85 = scmp.ne.s32.totalorder %s70, %s84
    %p86 = scmp.eq.s32.totalorder %s18, 0
    %p87 = por %p85, %p86
    %s89 = sadd.s32 %s88, 1
    %p92 = scmp.eq.s32.totalorder %s12, 1
    %p93 = scmp.ne.s32.totalorder %s88, %s90
    %p94 = scmp.eq.s32.totalorder %s12, 0
    %p95 = por %p93, %p94
    %p96 = scmp.ne.s32.totalorder %s88, %s90
    %p97 = scmp.eq.s32.totalorder %s17, 1
    %p98 = por %p96, %p97
    %p99 = scmp.ne.s32.totalorder %s90, %s91
    %p100 = scmp.eq.s32.totalorder %s17, 0
    %p101 = por %p99, %p100
    %p102 = scmp.ne.s32.totalorder %s90, %s91
    %p103 = scmp.eq.s32.totalorder %s18, 1
    %p104 = por %p102, %p103
    %p106 = scmp.ne.s32.totalorder %s91, %s105
    %p107 = scmp.eq.s32.totalorder %s18, 0
    %p108 = por %p106, %p107
    %s109 = ssub.s32 %s12, %s19
    %p110 = scmp.eq.s32.totalorder %s109, 0
    %s112 = sadd.s32 %s111, 1
    %s113 = scalar_select %p110, %s111, %s112
    %p116 = pneg %p110
    %p117 = scmp.eq.s32.totalorder %s12, 1
    %p118 = por %p116, %p117
    %p119 = scmp.ne.s32.totalorder %s111, %s114
    %p120 = scmp.eq.s32.totalorder %s12, 0
    %p121 = por %p119, %p120
    %p122 = scmp.ne.s32.totalorder %s111, %s114
    %p123 = scmp.eq.s32.totalorder %s17, 1
    %p124 = por %p122, %p123
    %p125 = scmp.ne.s32.totalorder %s114, %s115
    %p126 = scmp.eq.s32.totalorder %s17, 0
    %p127 = por %p125, %p126
    %p128 = scmp.ne.s32.totalorder %s114, %s115
    %p129 = scmp.eq.s32.totalorder %s18, 1
    %p130 = por %p128, %p129
    %p132 = scmp.ne.s32.totalorder %s115, %s131
    %p133 = scmp.eq.s32.totalorder %s18, 0
    %p134 = por %p132, %p133
    %s135 = ssub.s32 %s12, %s19
    %p136 = scmp.eq.s32.totalorder %s135, 0
    %s138 = sadd.s32 %s137, 1
    %s139 = scalar_select %p136, %s137, %s138
    %p142 = pneg %p136
    %p143 = scmp.eq.s32.totalorder %s12, 1
    %p144 = por %p142, %p143
    %p145 = scmp.ne.s32.totalorder %s137, %s140
    %p146 = scmp.eq.s32.totalorder %s12, 0
    %p147 = por %p145, %p146
    %p148 = scmp.ne.s32.totalorder %s137, %s140
    %p149 = scmp.eq.s32.totalorder %s17, 1
    %p150 = por %p148, %p149
    %p151 = scmp.ne.s32.totalorder %s140, %s141
    %p152 = scmp.eq.s32.totalorder %s17, 0
    %p153 = por %p151, %p152
    %p154 = scmp.ne.s32.totalorder %s140, %s141
    %p155 = scmp.eq.s32.totalorder %s18, 1
    %p156 = por %p154, %p155
    %p158 = scmp.ne.s32.totalorder %s141, %s157
    %p159 = scmp.eq.s32.totalorder %s18, 0
    %p160 = por %p158, %p159
    %p161 = scmp.le.s32.totalorder 1, %s12
    %p162 = scmp.lt.s32.totalorder %s12, 3
    %p163 = pnand %p161, %p162
    %p164 = pneg %p163
    // Predicated region
    $region9: #{encoder_block_forward.4} parent=5 // pred_check
      _
    $region10: #{encoder_block_forward.4} parent=5 // pred_check_branch
      %166 = sbr.rel (%p163) target = $region12
    $region11: #{encoder_block_forward.4} parent=5 // pred_region
      %s167 = ssub.s32 %s12, 1
      // Predicated region
      $region13: #{encoder_block_forward.4} parent=11 // pred_check
        %p168 = pneg %p59
      $region14: #{encoder_block_forward.4} parent=11 // pred_check_branch
        %170 = sbr.rel (%p168) target = $region16
      $region15: #{encoder_block_forward.4} parent=11 // pred_region
        _
      $region16: #{encoder_block_forward.4} parent=11 // pred_fallthru
        _
      // Predicated region
      $region17: #{encoder_block_forward.4} parent=11 // pred_check
        %p171 = pneg %p80
      $region18: #{encoder_block_forward.4} parent=11 // pred_check_branch
        %173 = sbr.rel (%p171) target = $region20
      $region19: #{encoder_block_forward.4} parent=11 // pred_region
        _
      $region20: #{encoder_block_forward.4} parent=11 // pred_fallthru
        _
      // Predicated region
      $region21: #{encoder_block_forward.4} parent=11 // pred_check
        %p174 = pneg %p101
      $region22: #{encoder_block_forward.4} parent=11 // pred_check_branch
        %176 = sbr.rel (%p174) target = $region24
      $region23: #{encoder_block_forward.4} parent=11 // pred_region
        _
      $region24: #{encoder_block_forward.4} parent=11 // pred_fallthru
        _
    $region12: #{encoder_block_forward.4} parent=5 // pred_fallthru
      _
    %p177 = scmp.lt.s32.totalorder %s12, 2
    // Predicated region
    $region25: #{encoder_block_forward.4} parent=5 // pred_check
      %p178 = pneg %p177
    $region26: #{encoder_block_forward.4} parent=5 // pred_check_branch
      %180 = sbr.rel (%p178) target = $region28
    $region27: #{encoder_block_forward.4} parent=5 // pred_region
      // Predicated region
      $region29: #{encoder_block_forward.4} parent=27 // pred_check
        %p181 = pneg %p32
      $region30: #{encoder_block_forward.4} parent=27 // pred_check_branch
        %183 = sbr.rel (%p181) target = $region32
      $region31: #{encoder_block_forward.4} parent=27 // pred_region
        %p184 = scmp.lt.s32.totalorder %s12, 1
        %s185 = scalar_select %p184, %s12, 1
        %s186 = smul.addr %s185, 32
        %s187 = smul.addr %s186, 4
        %s188 = scalar_lea.vmem %s0, %s187
      $region32: #{encoder_block_forward.4} parent=27 // pred_fallthru
        _
    $region28: #{encoder_block_forward.4} parent=5 // pred_fallthru
      _
    %p189 = scmp.le.s32.totalorder 1, %s12
    %p190 = scmp.lt.s32.totalorder %s12, 3
    %p191 = pnand %p189, %p190
    %p192 = pneg %p191
    // Predicated region
    $region33: #{encoder_block_forward.4} parent=5 // pred_check
      _
    $region34: #{encoder_block_forward.4} parent=5 // pred_check_branch
      %194 = sbr.rel (%p191) target = $region36
    $region35: #{encoder_block_forward.4} parent=5 // pred_region
      %s195 = ssub.s32 %s12, 1
      %p196 = scmp.lt.s32.totalorder %s17, 1
      %s197 = scalar_select %p196, %s17, 1
      %s198 = smul.addr %s197, 32
      %s199 = smul.addr %s198, 4
      %s200 = scalar_lea.vmem %s0, %s199
      %p201 = pneg %p38
      %p202 = pneg %p35
      %p203 = pneg %p59
      %p204 = pneg %p56
      %p205 = pneg %p80
      %p206 = pneg %p77
      %p207 = pneg %p101
      %p208 = pneg %p98
      %p209 = pneg %p127
      %p210 = pneg %p124
      %p211 = scmp.lt.s32.totalorder %s17, 1
      %s212 = scalar_select %p211, %s17, 1
      %s213 = smul.addr %s212, 32
      %s214 = smul.addr %s213, 4
      %s215 = scalar_lea.vmem %s4, %s214
      %p216 = pneg %p153
      %p217 = pneg %p150
      %p218 = scmp.lt.s32.totalorder %s17, 1
      %s219 = scalar_select %p218, %s17, 1
      %s220 = smul.addr %s219, 2
      %s221 = scalar_lea.vmem %s5, %s220
      %p222 = scmp.lt.s32.totalorder %s17, 1
      %s223 = scalar_select %p222, %s17, 1
      %s224 = smul.addr %s223, 32
      %s225 = smul.addr %s224, 4
      %s226 = scalar_lea.vmem %s0, %s225
      %p227 = scmp.lt.s32.totalorder %s17, 1
      %s228 = scalar_select %p227, %s17, 1
      %s229 = smul.addr %s228, 32
      %s230 = smul.addr %s229, 4
      %s231 = scalar_lea.vmem %s4, %s230
      %p232 = scmp.lt.s32.totalorder %s17, 1
      %s233 = scalar_select %p232, %s17, 1
      %s234 = smul.addr %s233, 2
      %s235 = scalar_lea.vmem %s5, %s234
      %v237 = vld [vmem:[%s226] sm:$0xf]
      %v238 = vld [vmem:[%s226 + $0x4] sm:$0xf]
      %v239 = vld [vmem:[%s226 + $0x8] sm:$0xf]
      %v240 = vld [vmem:[%s226 + $0xc] sm:$0xf]
      %v241 = vld [vmem:[%s226 + $0x10] sm:$0xf]
      %v242 = vld [vmem:[%s226 + $0x14] sm:$0xf]
      %v243 = vld [vmem:[%s226 + $0x18] sm:$0xf]
      %v244 = vld [vmem:[%s226 + $0x1c] sm:$0xf]
      %v245 = vld [vmem:[%s226 + $0x20] sm:$0xf]
      %v246 = vld [vmem:[%s226 + $0x24] sm:$0xf]
      %v247 = vld [vmem:[%s226 + $0x28] sm:$0xf]
      %v248 = vld [vmem:[%s226 + $0x2c] sm:$0xf]
      %v249 = vld [vmem:[%s226 + $0x30] sm:$0xf]
      %v250 = vld [vmem:[%s226 + $0x34] sm:$0xf]
      %v251 = vld [vmem:[%s226 + $0x38] sm:$0xf]
      %v252 = vld [vmem:[%s226 + $0x3c] sm:$0xf]
      %v253 = vld [vmem:[%s226 + $0x40] sm:$0xf]
      %v254 = vld [vmem:[%s226 + $0x44] sm:$0xf]
      %v255 = vld [vmem:[%s226 + $0x48] sm:$0xf]
      %v256 = vld [vmem:[%s226 + $0x4c] sm:$0xf]
      %v257 = vld [vmem:[%s226 + $0x50] sm:$0xf]
      %v258 = vld [vmem:[%s226 + $0x54] sm:$0xf]
      %v259 = vld [vmem:[%s226 + $0x58] sm:$0xf]
      %v260 = vld [vmem:[%s226 + $0x5c] sm:$0xf]
      %v261 = vld [vmem:[%s226 + $0x60] sm:$0xf]
      %v262 = vld [vmem:[%s226 + $0x64] sm:$0xf]
      %v263 = vld [vmem:[%s226 + $0x68] sm:$0xf]
      %v264 = vld [vmem:[%s226 + $0x6c] sm:$0xf]
      %v265 = vld [vmem:[%s226 + $0x70] sm:$0xf]
      %v266 = vld [vmem:[%s226 + $0x74] sm:$0xf]
      %v267 = vld [vmem:[%s226 + $0x78] sm:$0xf]
      %v268 = vld [vmem:[%s226 + $0x7c] sm:$0xf]
      %v269 = vunpack.c.l.bf16 %v237
      %v270 = vunpack.c.l.bf16 %v238
      %v271 = vunpack.c.l.bf16 %v239
      %v272 = vunpack.c.l.bf16 %v240
      %v273 = vunpack.c.l.bf16 %v241
      %v274 = vunpack.c.l.bf16 %v242
      %v275 = vunpack.c.l.bf16 %v243
      %v276 = vunpack.c.l.bf16 %v244
      %v277 = vunpack.c.l.bf16 %v245
      %v278 = vunpack.c.l.bf16 %v246
      %v279 = vunpack.c.l.bf16 %v247
      %v280 = vunpack.c.l.bf16 %v248
      %v281 = vunpack.c.l.bf16 %v249
      %v282 = vunpack.c.l.bf16 %v250
      %v283 = vunpack.c.l.bf16 %v251
      %v284 = vunpack.c.l.bf16 %v252
      %v285 = vunpack.c.l.bf16 %v253
      %v286 = vunpack.c.l.bf16 %v254
      %v287 = vunpack.c.l.bf16 %v255
      %v288 = vunpack.c.l.bf16 %v256
      %v289 = vunpack.c.l.bf16 %v257
      %v290 = vunpack.c.l.bf16 %v258
      %v291 = vunpack.c.l.bf16 %v259
      %v292 = vunpack.c.l.bf16 %v260
      %v293 = vunpack.c.l.bf16 %v261
      %v294 = vunpack.c.l.bf16 %v262
      %v295 = vunpack.c.l.bf16 %v263
      %v296 = vunpack.c.l.bf16 %v264
      %v297 = vunpack.c.l.bf16 %v265
      %v298 = vunpack.c.l.bf16 %v266
      %v299 = vunpack.c.l.bf16 %v267
      %v300 = vunpack.c.l.bf16 %v268
      %v301 = vld [vmem:[%s1] sm:$0x1]
      %v302 = vlaneseq
      %v303 = vshrl.u32 %v302, 7
      %v304 = vsub.s32 0, %v303
      %v305 = vrot.slane %v301, %v304
      %v306 = vmul.f32 %v269, %v305
      %v307 = vmul.f32 %v270, %v305
      %v308 = vmul.f32 %v271, %v305
      %v309 = vmul.f32 %v272, %v305
      %v310 = vmul.f32 %v273, %v305
      %v311 = vmul.f32 %v274, %v305
      %v312 = vmul.f32 %v275, %v305
      %v313 = vmul.f32 %v276, %v305
      %v314 = vmul.f32 %v277, %v305
      %v315 = vmul.f32 %v278, %v305
      %v316 = vmul.f32 %v279, %v305
      %v317 = vmul.f32 %v280, %v305
      %v318 = vmul.f32 %v281, %v305
      %v319 = vmul.f32 %v282, %v305
      %v320 = vmul.f32 %v283, %v305
      %v321 = vmul.f32 %v284, %v305
      %v322 = vmul.f32 %v285, %v305
      %v323 = vmul.f32 %v286, %v305
      %v324 = vmul.f32 %v287, %v305
      %v325 = vmul.f32 %v288, %v305
      %v326 = vmul.f32 %v289, %v305
      %v327 = vmul.f32 %v290, %v305
      %v328 = vmul.f32 %v291, %v305
      %v329 = vmul.f32 %v292, %v305
      %v330 = vmul.f32 %v293, %v305
      %v331 = vmul.f32 %v294, %v305
      %v332 = vmul.f32 %v295, %v305
      %v333 = vmul.f32 %v296, %v305
      %v334 = vmul.f32 %v297, %v305
      %v335 = vmul.f32 %v298, %v305
      %v336 = vmul.f32 %v299, %v305
      %v337 = vmul.f32 %v300, %v305
      %v338 = vld [vmem:[%s1 + $0x1] sm:$0x1]
      %v339 = vlaneseq
      %v340 = vshrl.u32 %v339, 7
      %v341 = vsub.s32 0, %v340
      %v342 = vrot.slane %v338, %v341
      %v343 = vadd.f32 %v306, %v342
      %v344 = vadd.f32 %v307, %v342
      %v345 = vadd.f32 %v308, %v342
      %v346 = vadd.f32 %v309, %v342
      %v347 = vadd.f32 %v310, %v342
      %v348 = vadd.f32 %v311, %v342
      %v349 = vadd.f32 %v312, %v342
      %v350 = vadd.f32 %v313, %v342
      %v351 = vadd.f32 %v314, %v342
      %v352 = vadd.f32 %v315, %v342
      %v353 = vadd.f32 %v316, %v342
      %v354 = vadd.f32 %v317, %v342
      %v355 = vadd.f32 %v318, %v342
      %v356 = vadd.f32 %v319, %v342
      %v357 = vadd.f32 %v320, %v342
      %v358 = vadd.f32 %v321, %v342
      %v359 = vadd.f32 %v322, %v342
      %v360 = vadd.f32 %v323, %v342
      %v361 = vadd.f32 %v324, %v342
      %v362 = vadd.f32 %v325, %v342
      %v363 = vadd.f32 %v326, %v342
      %v364 = vadd.f32 %v327, %v342
      %v365 = vadd.f32 %v328, %v342
      %v366 = vadd.f32 %v329, %v342
      %v367 = vadd.f32 %v330, %v342
      %v368 = vadd.f32 %v331, %v342
      %v369 = vadd.f32 %v332, %v342
      %v370 = vadd.f32 %v333, %v342
      %v371 = vadd.f32 %v334, %v342
      %v372 = vadd.f32 %v335, %v342
      %v373 = vadd.f32 %v336, %v342
      %v374 = vadd.f32 %v337, %v342
      %v375 = vmax.f32 %v343, 0.0
      %v376 = vmax.f32 %v344, 0.0
      %v377 = vmax.f32 %v345, 0.0
      %v378 = vmax.f32 %v346, 0.0
      %v379 = vmax.f32 %v347, 0.0
      %v380 = vmax.f32 %v348, 0.0
      %v381 = vmax.f32 %v349, 0.0
      %v382 = vmax.f32 %v350, 0.0
      %v383 = vmax.f32 %v351, 0.0
      %v384 = vmax.f32 %v352, 0.0
      %v385 = vmax.f32 %v353, 0.0
      %v386 = vmax.f32 %v354, 0.0
      %v387 = vmax.f32 %v355, 0.0
      %v388 = vmax.f32 %v356, 0.0
      %v389 = vmax.f32 %v357, 0.0
      %v390 = vmax.f32 %v358, 0.0
      %v391 = vmax.f32 %v359, 0.0
      %v392 = vmax.f32 %v360, 0.0
      %v393 = vmax.f32 %v361, 0.0
      %v394 = vmax.f32 %v362, 0.0
      %v395 = vmax.f32 %v363, 0.0
      %v396 = vmax.f32 %v364, 0.0
      %v397 = vmax.f32 %v365, 0.0
      %v398 = vmax.f32 %v366, 0.0
      %v399 = vmax.f32 %v367, 0.0
      %v400 = vmax.f32 %v368, 0.0
      %v401 = vmax.f32 %v369, 0.0
      %v402 = vmax.f32 %v370, 0.0
      %v403 = vmax.f32 %v371, 0.0
      %v404 = vmax.f32 %v372, 0.0
      %v405 = vmax.f32 %v373, 0.0
      %v406 = vmax.f32 %v374, 0.0
      %407 = vst [vmem:[#allocation2] sm:$0xf] 0
      %408 = vst [vmem:[#allocation2 + $0x4] sm:$0xf] 0
      %409 = vst [vmem:[#allocation2 + $0x8] sm:$0x1] 0
      %s410 = scalar_lea.vmem [#allocation2], 204
      %411 = vst [vmem:[%s410] sm:$0xf] 0
      %412 = vst [vmem:[%s410 + $0x4] sm:$0xf] 0
      %413 = vst [vmem:[%s410 + $0x8] sm:$0x1] 0
      %vm414 = vcmask 1040384
      %vm415 = vsmask.f32 256
      %vm416 = vmand %vm414, %vm415
      %v417 = vld [vmem:[#allocation2] sm:$0x1]
      %v418 = vsel %vm416, 0, %v417
      %419 = vst [vmem:[#allocation2] sm:$0x1] %v418
      %v420 = vld [vmem:[#allocation2 + $0xc] sm:$0x1]
      %v421 = vsel %vm416, 0, %v420
      %422 = vst [vmem:[#allocation2 + $0xc] sm:$0x1] %v421
      %v423 = vld [vmem:[#allocation2 + $0x18] sm:$0x1]
      %v424 = vsel %vm416, 0, %v423
      %425 = vst [vmem:[#allocation2 + $0x18] sm:$0x1] %v424
      %v426 = vld [vmem:[#allocation2 + $0x24] sm:$0x1]
      %v427 = vsel %vm416, 0, %v426
      %428 = vst [vmem:[#allocation2 + $0x24] sm:$0x1] %v427
      %v429 = vld [vmem:[#allocation2 + $0x30] sm:$0x1]
      %v430 = vsel %vm416, 0, %v429
      %431 = vst [vmem:[#allocation2 + $0x30] sm:$0x1] %v430
      %v432 = vld [vmem:[#allocation2 + $0x3c] sm:$0x1]
      %v433 = vsel %vm416, 0, %v432
      %434 = vst [vmem:[#allocation2 + $0x3c] sm:$0x1] %v433
      %v435 = vld [vmem:[#allocation2 + $0x48] sm:$0x1]
      %v436 = vsel %vm416, 0, %v435
      %437 = vst [vmem:[#allocation2 + $0x48] sm:$0x1] %v436
      %v438 = vld [vmem:[#allocation2 + $0x54] sm:$0x1]
      %v439 = vsel %vm416, 0, %v438
      %440 = vst [vmem:[#allocation2 + $0x54] sm:$0x1] %v439
      %v441 = vld [vmem:[#allocation2 + $0x60] sm:$0x1]
      %v442 = vsel %vm416, 0, %v441
      %443 = vst [vmem:[#allocation2 + $0x60] sm:$0x1] %v442
      %v444 = vld [vmem:[#allocation2 + $0x6c] sm:$0x1]
      %v445 = vsel %vm416, 0, %v444
      %446 = vst [vmem:[#allocation2 + $0x6c] sm:$0x1] %v445
      %v447 = vld [vmem:[#allocation2 + $0x78] sm:$0x1]
      %v448 = vsel %vm416, 0, %v447
      %449 = vst [vmem:[#allocation2 + $0x78] sm:$0x1] %v448
      %v450 = vld [vmem:[#allocation2 + $0x84] sm:$0x1]
      %v451 = vsel %vm416, 0, %v450
      %452 = vst [vmem:[#allocation2 + $0x84] sm:$0x1] %v451
      %v453 = vld [vmem:[#allocation2 + $0x90] sm:$0x1]
      %v454 = vsel %vm416, 0, %v453
      %455 = vst [vmem:[#allocation2 + $0x90] sm:$0x1] %v454
      %v456 = vld [vmem:[#allocation2 + $0x9c] sm:$0x1]
      %v457 = vsel %vm416, 0, %v456
      %458 = vst [vmem:[#allocation2 + $0x9c] sm:$0x1] %v457
      %v459 = vld [vmem:[#allocation2 + $0xa8] sm:$0x1]
      %v460 = vsel %vm416, 0, %v459
      %461 = vst [vmem:[#allocation2 + $0xa8] sm:$0x1] %v460
      %v462 = vld [vmem:[#allocation2 + $0xb4] sm:$0x1]
      %v463 = vsel %vm416, 0, %v462
      %464 = vst [vmem:[#allocation2 + $0xb4] sm:$0x1] %v463
      %v465 = vld [vmem:[#allocation2 + $0xc0] sm:$0x1]
      %v466 = vsel %vm416, 0, %v465
      %467 = vst [vmem:[#allocation2 + $0xc0] sm:$0x1] %v466
      %v468 = vld [vmem:[#allocation2 + $0xcc] sm:$0x1]
      %v469 = vsel %vm416, 0, %v468
      %470 = vst [vmem:[#allocation2 + $0xcc] sm:$0x1] %v469
      %vm471 = vsmask.f32 7938
      %vm472 = vmand %vm414, %vm471
      %v473 = vld [vmem:[#allocation2 + $0x8] sm:$0x1]
      %v474 = vsel %vm472, 0, %v473
      %475 = vst [vmem:[#allocation2 + $0x8] sm:$0x1] %v474
      %v476 = vld [vmem:[#allocation2 + $0x14] sm:$0x1]
      %v477 = vsel %vm472, 0, %v476
      %478 = vst [vmem:[#allocation2 + $0x14] sm:$0x1] %v477
      %v479 = vld [vmem:[#allocation2 + $0x20] sm:$0x1]
      %v480 = vsel %vm472, 0, %v479
      %481 = vst [vmem:[#allocation2 + $0x20] sm:$0x1] %v480
      %v482 = vld [vmem:[#allocation2 + $0x2c] sm:$0x1]
      %v483 = vsel %vm472, 0, %v482
      %484 = vst [vmem:[#allocation2 + $0x2c] sm:$0x1] %v483
      %v485 = vld [vmem:[#allocation2 + $0x38] sm:$0x1]
      %v486 = vsel %vm472, 0, %v485
      %487 = vst [vmem:[#allocation2 + $0x38] sm:$0x1] %v486
      %v488 = vld [vmem:[#allocation2 + $0x44] sm:$0x1]
      %v489 = vsel %vm472, 0, %v488
      %490 = vst [vmem:[#allocation2 + $0x44] sm:$0x1] %v489
      %v491 = vld [vmem:[#allocation2 + $0x50] sm:$0x1]
      %v492 = vsel %vm472, 0, %v491
      %493 = vst [vmem:[#allocation2 + $0x50] sm:$0x1] %v492
      %v494 = vld [vmem:[#allocation2 + $0x5c] sm:$0x1]
      %v495 = vsel %vm472, 0, %v494
      %496 = vst [vmem:[#allocation2 + $0x5c] sm:$0x1] %v495
      %v497 = vld [vmem:[#allocation2 + $0x68] sm:$0x1]
      %v498 = vsel %vm472, 0, %v497
      %499 = vst [vmem:[#allocation2 + $0x68] sm:$0x1] %v498
      %v500 = vld [vmem:[#allocation2 + $0x74] sm:$0x1]
      %v501 = vsel %vm472, 0, %v500
      %502 = vst [vmem:[#allocation2 + $0x74] sm:$0x1] %v501
      %v503 = vld [vmem:[#allocation2 + $0x80] sm:$0x1]
      %v504 = vsel %vm472, 0, %v503
      %505 = vst [vmem:[#allocation2 + $0x80] sm:$0x1] %v504
      %v506 = vld [vmem:[#allocation2 + $0x8c] sm:$0x1]
      %v507 = vsel %vm472, 0, %v506
      %508 = vst [vmem:[#allocation2 + $0x8c] sm:$0x1] %v507
      %v509 = vld [vmem:[#allocation2 + $0x98] sm:$0x1]
      %v510 = vsel %vm472, 0, %v509
      %511 = vst [vmem:[#allocation2 + $0x98] sm:$0x1] %v510
      %v512 = vld [vmem:[#allocation2 + $0xa4] sm:$0x1]
      %v513 = vsel %vm472, 0, %v512
      %514 = vst [vmem:[#allocation2 + $0xa4] sm:$0x1] %v513
      %v515 = vld [vmem:[#allocation2 + $0xb0] sm:$0x1]
      %v516 = vsel %vm472, 0, %v515
      %517 = vst [vmem:[#allocation2 + $0xb0] sm:$0x1] %v516
      %v518 = vld [vmem:[#allocation2 + $0xbc] sm:$0x1]
      %v519 = vsel %vm472, 0, %v518
      %520 = vst [vmem:[#allocation2 + $0xbc] sm:$0x1] %v519
      %v521 = vld [vmem:[#allocation2 + $0xc8] sm:$0x1]
      %v522 = vsel %vm472, 0, %v521
      %523 = vst [vmem:[#allocation2 + $0xc8] sm:$0x1] %v522
      %v524 = vld [vmem:[#allocation2 + $0xd4] sm:$0x1]
      %v525 = vsel %vm472, 0, %v524
      %526 = vst [vmem:[#allocation2 + $0xd4] sm:$0x1] %v525
      %v527 = vpack.c.bf16 %v376, %v375
      %v528 = vpack.c.bf16 %v378, %v377
      %v529 = vpack.c.bf16 %v380, %v379
      %v530 = vpack.c.bf16 %v382, %v381
      %v531 = vpack.c.bf16 %v384, %v383
      %v532 = vpack.c.bf16 %v386, %v385
      %v533 = vpack.c.bf16 %v388, %v387
      %v534 = vpack.c.bf16 %v390, %v389
      %v535 = vpack.c.bf16 %v392, %v391
      %v536 = vpack.c.bf16 %v394, %v393
      %v537 = vpack.c.bf16 %v396, %v395
      %v538 = vpack.c.bf16 %v398, %v397
      %v539 = vpack.c.bf16 %v400, %v399
      %v540 = vpack.c.bf16 %v402, %v401
      %v541 = vpack.c.bf16 %v404, %v403
      %v542 = vpack.c.bf16 %v406, %v405
      %v559 = vunpack.c.l.b16 %v527
      %v560 = vunpack.c.h.b16 %v527
      %v561 = vunpack.c.l.b16 %v528
      %v562 = vunpack.c.h.b16 %v528
      %v563 = vunpack.c.l.b16 %v529
      %v564 = vunpack.c.h.b16 %v529
      %v565 = vunpack.c.l.b16 %v530
      %v566 = vunpack.c.h.b16 %v530
      %v567 = vunpack.c.l.b16 %v531
      %v568 = vunpack.c.h.b16 %v531
      %v569 = vunpack.c.l.b16 %v532
      %v570 = vunpack.c.h.b16 %v532
      %v571 = vunpack.c.l.b16 %v533
      %v572 = vunpack.c.h.b16 %v533
      %v573 = vunpack.c.l.b16 %v534
      %v574 = vunpack.c.h.b16 %v534
      %v575 = vunpack.c.l.b16 %v535
      %v576 = vunpack.c.h.b16 %v535
      %v577 = vunpack.c.l.b16 %v536
      %v578 = vunpack.c.h.b16 %v536
      %v579 = vunpack.c.l.b16 %v537
      %v580 = vunpack.c.h.b16 %v537
      %v581 = vunpack.c.l.b16 %v538
      %v582 = vunpack.c.h.b16 %v538
      %v583 = vunpack.c.l.b16 %v539
      %v584 = vunpack.c.h.b16 %v539
      %v585 = vunpack.c.l.b16 %v540
      %v586 = vunpack.c.h.b16 %v540
      %v587 = vunpack.c.l.b16 %v541
      %v588 = vunpack.c.h.b16 %v541
      %v589 = vunpack.c.l.b16 %v542
      %v590 = vunpack.c.h.b16 %v542
      %v591 = vpack.c.b16 %v559, %v559
      %v592 = vpack.c.b16 %v560, %v560
      %v593 = vpack.c.b16 %v561, %v561
      %v594 = vpack.c.b16 %v562, %v562
      %v595 = vpack.c.b16 %v563, %v563
      %v596 = vpack.c.b16 %v564, %v564
      %v597 = vpack.c.b16 %v565, %v565
      %v598 = vpack.c.b16 %v566, %v566
      %v599 = vpack.c.b16 %v567, %v567
      %v600 = vpack.c.b16 %v568, %v568
      %v601 = vpack.c.b16 %v569, %v569
      %v602 = vpack.c.b16 %v570, %v570
      %v603 = vpack.c.b16 %v571, %v571
      %v604 = vpack.c.b16 %v572, %v572
      %v605 = vpack.c.b16 %v573, %v573
      %v606 = vpack.c.b16 %v574, %v574
      %v607 = vpack.c.b16 %v575, %v575
      %v608 = vpack.c.b16 %v576, %v576
      %v609 = vpack.c.b16 %v577, %v577
      %v610 = vpack.c.b16 %v578, %v578
      %v611 = vpack.c.b16 %v579, %v579
      %v612 = vpack.c.b16 %v580, %v580
      %v613 = vpack.c.b16 %v581, %v581
      %v614 = vpack.c.b16 %v582, %v582
      %v615 = vpack.c.b16 %v583, %v583
      %v616 = vpack.c.b16 %v584, %v584
      %v617 = vpack.c.b16 %v585, %v585
      %v618 = vpack.c.b16 %v586, %v586
      %v619 = vpack.c.b16 %v587, %v587
      %v620 = vpack.c.b16 %v588, %v588
      %v621 = vpack.c.b16 %v589, %v589
      %v622 = vpack.c.b16 %v590, %v590
      %vm623 = vsmask.f32 4368
      %vm624 = vmor %vm415, %vm623
      %v626 = vshrl.u32 %v591, 16
      %v628 = vrot.slane %v626, 7
      %v629 = vshll.u32 %v591, 16
      %v631 = vor.u32 %v628, %v629
      %v632 = vrot.slane %v628, 4
      %v634 = vshrl.u32 %v592, 16
      %v636 = vrot.slane %v634, 7
      %v637 = vshll.u32 %v592, 16
      %v639 = vor.u32 %v636, %v637
      %v640 = vsel %vm624, %v632, %v639
      %v641 = vrot.slane %v636, 4
      %v643 = vshrl.u32 %v593, 16
      %v645 = vrot.slane %v643, 7
      %v646 = vshll.u32 %v593, 16
      %v648 = vor.u32 %v645, %v646
      %v649 = vrot.slane %v645, 4
      %v651 = vshrl.u32 %v594, 16
      %v653 = vrot.slane %v651, 7
      %v654 = vshll.u32 %v594, 16
      %v656 = vor.u32 %v653, %v654
      %v657 = vsel %vm624, %v649, %v656
      %v658 = vrot.slane %v653, 4
      %v660 = vshrl.u32 %v595, 16
      %v662 = vrot.slane %v660, 7
      %v663 = vshll.u32 %v595, 16
      %v665 = vor.u32 %v662, %v663
      %v666 = vrot.slane %v662, 4
      %v668 = vshrl.u32 %v596, 16
      %v670 = vrot.slane %v668, 7
      %v671 = vshll.u32 %v596, 16
      %v673 = vor.u32 %v670, %v671
      %v674 = vsel %vm624, %v666, %v673
      %v675 = vrot.slane %v670, 4
      %v677 = vshrl.u32 %v597, 16
      %v679 = vrot.slane %v677, 7
      %v680 = vshll.u32 %v597, 16
      %v682 = vor.u32 %v679, %v680
      %v683 = vrot.slane %v679, 4
      %v685 = vshrl.u32 %v598, 16
      %v687 = vrot.slane %v685, 7
      %v688 = vshll.u32 %v598, 16
      %v690 = vor.u32 %v687, %v688
      %v691 = vsel %vm624, %v683, %v690
      %v692 = vrot.slane %v687, 4
      %v694 = vshrl.u32 %v599, 16
      %v696 = vrot.slane %v694, 7
      %v697 = vshll.u32 %v599, 16
      %v699 = vor.u32 %v696, %v697
      %v700 = vrot.slane %v696, 4
      %v702 = vshrl.u32 %v600, 16
      %v704 = vrot.slane %v702, 7
      %v705 = vshll.u32 %v600, 16
      %v707 = vor.u32 %v704, %v705
      %v708 = vsel %vm624, %v700, %v707
      %v709 = vrot.slane %v704, 4
      %v711 = vshrl.u32 %v601, 16
      %v713 = vrot.slane %v711, 7
      %v714 = vshll.u32 %v601, 16
      %v716 = vor.u32 %v713, %v714
      %v717 = vrot.slane %v713, 4
      %v719 = vshrl.u32 %v602, 16
      %v721 = vrot.slane %v719, 7
      %v722 = vshll.u32 %v602, 16
      %v724 = vor.u32 %v721, %v722
      %v725 = vsel %vm624, %v717, %v724
      %v726 = vrot.slane %v721, 4
      %v728 = vshrl.u32 %v603, 16
      %v730 = vrot.slane %v728, 7
      %v731 = vshll.u32 %v603, 16
      %v733 = vor.u32 %v730, %v731
      %v734 = vrot.slane %v730, 4
      %v736 = vshrl.u32 %v604, 16
      %v738 = vrot.slane %v736, 7
      %v739 = vshll.u32 %v604, 16
      %v741 = vor.u32 %v738, %v739
      %v742 = vsel %vm624, %v734, %v741
      %v743 = vrot.slane %v738, 4
      %v745 = vshrl.u32 %v605, 16
      %v747 = vrot.slane %v745, 7
      %v748 = vshll.u32 %v605, 16
      %v750 = vor.u32 %v747, %v748
      %v751 = vrot.slane %v747, 4
      %v753 = vshrl.u32 %v606, 16
      %v755 = vrot.slane %v753, 7
      %v756 = vshll.u32 %v606, 16
      %v758 = vor.u32 %v755, %v756
      %v759 = vsel %vm624, %v751, %v758
      %v760 = vrot.slane %v755, 4
      %v762 = vshrl.u32 %v607, 16
      %v764 = vrot.slane %v762, 7
      %v765 = vshll.u32 %v607, 16
      %v767 = vor.u32 %v764, %v765
      %v768 = vrot.slane %v764, 4
      %v770 = vshrl.u32 %v608, 16
      %v772 = vrot.slane %v770, 7
      %v773 = vshll.u32 %v608, 16
      %v775 = vor.u32 %v772, %v773
      %v776 = vsel %vm624, %v768, %v775
      %v777 = vrot.slane %v772, 4
      %v779 = vshrl.u32 %v609, 16
      %v781 = vrot.slane %v779, 7
      %v782 = vshll.u32 %v609, 16
      %v784 = vor.u32 %v781, %v782
      %v785 = vrot.slane %v781, 4
      %v787 = vshrl.u32 %v610, 16
      %v789 = vrot.slane %v787, 7
      %v790 = vshll.u32 %v610, 16
      %v792 = vor.u32 %v789, %v790
      %v793 = vsel %vm624, %v785, %v792
      %v794 = vrot.slane %v789, 4
      %v796 = vshrl.u32 %v611, 16
      %v798 = vrot.slane %v796, 7
      %v799 = vshll.u32 %v611, 16
      %v801 = vor.u32 %v798, %v799
      %v802 = vrot.slane %v798, 4
      %v804 = vshrl.u32 %v612, 16
      %v806 = vrot.slane %v804, 7
      %v807 = vshll.u32 %v612, 16
      %v809 = vor.u32 %v806, %v807
      %v810 = vsel %vm624, %v802, %v809
      %v811 = vrot.slane %v806, 4
      %v813 = vshrl.u32 %v613, 16
      %v815 = vrot.slane %v813, 7
      %v816 = vshll.u32 %v613, 16
      %v818 = vor.u32 %v815, %v816
      %v819 = vrot.slane %v815, 4
      %v821 = vshrl.u32 %v614, 16
      %v823 = vrot.slane %v821, 7
      %v824 = vshll.u32 %v614, 16
      %v826 = vor.u32 %v823, %v824
      %v827 = vsel %vm624, %v819, %v826
      %v828 = vrot.slane %v823, 4
      %v830 = vshrl.u32 %v615, 16
      %v832 = vrot.slane %v830, 7
      %v833 = vshll.u32 %v615, 16
      %v835 = vor.u32 %v832, %v833
      %v836 = vrot.slane %v832, 4
      %v838 = vshrl.u32 %v616, 16
      %v840 = vrot.slane %v838, 7
      %v841 = vshll.u32 %v616, 16
      %v843 = vor.u32 %v840, %v841
      %v844 = vsel %vm624, %v836, %v843
      %v845 = vrot.slane %v840, 4
      %v847 = vshrl.u32 %v617, 16
      %v849 = vrot.slane %v847, 7
      %v850 = vshll.u32 %v617, 16
      %v852 = vor.u32 %v849, %v850
      %v853 = vrot.slane %v849, 4
      %v855 = vshrl.u32 %v618, 16
      %v857 = vrot.slane %v855, 7
      %v858 = vshll.u32 %v618, 16
      %v860 = vor.u32 %v857, %v858
      %v861 = vsel %vm624, %v853, %v860
      %v862 = vrot.slane %v857, 4
      %v864 = vshrl.u32 %v619, 16
      %v866 = vrot.slane %v864, 7
      %v867 = vshll.u32 %v619, 16
      %v869 = vor.u32 %v866, %v867
      %v870 = vrot.slane %v866, 4
      %v872 = vshrl.u32 %v620, 16
      %v874 = vrot.slane %v872, 7
      %v875 = vshll.u32 %v620, 16
      %v877 = vor.u32 %v874, %v875
      %v878 = vsel %vm624, %v870, %v877
      %v879 = vrot.slane %v874, 4
      %v881 = vshrl.u32 %v621, 16
      %v883 = vrot.slane %v881, 7
      %v884 = vshll.u32 %v621, 16
      %v886 = vor.u32 %v883, %v884
      %v887 = vrot.slane %v883, 4
      %v889 = vshrl.u32 %v622, 16
      %v891 = vrot.slane %v889, 7
      %v892 = vshll.u32 %v622, 16
      %v894 = vor.u32 %v891, %v892
      %v895 = vsel %vm624, %v887, %v894
      %v896 = vrot.slane %v891, 4
      %s945 = scalar_lea.vmem [#allocation2], 12
      %vm946 = vcmask 1043456
      %vm947 = vmand %vm946, %vm471
      %v948 = vld [vmem:[%s945] sm:$0xf]
      %v949 = vsel %vm947, %v631, %v948
      %950 = vst [vmem:[%s945] sm:$0xf] %v949
      %951 = vst [vmem:[%s945 + $0x4] sm:$0xf] %v640
      %v952 = vld [vmem:[%s945 + $0x8] sm:$0x1]
      %v953 = vsel %vm416, %v641, %v952
      %954 = vst [vmem:[%s945 + $0x8] sm:$0x1] %v953
      %v955 = vld [vmem:[%s945 + $0xc] sm:$0xf]
      %v956 = vsel %vm947, %v648, %v955
      %957 = vst [vmem:[%s945 + $0xc] sm:$0xf] %v956
      %958 = vst [vmem:[%s945 + $0x10] sm:$0xf] %v657
      %v959 = vld [vmem:[%s945 + $0x14] sm:$0x1]
      %v960 = vsel %vm416, %v658, %v959
      %961 = vst [vmem:[%s945 + $0x14] sm:$0x1] %v960
      %v962 = vld [vmem:[%s945 + $0x18] sm:$0xf]
      %v963 = vsel %vm947, %v665, %v962
      %964 = vst [vmem:[%s945 + $0x18] sm:$0xf] %v963
      %965 = vst [vmem:[%s945 + $0x1c] sm:$0xf] %v674
      %v966 = vld [vmem:[%s945 + $0x20] sm:$0x1]
      %v967 = vsel %vm416, %v675, %v966
      %968 = vst [vmem:[%s945 + $0x20] sm:$0x1] %v967
      %v969 = vld [vmem:[%s945 + $0x24] sm:$0xf]
      %v970 = vsel %vm947, %v682, %v969
      %971 = vst [vmem:[%s945 + $0x24] sm:$0xf] %v970
      %972 = vst [vmem:[%s945 + $0x28] sm:$0xf] %v691
      %v973 = vld [vmem:[%s945 + $0x2c] sm:$0x1]
      %v974 = vsel %vm416, %v692, %v973
      %975 = vst [vmem:[%s945 + $0x2c] sm:$0x1] %v974
      %v976 = vld [vmem:[%s945 + $0x30] sm:$0xf]
      %v977 = vsel %vm947, %v699, %v976
      %978 = vst [vmem:[%s945 + $0x30] sm:$0xf] %v977
      %979 = vst [vmem:[%s945 + $0x34] sm:$0xf] %v708
      %v980 = vld [vmem:[%s945 + $0x38] sm:$0x1]
      %v981 = vsel %vm416, %v709, %v980
      %982 = vst [vmem:[%s945 + $0x38] sm:$0x1] %v981
      %v983 = vld [vmem:[%s945 + $0x3c] sm:$0xf]
      %v984 = vsel %vm947, %v716, %v983
      %985 = vst [vmem:[%s945 + $0x3c] sm:$0xf] %v984
      %986 = vst [vmem:[%s945 + $0x40] sm:$0xf] %v725
      %v987 = vld [vmem:[%s945 + $0x44] sm:$0x1]
      %v988 = vsel %vm416, %v726, %v987
      %989 = vst [vmem:[%s945 + $0x44] sm:$0x1] %v988
      %v990 = vld [vmem:[%s945 + $0x48] sm:$0xf]
      %v991 = vsel %vm947, %v733, %v990
      %992 = vst [vmem:[%s945 + $0x48] sm:$0xf] %v991
      %993 = vst [vmem:[%s945 + $0x4c] sm:$0xf] %v742
      %v994 = vld [vmem:[%s945 + $0x50] sm:$0x1]
      %v995 = vsel %vm416, %v743, %v994
      %996 = vst [vmem:[%s945 + $0x50] sm:$0x1] %v995
      %v997 = vld [vmem:[%s945 + $0x54] sm:$0xf]
      %v998 = vsel %vm947, %v750, %v997
      %999 = vst [vmem:[%s945 + $0x54] sm:$0xf] %v998
      %1000 = vst [vmem:[%s945 + $0x58] sm:$0xf] %v759
      %v1001 = vld [vmem:[%s945 + $0x5c] sm:$0x1]
      %v1002 = vsel %vm416, %v760, %v1001
      %1003 = vst [vmem:[%s945 + $0x5c] sm:$0x1] %v1002
      %v1004 = vld [vmem:[%s945 + $0x60] sm:$0xf]
      %v1005 = vsel %vm947, %v767, %v1004
      %1006 = vst [vmem:[%s945 + $0x60] sm:$0xf] %v1005
      %1007 = vst [vmem:[%s945 + $0x64] sm:$0xf] %v776
      %v1008 = vld [vmem:[%s945 + $0x68] sm:$0x1]
      %v1009 = vsel %vm416, %v777, %v1008
      %1010 = vst [vmem:[%s945 + $0x68] sm:$0x1] %v1009
      %v1011 = vld [vmem:[%s945 + $0x6c] sm:$0xf]
      %v1012 = vsel %vm947, %v784, %v1011
      %1013 = vst [vmem:[%s945 + $0x6c] sm:$0xf] %v1012
      %1014 = vst [vmem:[%s945 + $0x70] sm:$0xf] %v793
      %v1015 = vld [vmem:[%s945 + $0x74] sm:$0x1]
      %v1016 = vsel %vm416, %v794, %v1015
      %1017 = vst [vmem:[%s945 + $0x74] sm:$0x1] %v1016
      %v1018 = vld [vmem:[%s945 + $0x78] sm:$0xf]
      %v1019 = vsel %vm947, %v801, %v1018
      %1020 = vst [vmem:[%s945 + $0x78] sm:$0xf] %v1019
      %1021 = vst [vmem:[%s945 + $0x7c] sm:$0xf] %v810
      %v1022 = vld [vmem:[%s945 + $0x80] sm:$0x1]
      %v1023 = vsel %vm416, %v811, %v1022
      %1024 = vst [vmem:[%s945 + $0x80] sm:$0x1] %v1023
      %v1025 = vld [vmem:[%s945 + $0x84] sm:$0xf]
      %v1026 = vsel %vm947, %v818, %v1025
      %1027 = vst [vmem:[%s945 + $0x84] sm:$0xf] %v1026
      %1028 = vst [vmem:[%s945 + $0x88] sm:$0xf] %v827
      %v1029 = vld [vmem:[%s945 + $0x8c] sm:$0x1]
      %v1030 = vsel %vm416, %v828, %v1029
      %1031 = vst [vmem:[%s945 + $0x8c] sm:$0x1] %v1030
      %v1032 = vld [vmem:[%s945 + $0x90] sm:$0xf]
      %v1033 = vsel %vm947, %v835, %v1032
      %1034 = vst [vmem:[%s945 + $0x90] sm:$0xf] %v1033
      %1035 = vst [vmem:[%s945 + $0x94] sm:$0xf] %v844
      %v1036 = vld [vmem:[%s945 + $0x98] sm:$0x1]
      %v1037 = vsel %vm416, %v845, %v1036
      %1038 = vst [vmem:[%s945 + $0x98] sm:$0x1] %v1037
      %v1039 = vld [vmem:[%s945 + $0x9c] sm:$0xf]
      %v1040 = vsel %vm947, %v852, %v1039
      %1041 = vst [vmem:[%s945 + $0x9c] sm:$0xf] %v1040
      %1042 = vst [vmem:[%s945 + $0xa0] sm:$0xf] %v861
      %v1043 = vld [vmem:[%s945 + $0xa4] sm:$0x1]
      %v1044 = vsel %vm416, %v862, %v1043
      %1045 = vst [vmem:[%s945 + $0xa4] sm:$0x1] %v1044
      %v1046 = vld [vmem:[%s945 + $0xa8] sm:$0xf]
      %v1047 = vsel %vm947, %v869, %v1046
      %1048 = vst [vmem:[%s945 + $0xa8] sm:$0xf] %v1047
      %1049 = vst [vmem:[%s945 + $0xac] sm:$0xf] %v878
      %v1050 = vld [vmem:[%s945 + $0xb0] sm:$0x1]
      %v1051 = vsel %vm416, %v879, %v1050
      %1052 = vst [vmem:[%s945 + $0xb0] sm:$0x1] %v1051
      %v1053 = vld [vmem:[%s945 + $0xb4] sm:$0xf]
      %v1054 = vsel %vm947, %v886, %v1053
      %1055 = vst [vmem:[%s945 + $0xb4] sm:$0xf] %v1054
      %1056 = vst [vmem:[%s945 + $0xb8] sm:$0xf] %v895
      %v1057 = vld [vmem:[%s945 + $0xbc] sm:$0x1]
      %v1058 = vsel %vm416, %v896, %v1057
      %1059 = vst [vmem:[%s945 + $0xbc] sm:$0x1] %v1058
      %v1060 = vld [vmem:[#allocation2] sm:$0xf]
      %v1061 = vld [vmem:[#allocation2 + $0x4] sm:$0xf]
      %v1062 = vld [vmem:[#allocation2 + $0xc] sm:$0xf]
      %v1063 = vld [vmem:[#allocation2 + $0x10] sm:$0xf]
      %v1064 = vld [vmem:[#allocation2 + $0x18] sm:$0xf]
      %v1065 = vld [vmem:[#allocation2 + $0x1c] sm:$0xf]
      %v1066 = vld [vmem:[#allocation2 + $0x24] sm:$0xf]
      %v1067 = vld [vmem:[#allocation2 + $0x28] sm:$0xf]
      %v1068 = vld [vmem:[#allocation2 + $0x30] sm:$0xf]
      %v1069 = vld [vmem:[#allocation2 + $0x34] sm:$0xf]
      %v1070 = vld [vmem:[#allocation2 + $0x3c] sm:$0xf]
      %v1071 = vld [vmem:[#allocation2 + $0x40] sm:$0xf]
      %v1072 = vld [vmem:[#allocation2 + $0x48] sm:$0xf]
      %v1073 = vld [vmem:[#allocation2 + $0x4c] sm:$0xf]
      %v1074 = vld [vmem:[#allocation2 + $0x54] sm:$0xf]
      %v1075 = vld [vmem:[#allocation2 + $0x58] sm:$0xf]
      %v1076 = vld [vmem:[#allocation2 + $0x60] sm:$0xf]
      %v1077 = vld [vmem:[#allocation2 + $0x64] sm:$0xf]
      %v1078 = vld [vmem:[#allocation2 + $0x6c] sm:$0xf]
      %v1079 = vld [vmem:[#allocation2 + $0x70] sm:$0xf]
      %v1080 = vld [vmem:[#allocation2 + $0x78] sm:$0xf]
      %v1081 = vld [vmem:[#allocation2 + $0x7c] sm:$0xf]
      %v1082 = vld [vmem:[#allocation2 + $0x84] sm:$0xf]
      %v1083 = vld [vmem:[#allocation2 + $0x88] sm:$0xf]
      %v1084 = vld [vmem:[#allocation2 + $0x90] sm:$0xf]
      %v1085 = vld [vmem:[#allocation2 + $0x94] sm:$0xf]
      %v1086 = vld [vmem:[#allocation2 + $0x9c] sm:$0xf]
      %v1087 = vld [vmem:[#allocation2 + $0xa0] sm:$0xf]
      %v1088 = vld [vmem:[#allocation2 + $0xa8] sm:$0xf]
      %v1089 = vld [vmem:[#allocation2 + $0xac] sm:$0xf]
      %v1090 = vld [vmem:[#allocation2 + $0xb4] sm:$0xf]
      %v1091 = vld [vmem:[#allocation2 + $0xb8] sm:$0xf]
      %v1124 = vunpack.c.l.b16 %v1060
      %v1125 = vunpack.c.l.b16 %v1061
      %v1126 = vunpack.c.l.b16 %v1062
      %v1127 = vunpack.c.l.b16 %v1063
      %v1128 = vunpack.c.l.b16 %v1064
      %v1129 = vunpack.c.l.b16 %v1065
      %v1130 = vunpack.c.l.b16 %v1066
      %v1131 = vunpack.c.l.b16 %v1067
      %v1132 = vunpack.c.l.b16 %v1068
      %v1133 = vunpack.c.l.b16 %v1069
      %v1134 = vunpack.c.l.b16 %v1070
      %v1135 = vunpack.c.l.b16 %v1071
      %v1136 = vunpack.c.l.b16 %v1072
      %v1137 = vunpack.c.l.b16 %v1073
      %v1138 = vunpack.c.l.b16 %v1074
      %v1139 = vunpack.c.l.b16 %v1075
      %v1140 = vunpack.c.l.b16 %v1076
      %v1141 = vunpack.c.l.b16 %v1077
      %v1142 = vunpack.c.l.b16 %v1078
      %v1143 = vunpack.c.l.b16 %v1079
      %v1144 = vunpack.c.l.b16 %v1080
      %v1145 = vunpack.c.l.b16 %v1081
      %v1146 = vunpack.c.l.b16 %v1082
      %v1147 = vunpack.c.l.b16 %v1083
      %v1148 = vunpack.c.l.b16 %v1084
      %v1149 = vunpack.c.l.b16 %v1085
      %v1150 = vunpack.c.l.b16 %v1086
      %v1151 = vunpack.c.l.b16 %v1087
      %v1152 = vunpack.c.l.b16 %v1088
      %v1153 = vunpack.c.l.b16 %v1089
      %v1154 = vunpack.c.l.b16 %v1090
      %v1155 = vunpack.c.l.b16 %v1091
      %v1156 = vpack.c.b16 %v1125, %v1124
      %v1157 = vpack.c.b16 %v1127, %v1126
      %v1158 = vpack.c.b16 %v1129, %v1128
      %v1159 = vpack.c.b16 %v1131, %v1130
      %v1160 = vpack.c.b16 %v1133, %v1132
      %v1161 = vpack.c.b16 %v1135, %v1134
      %v1162 = vpack.c.b16 %v1137, %v1136
      %v1163 = vpack.c.b16 %v1139, %v1138
      %v1164 = vpack.c.b16 %v1141, %v1140
      %v1165 = vpack.c.b16 %v1143, %v1142
      %v1166 = vpack.c.b16 %v1145, %v1144
      %v1167 = vpack.c.b16 %v1147, %v1146
      %v1168 = vpack.c.b16 %v1149, %v1148
      %v1169 = vpack.c.b16 %v1151, %v1150
      %v1170 = vpack.c.b16 %v1153, %v1152
      %v1171 = vpack.c.b16 %v1155, %v1154
      %1188 = vst [vmem:[#allocation3] sm:$0xff] %v1156
      %1189 = vst [vmem:[#allocation3 + $0x48] sm:$0xff] %v1157
      %1190 = vst [vmem:[#allocation3 + $0x90] sm:$0xff] %v1158
      %1191 = vst [vmem:[#allocation3 + $0xd8] sm:$0xff] %v1159
      %1192 = vst [vmem:[#allocation3 + $0x120] sm:$0xff] %v1160
      %1193 = vst [vmem:[#allocation3 + $0x168] sm:$0xff] %v1161
      %1194 = vst [vmem:[#allocation3 + $0x1b0] sm:$0xff] %v1162
      %1195 = vst [vmem:[#allocation3 + $0x1f8] sm:$0xff] %v1163
      %1196 = vst [vmem:[#allocation3 + $0x240] sm:$0xff] %v1164
      %1197 = vst [vmem:[#allocation3 + $0x288] sm:$0xff] %v1165
      %1198 = vst [vmem:[#allocation3 + $0x2d0] sm:$0xff] %v1166
      %1199 = vst [vmem:[#allocation3 + $0x318] sm:$0xff] %v1167
      %1200 = vst [vmem:[#allocation3 + $0x360] sm:$0xff] %v1168
      %1201 = vst [vmem:[#allocation3 + $0x3a8] sm:$0xff] %v1169
      %1202 = vst [vmem:[#allocation3 + $0x3f0] sm:$0xff] %v1170
      %1203 = vst [vmem:[#allocation3 + $0x438] sm:$0xff] %v1171
      %v1204 = vld [vmem:[#allocation2] sm:$0xf]
      %v1205 = vld [vmem:[#allocation2 + $0x4] sm:$0xf]
      %v1206 = vld [vmem:[#allocation2 + $0x8] sm:$0x1]
      %v1207 = vld [vmem:[#allocation2 + $0xc] sm:$0xf]
      %v1208 = vld [vmem:[#allocation2 + $0x10] sm:$0xf]
      %v1209 = vld [vmem:[#allocation2 + $0x14] sm:$0x1]
      %v1210 = vld [vmem:[#allocation2 + $0x18] sm:$0xf]
      %v1211 = vld [vmem:[#allocation2 + $0x1c] sm:$0xf]
      %v1212 = vld [vmem:[#allocation2 + $0x20] sm:$0x1]
      %v1213 = vld [vmem:[#allocation2 + $0x24] sm:$0xf]
      %v1214 = vld [vmem:[#allocation2 + $0x28] sm:$0xf]
      %v1215 = vld [vmem:[#allocation2 + $0x2c] sm:$0x1]
      %v1216 = vld [vmem:[#allocation2 + $0x30] sm:$0xf]
      %v1217 = vld [vmem:[#allocation2 + $0x34] sm:$0xf]
      %v1218 = vld [vmem:[#allocation2 + $0x38] sm:$0x1]
      %v1219 = vld [vmem:[#allocation2 + $0x3c] sm:$0xf]
      %v1220 = vld [vmem:[#allocation2 + $0x40] sm:$0xf]
      %v1221 = vld [vmem:[#allocation2 + $0x44] sm:$0x1]
      %v1222 = vld [vmem:[#allocation2 + $0x48] sm:$0xf]
      %v1223 = vld [vmem:[#allocation2 + $0x4c] sm:$0xf]
      %v1224 = vld [vmem:[#allocation2 + $0x50] sm:$0x1]
      %v1225 = vld [vmem:[#allocation2 + $0x54] sm:$0xf]
      %v1226 = vld [vmem:[#allocation2 + $0x58] sm:$0xf]
      %v1227 = vld [vmem:[#allocation2 + $0x5c] sm:$0x1]
      %v1228 = vld [vmem:[#allocation2 + $0x60] sm:$0xf]
      %v1229 = vld [vmem:[#allocation2 + $0x64] sm:$0xf]
      %v1230 = vld [vmem:[#allocation2 + $0x68] sm:$0x1]
      %v1231 = vld [vmem:[#allocation2 + $0x6c] sm:$0xf]
      %v1232 = vld [vmem:[#allocation2 + $0x70] sm:$0xf]
      %v1233 = vld [vmem:[#allocation2 + $0x74] sm:$0x1]
      %v1234 = vld [vmem:[#allocation2 + $0x78] sm:$0xf]
      %v1235 = vld [vmem:[#allocation2 + $0x7c] sm:$0xf]
      %v1236 = vld [vmem:[#allocation2 + $0x80] sm:$0x1]
      %v1237 = vld [vmem:[#allocation2 + $0x84] sm:$0xf]
      %v1238 = vld [vmem:[#allocation2 + $0x88] sm:$0xf]
      %v1239 = vld [vmem:[#allocation2 + $0x8c] sm:$0x1]
      %v1240 = vld [vmem:[#allocation2 + $0x90] sm:$0xf]
      %v1241 = vld [vmem:[#allocation2 + $0x94] sm:$0xf]
      %v1242 = vld [vmem:[#allocation2 + $0x98] sm:$0x1]
      %v1243 = vld [vmem:[#allocation2 + $0x9c] sm:$0xf]
      %v1244 = vld [vmem:[#allocation2 + $0xa0] sm:$0xf]
      %v1245 = vld [vmem:[#allocation2 + $0xa4] sm:$0x1]
      %v1246 = vld [vmem:[#allocation2 + $0xa8] sm:$0xf]
      %v1247 = vld [vmem:[#allocation2 + $0xac] sm:$0xf]
      %v1248 = vld [vmem:[#allocation2 + $0xb0] sm:$0x1]
      %v1249 = vld [vmem:[#allocation2 + $0xb4] sm:$0xf]
      %v1250 = vld [vmem:[#allocation2 + $0xb8] sm:$0xf]
      %v1251 = vld [vmem:[#allocation2 + $0xbc] sm:$0x1]
      %vm1252 = vsmask.f32 3328
      %vm1253 = vsmask.f32 7440
      %vm1254 = vmor %vm1252, %vm1253
      %v1256 = vshrl.u32 %v1204, 16
      %v1258 = vrot.slane %v1256, 4
      %v1259 = vshll.u32 %v1204, 16
      %v1261 = vrot.slane %v1259, 5
      %v1262 = vor.u32 %v1258, %v1261
      %v1263 = vrot.slane %v1262, 4
      %v1265 = vshll.u32 %v1205, 16
      %v1267 = vrot.slane %v1265, 5
      %v1268 = vsel %vm1254, %v1263, %v1267
      %v1269 = vshrl.u32 %v1205, 16
      %v1271 = vrot.slane %v1269, 4
      %v1272 = vor.u32 %v1271, %v1267
      %v1273 = vrot.slane %v1272, 4
      %v1275 = vshll.u32 %v1206, 16
      %v1277 = vrot.slane %v1275, 5
      %v1278 = vsel %vm1254, %v1273, %v1277
      %v1280 = vshrl.u32 %v1207, 16
      %v1282 = vrot.slane %v1280, 4
      %v1283 = vshll.u32 %v1207, 16
      %v1285 = vrot.slane %v1283, 5
      %v1286 = vor.u32 %v1282, %v1285
      %v1287 = vrot.slane %v1286, 4
      %v1289 = vshll.u32 %v1208, 16
      %v1291 = vrot.slane %v1289, 5
      %v1292 = vsel %vm1254, %v1287, %v1291
      %v1293 = vshrl.u32 %v1208, 16
      %v1295 = vrot.slane %v1293, 4
      %v1296 = vor.u32 %v1295, %v1291
      %v1297 = vrot.slane %v1296, 4
      %v1299 = vshll.u32 %v1209, 16
      %v1301 = vrot.slane %v1299, 5
      %v1302 = vsel %vm1254, %v1297, %v1301
      %v1304 = vshrl.u32 %v1210, 16
      %v1306 = vrot.slane %v1304, 4
      %v1307 = vshll.u32 %v1210, 16
      %v1309 = vrot.slane %v1307, 5
      %v1310 = vor.u32 %v1306, %v1309
      %v1311 = vrot.slane %v1310, 4
      %v1313 = vshll.u32 %v1211, 16
      %v1315 = vrot.slane %v1313, 5
      %v1316 = vsel %vm1254, %v1311, %v1315
      %v1317 = vshrl.u32 %v1211, 16
      %v1319 = vrot.slane %v1317, 4
      %v1320 = vor.u32 %v1319, %v1315
      %v1321 = vrot.slane %v1320, 4
      %v1323 = vshll.u32 %v1212, 16
      %v1325 = vrot.slane %v1323, 5
      %v1326 = vsel %vm1254, %v1321, %v1325
      %v1328 = vshrl.u32 %v1213, 16
      %v1330 = vrot.slane %v1328, 4
      %v1331 = vshll.u32 %v1213, 16
      %v1333 = vrot.slane %v1331, 5
      %v1334 = vor.u32 %v1330, %v1333
      %v1335 = vrot.slane %v1334, 4
      %v1337 = vshll.u32 %v1214, 16
      %v1339 = vrot.slane %v1337, 5
      %v1340 = vsel %vm1254, %v1335, %v1339
      %v1341 = vshrl.u32 %v1214, 16
      %v1343 = vrot.slane %v1341, 4
      %v1344 = vor.u32 %v1343, %v1339
      %v1345 = vrot.slane %v1344, 4
      %v1347 = vshll.u32 %v1215, 16
      %v1349 = vrot.slane %v1347, 5
      %v1350 = vsel %vm1254, %v1345, %v1349
      %v1352 = vshrl.u32 %v1216, 16
      %v1354 = vrot.slane %v1352, 4
      %v1355 = vshll.u32 %v1216, 16
      %v1357 = vrot.slane %v1355, 5
      %v1358 = vor.u32 %v1354, %v1357
      %v1359 = vrot.slane %v1358, 4
      %v1361 = vshll.u32 %v1217, 16
      %v1363 = vrot.slane %v1361, 5
      %v1364 = vsel %vm1254, %v1359, %v1363
      %v1365 = vshrl.u32 %v1217, 16
      %v1367 = vrot.slane %v1365, 4
      %v1368 = vor.u32 %v1367, %v1363
      %v1369 = vrot.slane %v1368, 4
      %v1371 = vshll.u32 %v1218, 16
      %v1373 = vrot.slane %v1371, 5
      %v1374 = vsel %vm1254, %v1369, %v1373
      %v1376 = vshrl.u32 %v1219, 16
      %v1378 = vrot.slane %v1376, 4
      %v1379 = vshll.u32 %v1219, 16
      %v1381 = vrot.slane %v1379, 5
      %v1382 = vor.u32 %v1378, %v1381
      %v1383 = vrot.slane %v1382, 4
      %v1385 = vshll.u32 %v1220, 16
      %v1387 = vrot.slane %v1385, 5
      %v1388 = vsel %vm1254, %v1383, %v1387
      %v1389 = vshrl.u32 %v1220, 16
      %v1391 = vrot.slane %v1389, 4
      %v1392 = vor.u32 %v1391, %v1387
      %v1393 = vrot.slane %v1392, 4
      %v1395 = vshll.u32 %v1221, 16
      %v1397 = vrot.slane %v1395, 5
      %v1398 = vsel %vm1254, %v1393, %v1397
      %v1400 = vshrl.u32 %v1222, 16
      %v1402 = vrot.slane %v1400, 4
      %v1403 = vshll.u32 %v1222, 16
      %v1405 = vrot.slane %v1403, 5
      %v1406 = vor.u32 %v1402, %v1405
      %v1407 = vrot.slane %v1406, 4
      %v1409 = vshll.u32 %v1223, 16
      %v1411 = vrot.slane %v1409, 5
      %v1412 = vsel %vm1254, %v1407, %v1411
      %v1413 = vshrl.u32 %v1223, 16
      %v1415 = vrot.slane %v1413, 4
      %v1416 = vor.u32 %v1415, %v1411
      %v1417 = vrot.slane %v1416, 4
      %v1419 = vshll.u32 %v1224, 16
      %v1421 = vrot.slane %v1419, 5
      %v1422 = vsel %vm1254, %v1417, %v1421
      %v1424 = vshrl.u32 %v1225, 16
      %v1426 = vrot.slane %v1424, 4
      %v1427 = vshll.u32 %v1225, 16
      %v1429 = vrot.slane %v1427, 5
      %v1430 = vor.u32 %v1426, %v1429
      %v1431 = vrot.slane %v1430, 4
      %v1433 = vshll.u32 %v1226, 16
      %v1435 = vrot.slane %v1433, 5
      %v1436 = vsel %vm1254, %v1431, %v1435
      %v1437 = vshrl.u32 %v1226, 16
      %v1439 = vrot.slane %v1437, 4
      %v1440 = vor.u32 %v1439, %v1435
      %v1441 = vrot.slane %v1440, 4
      %v1443 = vshll.u32 %v1227, 16
      %v1445 = vrot.slane %v1443, 5
      %v1446 = vsel %vm1254, %v1441, %v1445
      %v1448 = vshrl.u32 %v1228, 16
      %v1450 = vrot.slane %v1448, 4
      %v1451 = vshll.u32 %v1228, 16
      %v1453 = vrot.slane %v1451, 5
      %v1454 = vor.u32 %v1450, %v1453
      %v1455 = vrot.slane %v1454, 4
      %v1457 = vshll.u32 %v1229, 16
      %v1459 = vrot.slane %v1457, 5
      %v1460 = vsel %vm1254, %v1455, %v1459
      %v1461 = vshrl.u32 %v1229, 16
      %v1463 = vrot.slane %v1461, 4
      %v1464 = vor.u32 %v1463, %v1459
      %v1465 = vrot.slane %v1464, 4
      %v1467 = vshll.u32 %v1230, 16
      %v1469 = vrot.slane %v1467, 5
      %v1470 = vsel %vm1254, %v1465, %v1469
      %v1472 = vshrl.u32 %v1231, 16
      %v1474 = vrot.slane %v1472, 4
      %v1475 = vshll.u32 %v1231, 16
      %v1477 = vrot.slane %v1475, 5
      %v1478 = vor.u32 %v1474, %v1477
      %v1479 = vrot.slane %v1478, 4
      %v1481 = vshll.u32 %v1232, 16
      %v1483 = vrot.slane %v1481, 5
      %v1484 = vsel %vm1254, %v1479, %v1483
      %v1485 = vshrl.u32 %v1232, 16
      %v1487 = vrot.slane %v1485, 4
      %v1488 = vor.u32 %v1487, %v1483
      %v1489 = vrot.slane %v1488, 4
      %v1491 = vshll.u32 %v1233, 16
      %v1493 = vrot.slane %v1491, 5
      %v1494 = vsel %vm1254, %v1489, %v1493
      %v1496 = vshrl.u32 %v1234, 16
      %v1498 = vrot.slane %v1496, 4
      %v1499 = vshll.u32 %v1234, 16
      %v1501 = vrot.slane %v1499, 5
      %v1502 = vor.u32 %v1498, %v1501
      %v1503 = vrot.slane %v1502, 4
      %v1505 = vshll.u32 %v1235, 16
      %v1507 = vrot.slane %v1505, 5
      %v1508 = vsel %vm1254, %v1503, %v1507
      %v1509 = vshrl.u32 %v1235, 16
      %v1511 = vrot.slane %v1509, 4
      %v1512 = vor.u32 %v1511, %v1507
      %v1513 = vrot.slane %v1512, 4
      %v1515 = vshll.u32 %v1236, 16
      %v1517 = vrot.slane %v1515, 5
      %v1518 = vsel %vm1254, %v1513, %v1517
      %v1520 = vshrl.u32 %v1237, 16
      %v1522 = vrot.slane %v1520, 4
      %v1523 = vshll.u32 %v1237, 16
      %v1525 = vrot.slane %v1523, 5
      %v1526 = vor.u32 %v1522, %v1525
      %v1527 = vrot.slane %v1526, 4
      %v1529 = vshll.u32 %v1238, 16
      %v1531 = vrot.slane %v1529, 5
      %v1532 = vsel %vm1254, %v1527, %v1531
      %v1533 = vshrl.u32 %v1238, 16
      %v1535 = vrot.slane %v1533, 4
      %v1536 = vor.u32 %v1535, %v1531
      %v1537 = vrot.slane %v1536, 4
      %v1539 = vshll.u32 %v1239, 16
      %v1541 = vrot.slane %v1539, 5
      %v1542 = vsel %vm1254, %v1537, %v1541
      %v1544 = vshrl.u32 %v1240, 16
      %v1546 = vrot.slane %v1544, 4
      %v1547 = vshll.u32 %v1240, 16
      %v1549 = vrot.slane %v1547, 5
      %v1550 = vor.u32 %v1546, %v1549
      %v1551 = vrot.slane %v1550, 4
      %v1553 = vshll.u32 %v1241, 16
      %v1555 = vrot.slane %v1553, 5
      %v1556 = vsel %vm1254, %v1551, %v1555
      %v1557 = vshrl.u32 %v1241, 16
      %v1559 = vrot.slane %v1557, 4
      %v1560 = vor.u32 %v1559, %v1555
      %v1561 = vrot.slane %v1560, 4
      %v1563 = vshll.u32 %v1242, 16
      %v1565 = vrot.slane %v1563, 5
      %v1566 = vsel %vm1254, %v1561, %v1565
      %v1568 = vshrl.u32 %v1243, 16
      %v1570 = vrot.slane %v1568, 4
      %v1571 = vshll.u32 %v1243, 16
      %v1573 = vrot.slane %v1571, 5
      %v1574 = vor.u32 %v1570, %v1573
      %v1575 = vrot.slane %v1574, 4
      %v1577 = vshll.u32 %v1244, 16
      %v1579 = vrot.slane %v1577, 5
      %v1580 = vsel %vm1254, %v1575, %v1579
      %v1581 = vshrl.u32 %v1244, 16
      %v1583 = vrot.slane %v1581, 4
      %v1584 = vor.u32 %v1583, %v1579
      %v1585 = vrot.slane %v1584, 4
      %v1587 = vshll.u32 %v1245, 16
      %v1589 = vrot.slane %v1587, 5
      %v1590 = vsel %vm1254, %v1585, %v1589
      %v1592 = vshrl.u32 %v1246, 16
      %v1594 = vrot.slane %v1592, 4
      %v1595 = vshll.u32 %v1246, 16
      %v1597 = vrot.slane %v1595, 5
      %v1598 = vor.u32 %v1594, %v1597
      %v1599 = vrot.slane %v1598, 4
      %v1601 = vshll.u32 %v1247, 16
      %v1603 = vrot.slane %v1601, 5
      %v1604 = vsel %vm1254, %v1599, %v1603
      %v1605 = vshrl.u32 %v1247, 16
      %v1607 = vrot.slane %v1605, 4
      %v1608 = vor.u32 %v1607, %v1603
      %v1609 = vrot.slane %v1608, 4
      %v1611 = vshll.u32 %v1248, 16
      %v1613 = vrot.slane %v1611, 5
      %v1614 = vsel %vm1254, %v1609, %v1613
      %v1616 = vshrl.u32 %v1249, 16
      %v1618 = vrot.slane %v1616, 4
      %v1619 = vshll.u32 %v1249, 16
      %v1621 = vrot.slane %v1619, 5
      %v1622 = vor.u32 %v1618, %v1621
      %v1623 = vrot.slane %v1622, 4
      %v1625 = vshll.u32 %v1250, 16
      %v1627 = vrot.slane %v1625, 5
      %v1628 = vsel %vm1254, %v1623, %v1627
      %v1629 = vshrl.u32 %v1250, 16
      %v1631 = vrot.slane %v1629, 4
      %v1632 = vor.u32 %v1631, %v1627
      %v1633 = vrot.slane %v1632, 4
      %v1635 = vshll.u32 %v1251, 16
      %v1637 = vrot.slane %v1635, 5
      %v1638 = vsel %vm1254, %v1633, %v1637
      %v1639 = vunpack.c.l.b16 %v1268
      %v1640 = vunpack.c.l.b16 %v1278
      %v1641 = vunpack.c.l.b16 %v1292
      %v1642 = vunpack.c.l.b16 %v1302
      %v1643 = vunpack.c.l.b16 %v1316
      %v1644 = vunpack.c.l.b16 %v1326
      %v1645 = vunpack.c.l.b16 %v1340
      %v1646 = vunpack.c.l.b16 %v1350
      %v1647 = vunpack.c.l.b16 %v1364
      %v1648 = vunpack.c.l.b16 %v1374
      %v1649 = vunpack.c.l.b16 %v1388
      %v1650 = vunpack.c.l.b16 %v1398
      %v1651 = vunpack.c.l.b16 %v1412
      %v1652 = vunpack.c.l.b16 %v1422
      %v1653 = vunpack.c.l.b16 %v1436
      %v1654 = vunpack.c.l.b16 %v1446
      %v1655 = vunpack.c.l.b16 %v1460
      %v1656 = vunpack.c.l.b16 %v1470
      %v1657 = vunpack.c.l.b16 %v1484
      %v1658 = vunpack.c.l.b16 %v1494
      %v1659 = vunpack.c.l.b16 %v1508
      %v1660 = vunpack.c.l.b16 %v1518
      %v1661 = vunpack.c.l.b16 %v1532
      %v1662 = vunpack.c.l.b16 %v1542
      %v1663 = vunpack.c.l.b16 %v1556
      %v1664 = vunpack.c.l.b16 %v1566
      %v1665 = vunpack.c.l.b16 %v1580
      %v1666 = vunpack.c.l.b16 %v1590
      %v1667 = vunpack.c.l.b16 %v1604
      %v1668 = vunpack.c.l.b16 %v1614
      %v1669 = vunpack.c.l.b16 %v1628
      %v1670 = vunpack.c.l.b16 %v1638
      %v1671 = vpack.c.b16 %v1640, %v1639
      %v1672 = vpack.c.b16 %v1642, %v1641
      %v1673 = vpack.c.b16 %v1644, %v1643
      %v1674 = vpack.c.b16 %v1646, %v1645
      %v1675 = vpack.c.b16 %v1648, %v1647
      %v1676 = vpack.c.b16 %v1650, %v1649
      %v1677 = vpack.c.b16 %v1652, %v1651
      %v1678 = vpack.c.b16 %v1654, %v1653
      %v1679 = vpack.c.b16 %v1656, %v1655
      %v1680 = vpack.c.b16 %v1658, %v1657
      %v1681 = vpack.c.b16 %v1660, %v1659
      %v1682 = vpack.c.b16 %v1662, %v1661
      %v1683 = vpack.c.b16 %v1664, %v1663
      %v1684 = vpack.c.b16 %v1666, %v1665
      %v1685 = vpack.c.b16 %v1668, %v1667
      %v1686 = vpack.c.b16 %v1670, %v1669
      %1703 = vst [vmem:[#allocation3 + $0x8] sm:$0xff] %v1671
      %1704 = vst [vmem:[#allocation3 + $0x50] sm:$0xff] %v1672
      %1705 = vst [vmem:[#allocation3 + $0x98] sm:$0xff] %v1673
      %1706 = vst [vmem:[#allocation3 + $0xe0] sm:$0xff] %v1674
      %1707 = vst [vmem:[#allocation3 + $0x128] sm:$0xff] %v1675
      %1708 = vst [vmem:[#allocation3 + $0x170] sm:$0xff] %v1676
      %1709 = vst [vmem:[#allocation3 + $0x1b8] sm:$0xff] %v1677
      %1710 = vst [vmem:[#allocation3 + $0x200] sm:$0xff] %v1678
      %1711 = vst [vmem:[#allocation3 + $0x248] sm:$0xff] %v1679
      %1712 = vst [vmem:[#allocation3 + $0x290] sm:$0xff] %v1680
      %1713 = vst [vmem:[#allocation3 + $0x2d8] sm:$0xff] %v1681
      %1714 = vst [vmem:[#allocation3 + $0x320] sm:$0xff] %v1682
      %1715 = vst [vmem:[#allocation3 + $0x368] sm:$0xff] %v1683
      %1716 = vst [vmem:[#allocation3 + $0x3b0] sm:$0xff] %v1684
      %1717 = vst [vmem:[#allocation3 + $0x3f8] sm:$0xff] %v1685
      %1718 = vst [vmem:[#allocation3 + $0x440] sm:$0xff] %v1686
      %v1719 = vld [vmem:[#allocation2] sm:$0xe]
      %v1720 = vld [vmem:[#allocation2 + $0x4] sm:$0xf]
      %v1721 = vld [vmem:[#allocation2 + $0x8] sm:$0x1]
      %v1722 = vld [vmem:[#allocation2 + $0xc] sm:$0xe]
      %v1723 = vld [vmem:[#allocation2 + $0x10] sm:$0xf]
      %v1724 = vld [vmem:[#allocation2 + $0x14] sm:$0x1]
      %v1725 = vld [vmem:[#allocation2 + $0x18] sm:$0xe]
      %v1726 = vld [vmem:[#allocation2 + $0x1c] sm:$0xf]
      %v1727 = vld [vmem:[#allocation2 + $0x20] sm:$0x1]
      %v1728 = vld [vmem:[#allocation2 + $0x24] sm:$0xe]
      %v1729 = vld [vmem:[#allocation2 + $0x28] sm:$0xf]
      %v1730 = vld [vmem:[#allocation2 + $0x2c] sm:$0x1]
      %v1731 = vld [vmem:[#allocation2 + $0x30] sm:$0xe]
      %v1732 = vld [vmem:[#allocation2 + $0x34] sm:$0xf]
      %v1733 = vld [vmem:[#allocation2 + $0x38] sm:$0x1]
      %v1734 = vld [vmem:[#allocation2 + $0x3c] sm:$0xe]
      %v1735 = vld [vmem:[#allocation2 + $0x40] sm:$0xf]
      %v1736 = vld [vmem:[#allocation2 + $0x44] sm:$0x1]
      %v1737 = vld [vmem:[#allocation2 + $0x48] sm:$0xe]
      %v1738 = vld [vmem:[#allocation2 + $0x4c] sm:$0xf]
      %v1739 = vld [vmem:[#allocation2 + $0x50] sm:$0x1]
      %v1740 = vld [vmem:[#allocation2 + $0x54] sm:$0xe]
      %v1741 = vld [vmem:[#allocation2 + $0x58] sm:$0xf]
      %v1742 = vld [vmem:[#allocation2 + $0x5c] sm:$0x1]
      %v1743 = vld [vmem:[#allocation2 + $0x60] sm:$0xe]
      %v1744 = vld [vmem:[#allocation2 + $0x64] sm:$0xf]
      %v1745 = vld [vmem:[#allocation2 + $0x68] sm:$0x1]
      %v1746 = vld [vmem:[#allocation2 + $0x6c] sm:$0xe]
      %v1747 = vld [vmem:[#allocation2 + $0x70] sm:$0xf]
      %v1748 = vld [vmem:[#allocation2 + $0x74] sm:$0x1]
      %v1749 = vld [vmem:[#allocation2 + $0x78] sm:$0xe]
      %v1750 = vld [vmem:[#allocation2 + $0x7c] sm:$0xf]
      %v1751 = vld [vmem:[#allocation2 + $0x80] sm:$0x1]
      %v1752 = vld [vmem:[#allocation2 + $0x84] sm:$0xe]
      %v1753 = vld [vmem:[#allocation2 + $0x88] sm:$0xf]
      %v1754 = vld [vmem:[#allocation2 + $0x8c] sm:$0x1]
      %v1755 = vld [vmem:[#allocation2 + $0x90] sm:$0xe]
      %v1756 = vld [vmem:[#allocation2 + $0x94] sm:$0xf]
      %v1757 = vld [vmem:[#allocation2 + $0x98] sm:$0x1]
      %v1758 = vld [vmem:[#allocation2 + $0x9c] sm:$0xe]
      %v1759 = vld [vmem:[#allocation2 + $0xa0] sm:$0xf]
      %v1760 = vld [vmem:[#allocation2 + $0xa4] sm:$0x1]
      %v1761 = vld [vmem:[#allocation2 + $0xa8] sm:$0xe]
      %v1762 = vld [vmem:[#allocation2 + $0xac] sm:$0xf]
      %v1763 = vld [vmem:[#allocation2 + $0xb0] sm:$0x1]
      %v1764 = vld [vmem:[#allocation2 + $0xb4] sm:$0xe]
      %v1765 = vld [vmem:[#allocation2 + $0xb8] sm:$0xf]
      %v1766 = vld [vmem:[#allocation2 + $0xbc] sm:$0x1]
      %vm1815 = vcmask 1042432
      %vm1816 = vcmask 1046532
      %vm1817 = vmor %vm1815, %vm1816
      %v1818 = vrot.slane %v1719, 5
      %v1819 = vrot.slane %v1818, 4
      %v1820 = vrot.slane %v1720, 5
      %v1821 = vsel %vm1817, %v1819, %v1820
      %v1822 = vrot.slane %v1820, 4
      %v1823 = vrot.slane %v1721, 5
      %v1824 = vsel %vm1817, %v1822, %v1823
      %v1825 = vrot.slane %v1722, 5
      %v1826 = vrot.slane %v1825, 4
      %v1827 = vrot.slane %v1723, 5
      %v1828 = vsel %vm1817, %v1826, %v1827
      %v1829 = vrot.slane %v1827, 4
      %v1830 = vrot.slane %v1724, 5
      %v1831 = vsel %vm1817, %v1829, %v1830
      %v1832 = vrot.slane %v1725, 5
      %v1833 = vrot.slane %v1832, 4
      %v1834 = vrot.slane %v1726, 5
      %v1835 = vsel %vm1817, %v1833, %v1834
      %v1836 = vrot.slane %v1834, 4
      %v1837 = vrot.slane %v1727, 5
      %v1838 = vsel %vm1817, %v1836, %v1837
      %v1839 = vrot.slane %v1728, 5
      %v1840 = vrot.slane %v1839, 4
      %v1841 = vrot.slane %v1729, 5
      %v1842 = vsel %vm1817, %v1840, %v1841
      %v1843 = vrot.slane %v1841, 4
      %v1844 = vrot.slane %v1730, 5
      %v1845 = vsel %vm1817, %v1843, %v1844
      %v1846 = vrot.slane %v1731, 5
      %v1847 = vrot.slane %v1846, 4
      %v1848 = vrot.slane %v1732, 5
      %v1849 = vsel %vm1817, %v1847, %v1848
      %v1850 = vrot.slane %v1848, 4
      %v1851 = vrot.slane %v1733, 5
      %v1852 = vsel %vm1817, %v1850, %v1851
      %v1853 = vrot.slane %v1734, 5
      %v1854 = vrot.slane %v1853, 4
      %v1855 = vrot.slane %v1735, 5
      %v1856 = vsel %vm1817, %v1854, %v1855
      %v1857 = vrot.slane %v1855, 4
      %v1858 = vrot.slane %v1736, 5
      %v1859 = vsel %vm1817, %v1857, %v1858
      %v1860 = vrot.slane %v1737, 5
      %v1861 = vrot.slane %v1860, 4
      %v1862 = vrot.slane %v1738, 5
      %v1863 = vsel %vm1817, %v1861, %v1862
      %v1864 = vrot.slane %v1862, 4
      %v1865 = vrot.slane %v1739, 5
      %v1866 = vsel %vm1817, %v1864, %v1865
      %v1867 = vrot.slane %v1740, 5
      %v1868 = vrot.slane %v1867, 4
      %v1869 = vrot.slane %v1741, 5
      %v1870 = vsel %vm1817, %v1868, %v1869
      %v1871 = vrot.slane %v1869, 4
      %v1872 = vrot.slane %v1742, 5
      %v1873 = vsel %vm1817, %v1871, %v1872
      %v1874 = vrot.slane %v1743, 5
      %v1875 = vrot.slane %v1874, 4
      %v1876 = vrot.slane %v1744, 5
      %v1877 = vsel %vm1817, %v1875, %v1876
      %v1878 = vrot.slane %v1876, 4
      %v1879 = vrot.slane %v1745, 5
      %v1880 = vsel %vm1817, %v1878, %v1879
      %v1881 = vrot.slane %v1746, 5
      %v1882 = vrot.slane %v1881, 4
      %v1883 = vrot.slane %v1747, 5
      %v1884 = vsel %vm1817, %v1882, %v1883
      %v1885 = vrot.slane %v1883, 4
      %v1886 = vrot.slane %v1748, 5
      %v1887 = vsel %vm1817, %v1885, %v1886
      %v1888 = vrot.slane %v1749, 5
      %v1889 = vrot.slane %v1888, 4
      %v1890 = vrot.slane %v1750, 5
      %v1891 = vsel %vm1817, %v1889, %v1890
      %v1892 = vrot.slane %v1890, 4
      %v1893 = vrot.slane %v1751, 5
      %v1894 = vsel %vm1817, %v1892, %v1893
      %v1895 = vrot.slane %v1752, 5
      %v1896 = vrot.slane %v1895, 4
      %v1897 = vrot.slane %v1753, 5
      %v1898 = vsel %vm1817, %v1896, %v1897
      %v1899 = vrot.slane %v1897, 4
      %v1900 = vrot.slane %v1754, 5
      %v1901 = vsel %vm1817, %v1899, %v1900
      %v1902 = vrot.slane %v1755, 5
      %v1903 = vrot.slane %v1902, 4
      %v1904 = vrot.slane %v1756, 5
      %v1905 = vsel %vm1817, %v1903, %v1904
      %v1906 = vrot.slane %v1904, 4
      %v1907 = vrot.slane %v1757, 5
      %v1908 = vsel %vm1817, %v1906, %v1907
      %v1909 = vrot.slane %v1758, 5
      %v1910 = vrot.slane %v1909, 4
      %v1911 = vrot.slane %v1759, 5
      %v1912 = vsel %vm1817, %v1910, %v1911
      %v1913 = vrot.slane %v1911, 4
      %v1914 = vrot.slane %v1760, 5
      %v1915 = vsel %vm1817, %v1913, %v1914
      %v1916 = vrot.slane %v1761, 5
      %v1917 = vrot.slane %v1916, 4
      %v1918 = vrot.slane %v1762, 5
      %v1919 = vsel %vm1817, %v1917, %v1918
      %v1920 = vrot.slane %v1918, 4
      %v1921 = vrot.slane %v1763, 5
      %v1922 = vsel %vm1817, %v1920, %v1921
      %v1923 = vrot.slane %v1764, 5
      %v1924 = vrot.slane %v1923, 4
      %v1925 = vrot.slane %v1765, 5
      %v1926 = vsel %vm1817, %v1924, %v1925
      %v1927 = vrot.slane %v1925, 4
      %v1928 = vrot.slane %v1766, 5
      %v1929 = vsel %vm1817, %v1927, %v1928
      %v1930 = vunpack.c.l.b16 %v1821
      %v1931 = vunpack.c.l.b16 %v1824
      %v1932 = vunpack.c.l.b16 %v1828
      %v1933 = vunpack.c.l.b16 %v1831
      %v1934 = vunpack.c.l.b16 %v1835
      %v1935 = vunpack.c.l.b16 %v1838
      %v1936 = vunpack.c.l.b16 %v1842
      %v1937 = vunpack.c.l.b16 %v1845
      %v1938 = vunpack.c.l.b16 %v1849
      %v1939 = vunpack.c.l.b16 %v1852
      %v1940 = vunpack.c.l.b16 %v1856
      %v1941 = vunpack.c.l.b16 %v1859
      %v1942 = vunpack.c.l.b16 %v1863
      %v1943 = vunpack.c.l.b16 %v1866
      %v1944 = vunpack.c.l.b16 %v1870
      %v1945 = vunpack.c.l.b16 %v1873
      %v1946 = vunpack.c.l.b16 %v1877
      %v1947 = vunpack.c.l.b16 %v1880
      %v1948 = vunpack.c.l.b16 %v1884
      %v1949 = vunpack.c.l.b16 %v1887
      %v1950 = vunpack.c.l.b16 %v1891
      %v1951 = vunpack.c.l.b16 %v1894
      %v1952 = vunpack.c.l.b16 %v1898
      %v1953 = vunpack.c.l.b16 %v1901
      %v1954 = vunpack.c.l.b16 %v1905
      %v1955 = vunpack.c.l.b16 %v1908
      %v1956 = vunpack.c.l.b16 %v1912
      %v1957 = vunpack.c.l.b16 %v1915
      %v1958 = vunpack.c.l.b16 %v1919
      %v1959 = vunpack.c.l.b16 %v1922
      %v1960 = vunpack.c.l.b16 %v1926
      %v1961 = vunpack.c.l.b16 %v1929
      %v1962 = vpack.c.b16 %v1931, %v1930
      %v1963 = vpack.c.b16 %v1933, %v1932
      %v1964 = vpack.c.b16 %v1935, %v1934
      %v1965 = vpack.c.b16 %v1937, %v1936
      %v1966 = vpack.c.b16 %v1939, %v1938
      %v1967 = vpack.c.b16 %v1941, %v1940
      %v1968 = vpack.c.b16 %v1943, %v1942
      %v1969 = vpack.c.b16 %v1945, %v1944
      %v1970 = vpack.c.b16 %v1947, %v1946
      %v1971 = vpack.c.b16 %v1949, %v1948
      %v1972 = vpack.c.b16 %v1951, %v1950
      %v1973 = vpack.c.b16 %v1953, %v1952
      %v1974 = vpack.c.b16 %v1955, %v1954
      %v1975 = vpack.c.b16 %v1957, %v1956
      %v1976 = vpack.c.b16 %v1959, %v1958
      %v1977 = vpack.c.b16 %v1961, %v1960
      %1994 = vst [vmem:[#allocation3 + $0x10] sm:$0xff] %v1962
      %1995 = vst [vmem:[#allocation3 + $0x58] sm:$0xff] %v1963
      %1996 = vst [vmem:[#allocation3 + $0xa0] sm:$0xff] %v1964
      %1997 = vst [vmem:[#allocation3 + $0xe8] sm:$0xff] %v1965
      %1998 = vst [vmem:[#allocation3 + $0x130] sm:$0xff] %v1966
      %1999 = vst [vmem:[#allocation3 + $0x178] sm:$0xff] %v1967
      %2000 = vst [vmem:[#allocation3 + $0x1c0] sm:$0xff] %v1968
      %2001 = vst [vmem:[#allocation3 + $0x208] sm:$0xff] %v1969
      %2002 = vst [vmem:[#allocation3 + $0x250] sm:$0xff] %v1970
      %2003 = vst [vmem:[#allocation3 + $0x298] sm:$0xff] %v1971
      %2004 = vst [vmem:[#allocation3 + $0x2e0] sm:$0xff] %v1972
      %2005 = vst [vmem:[#allocation3 + $0x328] sm:$0xff] %v1973
      %2006 = vst [vmem:[#allocation3 + $0x370] sm:$0xff] %v1974
      %2007 = vst [vmem:[#allocation3 + $0x3b8] sm:$0xff] %v1975
      %2008 = vst [vmem:[#allocation3 + $0x400] sm:$0xff] %v1976
      %2009 = vst [vmem:[#allocation3 + $0x448] sm:$0xff] %v1977
      %v2010 = vld [vmem:[%s945] sm:$0xf]
      %v2011 = vld [vmem:[%s945 + $0x4] sm:$0xf]
      %v2012 = vld [vmem:[%s945 + $0xc] sm:$0xf]
      %v2013 = vld [vmem:[%s945 + $0x10] sm:$0xf]
      %v2014 = vld [vmem:[%s945 + $0x18] sm:$0xf]
      %v2015 = vld [vmem:[%s945 + $0x1c] sm:$0xf]
      %v2016 = vld [vmem:[%s945 + $0x24] sm:$0xf]
      %v2017 = vld [vmem:[%s945 + $0x28] sm:$0xf]
      %v2018 = vld [vmem:[%s945 + $0x30] sm:$0xf]
      %v2019 = vld [vmem:[%s945 + $0x34] sm:$0xf]
      %v2020 = vld [vmem:[%s945 + $0x3c] sm:$0xf]
      %v2021 = vld [vmem:[%s945 + $0x40] sm:$0xf]
      %v2022 = vld [vmem:[%s945 + $0x48] sm:$0xf]
      %v2023 = vld [vmem:[%s945 + $0x4c] sm:$0xf]
      %v2024 = vld [vmem:[%s945 + $0x54] sm:$0xf]
      %v2025 = vld [vmem:[%s945 + $0x58] sm:$0xf]
      %v2026 = vld [vmem:[%s945 + $0x60] sm:$0xf]
      %v2027 = vld [vmem:[%s945 + $0x64] sm:$0xf]
      %v2028 = vld [vmem:[%s945 + $0x6c] sm:$0xf]
      %v2029 = vld [vmem:[%s945 + $0x70] sm:$0xf]
      %v2030 = vld [vmem:[%s945 + $0x78] sm:$0xf]
      %v2031 = vld [vmem:[%s945 + $0x7c] sm:$0xf]
      %v2032 = vld [vmem:[%s945 + $0x84] sm:$0xf]
      %v2033 = vld [vmem:[%s945 + $0x88] sm:$0xf]
      %v2034 = vld [vmem:[%s945 + $0x90] sm:$0xf]
      %v2035 = vld [vmem:[%s945 + $0x94] sm:$0xf]
      %v2036 = vld [vmem:[%s945 + $0x9c] sm:$0xf]
      %v2037 = vld [vmem:[%s945 + $0xa0] sm:$0xf]
      %v2038 = vld [vmem:[%s945 + $0xa8] sm:$0xf]
      %v2039 = vld [vmem:[%s945 + $0xac] sm:$0xf]
      %v2040 = vld [vmem:[%s945 + $0xb4] sm:$0xf]
      %v2041 = vld [vmem:[%s945 + $0xb8] sm:$0xf]
      %v2074 = vunpack.c.l.b16 %v2010
      %v2075 = vunpack.c.l.b16 %v2011
      %v2076 = vunpack.c.l.b16 %v2012
      %v2077 = vunpack.c.l.b16 %v2013
      %v2078 = vunpack.c.l.b16 %v2014
      %v2079 = vunpack.c.l.b16 %v2015
      %v2080 = vunpack.c.l.b16 %v2016
      %v2081 = vunpack.c.l.b16 %v2017
      %v2082 = vunpack.c.l.b16 %v2018
      %v2083 = vunpack.c.l.b16 %v2019
      %v2084 = vunpack.c.l.b16 %v2020
      %v2085 = vunpack.c.l.b16 %v2021
      %v2086 = vunpack.c.l.b16 %v2022
      %v2087 = vunpack.c.l.b16 %v2023
      %v2088 = vunpack.c.l.b16 %v2024
      %v2089 = vunpack.c.l.b16 %v2025
      %v2090 = vunpack.c.l.b16 %v2026
      %v2091 = vunpack.c.l.b16 %v2027
      %v2092 = vunpack.c.l.b16 %v2028
      %v2093 = vunpack.c.l.b16 %v2029
      %v2094 = vunpack.c.l.b16 %v2030
      %v2095 = vunpack.c.l.b16 %v2031
      %v2096 = vunpack.c.l.b16 %v2032
      %v2097 = vunpack.c.l.b16 %v2033
      %v2098 = vunpack.c.l.b16 %v2034
      %v2099 = vunpack.c.l.b16 %v2035
      %v2100 = vunpack.c.l.b16 %v2036
      %v2101 = vunpack.c.l.b16 %v2037
      %v2102 = vunpack.c.l.b16 %v2038
      %v2103 = vunpack.c.l.b16 %v2039
      %v2104 = vunpack.c.l.b16 %v2040
      %v2105 = vunpack.c.l.b16 %v2041
      %v2106 = vpack.c.b16 %v2075, %v2074
      %v2107 = vpack.c.b16 %v2077, %v2076
      %v2108 = vpack.c.b16 %v2079, %v2078
      %v2109 = vpack.c.b16 %v2081, %v2080
      %v2110 = vpack.c.b16 %v2083, %v2082
      %v2111 = vpack.c.b16 %v2085, %v2084
      %v2112 = vpack.c.b16 %v2087, %v2086
      %v2113 = vpack.c.b16 %v2089, %v2088
      %v2114 = vpack.c.b16 %v2091, %v2090
      %v2115 = vpack.c.b16 %v2093, %v2092
      %v2116 = vpack.c.b16 %v2095, %v2094
      %v2117 = vpack.c.b16 %v2097, %v2096
      %v2118 = vpack.c.b16 %v2099, %v2098
      %v2119 = vpack.c.b16 %v2101, %v2100
      %v2120 = vpack.c.b16 %v2103, %v2102
      %v2121 = vpack.c.b16 %v2105, %v2104
      %2138 = vst [vmem:[#allocation3 + $0x18] sm:$0xff] %v2106
      %2139 = vst [vmem:[#allocation3 + $0x60] sm:$0xff] %v2107
      %2140 = vst [vmem:[#allocation3 + $0xa8] sm:$0xff] %v2108
      %2141 = vst [vmem:[#allocation3 + $0xf0] sm:$0xff] %v2109
      %2142 = vst [vmem:[#allocation3 + $0x138] sm:$0xff] %v2110
      %2143 = vst [vmem:[#allocation3 + $0x180] sm:$0xff] %v2111
      %2144 = vst [vmem:[#allocation3 + $0x1c8] sm:$0xff] %v2112
      %2145 = vst [vmem:[#allocation3 + $0x210] sm:$0xff] %v2113
      %2146 = vst [vmem:[#allocation3 + $0x258] sm:$0xff] %v2114
      %2147 = vst [vmem:[#allocation3 + $0x2a0] sm:$0xff] %v2115
      %2148 = vst [vmem:[#allocation3 + $0x2e8] sm:$0xff] %v2116
      %2149 = vst [vmem:[#allocation3 + $0x330] sm:$0xff] %v2117
      %2150 = vst [vmem:[#allocation3 + $0x378] sm:$0xff] %v2118
      %2151 = vst [vmem:[#allocation3 + $0x3c0] sm:$0xff] %v2119
      %2152 = vst [vmem:[#allocation3 + $0x408] sm:$0xff] %v2120
      %2153 = vst [vmem:[#allocation3 + $0x450] sm:$0xff] %v2121
      %v2154 = vld [vmem:[%s945] sm:$0xf]
      %v2155 = vld [vmem:[%s945 + $0x4] sm:$0xf]
      %v2156 = vld [vmem:[%s945 + $0x8] sm:$0x1]
      %v2157 = vld [vmem:[%s945 + $0xc] sm:$0xf]
      %v2158 = vld [vmem:[%s945 + $0x10] sm:$0xf]
      %v2159 = vld [vmem:[%s945 + $0x14] sm:$0x1]
      %v2160 = vld [vmem:[%s945 + $0x18] sm:$0xf]
      %v2161 = vld [vmem:[%s945 + $0x1c] sm:$0xf]
      %v2162 = vld [vmem:[%s945 + $0x20] sm:$0x1]
      %v2163 = vld [vmem:[%s945 + $0x24] sm:$0xf]
      %v2164 = vld [vmem:[%s945 + $0x28] sm:$0xf]
      %v2165 = vld [vmem:[%s945 + $0x2c] sm:$0x1]
      %v2166 = vld [vmem:[%s945 + $0x30] sm:$0xf]
      %v2167 = vld [vmem:[%s945 + $0x34] sm:$0xf]
      %v2168 = vld [vmem:[%s945 + $0x38] sm:$0x1]
      %v2169 = vld [vmem:[%s945 + $0x3c] sm:$0xf]
      %v2170 = vld [vmem:[%s945 + $0x40] sm:$0xf]
      %v2171 = vld [vmem:[%s945 + $0x44] sm:$0x1]
      %v2172 = vld [vmem:[%s945 + $0x48] sm:$0xf]
      %v2173 = vld [vmem:[%s945 + $0x4c] sm:$0xf]
      %v2174 = vld [vmem:[%s945 + $0x50] sm:$0x1]
      %v2175 = vld [vmem:[%s945 + $0x54] sm:$0xf]
      %v2176 = vld [vmem:[%s945 + $0x58] sm:$0xf]
      %v2177 = vld [vmem:[%s945 + $0x5c] sm:$0x1]
      %v2178 = vld [vmem:[%s945 + $0x60] sm:$0xf]
      %v2179 = vld [vmem:[%s945 + $0x64] sm:$0xf]
      %v2180 = vld [vmem:[%s945 + $0x68] sm:$0x1]
      %v2181 = vld [vmem:[%s945 + $0x6c] sm:$0xf]
      %v2182 = vld [vmem:[%s945 + $0x70] sm:$0xf]
      %v2183 = vld [vmem:[%s945 + $0x74] sm:$0x1]
      %v2184 = vld [vmem:[%s945 + $0x78] sm:$0xf]
      %v2185 = vld [vmem:[%s945 + $0x7c] sm:$0xf]
      %v2186 = vld [vmem:[%s945 + $0x80] sm:$0x1]
      %v2187 = vld [vmem:[%s945 + $0x84] sm:$0xf]
      %v2188 = vld [vmem:[%s945 + $0x88] sm:$0xf]
      %v2189 = vld [vmem:[%s945 + $0x8c] sm:$0x1]
      %v2190 = vld [vmem:[%s945 + $0x90] sm:$0xf]
      %v2191 = vld [vmem:[%s945 + $0x94] sm:$0xf]
      %v2192 = vld [vmem:[%s945 + $0x98] sm:$0x1]
      %v2193 = vld [vmem:[%s945 + $0x9c] sm:$0xf]
      %v2194 = vld [vmem:[%s945 + $0xa0] sm:$0xf]
      %v2195 = vld [vmem:[%s945 + $0xa4] sm:$0x1]
      %v2196 = vld [vmem:[%s945 + $0xa8] sm:$0xf]
      %v2197 = vld [vmem:[%s945 + $0xac] sm:$0xf]
      %v2198 = vld [vmem:[%s945 + $0xb0] sm:$0x1]
      %v2199 = vld [vmem:[%s945 + $0xb4] sm:$0xf]
      %v2200 = vld [vmem:[%s945 + $0xb8] sm:$0xf]
      %v2201 = vld [vmem:[%s945 + $0xbc] sm:$0x1]
      %v2203 = vshrl.u32 %v2154, 16
      %v2205 = vrot.slane %v2203, 4
      %v2206 = vshll.u32 %v2154, 16
      %v2208 = vrot.slane %v2206, 5
      %v2209 = vor.u32 %v2205, %v2208
      %v2210 = vrot.slane %v2209, 4
      %v2212 = vshll.u32 %v2155, 16
      %v2214 = vrot.slane %v2212, 5
      %v2215 = vsel %vm1254, %v2210, %v2214
      %v2216 = vshrl.u32 %v2155, 16
      %v2218 = vrot.slane %v2216, 4
      %v2219 = vor.u32 %v2218, %v2214
      %v2220 = vrot.slane %v2219, 4
      %v2222 = vshll.u32 %v2156, 16
      %v2224 = vrot.slane %v2222, 5
      %v2225 = vsel %vm1254, %v2220, %v2224
      %v2227 = vshrl.u32 %v2157, 16
      %v2229 = vrot.slane %v2227, 4
      %v2230 = vshll.u32 %v2157, 16
      %v2232 = vrot.slane %v2230, 5
      %v2233 = vor.u32 %v2229, %v2232
      %v2234 = vrot.slane %v2233, 4
      %v2236 = vshll.u32 %v2158, 16
      %v2238 = vrot.slane %v2236, 5
      %v2239 = vsel %vm1254, %v2234, %v2238
      %v2240 = vshrl.u32 %v2158, 16
      %v2242 = vrot.slane %v2240, 4
      %v2243 = vor.u32 %v2242, %v2238
      %v2244 = vrot.slane %v2243, 4
      %v2246 = vshll.u32 %v2159, 16
      %v2248 = vrot.slane %v2246, 5
      %v2249 = vsel %vm1254, %v2244, %v2248
      %v2251 = vshrl.u32 %v2160, 16
      %v2253 = vrot.slane %v2251, 4
      %v2254 = vshll.u32 %v2160, 16
      %v2256 = vrot.slane %v2254, 5
      %v2257 = vor.u32 %v2253, %v2256
      %v2258 = vrot.slane %v2257, 4
      %v2260 = vshll.u32 %v2161, 16
      %v2262 = vrot.slane %v2260, 5
      %v2263 = vsel %vm1254, %v2258, %v2262
      %v2264 = vshrl.u32 %v2161, 16
      %v2266 = vrot.slane %v2264, 4
      %v2267 = vor.u32 %v2266, %v2262
      %v2268 = vrot.slane %v2267, 4
      %v2270 = vshll.u32 %v2162, 16
      %v2272 = vrot.slane %v2270, 5
      %v2273 = vsel %vm1254, %v2268, %v2272
      %v2275 = vshrl.u32 %v2163, 16
      %v2277 = vrot.slane %v2275, 4
      %v2278 = vshll.u32 %v2163, 16
      %v2280 = vrot.slane %v2278, 5
      %v2281 = vor.u32 %v2277, %v2280
      %v2282 = vrot.slane %v2281, 4
      %v2284 = vshll.u32 %v2164, 16
      %v2286 = vrot.slane %v2284, 5
      %v2287 = vsel %vm1254, %v2282, %v2286
      %v2288 = vshrl.u32 %v2164, 16
      %v2290 = vrot.slane %v2288, 4
      %v2291 = vor.u32 %v2290, %v2286
      %v2292 = vrot.slane %v2291, 4
      %v2294 = vshll.u32 %v2165, 16
      %v2296 = vrot.slane %v2294, 5
      %v2297 = vsel %vm1254, %v2292, %v2296
      %v2299 = vshrl.u32 %v2166, 16
      %v2301 = vrot.slane %v2299, 4
      %v2302 = vshll.u32 %v2166, 16
      %v2304 = vrot.slane %v2302, 5
      %v2305 = vor.u32 %v2301, %v2304
      %v2306 = vrot.slane %v2305, 4
      %v2308 = vshll.u32 %v2167, 16
      %v2310 = vrot.slane %v2308, 5
      %v2311 = vsel %vm1254, %v2306, %v2310
      %v2312 = vshrl.u32 %v2167, 16
      %v2314 = vrot.slane %v2312, 4
      %v2315 = vor.u32 %v2314, %v2310
      %v2316 = vrot.slane %v2315, 4
      %v2318 = vshll.u32 %v2168, 16
      %v2320 = vrot.slane %v2318, 5
      %v2321 = vsel %vm1254, %v2316, %v2320
      %v2323 = vshrl.u32 %v2169, 16
      %v2325 = vrot.slane %v2323, 4
      %v2326 = vshll.u32 %v2169, 16
      %v2328 = vrot.slane %v2326, 5
      %v2329 = vor.u32 %v2325, %v2328
      %v2330 = vrot.slane %v2329, 4
      %v2332 = vshll.u32 %v2170, 16
      %v2334 = vrot.slane %v2332, 5
      %v2335 = vsel %vm1254, %v2330, %v2334
      %v2336 = vshrl.u32 %v2170, 16
      %v2338 = vrot.slane %v2336, 4
      %v2339 = vor.u32 %v2338, %v2334
      %v2340 = vrot.slane %v2339, 4
      %v2342 = vshll.u32 %v2171, 16
      %v2344 = vrot.slane %v2342, 5
      %v2345 = vsel %vm1254, %v2340, %v2344
      %v2347 = vshrl.u32 %v2172, 16
      %v2349 = vrot.slane %v2347, 4
      %v2350 = vshll.u32 %v2172, 16
      %v2352 = vrot.slane %v2350, 5
      %v2353 = vor.u32 %v2349, %v2352
      %v2354 = vrot.slane %v2353, 4
      %v2356 = vshll.u32 %v2173, 16
      %v2358 = vrot.slane %v2356, 5
      %v2359 = vsel %vm1254, %v2354, %v2358
      %v2360 = vshrl.u32 %v2173, 16
      %v2362 = vrot.slane %v2360, 4
      %v2363 = vor.u32 %v2362, %v2358
      %v2364 = vrot.slane %v2363, 4
      %v2366 = vshll.u32 %v2174, 16
      %v2368 = vrot.slane %v2366, 5
      %v2369 = vsel %vm1254, %v2364, %v2368
      %v2371 = vshrl.u32 %v2175, 16
      %v2373 = vrot.slane %v2371, 4
      %v2374 = vshll.u32 %v2175, 16
      %v2376 = vrot.slane %v2374, 5
      %v2377 = vor.u32 %v2373, %v2376
      %v2378 = vrot.slane %v2377, 4
      %v2380 = vshll.u32 %v2176, 16
      %v2382 = vrot.slane %v2380, 5
      %v2383 = vsel %vm1254, %v2378, %v2382
      %v2384 = vshrl.u32 %v2176, 16
      %v2386 = vrot.slane %v2384, 4
      %v2387 = vor.u32 %v2386, %v2382
      %v2388 = vrot.slane %v2387, 4
      %v2390 = vshll.u32 %v2177, 16
      %v2392 = vrot.slane %v2390, 5
      %v2393 = vsel %vm1254, %v2388, %v2392
      %v2395 = vshrl.u32 %v2178, 16
      %v2397 = vrot.slane %v2395, 4
      %v2398 = vshll.u32 %v2178, 16
      %v2400 = vrot.slane %v2398, 5
      %v2401 = vor.u32 %v2397, %v2400
      %v2402 = vrot.slane %v2401, 4
      %v2404 = vshll.u32 %v2179, 16
      %v2406 = vrot.slane %v2404, 5
      %v2407 = vsel %vm1254, %v2402, %v2406
      %v2408 = vshrl.u32 %v2179, 16
      %v2410 = vrot.slane %v2408, 4
      %v2411 = vor.u32 %v2410, %v2406
      %v2412 = vrot.slane %v2411, 4
      %v2414 = vshll.u32 %v2180, 16
      %v2416 = vrot.slane %v2414, 5
      %v2417 = vsel %vm1254, %v2412, %v2416
      %v2419 = vshrl.u32 %v2181, 16
      %v2421 = vrot.slane %v2419, 4
      %v2422 = vshll.u32 %v2181, 16
      %v2424 = vrot.slane %v2422, 5
      %v2425 = vor.u32 %v2421, %v2424
      %v2426 = vrot.slane %v2425, 4
      %v2428 = vshll.u32 %v2182, 16
      %v2430 = vrot.slane %v2428, 5
      %v2431 = vsel %vm1254, %v2426, %v2430
      %v2432 = vshrl.u32 %v2182, 16
      %v2434 = vrot.slane %v2432, 4
      %v2435 = vor.u32 %v2434, %v2430
      %v2436 = vrot.slane %v2435, 4
      %v2438 = vshll.u32 %v2183, 16
      %v2440 = vrot.slane %v2438, 5
      %v2441 = vsel %vm1254, %v2436, %v2440
      %v2443 = vshrl.u32 %v2184, 16
      %v2445 = vrot.slane %v2443, 4
      %v2446 = vshll.u32 %v2184, 16
      %v2448 = vrot.slane %v2446, 5
      %v2449 = vor.u32 %v2445, %v2448
      %v2450 = vrot.slane %v2449, 4
      %v2452 = vshll.u32 %v2185, 16
      %v2454 = vrot.slane %v2452, 5
      %v2455 = vsel %vm1254, %v2450, %v2454
      %v2456 = vshrl.u32 %v2185, 16
      %v2458 = vrot.slane %v2456, 4
      %v2459 = vor.u32 %v2458, %v2454
      %v2460 = vrot.slane %v2459, 4
      %v2462 = vshll.u32 %v2186, 16
      %v2464 = vrot.slane %v2462, 5
      %v2465 = vsel %vm1254, %v2460, %v2464
      %v2467 = vshrl.u32 %v2187, 16
      %v2469 = vrot.slane %v2467, 4
      %v2470 = vshll.u32 %v2187, 16
      %v2472 = vrot.slane %v2470, 5
      %v2473 = vor.u32 %v2469, %v2472
      %v2474 = vrot.slane %v2473, 4
      %v2476 = vshll.u32 %v2188, 16
      %v2478 = vrot.slane %v2476, 5
      %v2479 = vsel %vm1254, %v2474, %v2478
      %v2480 = vshrl.u32 %v2188, 16
      %v2482 = vrot.slane %v2480, 4
      %v2483 = vor.u32 %v2482, %v2478
      %v2484 = vrot.slane %v2483, 4
      %v2486 = vshll.u32 %v2189, 16
      %v2488 = vrot.slane %v2486, 5
      %v2489 = vsel %vm1254, %v2484, %v2488
      %v2491 = vshrl.u32 %v2190, 16
      %v2493 = vrot.slane %v2491, 4
      %v2494 = vshll.u32 %v2190, 16
      %v2496 = vrot.slane %v2494, 5
      %v2497 = vor.u32 %v2493, %v2496
      %v2498 = vrot.slane %v2497, 4
      %v2500 = vshll.u32 %v2191, 16
      %v2502 = vrot.slane %v2500, 5
      %v2503 = vsel %vm1254, %v2498, %v2502
      %v2504 = vshrl.u32 %v2191, 16
      %v2506 = vrot.slane %v2504, 4
      %v2507 = vor.u32 %v2506, %v2502
      %v2508 = vrot.slane %v2507, 4
      %v2510 = vshll.u32 %v2192, 16
      %v2512 = vrot.slane %v2510, 5
      %v2513 = vsel %vm1254, %v2508, %v2512
      %v2515 = vshrl.u32 %v2193, 16
      %v2517 = vrot.slane %v2515, 4
      %v2518 = vshll.u32 %v2193, 16
      %v2520 = vrot.slane %v2518, 5
      %v2521 = vor.u32 %v2517, %v2520
      %v2522 = vrot.slane %v2521, 4
      %v2524 = vshll.u32 %v2194, 16
      %v2526 = vrot.slane %v2524, 5
      %v2527 = vsel %vm1254, %v2522, %v2526
      %v2528 = vshrl.u32 %v2194, 16
      %v2530 = vrot.slane %v2528, 4
      %v2531 = vor.u32 %v2530, %v2526
      %v2532 = vrot.slane %v2531, 4
      %v2534 = vshll.u32 %v2195, 16
      %v2536 = vrot.slane %v2534, 5
      %v2537 = vsel %vm1254, %v2532, %v2536
      %v2539 = vshrl.u32 %v2196, 16
      %v2541 = vrot.slane %v2539, 4
      %v2542 = vshll.u32 %v2196, 16
      %v2544 = vrot.slane %v2542, 5
      %v2545 = vor.u32 %v2541, %v2544
      %v2546 = vrot.slane %v2545, 4
      %v2548 = vshll.u32 %v2197, 16
      %v2550 = vrot.slane %v2548, 5
      %v2551 = vsel %vm1254, %v2546, %v2550
      %v2552 = vshrl.u32 %v2197, 16
      %v2554 = vrot.slane %v2552, 4
      %v2555 = vor.u32 %v2554, %v2550
      %v2556 = vrot.slane %v2555, 4
      %v2558 = vshll.u32 %v2198, 16
      %v2560 = vrot.slane %v2558, 5
      %v2561 = vsel %vm1254, %v2556, %v2560
      %v2563 = vshrl.u32 %v2199, 16
      %v2565 = vrot.slane %v2563, 4
      %v2566 = vshll.u32 %v2199, 16
      %v2568 = vrot.slane %v2566, 5
      %v2569 = vor.u32 %v2565, %v2568
      %v2570 = vrot.slane %v2569, 4
      %v2572 = vshll.u32 %v2200, 16
      %v2574 = vrot.slane %v2572, 5
      %v2575 = vsel %vm1254, %v2570, %v2574
      %v2576 = vshrl.u32 %v2200, 16
      %v2578 = vrot.slane %v2576, 4
      %v2579 = vor.u32 %v2578, %v2574
      %v2580 = vrot.slane %v2579, 4
      %v2582 = vshll.u32 %v2201, 16
      %v2584 = vrot.slane %v2582, 5
      %v2585 = vsel %vm1254, %v2580, %v2584
      %v2586 = vunpack.c.l.b16 %v2215
      %v2587 = vunpack.c.l.b16 %v2225
      %v2588 = vunpack.c.l.b16 %v2239
      %v2589 = vunpack.c.l.b16 %v2249
      %v2590 = vunpack.c.l.b16 %v2263
      %v2591 = vunpack.c.l.b16 %v2273
      %v2592 = vunpack.c.l.b16 %v2287
      %v2593 = vunpack.c.l.b16 %v2297
      %v2594 = vunpack.c.l.b16 %v2311
      %v2595 = vunpack.c.l.b16 %v2321
      %v2596 = vunpack.c.l.b16 %v2335
      %v2597 = vunpack.c.l.b16 %v2345
      %v2598 = vunpack.c.l.b16 %v2359
      %v2599 = vunpack.c.l.b16 %v2369
      %v2600 = vunpack.c.l.b16 %v2383
      %v2601 = vunpack.c.l.b16 %v2393
      %v2602 = vunpack.c.l.b16 %v2407
      %v2603 = vunpack.c.l.b16 %v2417
      %v2604 = vunpack.c.l.b16 %v2431
      %v2605 = vunpack.c.l.b16 %v2441
      %v2606 = vunpack.c.l.b16 %v2455
      %v2607 = vunpack.c.l.b16 %v2465
      %v2608 = vunpack.c.l.b16 %v2479
      %v2609 = vunpack.c.l.b16 %v2489
      %v2610 = vunpack.c.l.b16 %v2503
      %v2611 = vunpack.c.l.b16 %v2513
      %v2612 = vunpack.c.l.b16 %v2527
      %v2613 = vunpack.c.l.b16 %v2537
      %v2614 = vunpack.c.l.b16 %v2551
      %v2615 = vunpack.c.l.b16 %v2561
      %v2616 = vunpack.c.l.b16 %v2575
      %v2617 = vunpack.c.l.b16 %v2585
      %v2618 = vpack.c.b16 %v2587, %v2586
      %v2619 = vpack.c.b16 %v2589, %v2588
      %v2620 = vpack.c.b16 %v2591, %v2590
      %v2621 = vpack.c.b16 %v2593, %v2592
      %v2622 = vpack.c.b16 %v2595, %v2594
      %v2623 = vpack.c.b16 %v2597, %v2596
      %v2624 = vpack.c.b16 %v2599, %v2598
      %v2625 = vpack.c.b16 %v2601, %v2600
      %v2626 = vpack.c.b16 %v2603, %v2602
      %v2627 = vpack.c.b16 %v2605, %v2604
      %v2628 = vpack.c.b16 %v2607, %v2606
      %v2629 = vpack.c.b16 %v2609, %v2608
      %v2630 = vpack.c.b16 %v2611, %v2610
      %v2631 = vpack.c.b16 %v2613, %v2612
      %v2632 = vpack.c.b16 %v2615, %v2614
      %v2633 = vpack.c.b16 %v2617, %v2616
      %2650 = vst [vmem:[#allocation3 + $0x20] sm:$0xff] %v2618
      %2651 = vst [vmem:[#allocation3 + $0x68] sm:$0xff] %v2619
      %2652 = vst [vmem:[#allocation3 + $0xb0] sm:$0xff] %v2620
      %2653 = vst [vmem:[#allocation3 + $0xf8] sm:$0xff] %v2621
      %2654 = vst [vmem:[#allocation3 + $0x140] sm:$0xff] %v2622
      %2655 = vst [vmem:[#allocation3 + $0x188] sm:$0xff] %v2623
      %2656 = vst [vmem:[#allocation3 + $0x1d0] sm:$0xff] %v2624
      %2657 = vst [vmem:[#allocation3 + $0x218] sm:$0xff] %v2625
      %2658 = vst [vmem:[#allocation3 + $0x260] sm:$0xff] %v2626
      %2659 = vst [vmem:[#allocation3 + $0x2a8] sm:$0xff] %v2627
      %2660 = vst [vmem:[#allocation3 + $0x2f0] sm:$0xff] %v2628
      %2661 = vst [vmem:[#allocation3 + $0x338] sm:$0xff] %v2629
      %2662 = vst [vmem:[#allocation3 + $0x380] sm:$0xff] %v2630
      %2663 = vst [vmem:[#allocation3 + $0x3c8] sm:$0xff] %v2631
      %2664 = vst [vmem:[#allocation3 + $0x410] sm:$0xff] %v2632
      %2665 = vst [vmem:[#allocation3 + $0x458] sm:$0xff] %v2633
      %v2666 = vld [vmem:[%s945] sm:$0xe]
      %v2667 = vld [vmem:[%s945 + $0x4] sm:$0xf]
      %v2668 = vld [vmem:[%s945 + $0x8] sm:$0x1]
      %v2669 = vld [vmem:[%s945 + $0xc] sm:$0xe]
      %v2670 = vld [vmem:[%s945 + $0x10] sm:$0xf]
      %v2671 = vld [vmem:[%s945 + $0x14] sm:$0x1]
      %v2672 = vld [vmem:[%s945 + $0x18] sm:$0xe]
      %v2673 = vld [vmem:[%s945 + $0x1c] sm:$0xf]
      %v2674 = vld [vmem:[%s945 + $0x20] sm:$0x1]
      %v2675 = vld [vmem:[%s945 + $0x24] sm:$0xe]
      %v2676 = vld [vmem:[%s945 + $0x28] sm:$0xf]
      %v2677 = vld [vmem:[%s945 + $0x2c] sm:$0x1]
      %v2678 = vld [vmem:[%s945 + $0x30] sm:$0xe]
      %v2679 = vld [vmem:[%s945 + $0x34] sm:$0xf]
      %v2680 = vld [vmem:[%s945 + $0x38] sm:$0x1]
      %v2681 = vld [vmem:[%s945 + $0x3c] sm:$0xe]
      %v2682 = vld [vmem:[%s945 + $0x40] sm:$0xf]
      %v2683 = vld [vmem:[%s945 + $0x44] sm:$0x1]
      %v2684 = vld [vmem:[%s945 + $0x48] sm:$0xe]
      %v2685 = vld [vmem:[%s945 + $0x4c] sm:$0xf]
      %v2686 = vld [vmem:[%s945 + $0x50] sm:$0x1]
      %v2687 = vld [vmem:[%s945 + $0x54] sm:$0xe]
      %v2688 = vld [vmem:[%s945 + $0x58] sm:$0xf]
      %v2689 = vld [vmem:[%s945 + $0x5c] sm:$0x1]
      %v2690 = vld [vmem:[%s945 + $0x60] sm:$0xe]
      %v2691 = vld [vmem:[%s945 + $0x64] sm:$0xf]
      %v2692 = vld [vmem:[%s945 + $0x68] sm:$0x1]
      %v2693 = vld [vmem:[%s945 + $0x6c] sm:$0xe]
      %v2694 = vld [vmem:[%s945 + $0x70] sm:$0xf]
      %v2695 = vld [vmem:[%s945 + $0x74] sm:$0x1]
      %v2696 = vld [vmem:[%s945 + $0x78] sm:$0xe]
      %v2697 = vld [vmem:[%s945 + $0x7c] sm:$0xf]
      %v2698 = vld [vmem:[%s945 + $0x80] sm:$0x1]
      %v2699 = vld [vmem:[%s945 + $0x84] sm:$0xe]
      %v2700 = vld [vmem:[%s945 + $0x88] sm:$0xf]
      %v2701 = vld [vmem:[%s945 + $0x8c] sm:$0x1]
      %v2702 = vld [vmem:[%s945 + $0x90] sm:$0xe]
      %v2703 = vld [vmem:[%s945 + $0x94] sm:$0xf]
      %v2704 = vld [vmem:[%s945 + $0x98] sm:$0x1]
      %v2705 = vld [vmem:[%s945 + $0x9c] sm:$0xe]
      %v2706 = vld [vmem:[%s945 + $0xa0] sm:$0xf]
      %v2707 = vld [vmem:[%s945 + $0xa4] sm:$0x1]
      %v2708 = vld [vmem:[%s945 + $0xa8] sm:$0xe]
      %v2709 = vld [vmem:[%s945 + $0xac] sm:$0xf]
      %v2710 = vld [vmem:[%s945 + $0xb0] sm:$0x1]
      %v2711 = vld [vmem:[%s945 + $0xb4] sm:$0xe]
      %v2712 = vld [vmem:[%s945 + $0xb8] sm:$0xf]
      %v2713 = vld [vmem:[%s945 + $0xbc] sm:$0x1]
      %v2762 = vrot.slane %v2666, 5
      %v2763 = vrot.slane %v2762, 4
      %v2764 = vrot.slane %v2667, 5
      %v2765 = vsel %vm1817, %v2763, %v2764
      %v2766 = vrot.slane %v2764, 4
      %v2767 = vrot.slane %v2668, 5
      %v2768 = vsel %vm1817, %v2766, %v2767
      %v2769 = vrot.slane %v2669, 5
      %v2770 = vrot.slane %v2769, 4
      %v2771 = vrot.slane %v2670, 5
      %v2772 = vsel %vm1817, %v2770, %v2771
      %v2773 = vrot.slane %v2771, 4
      %v2774 = vrot.slane %v2671, 5
      %v2775 = vsel %vm1817, %v2773, %v2774
      %v2776 = vrot.slane %v2672, 5
      %v2777 = vrot.slane %v2776, 4
      %v2778 = vrot.slane %v2673, 5
      %v2779 = vsel %vm1817, %v2777, %v2778
      %v2780 = vrot.slane %v2778, 4
      %v2781 = vrot.slane %v2674, 5
      %v2782 = vsel %vm1817, %v2780, %v2781
      %v2783 = vrot.slane %v2675, 5
      %v2784 = vrot.slane %v2783, 4
      %v2785 = vrot.slane %v2676, 5
      %v2786 = vsel %vm1817, %v2784, %v2785
      %v2787 = vrot.slane %v2785, 4
      %v2788 = vrot.slane %v2677, 5
      %v2789 = vsel %vm1817, %v2787, %v2788
      %v2790 = vrot.slane %v2678, 5
      %v2791 = vrot.slane %v2790, 4
      %v2792 = vrot.slane %v2679, 5
      %v2793 = vsel %vm1817, %v2791, %v2792
      %v2794 = vrot.slane %v2792, 4
      %v2795 = vrot.slane %v2680, 5
      %v2796 = vsel %vm1817, %v2794, %v2795
      %v2797 = vrot.slane %v2681, 5
      %v2798 = vrot.slane %v2797, 4
      %v2799 = vrot.slane %v2682, 5
      %v2800 = vsel %vm1817, %v2798, %v2799
      %v2801 = vrot.slane %v2799, 4
      %v2802 = vrot.slane %v2683, 5
      %v2803 = vsel %vm1817, %v2801, %v2802
      %v2804 = vrot.slane %v2684, 5
      %v2805 = vrot.slane %v2804, 4
      %v2806 = vrot.slane %v2685, 5
      %v2807 = vsel %vm1817, %v2805, %v2806
      %v2808 = vrot.slane %v2806, 4
      %v2809 = vrot.slane %v2686, 5
      %v2810 = vsel %vm1817, %v2808, %v2809
      %v2811 = vrot.slane %v2687, 5
      %v2812 = vrot.slane %v2811, 4
      %v2813 = vrot.slane %v2688, 5
      %v2814 = vsel %vm1817, %v2812, %v2813
      %v2815 = vrot.slane %v2813, 4
      %v2816 = vrot.slane %v2689, 5
      %v2817 = vsel %vm1817, %v2815, %v2816
      %v2818 = vrot.slane %v2690, 5
      %v2819 = vrot.slane %v2818, 4
      %v2820 = vrot.slane %v2691, 5
      %v2821 = vsel %vm1817, %v2819, %v2820
      %v2822 = vrot.slane %v2820, 4
      %v2823 = vrot.slane %v2692, 5
      %v2824 = vsel %vm1817, %v2822, %v2823
      %v2825 = vrot.slane %v2693, 5
      %v2826 = vrot.slane %v2825, 4
      %v2827 = vrot.slane %v2694, 5
      %v2828 = vsel %vm1817, %v2826, %v2827
      %v2829 = vrot.slane %v2827, 4
      %v2830 = vrot.slane %v2695, 5
      %v2831 = vsel %vm1817, %v2829, %v2830
      %v2832 = vrot.slane %v2696, 5
      %v2833 = vrot.slane %v2832, 4
      %v2834 = vrot.slane %v2697, 5
      %v2835 = vsel %vm1817, %v2833, %v2834
      %v2836 = vrot.slane %v2834, 4
      %v2837 = vrot.slane %v2698, 5
      %v2838 = vsel %vm1817, %v2836, %v2837
      %v2839 = vrot.slane %v2699, 5
      %v2840 = vrot.slane %v2839, 4
      %v2841 = vrot.slane %v2700, 5
      %v2842 = vsel %vm1817, %v2840, %v2841
      %v2843 = vrot.slane %v2841, 4
      %v2844 = vrot.slane %v2701, 5
      %v2845 = vsel %vm1817, %v2843, %v2844
      %v2846 = vrot.slane %v2702, 5
      %v2847 = vrot.slane %v2846, 4
      %v2848 = vrot.slane %v2703, 5
      %v2849 = vsel %vm1817, %v2847, %v2848
      %v2850 = vrot.slane %v2848, 4
      %v2851 = vrot.slane %v2704, 5
      %v2852 = vsel %vm1817, %v2850, %v2851
      %v2853 = vrot.slane %v2705, 5
      %v2854 = vrot.slane %v2853, 4
      %v2855 = vrot.slane %v2706, 5
      %v2856 = vsel %vm1817, %v2854, %v2855
      %v2857 = vrot.slane %v2855, 4
      %v2858 = vrot.slane %v2707, 5
      %v2859 = vsel %vm1817, %v2857, %v2858
      %v2860 = vrot.slane %v2708, 5
      %v2861 = vrot.slane %v2860, 4
      %v2862 = vrot.slane %v2709, 5
      %v2863 = vsel %vm1817, %v2861, %v2862
      %v2864 = vrot.slane %v2862, 4
      %v2865 = vrot.slane %v2710, 5
      %v2866 = vsel %vm1817, %v2864, %v2865
      %v2867 = vrot.slane %v2711, 5
      %v2868 = vrot.slane %v2867, 4
      %v2869 = vrot.slane %v2712, 5
      %v2870 = vsel %vm1817, %v2868, %v2869
      %v2871 = vrot.slane %v2869, 4
      %v2872 = vrot.slane %v2713, 5
      %v2873 = vsel %vm1817, %v2871, %v2872
      %v2874 = vunpack.c.l.b16 %v2765
      %v2875 = vunpack.c.l.b16 %v2768
      %v2876 = vunpack.c.l.b16 %v2772
      %v2877 = vunpack.c.l.b16 %v2775
      %v2878 = vunpack.c.l.b16 %v2779
      %v2879 = vunpack.c.l.b16 %v2782
      %v2880 = vunpack.c.l.b16 %v2786
      %v2881 = vunpack.c.l.b16 %v2789
      %v2882 = vunpack.c.l.b16 %v2793
      %v2883 = vunpack.c.l.b16 %v2796
      %v2884 = vunpack.c.l.b16 %v2800
      %v2885 = vunpack.c.l.b16 %v2803
      %v2886 = vunpack.c.l.b16 %v2807
      %v2887 = vunpack.c.l.b16 %v2810
      %v2888 = vunpack.c.l.b16 %v2814
      %v2889 = vunpack.c.l.b16 %v2817
      %v2890 = vunpack.c.l.b16 %v2821
      %v2891 = vunpack.c.l.b16 %v2824
      %v2892 = vunpack.c.l.b16 %v2828
      %v2893 = vunpack.c.l.b16 %v2831
      %v2894 = vunpack.c.l.b16 %v2835
      %v2895 = vunpack.c.l.b16 %v2838
      %v2896 = vunpack.c.l.b16 %v2842
      %v2897 = vunpack.c.l.b16 %v2845
      %v2898 = vunpack.c.l.b16 %v2849
      %v2899 = vunpack.c.l.b16 %v2852
      %v2900 = vunpack.c.l.b16 %v2856
      %v2901 = vunpack.c.l.b16 %v2859
      %v2902 = vunpack.c.l.b16 %v2863
      %v2903 = vunpack.c.l.b16 %v2866
      %v2904 = vunpack.c.l.b16 %v2870
      %v2905 = vunpack.c.l.b16 %v2873
      %v2906 = vpack.c.b16 %v2875, %v2874
      %v2907 = vpack.c.b16 %v2877, %v2876
      %v2908 = vpack.c.b16 %v2879, %v2878
      %v2909 = vpack.c.b16 %v2881, %v2880
      %v2910 = vpack.c.b16 %v2883, %v2882
      %v2911 = vpack.c.b16 %v2885, %v2884
      %v2912 = vpack.c.b16 %v2887, %v2886
      %v2913 = vpack.c.b16 %v2889, %v2888
      %v2914 = vpack.c.b16 %v2891, %v2890
      %v2915 = vpack.c.b16 %v2893, %v2892
      %v2916 = vpack.c.b16 %v2895, %v2894
      %v2917 = vpack.c.b16 %v2897, %v2896
      %v2918 = vpack.c.b16 %v2899, %v2898
      %v2919 = vpack.c.b16 %v2901, %v2900
      %v2920 = vpack.c.b16 %v2903, %v2902
      %v2921 = vpack.c.b16 %v2905, %v2904
      %2938 = vst [vmem:[#allocation3 + $0x28] sm:$0xff] %v2906
      %2939 = vst [vmem:[#allocation3 + $0x70] sm:$0xff] %v2907
      %2940 = vst [vmem:[#allocation3 + $0xb8] sm:$0xff] %v2908
      %2941 = vst [vmem:[#allocation3 + $0x100] sm:$0xff] %v2909
      %2942 = vst [vmem:[#allocation3 + $0x148] sm:$0xff] %v2910
      %2943 = vst [vmem:[#allocation3 + $0x190] sm:$0xff] %v2911
      %2944 = vst [vmem:[#allocation3 + $0x1d8] sm:$0xff] %v2912
      %2945 = vst [vmem:[#allocation3 + $0x220] sm:$0xff] %v2913
      %2946 = vst [vmem:[#allocation3 + $0x268] sm:$0xff] %v2914
      %2947 = vst [vmem:[#allocation3 + $0x2b0] sm:$0xff] %v2915
      %2948 = vst [vmem:[#allocation3 + $0x2f8] sm:$0xff] %v2916
      %2949 = vst [vmem:[#allocation3 + $0x340] sm:$0xff] %v2917
      %2950 = vst [vmem:[#allocation3 + $0x388] sm:$0xff] %v2918
      %2951 = vst [vmem:[#allocation3 + $0x3d0] sm:$0xff] %v2919
      %2952 = vst [vmem:[#allocation3 + $0x418] sm:$0xff] %v2920
      %2953 = vst [vmem:[#allocation3 + $0x460] sm:$0xff] %v2921
      %s2954 = scalar_lea.vmem [#allocation2], 24
      %v2955 = vld [vmem:[%s2954] sm:$0xf]
      %v2956 = vld [vmem:[%s2954 + $0x4] sm:$0xf]
      %v2957 = vld [vmem:[%s2954 + $0xc] sm:$0xf]
      %v2958 = vld [vmem:[%s2954 + $0x10] sm:$0xf]
      %v2959 = vld [vmem:[%s2954 + $0x18] sm:$0xf]
      %v2960 = vld [vmem:[%s2954 + $0x1c] sm:$0xf]
      %v2961 = vld [vmem:[%s2954 + $0x24] sm:$0xf]
      %v2962 = vld [vmem:[%s2954 + $0x28] sm:$0xf]
      %v2963 = vld [vmem:[%s2954 + $0x30] sm:$0xf]
      %v2964 = vld [vmem:[%s2954 + $0x34] sm:$0xf]
      %v2965 = vld [vmem:[%s2954 + $0x3c] sm:$0xf]
      %v2966 = vld [vmem:[%s2954 + $0x40] sm:$0xf]
      %v2967 = vld [vmem:[%s2954 + $0x48] sm:$0xf]
      %v2968 = vld [vmem:[%s2954 + $0x4c] sm:$0xf]
      %v2969 = vld [vmem:[%s2954 + $0x54] sm:$0xf]
      %v2970 = vld [vmem:[%s2954 + $0x58] sm:$0xf]
      %v2971 = vld [vmem:[%s2954 + $0x60] sm:$0xf]
      %v2972 = vld [vmem:[%s2954 + $0x64] sm:$0xf]
      %v2973 = vld [vmem:[%s2954 + $0x6c] sm:$0xf]
      %v2974 = vld [vmem:[%s2954 + $0x70] sm:$0xf]
      %v2975 = vld [vmem:[%s2954 + $0x78] sm:$0xf]
      %v2976 = vld [vmem:[%s2954 + $0x7c] sm:$0xf]
      %v2977 = vld [vmem:[%s2954 + $0x84] sm:$0xf]
      %v2978 = vld [vmem:[%s2954 + $0x88] sm:$0xf]
      %v2979 = vld [vmem:[%s2954 + $0x90] sm:$0xf]
      %v2980 = vld [vmem:[%s2954 + $0x94] sm:$0xf]
      %v2981 = vld [vmem:[%s2954 + $0x9c] sm:$0xf]
      %v2982 = vld [vmem:[%s2954 + $0xa0] sm:$0xf]
      %v2983 = vld [vmem:[%s2954 + $0xa8] sm:$0xf]
      %v2984 = vld [vmem:[%s2954 + $0xac] sm:$0xf]
      %v2985 = vld [vmem:[%s2954 + $0xb4] sm:$0xf]
      %v2986 = vld [vmem:[%s2954 + $0xb8] sm:$0xf]
      %v3019 = vunpack.c.l.b16 %v2955
      %v3020 = vunpack.c.l.b16 %v2956
      %v3021 = vunpack.c.l.b16 %v2957
      %v3022 = vunpack.c.l.b16 %v2958
      %v3023 = vunpack.c.l.b16 %v2959
      %v3024 = vunpack.c.l.b16 %v2960
      %v3025 = vunpack.c.l.b16 %v2961
      %v3026 = vunpack.c.l.b16 %v2962
      %v3027 = vunpack.c.l.b16 %v2963
      %v3028 = vunpack.c.l.b16 %v2964
      %v3029 = vunpack.c.l.b16 %v2965
      %v3030 = vunpack.c.l.b16 %v2966
      %v3031 = vunpack.c.l.b16 %v2967
      %v3032 = vunpack.c.l.b16 %v2968
      %v3033 = vunpack.c.l.b16 %v2969
      %v3034 = vunpack.c.l.b16 %v2970
      %v3035 = vunpack.c.l.b16 %v2971
      %v3036 = vunpack.c.l.b16 %v2972
      %v3037 = vunpack.c.l.b16 %v2973
      %v3038 = vunpack.c.l.b16 %v2974
      %v3039 = vunpack.c.l.b16 %v2975
      %v3040 = vunpack.c.l.b16 %v2976
      %v3041 = vunpack.c.l.b16 %v2977
      %v3042 = vunpack.c.l.b16 %v2978
      %v3043 = vunpack.c.l.b16 %v2979
      %v3044 = vunpack.c.l.b16 %v2980
      %v3045 = vunpack.c.l.b16 %v2981
      %v3046 = vunpack.c.l.b16 %v2982
      %v3047 = vunpack.c.l.b16 %v2983
      %v3048 = vunpack.c.l.b16 %v2984
      %v3049 = vunpack.c.l.b16 %v2985
      %v3050 = vunpack.c.l.b16 %v2986
      %v3051 = vpack.c.b16 %v3020, %v3019
      %v3052 = vpack.c.b16 %v3022, %v3021
      %v3053 = vpack.c.b16 %v3024, %v3023
      %v3054 = vpack.c.b16 %v3026, %v3025
      %v3055 = vpack.c.b16 %v3028, %v3027
      %v3056 = vpack.c.b16 %v3030, %v3029
      %v3057 = vpack.c.b16 %v3032, %v3031
      %v3058 = vpack.c.b16 %v3034, %v3033
      %v3059 = vpack.c.b16 %v3036, %v3035
      %v3060 = vpack.c.b16 %v3038, %v3037
      %v3061 = vpack.c.b16 %v3040, %v3039
      %v3062 = vpack.c.b16 %v3042, %v3041
      %v3063 = vpack.c.b16 %v3044, %v3043
      %v3064 = vpack.c.b16 %v3046, %v3045
      %v3065 = vpack.c.b16 %v3048, %v3047
      %v3066 = vpack.c.b16 %v3050, %v3049
      %3083 = vst [vmem:[#allocation3 + $0x30] sm:$0xff] %v3051
      %3084 = vst [vmem:[#allocation3 + $0x78] sm:$0xff] %v3052
      %3085 = vst [vmem:[#allocation3 + $0xc0] sm:$0xff] %v3053
      %3086 = vst [vmem:[#allocation3 + $0x108] sm:$0xff] %v3054
      %3087 = vst [vmem:[#allocation3 + $0x150] sm:$0xff] %v3055
      %3088 = vst [vmem:[#allocation3 + $0x198] sm:$0xff] %v3056
      %3089 = vst [vmem:[#allocation3 + $0x1e0] sm:$0xff] %v3057
      %3090 = vst [vmem:[#allocation3 + $0x228] sm:$0xff] %v3058
      %3091 = vst [vmem:[#allocation3 + $0x270] sm:$0xff] %v3059
      %3092 = vst [vmem:[#allocation3 + $0x2b8] sm:$0xff] %v3060
      %3093 = vst [vmem:[#allocation3 + $0x300] sm:$0xff] %v3061
      %3094 = vst [vmem:[#allocation3 + $0x348] sm:$0xff] %v3062
      %3095 = vst [vmem:[#allocation3 + $0x390] sm:$0xff] %v3063
      %3096 = vst [vmem:[#allocation3 + $0x3d8] sm:$0xff] %v3064
      %3097 = vst [vmem:[#allocation3 + $0x420] sm:$0xff] %v3065
      %3098 = vst [vmem:[#allocation3 + $0x468] sm:$0xff] %v3066
      %v3099 = vld [vmem:[%s2954] sm:$0xf]
      %v3100 = vld [vmem:[%s2954 + $0x4] sm:$0xf]
      %v3101 = vld [vmem:[%s2954 + $0x8] sm:$0x1]
      %v3102 = vld [vmem:[%s2954 + $0xc] sm:$0xf]
      %v3103 = vld [vmem:[%s2954 + $0x10] sm:$0xf]
      %v3104 = vld [vmem:[%s2954 + $0x14] sm:$0x1]
      %v3105 = vld [vmem:[%s2954 + $0x18] sm:$0xf]
      %v3106 = vld [vmem:[%s2954 + $0x1c] sm:$0xf]
      %v3107 = vld [vmem:[%s2954 + $0x20] sm:$0x1]
      %v3108 = vld [vmem:[%s2954 + $0x24] sm:$0xf]
      %v3109 = vld [vmem:[%s2954 + $0x28] sm:$0xf]
      %v3110 = vld [vmem:[%s2954 + $0x2c] sm:$0x1]
      %v3111 = vld [vmem:[%s2954 + $0x30] sm:$0xf]
      %v3112 = vld [vmem:[%s2954 + $0x34] sm:$0xf]
      %v3113 = vld [vmem:[%s2954 + $0x38] sm:$0x1]
      %v3114 = vld [vmem:[%s2954 + $0x3c] sm:$0xf]
      %v3115 = vld [vmem:[%s2954 + $0x40] sm:$0xf]
      %v3116 = vld [vmem:[%s2954 + $0x44] sm:$0x1]
      %v3117 = vld [vmem:[%s2954 + $0x48] sm:$0xf]
      %v3118 = vld [vmem:[%s2954 + $0x4c] sm:$0xf]
      %v3119 = vld [vmem:[%s2954 + $0x50] sm:$0x1]
      %v3120 = vld [vmem:[%s2954 + $0x54] sm:$0xf]
      %v3121 = vld [vmem:[%s2954 + $0x58] sm:$0xf]
      %v3122 = vld [vmem:[%s2954 + $0x5c] sm:$0x1]
      %v3123 = vld [vmem:[%s2954 + $0x60] sm:$0xf]
      %v3124 = vld [vmem:[%s2954 + $0x64] sm:$0xf]
      %v3125 = vld [vmem:[%s2954 + $0x68] sm:$0x1]
      %v3126 = vld [vmem:[%s2954 + $0x6c] sm:$0xf]
      %v3127 = vld [vmem:[%s2954 + $0x70] sm:$0xf]
      %v3128 = vld [vmem:[%s2954 + $0x74] sm:$0x1]
      %v3129 = vld [vmem:[%s2954 + $0x78] sm:$0xf]
      %v3130 = vld [vmem:[%s2954 + $0x7c] sm:$0xf]
      %v3131 = vld [vmem:[%s2954 + $0x80] sm:$0x1]
      %v3132 = vld [vmem:[%s2954 + $0x84] sm:$0xf]
      %v3133 = vld [vmem:[%s2954 + $0x88] sm:$0xf]
      %v3134 = vld [vmem:[%s2954 + $0x8c] sm:$0x1]
      %v3135 = vld [vmem:[%s2954 + $0x90] sm:$0xf]
      %v3136 = vld [vmem:[%s2954 + $0x94] sm:$0xf]
      %v3137 = vld [vmem:[%s2954 + $0x98] sm:$0x1]
      %v3138 = vld [vmem:[%s2954 + $0x9c] sm:$0xf]
      %v3139 = vld [vmem:[%s2954 + $0xa0] sm:$0xf]
      %v3140 = vld [vmem:[%s2954 + $0xa4] sm:$0x1]
      %v3141 = vld [vmem:[%s2954 + $0xa8] sm:$0xf]
      %v3142 = vld [vmem:[%s2954 + $0xac] sm:$0xf]
      %v3143 = vld [vmem:[%s2954 + $0xb0] sm:$0x1]
      %v3144 = vld [vmem:[%s2954 + $0xb4] sm:$0xf]
      %v3145 = vld [vmem:[%s2954 + $0xb8] sm:$0xf]
      %v3146 = vld [vmem:[%s2954 + $0xbc] sm:$0x1]
      %v3148 = vshrl.u32 %v3099, 16
      %v3150 = vrot.slane %v3148, 4
      %v3151 = vshll.u32 %v3099, 16
      %v3153 = vrot.slane %v3151, 5
      %v3154 = vor.u32 %v3150, %v3153
      %v3155 = vrot.slane %v3154, 4
      %v3157 = vshll.u32 %v3100, 16
      %v3159 = vrot.slane %v3157, 5
      %v3160 = vsel %vm1254, %v3155, %v3159
      %v3161 = vshrl.u32 %v3100, 16
      %v3163 = vrot.slane %v3161, 4
      %v3164 = vor.u32 %v3163, %v3159
      %v3165 = vrot.slane %v3164, 4
      %v3167 = vshll.u32 %v3101, 16
      %v3169 = vrot.slane %v3167, 5
      %v3170 = vsel %vm1254, %v3165, %v3169
      %v3172 = vshrl.u32 %v3102, 16
      %v3174 = vrot.slane %v3172, 4
      %v3175 = vshll.u32 %v3102, 16
      %v3177 = vrot.slane %v3175, 5
      %v3178 = vor.u32 %v3174, %v3177
      %v3179 = vrot.slane %v3178, 4
      %v3181 = vshll.u32 %v3103, 16
      %v3183 = vrot.slane %v3181, 5
      %v3184 = vsel %vm1254, %v3179, %v3183
      %v3185 = vshrl.u32 %v3103, 16
      %v3187 = vrot.slane %v3185, 4
      %v3188 = vor.u32 %v3187, %v3183
      %v3189 = vrot.slane %v3188, 4
      %v3191 = vshll.u32 %v3104, 16
      %v3193 = vrot.slane %v3191, 5
      %v3194 = vsel %vm1254, %v3189, %v3193
      %v3196 = vshrl.u32 %v3105, 16
      %v3198 = vrot.slane %v3196, 4
      %v3199 = vshll.u32 %v3105, 16
      %v3201 = vrot.slane %v3199, 5
      %v3202 = vor.u32 %v3198, %v3201
      %v3203 = vrot.slane %v3202, 4
      %v3205 = vshll.u32 %v3106, 16
      %v3207 = vrot.slane %v3205, 5
      %v3208 = vsel %vm1254, %v3203, %v3207
      %v3209 = vshrl.u32 %v3106, 16
      %v3211 = vrot.slane %v3209, 4
      %v3212 = vor.u32 %v3211, %v3207
      %v3213 = vrot.slane %v3212, 4
      %v3215 = vshll.u32 %v3107, 16
      %v3217 = vrot.slane %v3215, 5
      %v3218 = vsel %vm1254, %v3213, %v3217
      %v3220 = vshrl.u32 %v3108, 16
      %v3222 = vrot.slane %v3220, 4
      %v3223 = vshll.u32 %v3108, 16
      %v3225 = vrot.slane %v3223, 5
      %v3226 = vor.u32 %v3222, %v3225
      %v3227 = vrot.slane %v3226, 4
      %v3229 = vshll.u32 %v3109, 16
      %v3231 = vrot.slane %v3229, 5
      %v3232 = vsel %vm1254, %v3227, %v3231
      %v3233 = vshrl.u32 %v3109, 16
      %v3235 = vrot.slane %v3233, 4
      %v3236 = vor.u32 %v3235, %v3231
      %v3237 = vrot.slane %v3236, 4
      %v3239 = vshll.u32 %v3110, 16
      %v3241 = vrot.slane %v3239, 5
      %v3242 = vsel %vm1254, %v3237, %v3241
      %v3244 = vshrl.u32 %v3111, 16
      %v3246 = vrot.slane %v3244, 4
      %v3247 = vshll.u32 %v3111, 16
      %v3249 = vrot.slane %v3247, 5
      %v3250 = vor.u32 %v3246, %v3249
      %v3251 = vrot.slane %v3250, 4
      %v3253 = vshll.u32 %v3112, 16
      %v3255 = vrot.slane %v3253, 5
      %v3256 = vsel %vm1254, %v3251, %v3255
      %v3257 = vshrl.u32 %v3112, 16
      %v3259 = vrot.slane %v3257, 4
      %v3260 = vor.u32 %v3259, %v3255
      %v3261 = vrot.slane %v3260, 4
      %v3263 = vshll.u32 %v3113, 16
      %v3265 = vrot.slane %v3263, 5
      %v3266 = vsel %vm1254, %v3261, %v3265
      %v3268 = vshrl.u32 %v3114, 16
      %v3270 = vrot.slane %v3268, 4
      %v3271 = vshll.u32 %v3114, 16
      %v3273 = vrot.slane %v3271, 5
      %v3274 = vor.u32 %v3270, %v3273
      %v3275 = vrot.slane %v3274, 4
      %v3277 = vshll.u32 %v3115, 16
      %v3279 = vrot.slane %v3277, 5
      %v3280 = vsel %vm1254, %v3275, %v3279
      %v3281 = vshrl.u32 %v3115, 16
      %v3283 = vrot.slane %v3281, 4
      %v3284 = vor.u32 %v3283, %v3279
      %v3285 = vrot.slane %v3284, 4
      %v3287 = vshll.u32 %v3116, 16
      %v3289 = vrot.slane %v3287, 5
      %v3290 = vsel %vm1254, %v3285, %v3289
      %v3292 = vshrl.u32 %v3117, 16
      %v3294 = vrot.slane %v3292, 4
      %v3295 = vshll.u32 %v3117, 16
      %v3297 = vrot.slane %v3295, 5
      %v3298 = vor.u32 %v3294, %v3297
      %v3299 = vrot.slane %v3298, 4
      %v3301 = vshll.u32 %v3118, 16
      %v3303 = vrot.slane %v3301, 5
      %v3304 = vsel %vm1254, %v3299, %v3303
      %v3305 = vshrl.u32 %v3118, 16
      %v3307 = vrot.slane %v3305, 4
      %v3308 = vor.u32 %v3307, %v3303
      %v3309 = vrot.slane %v3308, 4
      %v3311 = vshll.u32 %v3119, 16
      %v3313 = vrot.slane %v3311, 5
      %v3314 = vsel %vm1254, %v3309, %v3313
      %v3316 = vshrl.u32 %v3120, 16
      %v3318 = vrot.slane %v3316, 4
      %v3319 = vshll.u32 %v3120, 16
      %v3321 = vrot.slane %v3319, 5
      %v3322 = vor.u32 %v3318, %v3321
      %v3323 = vrot.slane %v3322, 4
      %v3325 = vshll.u32 %v3121, 16
      %v3327 = vrot.slane %v3325, 5
      %v3328 = vsel %vm1254, %v3323, %v3327
      %v3329 = vshrl.u32 %v3121, 16
      %v3331 = vrot.slane %v3329, 4
      %v3332 = vor.u32 %v3331, %v3327
      %v3333 = vrot.slane %v3332, 4
      %v3335 = vshll.u32 %v3122, 16
      %v3337 = vrot.slane %v3335, 5
      %v3338 = vsel %vm1254, %v3333, %v3337
      %v3340 = vshrl.u32 %v3123, 16
      %v3342 = vrot.slane %v3340, 4
      %v3343 = vshll.u32 %v3123, 16
      %v3345 = vrot.slane %v3343, 5
      %v3346 = vor.u32 %v3342, %v3345
      %v3347 = vrot.slane %v3346, 4
      %v3349 = vshll.u32 %v3124, 16
      %v3351 = vrot.slane %v3349, 5
      %v3352 = vsel %vm1254, %v3347, %v3351
      %v3353 = vshrl.u32 %v3124, 16
      %v3355 = vrot.slane %v3353, 4
      %v3356 = vor.u32 %v3355, %v3351
      %v3357 = vrot.slane %v3356, 4
      %v3359 = vshll.u32 %v3125, 16
      %v3361 = vrot.slane %v3359, 5
      %v3362 = vsel %vm1254, %v3357, %v3361
      %v3364 = vshrl.u32 %v3126, 16
      %v3366 = vrot.slane %v3364, 4
      %v3367 = vshll.u32 %v3126, 16
      %v3369 = vrot.slane %v3367, 5
      %v3370 = vor.u32 %v3366, %v3369
      %v3371 = vrot.slane %v3370, 4
      %v3373 = vshll.u32 %v3127, 16
      %v3375 = vrot.slane %v3373, 5
      %v3376 = vsel %vm1254, %v3371, %v3375
      %v3377 = vshrl.u32 %v3127, 16
      %v3379 = vrot.slane %v3377, 4
      %v3380 = vor.u32 %v3379, %v3375
      %v3381 = vrot.slane %v3380, 4
      %v3383 = vshll.u32 %v3128, 16
      %v3385 = vrot.slane %v3383, 5
      %v3386 = vsel %vm1254, %v3381, %v3385
      %v3388 = vshrl.u32 %v3129, 16
      %v3390 = vrot.slane %v3388, 4
      %v3391 = vshll.u32 %v3129, 16
      %v3393 = vrot.slane %v3391, 5
      %v3394 = vor.u32 %v3390, %v3393
      %v3395 = vrot.slane %v3394, 4
      %v3397 = vshll.u32 %v3130, 16
      %v3399 = vrot.slane %v3397, 5
      %v3400 = vsel %vm1254, %v3395, %v3399
      %v3401 = vshrl.u32 %v3130, 16
      %v3403 = vrot.slane %v3401, 4
      %v3404 = vor.u32 %v3403, %v3399
      %v3405 = vrot.slane %v3404, 4
      %v3407 = vshll.u32 %v3131, 16
      %v3409 = vrot.slane %v3407, 5
      %v3410 = vsel %vm1254, %v3405, %v3409
      %v3412 = vshrl.u32 %v3132, 16
      %v3414 = vrot.slane %v3412, 4
      %v3415 = vshll.u32 %v3132, 16
      %v3417 = vrot.slane %v3415, 5
      %v3418 = vor.u32 %v3414, %v3417
      %v3419 = vrot.slane %v3418, 4
      %v3421 = vshll.u32 %v3133, 16
      %v3423 = vrot.slane %v3421, 5
      %v3424 = vsel %vm1254, %v3419, %v3423
      %v3425 = vshrl.u32 %v3133, 16
      %v3427 = vrot.slane %v3425, 4
      %v3428 = vor.u32 %v3427, %v3423
      %v3429 = vrot.slane %v3428, 4
      %v3431 = vshll.u32 %v3134, 16
      %v3433 = vrot.slane %v3431, 5
      %v3434 = vsel %vm1254, %v3429, %v3433
      %v3436 = vshrl.u32 %v3135, 16
      %v3438 = vrot.slane %v3436, 4
      %v3439 = vshll.u32 %v3135, 16
      %v3441 = vrot.slane %v3439, 5
      %v3442 = vor.u32 %v3438, %v3441
      %v3443 = vrot.slane %v3442, 4
      %v3445 = vshll.u32 %v3136, 16
      %v3447 = vrot.slane %v3445, 5
      %v3448 = vsel %vm1254, %v3443, %v3447
      %v3449 = vshrl.u32 %v3136, 16
      %v3451 = vrot.slane %v3449, 4
      %v3452 = vor.u32 %v3451, %v3447
      %v3453 = vrot.slane %v3452, 4
      %v3455 = vshll.u32 %v3137, 16
      %v3457 = vrot.slane %v3455, 5
      %v3458 = vsel %vm1254, %v3453, %v3457
      %v3460 = vshrl.u32 %v3138, 16
      %v3462 = vrot.slane %v3460, 4
      %v3463 = vshll.u32 %v3138, 16
      %v3465 = vrot.slane %v3463, 5
      %v3466 = vor.u32 %v3462, %v3465
      %v3467 = vrot.slane %v3466, 4
      %v3469 = vshll.u32 %v3139, 16
      %v3471 = vrot.slane %v3469, 5
      %v3472 = vsel %vm1254, %v3467, %v3471
      %v3473 = vshrl.u32 %v3139, 16
      %v3475 = vrot.slane %v3473, 4
      %v3476 = vor.u32 %v3475, %v3471
      %v3477 = vrot.slane %v3476, 4
      %v3479 = vshll.u32 %v3140, 16
      %v3481 = vrot.slane %v3479, 5
      %v3482 = vsel %vm1254, %v3477, %v3481
      %v3484 = vshrl.u32 %v3141, 16
      %v3486 = vrot.slane %v3484, 4
      %v3487 = vshll.u32 %v3141, 16
      %v3489 = vrot.slane %v3487, 5
      %v3490 = vor.u32 %v3486, %v3489
      %v3491 = vrot.slane %v3490, 4
      %v3493 = vshll.u32 %v3142, 16
      %v3495 = vrot.slane %v3493, 5
      %v3496 = vsel %vm1254, %v3491, %v3495
      %v3497 = vshrl.u32 %v3142, 16
      %v3499 = vrot.slane %v3497, 4
      %v3500 = vor.u32 %v3499, %v3495
      %v3501 = vrot.slane %v3500, 4
      %v3503 = vshll.u32 %v3143, 16
      %v3505 = vrot.slane %v3503, 5
      %v3506 = vsel %vm1254, %v3501, %v3505
      %v3508 = vshrl.u32 %v3144, 16
      %v3510 = vrot.slane %v3508, 4
      %v3511 = vshll.u32 %v3144, 16
      %v3513 = vrot.slane %v3511, 5
      %v3514 = vor.u32 %v3510, %v3513
      %v3515 = vrot.slane %v3514, 4
      %v3517 = vshll.u32 %v3145, 16
      %v3519 = vrot.slane %v3517, 5
      %v3520 = vsel %vm1254, %v3515, %v3519
      %v3521 = vshrl.u32 %v3145, 16
      %v3523 = vrot.slane %v3521, 4
      %v3524 = vor.u32 %v3523, %v3519
      %v3525 = vrot.slane %v3524, 4
      %v3527 = vshll.u32 %v3146, 16
      %v3529 = vrot.slane %v3527, 5
      %v3530 = vsel %vm1254, %v3525, %v3529
      %v3531 = vunpack.c.l.b16 %v3160
      %v3532 = vunpack.c.l.b16 %v3170
      %v3533 = vunpack.c.l.b16 %v3184
      %v3534 = vunpack.c.l.b16 %v3194
      %v3535 = vunpack.c.l.b16 %v3208
      %v3536 = vunpack.c.l.b16 %v3218
      %v3537 = vunpack.c.l.b16 %v3232
      %v3538 = vunpack.c.l.b16 %v3242
      %v3539 = vunpack.c.l.b16 %v3256
      %v3540 = vunpack.c.l.b16 %v3266
      %v3541 = vunpack.c.l.b16 %v3280
      %v3542 = vunpack.c.l.b16 %v3290
      %v3543 = vunpack.c.l.b16 %v3304
      %v3544 = vunpack.c.l.b16 %v3314
      %v3545 = vunpack.c.l.b16 %v3328
      %v3546 = vunpack.c.l.b16 %v3338
      %v3547 = vunpack.c.l.b16 %v3352
      %v3548 = vunpack.c.l.b16 %v3362
      %v3549 = vunpack.c.l.b16 %v3376
      %v3550 = vunpack.c.l.b16 %v3386
      %v3551 = vunpack.c.l.b16 %v3400
      %v3552 = vunpack.c.l.b16 %v3410
      %v3553 = vunpack.c.l.b16 %v3424
      %v3554 = vunpack.c.l.b16 %v3434
      %v3555 = vunpack.c.l.b16 %v3448
      %v3556 = vunpack.c.l.b16 %v3458
      %v3557 = vunpack.c.l.b16 %v3472
      %v3558 = vunpack.c.l.b16 %v3482
      %v3559 = vunpack.c.l.b16 %v3496
      %v3560 = vunpack.c.l.b16 %v3506
      %v3561 = vunpack.c.l.b16 %v3520
      %v3562 = vunpack.c.l.b16 %v3530
      %v3563 = vpack.c.b16 %v3532, %v3531
      %v3564 = vpack.c.b16 %v3534, %v3533
      %v3565 = vpack.c.b16 %v3536, %v3535
      %v3566 = vpack.c.b16 %v3538, %v3537
      %v3567 = vpack.c.b16 %v3540, %v3539
      %v3568 = vpack.c.b16 %v3542, %v3541
      %v3569 = vpack.c.b16 %v3544, %v3543
      %v3570 = vpack.c.b16 %v3546, %v3545
      %v3571 = vpack.c.b16 %v3548, %v3547
      %v3572 = vpack.c.b16 %v3550, %v3549
      %v3573 = vpack.c.b16 %v3552, %v3551
      %v3574 = vpack.c.b16 %v3554, %v3553
      %v3575 = vpack.c.b16 %v3556, %v3555
      %v3576 = vpack.c.b16 %v3558, %v3557
      %v3577 = vpack.c.b16 %v3560, %v3559
      %v3578 = vpack.c.b16 %v3562, %v3561
      %3595 = vst [vmem:[#allocation3 + $0x38] sm:$0xff] %v3563
      %3596 = vst [vmem:[#allocation3 + $0x80] sm:$0xff] %v3564
      %3597 = vst [vmem:[#allocation3 + $0xc8] sm:$0xff] %v3565
      %3598 = vst [vmem:[#allocation3 + $0x110] sm:$0xff] %v3566
      %3599 = vst [vmem:[#allocation3 + $0x158] sm:$0xff] %v3567
      %3600 = vst [vmem:[#allocation3 + $0x1a0] sm:$0xff] %v3568
      %3601 = vst [vmem:[#allocation3 + $0x1e8] sm:$0xff] %v3569
      %3602 = vst [vmem:[#allocation3 + $0x230] sm:$0xff] %v3570
      %3603 = vst [vmem:[#allocation3 + $0x278] sm:$0xff] %v3571
      %3604 = vst [vmem:[#allocation3 + $0x2c0] sm:$0xff] %v3572
      %3605 = vst [vmem:[#allocation3 + $0x308] sm:$0xff] %v3573
      %3606 = vst [vmem:[#allocation3 + $0x350] sm:$0xff] %v3574
      %3607 = vst [vmem:[#allocation3 + $0x398] sm:$0xff] %v3575
      %3608 = vst [vmem:[#allocation3 + $0x3e0] sm:$0xff] %v3576
      %3609 = vst [vmem:[#allocation3 + $0x428] sm:$0xff] %v3577
      %3610 = vst [vmem:[#allocation3 + $0x470] sm:$0xff] %v3578
      %v3611 = vld [vmem:[%s2954] sm:$0xe]
      %v3612 = vld [vmem:[%s2954 + $0x4] sm:$0xf]
      %v3613 = vld [vmem:[%s2954 + $0x8] sm:$0x1]
      %v3614 = vld [vmem:[%s2954 + $0xc] sm:$0xe]
      %v3615 = vld [vmem:[%s2954 + $0x10] sm:$0xf]
      %v3616 = vld [vmem:[%s2954 + $0x14] sm:$0x1]
      %v3617 = vld [vmem:[%s2954 + $0x18] sm:$0xe]
      %v3618 = vld [vmem:[%s2954 + $0x1c] sm:$0xf]
      %v3619 = vld [vmem:[%s2954 + $0x20] sm:$0x1]
      %v3620 = vld [vmem:[%s2954 + $0x24] sm:$0xe]
      %v3621 = vld [vmem:[%s2954 + $0x28] sm:$0xf]
      %v3622 = vld [vmem:[%s2954 + $0x2c] sm:$0x1]
      %v3623 = vld [vmem:[%s2954 + $0x30] sm:$0xe]
      %v3624 = vld [vmem:[%s2954 + $0x34] sm:$0xf]
      %v3625 = vld [vmem:[%s2954 + $0x38] sm:$0x1]
      %v3626 = vld [vmem:[%s2954 + $0x3c] sm:$0xe]
      %v3627 = vld [vmem:[%s2954 + $0x40] sm:$0xf]
      %v3628 = vld [vmem:[%s2954 + $0x44] sm:$0x1]
      %v3629 = vld [vmem:[%s2954 + $0x48] sm:$0xe]
      %v3630 = vld [vmem:[%s2954 + $0x4c] sm:$0xf]
      %v3631 = vld [vmem:[%s2954 + $0x50] sm:$0x1]
      %v3632 = vld [vmem:[%s2954 + $0x54] sm:$0xe]
      %v3633 = vld [vmem:[%s2954 + $0x58] sm:$0xf]
      %v3634 = vld [vmem:[%s2954 + $0x5c] sm:$0x1]
      %v3635 = vld [vmem:[%s2954 + $0x60] sm:$0xe]
      %v3636 = vld [vmem:[%s2954 + $0x64] sm:$0xf]
      %v3637 = vld [vmem:[%s2954 + $0x68] sm:$0x1]
      %v3638 = vld [vmem:[%s2954 + $0x6c] sm:$0xe]
      %v3639 = vld [vmem:[%s2954 + $0x70] sm:$0xf]
      %v3640 = vld [vmem:[%s2954 + $0x74] sm:$0x1]
      %v3641 = vld [vmem:[%s2954 + $0x78] sm:$0xe]
      %v3642 = vld [vmem:[%s2954 + $0x7c] sm:$0xf]
      %v3643 = vld [vmem:[%s2954 + $0x80] sm:$0x1]
      %v3644 = vld [vmem:[%s2954 + $0x84] sm:$0xe]
      %v3645 = vld [vmem:[%s2954 + $0x88] sm:$0xf]
      %v3646 = vld [vmem:[%s2954 + $0x8c] sm:$0x1]
      %v3647 = vld [vmem:[%s2954 + $0x90] sm:$0xe]
      %v3648 = vld [vmem:[%s2954 + $0x94] sm:$0xf]
      %v3649 = vld [vmem:[%s2954 + $0x98] sm:$0x1]
      %v3650 = vld [vmem:[%s2954 + $0x9c] sm:$0xe]
      %v3651 = vld [vmem:[%s2954 + $0xa0] sm:$0xf]
      %v3652 = vld [vmem:[%s2954 + $0xa4] sm:$0x1]
      %v3653 = vld [vmem:[%s2954 + $0xa8] sm:$0xe]
      %v3654 = vld [vmem:[%s2954 + $0xac] sm:$0xf]
      %v3655 = vld [vmem:[%s2954 + $0xb0] sm:$0x1]
      %v3656 = vld [vmem:[%s2954 + $0xb4] sm:$0xe]
      %v3657 = vld [vmem:[%s2954 + $0xb8] sm:$0xf]
      %v3658 = vld [vmem:[%s2954 + $0xbc] sm:$0x1]
      %v3707 = vrot.slane %v3611, 5
      %v3708 = vrot.slane %v3707, 4
      %v3709 = vrot.slane %v3612, 5
      %v3710 = vsel %vm1817, %v3708, %v3709
      %v3711 = vrot.slane %v3709, 4
      %v3712 = vrot.slane %v3613, 5
      %v3713 = vsel %vm1817, %v3711, %v3712
      %v3714 = vrot.slane %v3614, 5
      %v3715 = vrot.slane %v3714, 4
      %v3716 = vrot.slane %v3615, 5
      %v3717 = vsel %vm1817, %v3715, %v3716
      %v3718 = vrot.slane %v3716, 4
      %v3719 = vrot.slane %v3616, 5
      %v3720 = vsel %vm1817, %v3718, %v3719
      %v3721 = vrot.slane %v3617, 5
      %v3722 = vrot.slane %v3721, 4
      %v3723 = vrot.slane %v3618, 5
      %v3724 = vsel %vm1817, %v3722, %v3723
      %v3725 = vrot.slane %v3723, 4
      %v3726 = vrot.slane %v3619, 5
      %v3727 = vsel %vm1817, %v3725, %v3726
      %v3728 = vrot.slane %v3620, 5
      %v3729 = vrot.slane %v3728, 4
      %v3730 = vrot.slane %v3621, 5
      %v3731 = vsel %vm1817, %v3729, %v3730
      %v3732 = vrot.slane %v3730, 4
      %v3733 = vrot.slane %v3622, 5
      %v3734 = vsel %vm1817, %v3732, %v3733
      %v3735 = vrot.slane %v3623, 5
      %v3736 = vrot.slane %v3735, 4
      %v3737 = vrot.slane %v3624, 5
      %v3738 = vsel %vm1817, %v3736, %v3737
      %v3739 = vrot.slane %v3737, 4
      %v3740 = vrot.slane %v3625, 5
      %v3741 = vsel %vm1817, %v3739, %v3740
      %v3742 = vrot.slane %v3626, 5
      %v3743 = vrot.slane %v3742, 4
      %v3744 = vrot.slane %v3627, 5
      %v3745 = vsel %vm1817, %v3743, %v3744
      %v3746 = vrot.slane %v3744, 4
      %v3747 = vrot.slane %v3628, 5
      %v3748 = vsel %vm1817, %v3746, %v3747
      %v3749 = vrot.slane %v3629, 5
      %v3750 = vrot.slane %v3749, 4
      %v3751 = vrot.slane %v3630, 5
      %v3752 = vsel %vm1817, %v3750, %v3751
      %v3753 = vrot.slane %v3751, 4
      %v3754 = vrot.slane %v3631, 5
      %v3755 = vsel %vm1817, %v3753, %v3754
      %v3756 = vrot.slane %v3632, 5
      %v3757 = vrot.slane %v3756, 4
      %v3758 = vrot.slane %v3633, 5
      %v3759 = vsel %vm1817, %v3757, %v3758
      %v3760 = vrot.slane %v3758, 4
      %v3761 = vrot.slane %v3634, 5
      %v3762 = vsel %vm1817, %v3760, %v3761
      %v3763 = vrot.slane %v3635, 5
      %v3764 = vrot.slane %v3763, 4
      %v3765 = vrot.slane %v3636, 5
      %v3766 = vsel %vm1817, %v3764, %v3765
      %v3767 = vrot.slane %v3765, 4
      %v3768 = vrot.slane %v3637, 5
      %v3769 = vsel %vm1817, %v3767, %v3768
      %v3770 = vrot.slane %v3638, 5
      %v3771 = vrot.slane %v3770, 4
      %v3772 = vrot.slane %v3639, 5
      %v3773 = vsel %vm1817, %v3771, %v3772
      %v3774 = vrot.slane %v3772, 4
      %v3775 = vrot.slane %v3640, 5
      %v3776 = vsel %vm1817, %v3774, %v3775
      %v3777 = vrot.slane %v3641, 5
      %v3778 = vrot.slane %v3777, 4
      %v3779 = vrot.slane %v3642, 5
      %v3780 = vsel %vm1817, %v3778, %v3779
      %v3781 = vrot.slane %v3779, 4
      %v3782 = vrot.slane %v3643, 5
      %v3783 = vsel %vm1817, %v3781, %v3782
      %v3784 = vrot.slane %v3644, 5
      %v3785 = vrot.slane %v3784, 4
      %v3786 = vrot.slane %v3645, 5
      %v3787 = vsel %vm1817, %v3785, %v3786
      %v3788 = vrot.slane %v3786, 4
      %v3789 = vrot.slane %v3646, 5
      %v3790 = vsel %vm1817, %v3788, %v3789
      %v3791 = vrot.slane %v3647, 5
      %v3792 = vrot.slane %v3791, 4
      %v3793 = vrot.slane %v3648, 5
      %v3794 = vsel %vm1817, %v3792, %v3793
      %v3795 = vrot.slane %v3793, 4
      %v3796 = vrot.slane %v3649, 5
      %v3797 = vsel %vm1817, %v3795, %v3796
      %v3798 = vrot.slane %v3650, 5
      %v3799 = vrot.slane %v3798, 4
      %v3800 = vrot.slane %v3651, 5
      %v3801 = vsel %vm1817, %v3799, %v3800
      %v3802 = vrot.slane %v3800, 4
      %v3803 = vrot.slane %v3652, 5
      %v3804 = vsel %vm1817, %v3802, %v3803
      %v3805 = vrot.slane %v3653, 5
      %v3806 = vrot.slane %v3805, 4
      %v3807 = vrot.slane %v3654, 5
      %v3808 = vsel %vm1817, %v3806, %v3807
      %v3809 = vrot.slane %v3807, 4
      %v3810 = vrot.slane %v3655, 5
      %v3811 = vsel %vm1817, %v3809, %v3810
      %v3812 = vrot.slane %v3656, 5
      %v3813 = vrot.slane %v3812, 4
      %v3814 = vrot.slane %v3657, 5
      %v3815 = vsel %vm1817, %v3813, %v3814
      %v3816 = vrot.slane %v3814, 4
      %v3817 = vrot.slane %v3658, 5
      %v3818 = vsel %vm1817, %v3816, %v3817
      %v3819 = vunpack.c.l.b16 %v3710
      %v3820 = vunpack.c.l.b16 %v3713
      %v3821 = vunpack.c.l.b16 %v3717
      %v3822 = vunpack.c.l.b16 %v3720
      %v3823 = vunpack.c.l.b16 %v3724
      %v3824 = vunpack.c.l.b16 %v3727
      %v3825 = vunpack.c.l.b16 %v3731
      %v3826 = vunpack.c.l.b16 %v3734
      %v3827 = vunpack.c.l.b16 %v3738
      %v3828 = vunpack.c.l.b16 %v3741
      %v3829 = vunpack.c.l.b16 %v3745
      %v3830 = vunpack.c.l.b16 %v3748
      %v3831 = vunpack.c.l.b16 %v3752
      %v3832 = vunpack.c.l.b16 %v3755
      %v3833 = vunpack.c.l.b16 %v3759
      %v3834 = vunpack.c.l.b16 %v3762
      %v3835 = vunpack.c.l.b16 %v3766
      %v3836 = vunpack.c.l.b16 %v3769
      %v3837 = vunpack.c.l.b16 %v3773
      %v3838 = vunpack.c.l.b16 %v3776
      %v3839 = vunpack.c.l.b16 %v3780
      %v3840 = vunpack.c.l.b16 %v3783
      %v3841 = vunpack.c.l.b16 %v3787
      %v3842 = vunpack.c.l.b16 %v3790
      %v3843 = vunpack.c.l.b16 %v3794
      %v3844 = vunpack.c.l.b16 %v3797
      %v3845 = vunpack.c.l.b16 %v3801
      %v3846 = vunpack.c.l.b16 %v3804
      %v3847 = vunpack.c.l.b16 %v3808
      %v3848 = vunpack.c.l.b16 %v3811
      %v3849 = vunpack.c.l.b16 %v3815
      %v3850 = vunpack.c.l.b16 %v3818
      %v3851 = vpack.c.b16 %v3820, %v3819
      %v3852 = vpack.c.b16 %v3822, %v3821
      %v3853 = vpack.c.b16 %v3824, %v3823
      %v3854 = vpack.c.b16 %v3826, %v3825
      %v3855 = vpack.c.b16 %v3828, %v3827
      %v3856 = vpack.c.b16 %v3830, %v3829
      %v3857 = vpack.c.b16 %v3832, %v3831
      %v3858 = vpack.c.b16 %v3834, %v3833
      %v3859 = vpack.c.b16 %v3836, %v3835
      %v3860 = vpack.c.b16 %v3838, %v3837
      %v3861 = vpack.c.b16 %v3840, %v3839
      %v3862 = vpack.c.b16 %v3842, %v3841
      %v3863 = vpack.c.b16 %v3844, %v3843
      %v3864 = vpack.c.b16 %v3846, %v3845
      %v3865 = vpack.c.b16 %v3848, %v3847
      %v3866 = vpack.c.b16 %v3850, %v3849
      %3883 = vst [vmem:[#allocation3 + $0x40] sm:$0xff] %v3851
      %3884 = vst [vmem:[#allocation3 + $0x88] sm:$0xff] %v3852
      %3885 = vst [vmem:[#allocation3 + $0xd0] sm:$0xff] %v3853
      %3886 = vst [vmem:[#allocation3 + $0x118] sm:$0xff] %v3854
      %3887 = vst [vmem:[#allocation3 + $0x160] sm:$0xff] %v3855
      %3888 = vst [vmem:[#allocation3 + $0x1a8] sm:$0xff] %v3856
      %3889 = vst [vmem:[#allocation3 + $0x1f0] sm:$0xff] %v3857
      %3890 = vst [vmem:[#allocation3 + $0x238] sm:$0xff] %v3858
      %3891 = vst [vmem:[#allocation3 + $0x280] sm:$0xff] %v3859
      %3892 = vst [vmem:[#allocation3 + $0x2c8] sm:$0xff] %v3860
      %3893 = vst [vmem:[#allocation3 + $0x310] sm:$0xff] %v3861
      %3894 = vst [vmem:[#allocation3 + $0x358] sm:$0xff] %v3862
      %3895 = vst [vmem:[#allocation3 + $0x3a0] sm:$0xff] %v3863
      %3896 = vst [vmem:[#allocation3 + $0x3e8] sm:$0xff] %v3864
      %3897 = vst [vmem:[#allocation3 + $0x430] sm:$0xff] %v3865
      %3898 = vst [vmem:[#allocation3 + $0x478] sm:$0xff] %v3866
      %v3899 = vld [vmem:[#allocation3] sm:$0xff]
      %v3900 = vld [vmem:[#allocation3 + $0x8] sm:$0xff]
      %v3901 = vld [vmem:[#allocation3 + $0x10] sm:$0xff]
      %v3902 = vld [vmem:[#allocation3 + $0x18] sm:$0xff]
      %v3903 = vld [vmem:[#allocation3 + $0x20] sm:$0xff]
      %v3904 = vld [vmem:[#allocation3 + $0x28] sm:$0xff]
      %v3905 = vld [vmem:[#allocation3 + $0x30] sm:$0xff]
      %v3906 = vld [vmem:[#allocation3 + $0x38] sm:$0xff]
      %v3907 = vld [vmem:[#allocation3 + $0x40] sm:$0xff]
      %v3908 = vld [vmem:[#allocation3 + $0x48] sm:$0xff]
      %v3909 = vld [vmem:[#allocation3 + $0x50] sm:$0xff]
      %v3910 = vld [vmem:[#allocation3 + $0x58] sm:$0xff]
      %v3911 = vld [vmem:[#allocation3 + $0x60] sm:$0xff]
      %v3912 = vld [vmem:[#allocation3 + $0x68] sm:$0xff]
      %v3913 = vld [vmem:[#allocation3 + $0x70] sm:$0xff]
      %v3914 = vld [vmem:[#allocation3 + $0x78] sm:$0xff]
      %v3915 = vld [vmem:[#allocation3 + $0x80] sm:$0xff]
      %v3916 = vld [vmem:[#allocation3 + $0x88] sm:$0xff]
      %v3917 = vld [vmem:[#allocation3 + $0x90] sm:$0xff]
      %v3918 = vld [vmem:[#allocation3 + $0x98] sm:$0xff]
      %v3919 = vld [vmem:[#allocation3 + $0xa0] sm:$0xff]
      %v3920 = vld [vmem:[#allocation3 + $0xa8] sm:$0xff]
      %v3921 = vld [vmem:[#allocation3 + $0xb0] sm:$0xff]
      %v3922 = vld [vmem:[#allocation3 + $0xb8] sm:$0xff]
      %v3923 = vld [vmem:[#allocation3 + $0xc0] sm:$0xff]
      %v3924 = vld [vmem:[#allocation3 + $0xc8] sm:$0xff]
      %v3925 = vld [vmem:[#allocation3 + $0xd0] sm:$0xff]
      %v3926 = vld [vmem:[#allocation3 + $0xd8] sm:$0xff]
      %v3927 = vld [vmem:[#allocation3 + $0xe0] sm:$0xff]
      %v3928 = vld [vmem:[#allocation3 + $0xe8] sm:$0xff]
      %v3929 = vld [vmem:[#allocation3 + $0xf0] sm:$0xff]
      %v3930 = vld [vmem:[#allocation3 + $0xf8] sm:$0xff]
      %v3931 = vld [vmem:[#allocation3 + $0x100] sm:$0xff]
      %v3932 = vld [vmem:[#allocation3 + $0x108] sm:$0xff]
      %v3933 = vld [vmem:[#allocation3 + $0x110] sm:$0xff]
      %v3934 = vld [vmem:[#allocation3 + $0x118] sm:$0xff]
      %v3935 = vld [vmem:[#allocation3 + $0x120] sm:$0xff]
      %v3936 = vld [vmem:[#allocation3 + $0x128] sm:$0xff]
      %v3937 = vld [vmem:[#allocation3 + $0x130] sm:$0xff]
      %v3938 = vld [vmem:[#allocation3 + $0x138] sm:$0xff]
      %v3939 = vld [vmem:[#allocation3 + $0x140] sm:$0xff]
      %v3940 = vld [vmem:[#allocation3 + $0x148] sm:$0xff]
      %v3941 = vld [vmem:[#allocation3 + $0x150] sm:$0xff]
      %v3942 = vld [vmem:[#allocation3 + $0x158] sm:$0xff]
      %v3943 = vld [vmem:[#allocation3 + $0x160] sm:$0xff]
      %v3944 = vld [vmem:[#allocation3 + $0x168] sm:$0xff]
      %v3945 = vld [vmem:[#allocation3 + $0x170] sm:$0xff]
      %v3946 = vld [vmem:[#allocation3 + $0x178] sm:$0xff]
      %v3947 = vld [vmem:[#allocation3 + $0x180] sm:$0xff]
      %v3948 = vld [vmem:[#allocation3 + $0x188] sm:$0xff]
      %v3949 = vld [vmem:[#allocation3 + $0x190] sm:$0xff]
      %v3950 = vld [vmem:[#allocation3 + $0x198] sm:$0xff]
      %v3951 = vld [vmem:[#allocation3 + $0x1a0] sm:$0xff]
      %v3952 = vld [vmem:[#allocation3 + $0x1a8] sm:$0xff]
      %v3953 = vld [vmem:[#allocation3 + $0x1b0] sm:$0xff]
      %v3954 = vld [vmem:[#allocation3 + $0x1b8] sm:$0xff]
      %v3955 = vld [vmem:[#allocation3 + $0x1c0] sm:$0xff]
      %v3956 = vld [vmem:[#allocation3 + $0x1c8] sm:$0xff]
      %v3957 = vld [vmem:[#allocation3 + $0x1d0] sm:$0xff]
      %v3958 = vld [vmem:[#allocation3 + $0x1d8] sm:$0xff]
      %v3959 = vld [vmem:[#allocation3 + $0x1e0] sm:$0xff]
      %v3960 = vld [vmem:[#allocation3 + $0x1e8] sm:$0xff]
      %v3961 = vld [vmem:[#allocation3 + $0x1f0] sm:$0xff]
      %v3962 = vld [vmem:[#allocation3 + $0x1f8] sm:$0xff]
      %v3963 = vld [vmem:[#allocation3 + $0x200] sm:$0xff]
      %v3964 = vld [vmem:[#allocation3 + $0x208] sm:$0xff]
      %v3965 = vld [vmem:[#allocation3 + $0x210] sm:$0xff]
      %v3966 = vld [vmem:[#allocation3 + $0x218] sm:$0xff]
      %v3967 = vld [vmem:[#allocation3 + $0x220] sm:$0xff]
      %v3968 = vld [vmem:[#allocation3 + $0x228] sm:$0xff]
      %v3969 = vld [vmem:[#allocation3 + $0x230] sm:$0xff]
      %v3970 = vld [vmem:[#allocation3 + $0x238] sm:$0xff]
      %v3971 = vld [vmem:[#allocation3 + $0x240] sm:$0xff]
      %v3972 = vld [vmem:[#allocation3 + $0x248] sm:$0xff]
      %v3973 = vld [vmem:[#allocation3 + $0x250] sm:$0xff]
      %v3974 = vld [vmem:[#allocation3 + $0x258] sm:$0xff]
      %v3975 = vld [vmem:[#allocation3 + $0x260] sm:$0xff]
      %v3976 = vld [vmem:[#allocation3 + $0x268] sm:$0xff]
      %v3977 = vld [vmem:[#allocation3 + $0x270] sm:$0xff]
      %v3978 = vld [vmem:[#allocation3 + $0x278] sm:$0xff]
      %v3979 = vld [vmem:[#allocation3 + $0x280] sm:$0xff]
      %v3980 = vld [vmem:[#allocation3 + $0x288] sm:$0xff]
      %v3981 = vld [vmem:[#allocation3 + $0x290] sm:$0xff]
      %v3982 = vld [vmem:[#allocation3 + $0x298] sm:$0xff]
      %v3983 = vld [vmem:[#allocation3 + $0x2a0] sm:$0xff]
      %v3984 = vld [vmem:[#allocation3 + $0x2a8] sm:$0xff]
      %v3985 = vld [vmem:[#allocation3 + $0x2b0] sm:$0xff]
      %v3986 = vld [vmem:[#allocation3 + $0x2b8] sm:$0xff]
      %v3987 = vld [vmem:[#allocation3 + $0x2c0] sm:$0xff]
      %v3988 = vld [vmem:[#allocation3 + $0x2c8] sm:$0xff]
      %v3989 = vld [vmem:[#allocation3 + $0x2d0] sm:$0xff]
      %v3990 = vld [vmem:[#allocation3 + $0x2d8] sm:$0xff]
      %v3991 = vld [vmem:[#allocation3 + $0x2e0] sm:$0xff]
      %v3992 = vld [vmem:[#allocation3 + $0x2e8] sm:$0xff]
      %v3993 = vld [vmem:[#allocation3 + $0x2f0] sm:$0xff]
      %v3994 = vld [vmem:[#allocation3 + $0x2f8] sm:$0xff]
      %v3995 = vld [vmem:[#allocation3 + $0x300] sm:$0xff]
      %v3996 = vld [vmem:[#allocation3 + $0x308] sm:$0xff]
      %v3997 = vld [vmem:[#allocation3 + $0x310] sm:$0xff]
      %v3998 = vld [vmem:[#allocation3 + $0x318] sm:$0xff]
      %v3999 = vld [vmem:[#allocation3 + $0x320] sm:$0xff]
      %v4000 = vld [vmem:[#allocation3 + $0x328] sm:$0xff]
      %v4001 = vld [vmem:[#allocation3 + $0x330] sm:$0xff]
      %v4002 = vld [vmem:[#allocation3 + $0x338] sm:$0xff]
      %v4003 = vld [vmem:[#allocation3 + $0x340] sm:$0xff]
      %v4004 = vld [vmem:[#allocation3 + $0x348] sm:$0xff]
      %v4005 = vld [vmem:[#allocation3 + $0x350] sm:$0xff]
      %v4006 = vld [vmem:[#allocation3 + $0x358] sm:$0xff]
      %v4007 = vld [vmem:[#allocation3 + $0x360] sm:$0xff]
      %v4008 = vld [vmem:[#allocation3 + $0x368] sm:$0xff]
      %v4009 = vld [vmem:[#allocation3 + $0x370] sm:$0xff]
      %v4010 = vld [vmem:[#allocation3 + $0x378] sm:$0xff]
      %v4011 = vld [vmem:[#allocation3 + $0x380] sm:$0xff]
      %v4012 = vld [vmem:[#allocation3 + $0x388] sm:$0xff]
      %v4013 = vld [vmem:[#allocation3 + $0x390] sm:$0xff]
      %v4014 = vld [vmem:[#allocation3 + $0x398] sm:$0xff]
      %v4015 = vld [vmem:[#allocation3 + $0x3a0] sm:$0xff]
      %v4016 = vld [vmem:[#allocation3 + $0x3a8] sm:$0xff]
      %v4017 = vld [vmem:[#allocation3 + $0x3b0] sm:$0xff]
      %v4018 = vld [vmem:[#allocation3 + $0x3b8] sm:$0xff]
      %v4019 = vld [vmem:[#allocation3 + $0x3c0] sm:$0xff]
      %v4020 = vld [vmem:[#allocation3 + $0x3c8] sm:$0xff]
      %v4021 = vld [vmem:[#allocation3 + $0x3d0] sm:$0xff]
      %v4022 = vld [vmem:[#allocation3 + $0x3d8] sm:$0xff]
      %v4023 = vld [vmem:[#allocation3 + $0x3e0] sm:$0xff]
      %v4024 = vld [vmem:[#allocation3 + $0x3e8] sm:$0xff]
      %v4025 = vld [vmem:[#allocation3 + $0x3f0] sm:$0xff]
      %v4026 = vld [vmem:[#allocation3 + $0x3f8] sm:$0xff]
      %v4027 = vld [vmem:[#allocation3 + $0x400] sm:$0xff]
      %v4028 = vld [vmem:[#allocation3 + $0x408] sm:$0xff]
      %v4029 = vld [vmem:[#allocation3 + $0x410] sm:$0xff]
      %v4030 = vld [vmem:[#allocation3 + $0x418] sm:$0xff]
      %v4031 = vld [vmem:[#allocation3 + $0x420] sm:$0xff]
      %v4032 = vld [vmem:[#allocation3 + $0x428] sm:$0xff]
      %v4033 = vld [vmem:[#allocation3 + $0x430] sm:$0xff]
      %v4034 = vld [vmem:[#allocation3 + $0x438] sm:$0xff]
      %v4035 = vld [vmem:[#allocation3 + $0x440] sm:$0xff]
      %v4036 = vld [vmem:[#allocation3 + $0x448] sm:$0xff]
      %v4037 = vld [vmem:[#allocation3 + $0x450] sm:$0xff]
      %v4038 = vld [vmem:[#allocation3 + $0x458] sm:$0xff]
      %v4039 = vld [vmem:[#allocation3 + $0x460] sm:$0xff]
      %v4040 = vld [vmem:[#allocation3 + $0x468] sm:$0xff]
      %v4041 = vld [vmem:[#allocation3 + $0x470] sm:$0xff]
      %v4042 = vld [vmem:[#allocation3 + $0x478] sm:$0xff]
      %v4043 = vld [vmem:[%s2] sm:$0xf]
      %v4044 = vld [vmem:[%s2 + $0x4] sm:$0xf]
      %v4045 = vld [vmem:[%s2 + $0x8] sm:$0xf]
      %v4046 = vld [vmem:[%s2 + $0xc] sm:$0xf]
      %v4047 = vld [vmem:[%s2 + $0x10] sm:$0xf]
      %v4048 = vld [vmem:[%s2 + $0x14] sm:$0xf]
      %v4049 = vld [vmem:[%s2 + $0x18] sm:$0xf]
      %v4050 = vld [vmem:[%s2 + $0x1c] sm:$0xf]
      %v4051 = vld [vmem:[%s2 + $0x20] sm:$0xf]
      %v4052 = vld [vmem:[%s2 + $0x24] sm:$0xf]
      %v4053 = vld [vmem:[%s2 + $0x28] sm:$0xf]
      %v4054 = vld [vmem:[%s2 + $0x2c] sm:$0xf]
      %v4055 = vld [vmem:[%s2 + $0x30] sm:$0xf]
      %v4056 = vld [vmem:[%s2 + $0x34] sm:$0xf]
      %v4057 = vld [vmem:[%s2 + $0x38] sm:$0xf]
      %v4058 = vld [vmem:[%s2 + $0x3c] sm:$0xf]
      %v4059 = vld [vmem:[%s2 + $0x40] sm:$0xf]
      %v4060 = vld [vmem:[%s2 + $0x44] sm:$0xf]
      %v4061 = vld [vmem:[%s2 + $0x48] sm:$0xf]
      %v4062 = vld [vmem:[%s2 + $0x4c] sm:$0xf]
      %v4063 = vld [vmem:[%s2 + $0x50] sm:$0xf]
      %v4064 = vld [vmem:[%s2 + $0x54] sm:$0xf]
      %v4065 = vld [vmem:[%s2 + $0x58] sm:$0xf]
      %v4066 = vld [vmem:[%s2 + $0x5c] sm:$0xf]
      %v4067 = vld [vmem:[%s2 + $0x60] sm:$0xf]
      %v4068 = vld [vmem:[%s2 + $0x64] sm:$0xf]
      %v4069 = vld [vmem:[%s2 + $0x68] sm:$0xf]
      %v4070 = vld [vmem:[%s2 + $0x6c] sm:$0xf]
      %v4071 = vld [vmem:[%s2 + $0x70] sm:$0xf]
      %v4072 = vld [vmem:[%s2 + $0x74] sm:$0xf]
      %v4073 = vld [vmem:[%s2 + $0x78] sm:$0xf]
      %v4074 = vld [vmem:[%s2 + $0x7c] sm:$0xf]
      %v4075 = vld [vmem:[%s2 + $0x80] sm:$0xf]
      %v4076 = vld [vmem:[%s2 + $0x84] sm:$0xf]
      %v4077 = vld [vmem:[%s2 + $0x88] sm:$0xf]
      %v4078 = vld [vmem:[%s2 + $0x8c] sm:$0xf]
      %v4079 = vld [vmem:[%s2 + $0x90] sm:$0xf]
      %v4080 = vld [vmem:[%s2 + $0x94] sm:$0xf]
      %v4081 = vld [vmem:[%s2 + $0x98] sm:$0xf]
      %v4082 = vld [vmem:[%s2 + $0x9c] sm:$0xf]
      %v4083 = vld [vmem:[%s2 + $0xa0] sm:$0xf]
      %v4084 = vld [vmem:[%s2 + $0xa4] sm:$0xf]
      %v4085 = vld [vmem:[%s2 + $0xa8] sm:$0xf]
      %v4086 = vld [vmem:[%s2 + $0xac] sm:$0xf]
      %v4087 = vld [vmem:[%s2 + $0xb0] sm:$0xf]
      %v4088 = vld [vmem:[%s2 + $0xb4] sm:$0xf]
      %v4089 = vld [vmem:[%s2 + $0xb8] sm:$0xf]
      %v4090 = vld [vmem:[%s2 + $0xbc] sm:$0xf]
      %v4091 = vld [vmem:[%s2 + $0xc0] sm:$0xf]
      %v4092 = vld [vmem:[%s2 + $0xc4] sm:$0xf]
      %v4093 = vld [vmem:[%s2 + $0xc8] sm:$0xf]
      %v4094 = vld [vmem:[%s2 + $0xcc] sm:$0xf]
      %v4095 = vld [vmem:[%s2 + $0xd0] sm:$0xf]
      %v4096 = vld [vmem:[%s2 + $0xd4] sm:$0xf]
      %v4097 = vld [vmem:[%s2 + $0xd8] sm:$0xf]
      %v4098 = vld [vmem:[%s2 + $0xdc] sm:$0xf]
      %v4099 = vld [vmem:[%s2 + $0xe0] sm:$0xf]
      %v4100 = vld [vmem:[%s2 + $0xe4] sm:$0xf]
      %v4101 = vld [vmem:[%s2 + $0xe8] sm:$0xf]
      %v4102 = vld [vmem:[%s2 + $0xec] sm:$0xf]
      %v4103 = vld [vmem:[%s2 + $0xf0] sm:$0xf]
      %v4104 = vld [vmem:[%s2 + $0xf4] sm:$0xf]
      %v4105 = vld [vmem:[%s2 + $0xf8] sm:$0xf]
      %v4106 = vld [vmem:[%s2 + $0xfc] sm:$0xf]
      %v4107 = vld [vmem:[%s2 + $0x100] sm:$0xf]
      %v4108 = vld [vmem:[%s2 + $0x104] sm:$0xf]
      %v4109 = vld [vmem:[%s2 + $0x108] sm:$0xf]
      %v4110 = vld [vmem:[%s2 + $0x10c] sm:$0xf]
      %v4111 = vld [vmem:[%s2 + $0x110] sm:$0xf]
      %v4112 = vld [vmem:[%s2 + $0x114] sm:$0xf]
      %v4113 = vld [vmem:[%s2 + $0x118] sm:$0xf]
      %v4114 = vld [vmem:[%s2 + $0x11c] sm:$0xf]
      %v4115 = vld [vmem:[%s2 + $0x120] sm:$0xf]
      %v4116 = vld [vmem:[%s2 + $0x124] sm:$0xf]
      %v4117 = vld [vmem:[%s2 + $0x128] sm:$0xf]
      %v4118 = vld [vmem:[%s2 + $0x12c] sm:$0xf]
      %v4119 = vld [vmem:[%s2 + $0x130] sm:$0xf]
      %v4120 = vld [vmem:[%s2 + $0x134] sm:$0xf]
      %v4121 = vld [vmem:[%s2 + $0x138] sm:$0xf]
      %v4122 = vld [vmem:[%s2 + $0x13c] sm:$0xf]
      %v4123 = vld [vmem:[%s2 + $0x140] sm:$0xf]
      %v4124 = vld [vmem:[%s2 + $0x144] sm:$0xf]
      %v4125 = vld [vmem:[%s2 + $0x148] sm:$0xf]
      %v4126 = vld [vmem:[%s2 + $0x14c] sm:$0xf]
      %v4127 = vld [vmem:[%s2 + $0x150] sm:$0xf]
      %v4128 = vld [vmem:[%s2 + $0x154] sm:$0xf]
      %v4129 = vld [vmem:[%s2 + $0x158] sm:$0xf]
      %v4130 = vld [vmem:[%s2 + $0x15c] sm:$0xf]
      %v4131 = vld [vmem:[%s2 + $0x160] sm:$0xf]
      %v4132 = vld [vmem:[%s2 + $0x164] sm:$0xf]
      %v4133 = vld [vmem:[%s2 + $0x168] sm:$0xf]
      %v4134 = vld [vmem:[%s2 + $0x16c] sm:$0xf]
      %v4135 = vld [vmem:[%s2 + $0x170] sm:$0xf]
      %v4136 = vld [vmem:[%s2 + $0x174] sm:$0xf]
      %v4137 = vld [vmem:[%s2 + $0x178] sm:$0xf]
      %v4138 = vld [vmem:[%s2 + $0x17c] sm:$0xf]
      %v4139 = vld [vmem:[%s2 + $0x180] sm:$0xf]
      %v4140 = vld [vmem:[%s2 + $0x184] sm:$0xf]
      %v4141 = vld [vmem:[%s2 + $0x188] sm:$0xf]
      %v4142 = vld [vmem:[%s2 + $0x18c] sm:$0xf]
      %v4143 = vld [vmem:[%s2 + $0x190] sm:$0xf]
      %v4144 = vld [vmem:[%s2 + $0x194] sm:$0xf]
      %v4145 = vld [vmem:[%s2 + $0x198] sm:$0xf]
      %v4146 = vld [vmem:[%s2 + $0x19c] sm:$0xf]
      %v4147 = vld [vmem:[%s2 + $0x1a0] sm:$0xf]
      %v4148 = vld [vmem:[%s2 + $0x1a4] sm:$0xf]
      %v4149 = vld [vmem:[%s2 + $0x1a8] sm:$0xf]
      %v4150 = vld [vmem:[%s2 + $0x1ac] sm:$0xf]
      %v4151 = vld [vmem:[%s2 + $0x1b0] sm:$0xf]
      %v4152 = vld [vmem:[%s2 + $0x1b4] sm:$0xf]
      %v4153 = vld [vmem:[%s2 + $0x1b8] sm:$0xf]
      %v4154 = vld [vmem:[%s2 + $0x1bc] sm:$0xf]
      %v4155 = vld [vmem:[%s2 + $0x1c0] sm:$0xf]
      %v4156 = vld [vmem:[%s2 + $0x1c4] sm:$0xf]
      %v4157 = vld [vmem:[%s2 + $0x1c8] sm:$0xf]
      %v4158 = vld [vmem:[%s2 + $0x1cc] sm:$0xf]
      %v4159 = vld [vmem:[%s2 + $0x1d0] sm:$0xf]
      %v4160 = vld [vmem:[%s2 + $0x1d4] sm:$0xf]
      %v4161 = vld [vmem:[%s2 + $0x1d8] sm:$0xf]
      %v4162 = vld [vmem:[%s2 + $0x1dc] sm:$0xf]
      %v4163 = vld [vmem:[%s2 + $0x1e0] sm:$0xf]
      %v4164 = vld [vmem:[%s2 + $0x1e4] sm:$0xf]
      %v4165 = vld [vmem:[%s2 + $0x1e8] sm:$0xf]
      %v4166 = vld [vmem:[%s2 + $0x1ec] sm:$0xf]
      %v4167 = vld [vmem:[%s2 + $0x1f0] sm:$0xf]
      %v4168 = vld [vmem:[%s2 + $0x1f4] sm:$0xf]
      %v4169 = vld [vmem:[%s2 + $0x1f8] sm:$0xf]
      %v4170 = vld [vmem:[%s2 + $0x1fc] sm:$0xf]
      %v4171 = vld [vmem:[%s2 + $0x200] sm:$0xf]
      %v4172 = vld [vmem:[%s2 + $0x204] sm:$0xf]
      %v4173 = vld [vmem:[%s2 + $0x208] sm:$0xf]
      %v4174 = vld [vmem:[%s2 + $0x20c] sm:$0xf]
      %v4175 = vld [vmem:[%s2 + $0x210] sm:$0xf]
      %v4176 = vld [vmem:[%s2 + $0x214] sm:$0xf]
      %v4177 = vld [vmem:[%s2 + $0x218] sm:$0xf]
      %v4178 = vld [vmem:[%s2 + $0x21c] sm:$0xf]
      %v4179 = vld [vmem:[%s2 + $0x220] sm:$0xf]
      %v4180 = vld [vmem:[%s2 + $0x224] sm:$0xf]
      %v4181 = vld [vmem:[%s2 + $0x228] sm:$0xf]
      %v4182 = vld [vmem:[%s2 + $0x22c] sm:$0xf]
      %v4183 = vld [vmem:[%s2 + $0x230] sm:$0xf]
      %v4184 = vld [vmem:[%s2 + $0x234] sm:$0xf]
      %v4185 = vld [vmem:[%s2 + $0x238] sm:$0xf]
      %v4186 = vld [vmem:[%s2 + $0x23c] sm:$0xf]
      %v4187 = vld [vmem:[%s3] sm:$0x1]
      %v4189 = vlaneseq
      %v4190 = vshrl.u32 %v4189, 7
      %v4191 = vsub.s32 0, %v4190
      %v4192 = vrot.slane %v4187, %v4191
      %v4338 = vunpack.c.l.b16 %v4043
      %v4339 = vunpack.c.l.b16 %v4044
      %v4340 = vunpack.c.l.b16 %v4045
      %v4341 = vunpack.c.l.b16 %v4046
      %v4342 = vunpack.c.l.b16 %v4047
      %v4343 = vunpack.c.l.b16 %v4048
      %v4344 = vunpack.c.l.b16 %v4049
      %v4345 = vunpack.c.l.b16 %v4050
      %v4346 = vunpack.c.l.b16 %v4051
      %v4347 = vunpack.c.l.b16 %v4052
      %v4348 = vunpack.c.l.b16 %v4053
      %v4349 = vunpack.c.l.b16 %v4054
      %v4350 = vunpack.c.l.b16 %v4055
      %v4351 = vunpack.c.l.b16 %v4056
      %v4352 = vunpack.c.l.b16 %v4057
      %v4353 = vunpack.c.l.b16 %v4058
      %v4354 = vunpack.c.l.b16 %v4059
      %v4355 = vunpack.c.l.b16 %v4060
      %v4356 = vunpack.c.l.b16 %v4061
      %v4357 = vunpack.c.l.b16 %v4062
      %v4358 = vunpack.c.l.b16 %v4063
      %v4359 = vunpack.c.l.b16 %v4064
      %v4360 = vunpack.c.l.b16 %v4065
      %v4361 = vunpack.c.l.b16 %v4066
      %v4362 = vunpack.c.l.b16 %v4067
      %v4363 = vunpack.c.l.b16 %v4068
      %v4364 = vunpack.c.l.b16 %v4069
      %v4365 = vunpack.c.l.b16 %v4070
      %v4366 = vunpack.c.l.b16 %v4071
      %v4367 = vunpack.c.l.b16 %v4072
      %v4368 = vunpack.c.l.b16 %v4073
      %v4369 = vunpack.c.l.b16 %v4074
      %v4370 = vunpack.c.l.b16 %v4075
      %v4371 = vunpack.c.l.b16 %v4076
      %v4372 = vunpack.c.l.b16 %v4077
      %v4373 = vunpack.c.l.b16 %v4078
      %v4374 = vunpack.c.l.b16 %v4079
      %v4375 = vunpack.c.l.b16 %v4080
      %v4376 = vunpack.c.l.b16 %v4081
      %v4377 = vunpack.c.l.b16 %v4082
      %v4378 = vunpack.c.l.b16 %v4083
      %v4379 = vunpack.c.l.b16 %v4084
      %v4380 = vunpack.c.l.b16 %v4085
      %v4381 = vunpack.c.l.b16 %v4086
      %v4382 = vunpack.c.l.b16 %v4087
      %v4383 = vunpack.c.l.b16 %v4088
      %v4384 = vunpack.c.l.b16 %v4089
      %v4385 = vunpack.c.l.b16 %v4090
      %v4386 = vunpack.c.l.b16 %v4091
      %v4387 = vunpack.c.l.b16 %v4092
      %v4388 = vunpack.c.l.b16 %v4093
      %v4389 = vunpack.c.l.b16 %v4094
      %v4390 = vunpack.c.l.b16 %v4095
      %v4391 = vunpack.c.l.b16 %v4096
      %v4392 = vunpack.c.l.b16 %v4097
      %v4393 = vunpack.c.l.b16 %v4098
      %v4394 = vunpack.c.l.b16 %v4099
      %v4395 = vunpack.c.l.b16 %v4100
      %v4396 = vunpack.c.l.b16 %v4101
      %v4397 = vunpack.c.l.b16 %v4102
      %v4398 = vunpack.c.l.b16 %v4103
      %v4399 = vunpack.c.l.b16 %v4104
      %v4400 = vunpack.c.l.b16 %v4105
      %v4401 = vunpack.c.l.b16 %v4106
      %v4402 = vunpack.c.l.b16 %v4107
      %v4403 = vunpack.c.l.b16 %v4108
      %v4404 = vunpack.c.l.b16 %v4109
      %v4405 = vunpack.c.l.b16 %v4110
      %v4406 = vunpack.c.l.b16 %v4111
      %v4407 = vunpack.c.l.b16 %v4112
      %v4408 = vunpack.c.l.b16 %v4113
      %v4409 = vunpack.c.l.b16 %v4114
      %v4410 = vunpack.c.l.b16 %v4115
      %v4411 = vunpack.c.l.b16 %v4116
      %v4412 = vunpack.c.l.b16 %v4117
      %v4413 = vunpack.c.l.b16 %v4118
      %v4414 = vunpack.c.l.b16 %v4119
      %v4415 = vunpack.c.l.b16 %v4120
      %v4416 = vunpack.c.l.b16 %v4121
      %v4417 = vunpack.c.l.b16 %v4122
      %v4418 = vunpack.c.l.b16 %v4123
      %v4419 = vunpack.c.l.b16 %v4124
      %v4420 = vunpack.c.l.b16 %v4125
      %v4421 = vunpack.c.l.b16 %v4126
      %v4422 = vunpack.c.l.b16 %v4127
      %v4423 = vunpack.c.l.b16 %v4128
      %v4424 = vunpack.c.l.b16 %v4129
      %v4425 = vunpack.c.l.b16 %v4130
      %v4426 = vunpack.c.l.b16 %v4131
      %v4427 = vunpack.c.l.b16 %v4132
      %v4428 = vunpack.c.l.b16 %v4133
      %v4429 = vunpack.c.l.b16 %v4134
      %v4430 = vunpack.c.l.b16 %v4135
      %v4431 = vunpack.c.l.b16 %v4136
      %v4432 = vunpack.c.l.b16 %v4137
      %v4433 = vunpack.c.l.b16 %v4138
      %v4434 = vunpack.c.l.b16 %v4139
      %v4435 = vunpack.c.l.b16 %v4140
      %v4436 = vunpack.c.l.b16 %v4141
      %v4437 = vunpack.c.l.b16 %v4142
      %v4438 = vunpack.c.l.b16 %v4143
      %v4439 = vunpack.c.l.b16 %v4144
      %v4440 = vunpack.c.l.b16 %v4145
      %v4441 = vunpack.c.l.b16 %v4146
      %v4442 = vunpack.c.l.b16 %v4147
      %v4443 = vunpack.c.l.b16 %v4148
      %v4444 = vunpack.c.l.b16 %v4149
      %v4445 = vunpack.c.l.b16 %v4150
      %v4446 = vunpack.c.l.b16 %v4151
      %v4447 = vunpack.c.l.b16 %v4152
      %v4448 = vunpack.c.l.b16 %v4153
      %v4449 = vunpack.c.l.b16 %v4154
      %v4450 = vunpack.c.l.b16 %v4155
      %v4451 = vunpack.c.l.b16 %v4156
      %v4452 = vunpack.c.l.b16 %v4157
      %v4453 = vunpack.c.l.b16 %v4158
      %v4454 = vunpack.c.l.b16 %v4159
      %v4455 = vunpack.c.l.b16 %v4160
      %v4456 = vunpack.c.l.b16 %v4161
      %v4457 = vunpack.c.l.b16 %v4162
      %v4458 = vunpack.c.l.b16 %v4163
      %v4459 = vunpack.c.l.b16 %v4164
      %v4460 = vunpack.c.l.b16 %v4165
      %v4461 = vunpack.c.l.b16 %v4166
      %v4462 = vunpack.c.l.b16 %v4167
      %v4463 = vunpack.c.l.b16 %v4168
      %v4464 = vunpack.c.l.b16 %v4169
      %v4465 = vunpack.c.l.b16 %v4170
      %v4466 = vunpack.c.l.b16 %v4171
      %v4467 = vunpack.c.l.b16 %v4172
      %v4468 = vunpack.c.l.b16 %v4173
      %v4469 = vunpack.c.l.b16 %v4174
      %v4470 = vunpack.c.l.b16 %v4175
      %v4471 = vunpack.c.l.b16 %v4176
      %v4472 = vunpack.c.l.b16 %v4177
      %v4473 = vunpack.c.l.b16 %v4178
      %v4474 = vunpack.c.l.b16 %v4179
      %v4475 = vunpack.c.l.b16 %v4180
      %v4476 = vunpack.c.l.b16 %v4181
      %v4477 = vunpack.c.l.b16 %v4182
      %v4478 = vunpack.c.l.b16 %v4183
      %v4479 = vunpack.c.l.b16 %v4184
      %v4480 = vunpack.c.l.b16 %v4185
      %v4481 = vunpack.c.l.b16 %v4186
      %v4482 = vpack.c.b16 %v4339, %v4338
      %v4483 = vpack.c.b16 %v4341, %v4340
      %v4484 = vpack.c.b16 %v4343, %v4342
      %v4485 = vpack.c.b16 %v4345, %v4344
      %v4486 = vpack.c.b16 %v4347, %v4346
      %v4487 = vpack.c.b16 %v4349, %v4348
      %v4488 = vpack.c.b16 %v4351, %v4350
      %v4489 = vpack.c.b16 %v4353, %v4352
      %v4490 = vpack.c.b16 %v4355, %v4354
      %v4491 = vpack.c.b16 %v4357, %v4356
      %v4492 = vpack.c.b16 %v4359, %v4358
      %v4493 = vpack.c.b16 %v4361, %v4360
      %v4494 = vpack.c.b16 %v4363, %v4362
      %v4495 = vpack.c.b16 %v4365, %v4364
      %v4496 = vpack.c.b16 %v4367, %v4366
      %v4497 = vpack.c.b16 %v4369, %v4368
      %v4498 = vpack.c.b16 %v4371, %v4370
      %v4499 = vpack.c.b16 %v4373, %v4372
      %v4500 = vpack.c.b16 %v4375, %v4374
      %v4501 = vpack.c.b16 %v4377, %v4376
      %v4502 = vpack.c.b16 %v4379, %v4378
      %v4503 = vpack.c.b16 %v4381, %v4380
      %v4504 = vpack.c.b16 %v4383, %v4382
      %v4505 = vpack.c.b16 %v4385, %v4384
      %v4506 = vpack.c.b16 %v4387, %v4386
      %v4507 = vpack.c.b16 %v4389, %v4388
      %v4508 = vpack.c.b16 %v4391, %v4390
      %v4509 = vpack.c.b16 %v4393, %v4392
      %v4510 = vpack.c.b16 %v4395, %v4394
      %v4511 = vpack.c.b16 %v4397, %v4396
      %v4512 = vpack.c.b16 %v4399, %v4398
      %v4513 = vpack.c.b16 %v4401, %v4400
      %v4514 = vpack.c.b16 %v4403, %v4402
      %v4515 = vpack.c.b16 %v4405, %v4404
      %v4516 = vpack.c.b16 %v4407, %v4406
      %v4517 = vpack.c.b16 %v4409, %v4408
      %v4518 = vpack.c.b16 %v4411, %v4410
      %v4519 = vpack.c.b16 %v4413, %v4412
      %v4520 = vpack.c.b16 %v4415, %v4414
      %v4521 = vpack.c.b16 %v4417, %v4416
      %v4522 = vpack.c.b16 %v4419, %v4418
      %v4523 = vpack.c.b16 %v4421, %v4420
      %v4524 = vpack.c.b16 %v4423, %v4422
      %v4525 = vpack.c.b16 %v4425, %v4424
      %v4526 = vpack.c.b16 %v4427, %v4426
      %v4527 = vpack.c.b16 %v4429, %v4428
      %v4528 = vpack.c.b16 %v4431, %v4430
      %v4529 = vpack.c.b16 %v4433, %v4432
      %v4530 = vpack.c.b16 %v4435, %v4434
      %v4531 = vpack.c.b16 %v4437, %v4436
      %v4532 = vpack.c.b16 %v4439, %v4438
      %v4533 = vpack.c.b16 %v4441, %v4440
      %v4534 = vpack.c.b16 %v4443, %v4442
      %v4535 = vpack.c.b16 %v4445, %v4444
      %v4536 = vpack.c.b16 %v4447, %v4446
      %v4537 = vpack.c.b16 %v4449, %v4448
      %v4538 = vpack.c.b16 %v4451, %v4450
      %v4539 = vpack.c.b16 %v4453, %v4452
      %v4540 = vpack.c.b16 %v4455, %v4454
      %v4541 = vpack.c.b16 %v4457, %v4456
      %v4542 = vpack.c.b16 %v4459, %v4458
      %v4543 = vpack.c.b16 %v4461, %v4460
      %v4544 = vpack.c.b16 %v4463, %v4462
      %v4545 = vpack.c.b16 %v4465, %v4464
      %v4546 = vpack.c.b16 %v4467, %v4466
      %v4547 = vpack.c.b16 %v4469, %v4468
      %v4548 = vpack.c.b16 %v4471, %v4470
      %v4549 = vpack.c.b16 %v4473, %v4472
      %v4550 = vpack.c.b16 %v4475, %v4474
      %v4551 = vpack.c.b16 %v4477, %v4476
      %v4552 = vpack.c.b16 %v4479, %v4478
      %v4553 = vpack.c.b16 %v4481, %v4480
      %4626 = vmatprep.subr.bf16.mxu0 0
      %4627 = vmatpush1.bf16.msra.mxu0 %v4482
      %4628 = vmatprep.subr.bf16.mxu0 0
      %4629 = vmatpush1.bf16.msra.mxu0 %v4483
      %4630 = vmatprep.subr.bf16.mxu0 0
      %4631 = vmatpush1.bf16.msra.mxu0 %v4484
      %4632 = vmatprep.subr.bf16.mxu0 0
      %4633 = vmatpush1.bf16.msra.mxu0 %v4485
      %4634 = vmatprep.subr.bf16.mxu0 0
      %4635 = vmatpush1.bf16.msra.mxu0 %v4486
      %4636 = vmatprep.subr.bf16.mxu0 0
      %4637 = vmatpush1.bf16.msra.mxu0 %v4487
      %4638 = vmatprep.subr.bf16.mxu0 0
      %4639 = vmatpush1.bf16.msra.mxu0 %v4488
      %4640 = vmatprep.subr.bf16.mxu0 0
      %4641 = vmatpush1.bf16.msra.mxu0 %v4489
      %4642 = vmatprep.subr.bf16.mxu0 0
      %4643 = vmatpush1.bf16.msra.mxu0 %v4490
      %4644 = vmatprep.subr.bf16.mxu0 0
      %4645 = vmatpush1.bf16.msra.mxu0 %v4491
      %4646 = vmatprep.subr.bf16.mxu0 0
      %4647 = vmatpush1.bf16.msra.mxu0 %v4492
      %4648 = vmatprep.subr.bf16.mxu0 0
      %4649 = vmatpush1.bf16.msra.mxu0 %v4493
      %4650 = vmatprep.subr.bf16.mxu0 0
      %4651 = vmatpush1.bf16.msra.mxu0 %v4494
      %4652 = vmatprep.subr.bf16.mxu0 0
      %4653 = vmatpush1.bf16.msra.mxu0 %v4495
      %4654 = vmatprep.subr.bf16.mxu0 0
      %4655 = vmatpush1.bf16.msra.mxu0 %v4496
      %4656 = vmatprep.subr.bf16.mxu0 0
      %4657 = vmatpush1.bf16.msra.mxu0 %v4497
      %4658 = vmatprep.mubr.bf16.mxu0 %v3900
      %4659 = vmatmul.mubr.bf16.gmra.mrb[0].mxu0 %v3899
      %v4660 = vpop.f32.mrb[0].mxu0
      %v4661 = vadd.f32 %v4192, %v4660
      %v4662 = vpop.f32.mrb[0].mxu0
      %v4663 = vpop.f32.mrb[0].mxu0
      %v4664 = vadd.f32 %v4192, %v4663
      %v4665 = vpop.f32.mrb[0].mxu0
      %4666 = vmatprep.mubr.bf16.mxu0 %v3909
      %4667 = vmatmul.mubr.bf16.gmra.mrb[0].mxu0 %v3908
      %v4668 = vpop.f32.mrb[0].mxu0
      %v4669 = vadd.f32 %v4192, %v4668
      %v4670 = vpop.f32.mrb[0].mxu0
      %v4671 = vpop.f32.mrb[0].mxu0
      %v4672 = vadd.f32 %v4192, %v4671
      %v4673 = vpop.f32.mrb[0].mxu0
      %4674 = vmatprep.mubr.bf16.mxu0 %v3918
      %4675 = vmatmul.mubr.bf16.gmra.mrb[0].mxu0 %v3917
      %v4676 = vpop.f32.mrb[0].mxu0
      %v4677 = vadd.f32 %v4192, %v4676
      %v4678 = vpop.f32.mrb[0].mxu0
      %v4679 = vpop.f32.mrb[0].mxu0
      %v4680 = vadd.f32 %v4192, %v4679
      %v4681 = vpop.f32.mrb[0].mxu0
      %4682 = vmatprep.mubr.bf16.mxu0 %v3927
      %4683 = vmatmul.mubr.bf16.gmra.mrb[0].mxu0 %v3926
      %v4684 = vpop.f32.mrb[0].mxu0
      %v4685 = vadd.f32 %v4192, %v4684
      %v4686 = vpop.f32.mrb[0].mxu0
      %v4687 = vpop.f32.mrb[0].mxu0
      %v4688 = vadd.f32 %v4192, %v4687
      %v4689 = vpop.f32.mrb[0].mxu0
      %4690 = vmatprep.mubr.bf16.mxu0 %v3936
      %4691 = vmatmul.mubr.bf16.gmra.mrb[0].mxu0 %v3935
      %v4692 = vpop.f32.mrb[0].mxu0
      %v4693 = vadd.f32 %v4192, %v4692
      %v4694 = vpop.f32.mrb[0].mxu0
      %v4695 = vpop.f32.mrb[0].mxu0
      %v4696 = vadd.f32 %v4192, %v4695
      %v4697 = vpop.f32.mrb[0].mxu0
      %4698 = vmatprep.mubr.bf16.mxu0 %v3945
      %4699 = vmatmul.mubr.bf16.gmra.mrb[0].mxu0 %v3944
      %v4700 = vpop.f32.mrb[0].mxu0
      %v4701 = vadd.f32 %v4192, %v4700
      %v4702 = vpop.f32.mrb[0].mxu0
      %v4703 = vpop.f32.mrb[0].mxu0
      %v4704 = vadd.f32 %v4192, %v4703
      %v4705 = vpop.f32.mrb[0].mxu0
      %4706 = vmatprep.mubr.bf16.mxu0 %v3954
      %4707 = vmatmul.mubr.bf16.gmra.mrb[0].mxu0 %v3953
      %v4708 = vpop.f32.mrb[0].mxu0
      %v4709 = vadd.f32 %v4192, %v4708
      %v4710 = vpop.f32.mrb[0].mxu0
      %v4711 = vpop.f32.mrb[0].mxu0
      %v4712 = vadd.f32 %v4192, %v4711
      %v4713 = vpop.f32.mrb[0].mxu0
      %4714 = vmatprep.mubr.bf16.mxu0 %v3963
      %4715 = vmatmul.mubr.bf16.gmra.mrb[0].mxu0 %v3962
      %v4716 = vpop.f32.mrb[0].mxu0
      %v4717 = vadd.f32 %v4192, %v4716
      %v4718 = vpop.f32.mrb[0].mxu0
      %v4719 = vpop.f32.mrb[0].mxu0
      %v4720 = vadd.f32 %v4192, %v4719
      %v4721 = vpop.f32.mrb[0].mxu0
      %4722 = vmatprep.mubr.bf16.mxu0 %v3972
      %4723 = vmatmul.mubr.bf16.gmra.mrb[0].mxu0 %v3971
      %v4724 = vpop.f32.mrb[0].mxu0
      %v4725 = vadd.f32 %v4192, %v4724
      %v4726 = vpop.f32.mrb[0].mxu0
      %v4727 = vpop.f32.mrb[0].mxu0
      %v4728 = vadd.f32 %v4192, %v4727
      %v4729 = vpop.f32.mrb[0].mxu0
      %4730 = vmatprep.mubr.bf16.mxu0 %v3981
      %4731 = vmatmul.mubr.bf16.gmra.mrb[0].mxu0 %v3980
      %v4732 = vpop.f32.mrb[0].mxu0
      %v4733 = vadd.f32 %v4192, %v4732
      %v4734 = vpop.f32.mrb[0].mxu0
      %v4735 = vpop.f32.mrb[0].mxu0
      %v4736 = vadd.f32 %v4192, %v4735
      %v4737 = vpop.f32.mrb[0].mxu0
      %4738 = vmatprep.mubr.bf16.mxu0 %v3990
      %4739 = vmatmul.mubr.bf16.gmra.mrb[0].mxu0 %v3989
      %v4740 = vpop.f32.mrb[0].mxu0
      %v4741 = vadd.f32 %v4192, %v4740
      %v4742 = vpop.f32.mrb[0].mxu0
      %v4743 = vpop.f32.mrb[0].mxu0
      %v4744 = vadd.f32 %v4192, %v4743
      %v4745 = vpop.f32.mrb[0].mxu0
      %4746 = vmatprep.mubr.bf16.mxu0 %v3999
      %4747 = vmatmul.mubr.bf16.gmra.mrb[0].mxu0 %v3998
      %v4748 = vpop.f32.mrb[0].mxu0
      %v4749 = vadd.f32 %v4192, %v4748
      %v4750 = vpop.f32.mrb[0].mxu0
      %v4751 = vpop.f32.mrb[0].mxu0
      %v4752 = vadd.f32 %v4192, %v4751
      %v4753 = vpop.f32.mrb[0].mxu0
      %4754 = vmatprep.mubr.bf16.mxu0 %v4008
      %4755 = vmatmul.mubr.bf16.gmra.mrb[0].mxu0 %v4007
      %v4756 = vpop.f32.mrb[0].mxu0
      %v4757 = vadd.f32 %v4192, %v4756
      %v4758 = vpop.f32.mrb[0].mxu0
      %v4759 = vpop.f32.mrb[0].mxu0
      %v4760 = vadd.f32 %v4192, %v4759
      %v4761 = vpop.f32.mrb[0].mxu0
      %4762 = vmatprep.mubr.bf16.mxu0 %v4017
      %4763 = vmatmul.mubr.bf16.gmra.mrb[0].mxu0 %v4016
      %v4764 = vpop.f32.mrb[0].mxu0
      %v4765 = vadd.f32 %v4192, %v4764
      %v4766 = vpop.f32.mrb[0].mxu0
      %v4767 = vpop.f32.mrb[0].mxu0
      %v4768 = vadd.f32 %v4192, %v4767
      %v4769 = vpop.f32.mrb[0].mxu0
      %4770 = vmatprep.mubr.bf16.mxu0 %v4026
      %4771 = vmatmul.mubr.bf16.gmra.mrb[0].mxu0 %v4025
      %v4772 = vpop.f32.mrb[0].mxu0
      %v4773 = vadd.f32 %v4192, %v4772
      %v4774 = vpop.f32.mrb[0].mxu0
      %v4775 = vpop.f32.mrb[0].mxu0
      %v4776 = vadd.f32 %v4192, %v4775
      %v4777 = vpop.f32.mrb[0].mxu0
      %4778 = vmatprep.mubr.bf16.mxu0 %v4035
      %4779 = vmatmul.mubr.bf16.gmra.mrb[0].mxu0 %v4034
      %v4780 = vpop.f32.mrb[0].mxu0
      %v4781 = vadd.f32 %v4192, %v4780
      %v4782 = vpop.f32.mrb[0].mxu0
      %v4783 = vpop.f32.mrb[0].mxu0
      %v4784 = vadd.f32 %v4192, %v4783
      %v4785 = vpop.f32.mrb[0].mxu0
      %4786 = vdwg.mxu0
      %4787 = vmatprep.subr.bf16.mxu0 0
      %4788 = vmatpush1.bf16.msra.mxu0 %v4498
      %4789 = vmatprep.subr.bf16.mxu0 0
      %4790 = vmatpush1.bf16.msra.mxu0 %v4499
      %4791 = vmatprep.subr.bf16.mxu0 0
      %4792 = vmatpush1.bf16.msra.mxu0 %v4500
      %4793 = vmatprep.subr.bf16.mxu0 0
      %4794 = vmatpush1.bf16.msra.mxu0 %v4501
      %4795 = vmatprep.subr.bf16.mxu0 0
      %4796 = vmatpush1.bf16.msra.mxu0 %v4502
      %4797 = vmatprep.subr.bf16.mxu0 0
      %4798 = vmatpush1.bf16.msra.mxu0 %v4503
      %4799 = vmatprep.subr.bf16.mxu0 0
      %4800 = vmatpush1.bf16.msra.mxu0 %v4504
      %4801 = vmatprep.subr.bf16.mxu0 0
      %4802 = vmatpush1.bf16.msra.mxu0 %v4505
      %4803 = vmatprep.subr.bf16.mxu0 0
      %4804 = vmatpush1.bf16.msra.mxu0 %v4506
      %4805 = vmatprep.subr.bf16.mxu0 0
      %4806 = vmatpush1.bf16.msra.mxu0 %v4507
      %4807 = vmatprep.subr.bf16.mxu0 0
      %4808 = vmatpush1.bf16.msra.mxu0 %v4508
      %4809 = vmatprep.subr.bf16.mxu0 0
      %4810 = vmatpush1.bf16.msra.mxu0 %v4509
      %4811 = vmatprep.subr.bf16.mxu0 0
      %4812 = vmatpush1.bf16.msra.mxu0 %v4510
      %4813 = vmatprep.subr.bf16.mxu0 0
      %4814 = vmatpush1.bf16.msra.mxu0 %v4511
      %4815 = vmatprep.subr.bf16.mxu0 0
      %4816 = vmatpush1.bf16.msra.mxu0 %v4512
      %4817 = vmatprep.subr.bf16.mxu0 0
      %4818 = vmatpush1.bf16.msra.mxu0 %v4513
      %4819 = vmatprep.mubr.bf16.mxu0 %v3902
      %4820 = vmatmul.mubr.bf16.gmra.mrb[0].mxu0 %v3901
      %v4821 = vpop.f32.mrb[0].mxu0
      %v4822 = vadd.f32 %v4661, %v4821
      %v4823 = vpop.f32.mrb[0].mxu0
      %v4824 = vpop.f32.mrb[0].mxu0
      %v4825 = vadd.f32 %v4664, %v4824
      %v4826 = vpop.f32.mrb[0].mxu0
      %4827 = vmatprep.mubr.bf16.mxu0 %v3911
      %4828 = vmatmul.mubr.bf16.gmra.mrb[0].mxu0 %v3910
      %v4829 = vpop.f32.mrb[0].mxu0
      %v4830 = vadd.f32 %v4669, %v4829
      %v4831 = vpop.f32.mrb[0].mxu0
      %v4832 = vpop.f32.mrb[0].mxu0
      %v4833 = vadd.f32 %v4672, %v4832
      %v4834 = vpop.f32.mrb[0].mxu0
      %4835 = vmatprep.mubr.bf16.mxu0 %v3920
      %4836 = vmatmul.mubr.bf16.gmra.mrb[0].mxu0 %v3919
      %v4837 = vpop.f32.mrb[0].mxu0
      %v4838 = vadd.f32 %v4677, %v4837
      %v4839 = vpop.f32.mrb[0].mxu0
      %v4840 = vpop.f32.mrb[0].mxu0
      %v4841 = vadd.f32 %v4680, %v4840
      %v4842 = vpop.f32.mrb[0].mxu0
      %4843 = vmatprep.mubr.bf16.mxu0 %v3929
      %4844 = vmatmul.mubr.bf16.gmra.mrb[0].mxu0 %v3928
      %v4845 = vpop.f32.mrb[0].mxu0
      %v4846 = vadd.f32 %v4685, %v4845
      %v4847 = vpop.f32.mrb[0].mxu0
      %v4848 = vpop.f32.mrb[0].mxu0
      %v4849 = vadd.f32 %v4688, %v4848
      %v4850 = vpop.f32.mrb[0].mxu0
      %4851 = vmatprep.mubr.bf16.mxu0 %v3938
      %4852 = vmatmul.mubr.bf16.gmra.mrb[0].mxu0 %v3937
      %v4853 = vpop.f32.mrb[0].mxu0
      %v4854 = vadd.f32 %v4693, %v4853
      %v4855 = vpop.f32.mrb[0].mxu0
      %v4856 = vpop.f32.mrb[0].mxu0
      %v4857 = vadd.f32 %v4696, %v4856
      %v4858 = vpop.f32.mrb[0].mxu0
      %4859 = vmatprep.mubr.bf16.mxu0 %v3947
      %4860 = vmatmul.mubr.bf16.gmra.mrb[0].mxu0 %v3946
      %v4861 = vpop.f32.mrb[0].mxu0
      %v4862 = vadd.f32 %v4701, %v4861
      %v4863 = vpop.f32.mrb[0].mxu0
      %v4864 = vpop.f32.mrb[0].mxu0
      %v4865 = vadd.f32 %v4704, %v4864
      %v4866 = vpop.f32.mrb[0].mxu0
      %4867 = vmatprep.mubr.bf16.mxu0 %v3956
      %4868 = vmatmul.mubr.bf16.gmra.mrb[0].mxu0 %v3955
      %v4869 = vpop.f32.mrb[0].mxu0
      %v4870 = vadd.f32 %v4709, %v4869
      %v4871 = vpop.f32.mrb[0].mxu0
      %v4872 = vpop.f32.mrb[0].mxu0
      %v4873 = vadd.f32 %v4712, %v4872
      %v4874 = vpop.f32.mrb[0].mxu0
      %4875 = vmatprep.mubr.bf16.mxu0 %v3965
      %4876 = vmatmul.mubr.bf16.gmra.mrb[0].mxu0 %v3964
      %v4877 = vpop.f32.mrb[0].mxu0
      %v4878 = vadd.f32 %v4717, %v4877
      %v4879 = vpop.f32.mrb[0].mxu0
      %v4880 = vpop.f32.mrb[0].mxu0
      %v4881 = vadd.f32 %v4720, %v4880
      %v4882 = vpop.f32.mrb[0].mxu0
      %4883 = vmatprep.mubr.bf16.mxu0 %v3974
      %4884 = vmatmul.mubr.bf16.gmra.mrb[0].mxu0 %v3973
      %v4885 = vpop.f32.mrb[0].mxu0
      %v4886 = vadd.f32 %v4725, %v4885
      %v4887 = vpop.f32.mrb[0].mxu0
      %v4888 = vpop.f32.mrb[0].mxu0
      %v4889 = vadd.f32 %v4728, %v4888
      %v4890 = vpop.f32.mrb[0].mxu0
      %4891 = vmatprep.mubr.bf16.mxu0 %v3983
      %4892 = vmatmul.mubr.bf16.gmra.mrb[0].mxu0 %v3982
      %v4893 = vpop.f32.mrb[0].mxu0
      %v4894 = vadd.f32 %v4733, %v4893
      %v4895 = vpop.f32.mrb[0].mxu0
      %v4896 = vpop.f32.mrb[0].mxu0
      %v4897 = vadd.f32 %v4736, %v4896
      %v4898 = vpop.f32.mrb[0].mxu0
      %4899 = vmatprep.mubr.bf16.mxu0 %v3992
      %4900 = vmatmul.mubr.bf16.gmra.mrb[0].mxu0 %v3991
      %v4901 = vpop.f32.mrb[0].mxu0
      %v4902 = vadd.f32 %v4741, %v4901
      %v4903 = vpop.f32.mrb[0].mxu0
      %v4904 = vpop.f32.mrb[0].mxu0
      %v4905 = vadd.f32 %v4744, %v4904
      %v4906 = vpop.f32.mrb[0].mxu0
      %4907 = vmatprep.mubr.bf16.mxu0 %v4001
      %4908 = vmatmul.mubr.bf16.gmra.mrb[0].mxu0 %v4000
      %v4909 = vpop.f32.mrb[0].mxu0
      %v4910 = vadd.f32 %v4749, %v4909
      %v4911 = vpop.f32.mrb[0].mxu0
      %v4912 = vpop.f32.mrb[0].mxu0
      %v4913 = vadd.f32 %v4752, %v4912
      %v4914 = vpop.f32.mrb[0].mxu0
      %4915 = vmatprep.mubr.bf16.mxu0 %v4010
      %4916 = vmatmul.mubr.bf16.gmra.mrb[0].mxu0 %v4009
      %v4917 = vpop.f32.mrb[0].mxu0
      %v4918 = vadd.f32 %v4757, %v4917
      %v4919 = vpop.f32.mrb[0].mxu0
      %v4920 = vpop.f32.mrb[0].mxu0
      %v4921 = vadd.f32 %v4760, %v4920
      %v4922 = vpop.f32.mrb[0].mxu0
      %4923 = vmatprep.mubr.bf16.mxu0 %v4019
      %4924 = vmatmul.mubr.bf16.gmra.mrb[0].mxu0 %v4018
      %v4925 = vpop.f32.mrb[0].mxu0
      %v4926 = vadd.f32 %v4765, %v4925
      %v4927 = vpop.f32.mrb[0].mxu0
      %v4928 = vpop.f32.mrb[0].mxu0
      %v4929 = vadd.f32 %v4768, %v4928
      %v4930 = vpop.f32.mrb[0].mxu0
      %4931 = vmatprep.mubr.bf16.mxu0 %v4028
      %4932 = vmatmul.mubr.bf16.gmra.mrb[0].mxu0 %v4027
      %v4933 = vpop.f32.mrb[0].mxu0
      %v4934 = vadd.f32 %v4773, %v4933
      %v4935 = vpop.f32.mrb[0].mxu0
      %v4936 = vpop.f32.mrb[0].mxu0
      %v4937 = vadd.f32 %v4776, %v4936
      %v4938 = vpop.f32.mrb[0].mxu0
      %4939 = vmatprep.mubr.bf16.mxu0 %v4037
      %4940 = vmatmul.mubr.bf16.gmra.mrb[0].mxu0 %v4036
      %v4941 = vpop.f32.mrb[0].mxu0
      %v4942 = vadd.f32 %v4781, %v4941
      %v4943 = vpop.f32.mrb[0].mxu0
      %v4944 = vpop.f32.mrb[0].mxu0
      %v4945 = vadd.f32 %v4784, %v4944
      %v4946 = vpop.f32.mrb[0].mxu0
      %4947 = vdwg.mxu0
      %4948 = vmatprep.subr.bf16.mxu0 0
      %4949 = vmatpush1.bf16.msra.mxu0 %v4514
      %4950 = vmatprep.subr.bf16.mxu0 0
      %4951 = vmatpush1.bf16.msra.mxu0 %v4515
      %4952 = vmatprep.subr.bf16.mxu0 0
      %4953 = vmatpush1.bf16.msra.mxu0 %v4516
      %4954 = vmatprep.subr.bf16.mxu0 0
      %4955 = vmatpush1.bf16.msra.mxu0 %v4517
      %4956 = vmatprep.subr.bf16.mxu0 0
      %4957 = vmatpush1.bf16.msra.mxu0 %v4518
      %4958 = vmatprep.subr.bf16.mxu0 0
      %4959 = vmatpush1.bf16.msra.mxu0 %v4519
      %4960 = vmatprep.subr.bf16.mxu0 0
      %4961 = vmatpush1.bf16.msra.mxu0 %v4520
      %4962 = vmatprep.subr.bf16.mxu0 0
      %4963 = vmatpush1.bf16.msra.mxu0 %v4521
      %4964 = vmatprep.subr.bf16.mxu0 0
      %4965 = vmatpush1.bf16.msra.mxu0 %v4522
      %4966 = vmatprep.subr.bf16.mxu0 0
      %4967 = vmatpush1.bf16.msra.mxu0 %v4523
      %4968 = vmatprep.subr.bf16.mxu0 0
      %4969 = vmatpush1.bf16.msra.mxu0 %v4524
      %4970 = vmatprep.subr.bf16.mxu0 0
      %4971 = vmatpush1.bf16.msra.mxu0 %v4525
      %4972 = vmatprep.subr.bf16.mxu0 0
      %4973 = vmatpush1.bf16.msra.mxu0 %v4526
      %4974 = vmatprep.subr.bf16.mxu0 0
      %4975 = vmatpush1.bf16.msra.mxu0 %v4527
      %4976 = vmatprep.subr.bf16.mxu0 0
      %4977 = vmatpush1.bf16.msra.mxu0 %v4528
      %4978 = vmatprep.subr.bf16.mxu0 0
      %4979 = vmatpush1.bf16.msra.mxu0 %v4529
      %4980 = vmatprep.mubr.bf16.mxu0 %v3904
      %4981 = vmatmul.mubr.bf16.gmra.mrb[0].mxu0 %v3903
      %v4982 = vpop.f32.mrb[0].mxu0
      %v4983 = vadd.f32 %v4822, %v4982
      %v4984 = vpop.f32.mrb[0].mxu0
      %v4985 = vpop.f32.mrb[0].mxu0
      %v4986 = vadd.f32 %v4825, %v4985
      %v4987 = vpop.f32.mrb[0].mxu0
      %4988 = vmatprep.mubr.bf16.mxu0 %v3913
      %4989 = vmatmul.mubr.bf16.gmra.mrb[0].mxu0 %v3912
      %v4990 = vpop.f32.mrb[0].mxu0
      %v4991 = vadd.f32 %v4830, %v4990
      %v4992 = vpop.f32.mrb[0].mxu0
      %v4993 = vpop.f32.mrb[0].mxu0
      %v4994 = vadd.f32 %v4833, %v4993
      %v4995 = vpop.f32.mrb[0].mxu0
      %4996 = vmatprep.mubr.bf16.mxu0 %v3922
      %4997 = vmatmul.mubr.bf16.gmra.mrb[0].mxu0 %v3921
      %v4998 = vpop.f32.mrb[0].mxu0
      %v4999 = vadd.f32 %v4838, %v4998
      %v5000 = vpop.f32.mrb[0].mxu0
      %v5001 = vpop.f32.mrb[0].mxu0
      %v5002 = vadd.f32 %v4841, %v5001
      %v5003 = vpop.f32.mrb[0].mxu0
      %5004 = vmatprep.mubr.bf16.mxu0 %v3931
      %5005 = vmatmul.mubr.bf16.gmra.mrb[0].mxu0 %v3930
      %v5006 = vpop.f32.mrb[0].mxu0
      %v5007 = vadd.f32 %v4846, %v5006
      %v5008 = vpop.f32.mrb[0].mxu0
      %v5009 = vpop.f32.mrb[0].mxu0
      %v5010 = vadd.f32 %v4849, %v5009
      %v5011 = vpop.f32.mrb[0].mxu0
      %5012 = vmatprep.mubr.bf16.mxu0 %v3940
      %5013 = vmatmul.mubr.bf16.gmra.mrb[0].mxu0 %v3939
      %v5014 = vpop.f32.mrb[0].mxu0
      %v5015 = vadd.f32 %v4854, %v5014
      %v5016 = vpop.f32.mrb[0].mxu0
      %v5017 = vpop.f32.mrb[0].mxu0
      %v5018 = vadd.f32 %v4857, %v5017
      %v5019 = vpop.f32.mrb[0].mxu0
      %5020 = vmatprep.mubr.bf16.mxu0 %v3949
      %5021 = vmatmul.mubr.bf16.gmra.mrb[0].mxu0 %v3948
      %v5022 = vpop.f32.mrb[0].mxu0
      %v5023 = vadd.f32 %v4862, %v5022
      %v5024 = vpop.f32.mrb[0].mxu0
      %v5025 = vpop.f32.mrb[0].mxu0
      %v5026 = vadd.f32 %v4865, %v5025
      %v5027 = vpop.f32.mrb[0].mxu0
      %5028 = vmatprep.mubr.bf16.mxu0 %v3958
      %5029 = vmatmul.mubr.bf16.gmra.mrb[0].mxu0 %v3957
      %v5030 = vpop.f32.mrb[0].mxu0
      %v5031 = vadd.f32 %v4870, %v5030
      %v5032 = vpop.f32.mrb[0].mxu0
      %v5033 = vpop.f32.mrb[0].mxu0
      %v5034 = vadd.f32 %v4873, %v5033
      %v5035 = vpop.f32.mrb[0].mxu0
      %5036 = vmatprep.mubr.bf16.mxu0 %v3967
      %5037 = vmatmul.mubr.bf16.gmra.mrb[0].mxu0 %v3966
      %v5038 = vpop.f32.mrb[0].mxu0
      %v5039 = vadd.f32 %v4878, %v5038
      %v5040 = vpop.f32.mrb[0].mxu0
      %v5041 = vpop.f32.mrb[0].mxu0
      %v5042 = vadd.f32 %v4881, %v5041
      %v5043 = vpop.f32.mrb[0].mxu0
      %5044 = vmatprep.mubr.bf16.mxu0 %v3976
      %5045 = vmatmul.mubr.bf16.gmra.mrb[0].mxu0 %v3975
      %v5046 = vpop.f32.mrb[0].mxu0
      %v5047 = vadd.f32 %v4886, %v5046
      %v5048 = vpop.f32.mrb[0].mxu0
      %v5049 = vpop.f32.mrb[0].mxu0
      %v5050 = vadd.f32 %v4889, %v5049
      %v5051 = vpop.f32.mrb[0].mxu0
      %5052 = vmatprep.mubr.bf16.mxu0 %v3985
      %5053 = vmatmul.mubr.bf16.gmra.mrb[0].mxu0 %v3984
      %v5054 = vpop.f32.mrb[0].mxu0
      %v5055 = vadd.f32 %v4894, %v5054
      %v5056 = vpop.f32.mrb[0].mxu0
      %v5057 = vpop.f32.mrb[0].mxu0
      %v5058 = vadd.f32 %v4897, %v5057
      %v5059 = vpop.f32.mrb[0].mxu0
      %5060 = vmatprep.mubr.bf16.mxu0 %v3994
      %5061 = vmatmul.mubr.bf16.gmra.mrb[0].mxu0 %v3993
      %v5062 = vpop.f32.mrb[0].mxu0
      %v5063 = vadd.f32 %v4902, %v5062
      %v5064 = vpop.f32.mrb[0].mxu0
      %v5065 = vpop.f32.mrb[0].mxu0
      %v5066 = vadd.f32 %v4905, %v5065
      %v5067 = vpop.f32.mrb[0].mxu0
      %5068 = vmatprep.mubr.bf16.mxu0 %v4003
      %5069 = vmatmul.mubr.bf16.gmra.mrb[0].mxu0 %v4002
      %v5070 = vpop.f32.mrb[0].mxu0
      %v5071 = vadd.f32 %v4910, %v5070
      %v5072 = vpop.f32.mrb[0].mxu0
      %v5073 = vpop.f32.mrb[0].mxu0
      %v5074 = vadd.f32 %v4913, %v5073
      %v5075 = vpop.f32.mrb[0].mxu0
      %5076 = vmatprep.mubr.bf16.mxu0 %v4012
      %5077 = vmatmul.mubr.bf16.gmra.mrb[0].mxu0 %v4011
      %v5078 = vpop.f32.mrb[0].mxu0
      %v5079 = vadd.f32 %v4918, %v5078
      %v5080 = vpop.f32.mrb[0].mxu0
      %v5081 = vpop.f32.mrb[0].mxu0
      %v5082 = vadd.f32 %v4921, %v5081
      %v5083 = vpop.f32.mrb[0].mxu0
      %5084 = vmatprep.mubr.bf16.mxu0 %v4021
      %5085 = vmatmul.mubr.bf16.gmra.mrb[0].mxu0 %v4020
      %v5086 = vpop.f32.mrb[0].mxu0
      %v5087 = vadd.f32 %v4926, %v5086
      %v5088 = vpop.f32.mrb[0].mxu0
      %v5089 = vpop.f32.mrb[0].mxu0
      %v5090 = vadd.f32 %v4929, %v5089
      %v5091 = vpop.f32.mrb[0].mxu0
      %5092 = vmatprep.mubr.bf16.mxu0 %v4030
      %5093 = vmatmul.mubr.bf16.gmra.mrb[0].mxu0 %v4029
      %v5094 = vpop.f32.mrb[0].mxu0
      %v5095 = vadd.f32 %v4934, %v5094
      %v5096 = vpop.f32.mrb[0].mxu0
      %v5097 = vpop.f32.mrb[0].mxu0
      %v5098 = vadd.f32 %v4937, %v5097
      %v5099 = vpop.f32.mrb[0].mxu0
      %5100 = vmatprep.mubr.bf16.mxu0 %v4039
      %5101 = vmatmul.mubr.bf16.gmra.mrb[0].mxu0 %v4038
      %v5102 = vpop.f32.mrb[0].mxu0
      %v5103 = vadd.f32 %v4942, %v5102
      %v5104 = vpop.f32.mrb[0].mxu0
      %v5105 = vpop.f32.mrb[0].mxu0
      %v5106 = vadd.f32 %v4945, %v5105
      %v5107 = vpop.f32.mrb[0].mxu0
      %5108 = vdwg.mxu0
      %5109 = vmatprep.subr.bf16.mxu0 0
      %5110 = vmatpush1.bf16.msra.mxu0 %v4530
      %5111 = vmatprep.subr.bf16.mxu0 0
      %5112 = vmatpush1.bf16.msra.mxu0 %v4531
      %5113 = vmatprep.subr.bf16.mxu0 0
      %5114 = vmatpush1.bf16.msra.mxu0 %v4532
      %5115 = vmatprep.subr.bf16.mxu0 0
      %5116 = vmatpush1.bf16.msra.mxu0 %v4533
      %5117 = vmatprep.subr.bf16.mxu0 0
      %5118 = vmatpush1.bf16.msra.mxu0 %v4534
      %5119 = vmatprep.subr.bf16.mxu0 0
      %5120 = vmatpush1.bf16.msra.mxu0 %v4535
      %5121 = vmatprep.subr.bf16.mxu0 0
      %5122 = vmatpush1.bf16.msra.mxu0 %v4536
      %5123 = vmatprep.subr.bf16.mxu0 0
      %5124 = vmatpush1.bf16.msra.mxu0 %v4537
      %5125 = vmatprep.subr.bf16.mxu0 0
      %5126 = vmatpush1.bf16.msra.mxu0 %v4538
      %5127 = vmatprep.subr.bf16.mxu0 0
      %5128 = vmatpush1.bf16.msra.mxu0 %v4539
      %5129 = vmatprep.subr.bf16.mxu0 0
      %5130 = vmatpush1.bf16.msra.mxu0 %v4540
      %5131 = vmatprep.subr.bf16.mxu0 0
      %5132 = vmatpush1.bf16.msra.mxu0 %v4541
      %5133 = vmatprep.subr.bf16.mxu0 0
      %5134 = vmatpush1.bf16.msra.mxu0 %v4542
      %5135 = vmatprep.subr.bf16.mxu0 0
      %5136 = vmatpush1.bf16.msra.mxu0 %v4543
      %5137 = vmatprep.subr.bf16.mxu0 0
      %5138 = vmatpush1.bf16.msra.mxu0 %v4544
      %5139 = vmatprep.subr.bf16.mxu0 0
      %5140 = vmatpush1.bf16.msra.mxu0 %v4545
      %5141 = vmatprep.mubr.bf16.mxu0 %v3906
      %5142 = vmatmul.mubr.bf16.gmra.mrb[0].mxu0 %v3905
      %v5143 = vpop.f32.mrb[0].mxu0
      %v5144 = vadd.f32 %v4983, %v5143
      %v5145 = vpop.f32.mrb[0].mxu0
      %v5146 = vpop.f32.mrb[0].mxu0
      %v5147 = vadd.f32 %v4986, %v5146
      %v5148 = vpop.f32.mrb[0].mxu0
      %5149 = vmatprep.mubr.bf16.mxu0 %v3915
      %5150 = vmatmul.mubr.bf16.gmra.mrb[0].mxu0 %v3914
      %v5151 = vpop.f32.mrb[0].mxu0
      %v5152 = vadd.f32 %v4991, %v5151
      %v5153 = vpop.f32.mrb[0].mxu0
      %v5154 = vpop.f32.mrb[0].mxu0
      %v5155 = vadd.f32 %v4994, %v5154
      %v5156 = vpop.f32.mrb[0].mxu0
      %5157 = vmatprep.mubr.bf16.mxu0 %v3924
      %5158 = vmatmul.mubr.bf16.gmra.mrb[0].mxu0 %v3923
      %v5159 = vpop.f32.mrb[0].mxu0
      %v5160 = vadd.f32 %v4999, %v5159
      %v5161 = vpop.f32.mrb[0].mxu0
      %v5162 = vpop.f32.mrb[0].mxu0
      %v5163 = vadd.f32 %v5002, %v5162
      %v5164 = vpop.f32.mrb[0].mxu0
      %5165 = vmatprep.mubr.bf16.mxu0 %v3933
      %5166 = vmatmul.mubr.bf16.gmra.mrb[0].mxu0 %v3932
      %v5167 = vpop.f32.mrb[0].mxu0
      %v5168 = vadd.f32 %v5007, %v5167
      %v5169 = vpop.f32.mrb[0].mxu0
      %v5170 = vpop.f32.mrb[0].mxu0
      %v5171 = vadd.f32 %v5010, %v5170
      %v5172 = vpop.f32.mrb[0].mxu0
      %5173 = vmatprep.mubr.bf16.mxu0 %v3942
      %5174 = vmatmul.mubr.bf16.gmra.mrb[0].mxu0 %v3941
      %v5175 = vpop.f32.mrb[0].mxu0
      %v5176 = vadd.f32 %v5015, %v5175
      %v5177 = vpop.f32.mrb[0].mxu0
      %v5178 = vpop.f32.mrb[0].mxu0
      %v5179 = vadd.f32 %v5018, %v5178
      %v5180 = vpop.f32.mrb[0].mxu0
      %5181 = vmatprep.mubr.bf16.mxu0 %v3951
      %5182 = vmatmul.mubr.bf16.gmra.mrb[0].mxu0 %v3950
      %v5183 = vpop.f32.mrb[0].mxu0
      %v5184 = vadd.f32 %v5023, %v5183
      %v5185 = vpop.f32.mrb[0].mxu0
      %v5186 = vpop.f32.mrb[0].mxu0
      %v5187 = vadd.f32 %v5026, %v5186
      %v5188 = vpop.f32.mrb[0].mxu0
      %5189 = vmatprep.mubr.bf16.mxu0 %v3960
      %5190 = vmatmul.mubr.bf16.gmra.mrb[0].mxu0 %v3959
      %v5191 = vpop.f32.mrb[0].mxu0
      %v5192 = vadd.f32 %v5031, %v5191
      %v5193 = vpop.f32.mrb[0].mxu0
      %v5194 = vpop.f32.mrb[0].mxu0
      %v5195 = vadd.f32 %v5034, %v5194
      %v5196 = vpop.f32.mrb[0].mxu0
      %5197 = vmatprep.mubr.bf16.mxu0 %v3969
      %5198 = vmatmul.mubr.bf16.gmra.mrb[0].mxu0 %v3968
      %v5199 = vpop.f32.mrb[0].mxu0
      %v5200 = vadd.f32 %v5039, %v5199
      %v5201 = vpop.f32.mrb[0].mxu0
      %v5202 = vpop.f32.mrb[0].mxu0
      %v5203 = vadd.f32 %v5042, %v5202
      %v5204 = vpop.f32.mrb[0].mxu0
      %5205 = vmatprep.mubr.bf16.mxu0 %v3978
      %5206 = vmatmul.mubr.bf16.gmra.mrb[0].mxu0 %v3977
      %v5207 = vpop.f32.mrb[0].mxu0
      %v5208 = vadd.f32 %v5047, %v5207
      %v5209 = vpop.f32.mrb[0].mxu0
      %v5210 = vpop.f32.mrb[0].mxu0
      %v5211 = vadd.f32 %v5050, %v5210
      %v5212 = vpop.f32.mrb[0].mxu0
      %5213 = vmatprep.mubr.bf16.mxu0 %v3987
      %5214 = vmatmul.mubr.bf16.gmra.mrb[0].mxu0 %v3986
      %v5215 = vpop.f32.mrb[0].mxu0
      %v5216 = vadd.f32 %v5055, %v5215
      %v5217 = vpop.f32.mrb[0].mxu0
      %v5218 = vpop.f32.mrb[0].mxu0
      %v5219 = vadd.f32 %v5058, %v5218
      %v5220 = vpop.f32.mrb[0].mxu0
      %5221 = vmatprep.mubr.bf16.mxu0 %v3996
      %5222 = vmatmul.mubr.bf16.gmra.mrb[0].mxu0 %v3995
      %v5223 = vpop.f32.mrb[0].mxu0
      %v5224 = vadd.f32 %v5063, %v5223
      %v5225 = vpop.f32.mrb[0].mxu0
      %v5226 = vpop.f32.mrb[0].mxu0
      %v5227 = vadd.f32 %v5066, %v5226
      %v5228 = vpop.f32.mrb[0].mxu0
      %5229 = vmatprep.mubr.bf16.mxu0 %v4005
      %5230 = vmatmul.mubr.bf16.gmra.mrb[0].mxu0 %v4004
      %v5231 = vpop.f32.mrb[0].mxu0
      %v5232 = vadd.f32 %v5071, %v5231
      %v5233 = vpop.f32.mrb[0].mxu0
      %v5234 = vpop.f32.mrb[0].mxu0
      %v5235 = vadd.f32 %v5074, %v5234
      %v5236 = vpop.f32.mrb[0].mxu0
      %5237 = vmatprep.mubr.bf16.mxu0 %v4014
      %5238 = vmatmul.mubr.bf16.gmra.mrb[0].mxu0 %v4013
      %v5239 = vpop.f32.mrb[0].mxu0
      %v5240 = vadd.f32 %v5079, %v5239
      %v5241 = vpop.f32.mrb[0].mxu0
      %v5242 = vpop.f32.mrb[0].mxu0
      %v5243 = vadd.f32 %v5082, %v5242
      %v5244 = vpop.f32.mrb[0].mxu0
      %5245 = vmatprep.mubr.bf16.mxu0 %v4023
      %5246 = vmatmul.mubr.bf16.gmra.mrb[0].mxu0 %v4022
      %v5247 = vpop.f32.mrb[0].mxu0
      %v5248 = vadd.f32 %v5087, %v5247
      %v5249 = vpop.f32.mrb[0].mxu0
      %v5250 = vpop.f32.mrb[0].mxu0
      %v5251 = vadd.f32 %v5090, %v5250
      %v5252 = vpop.f32.mrb[0].mxu0
      %5253 = vmatprep.mubr.bf16.mxu0 %v4032
      %5254 = vmatmul.mubr.bf16.gmra.mrb[0].mxu0 %v4031
      %v5255 = vpop.f32.mrb[0].mxu0
      %v5256 = vadd.f32 %v5095, %v5255
      %v5257 = vpop.f32.mrb[0].mxu0
      %v5258 = vpop.f32.mrb[0].mxu0
      %v5259 = vadd.f32 %v5098, %v5258
      %v5260 = vpop.f32.mrb[0].mxu0
      %5261 = vmatprep.mubr.bf16.mxu0 %v4041
      %5262 = vmatmul.mubr.bf16.gmra.mrb[0].mxu0 %v4040
      %v5263 = vpop.f32.mrb[0].mxu0
      %v5264 = vadd.f32 %v5103, %v5263
      %v5265 = vpop.f32.mrb[0].mxu0
      %v5266 = vpop.f32.mrb[0].mxu0
      %v5267 = vadd.f32 %v5106, %v5266
      %v5268 = vpop.f32.mrb[0].mxu0
      %5269 = vdwg.mxu0
      %5270 = vmatprep.subr.bf16.mxu0 0
      %5271 = vmatpush1.bf16.msra.mxu0 %v4546
      %5272 = vmatprep.subr.bf16.mxu0 0
      %5273 = vmatpush1.bf16.msra.mxu0 %v4547
      %5274 = vmatprep.subr.bf16.mxu0 0
      %5275 = vmatpush1.bf16.msra.mxu0 %v4548
      %5276 = vmatprep.subr.bf16.mxu0 0
      %5277 = vmatpush1.bf16.msra.mxu0 %v4549
      %5278 = vmatprep.subr.bf16.mxu0 0
      %5279 = vmatpush1.bf16.msra.mxu0 %v4550
      %5280 = vmatprep.subr.bf16.mxu0 0
      %5281 = vmatpush1.bf16.msra.mxu0 %v4551
      %5282 = vmatprep.subr.bf16.mxu0 0
      %5283 = vmatpush1.bf16.msra.mxu0 %v4552
      %5284 = vmatprep.subr.bf16.mxu0 0
      %5285 = vmatpush1.bf16.msra.mxu0 %v4553
      %5286 = vmatprep.subr.bf16.mxu0 0
      %5287 = vmatpush1.bf16.msra.mxu0 0
      %5288 = vmatprep.subr.bf16.mxu0 0
      %5289 = vmatpush1.bf16.msra.mxu0 0
      %5290 = vmatprep.subr.bf16.mxu0 0
      %5291 = vmatpush1.bf16.msra.mxu0 0
      %5292 = vmatprep.subr.bf16.mxu0 0
      %5293 = vmatpush1.bf16.msra.mxu0 0
      %5294 = vmatprep.subr.bf16.mxu0 0
      %5295 = vmatpush1.bf16.msra.mxu0 0
      %5296 = vmatprep.subr.bf16.mxu0 0
      %5297 = vmatpush1.bf16.msra.mxu0 0
      %5298 = vmatprep.subr.bf16.mxu0 0
      %5299 = vmatpush1.bf16.msra.mxu0 0
      %5300 = vmatprep.subr.bf16.mxu0 0
      %5301 = vmatpush1.bf16.msra.mxu0 0
      %5302 = vmatprep.mubr.bf16.mxu0 0
      %5303 = vmatmul.mubr.bf16.gmra.mrb[0].mxu0 %v3907
      %v5304 = vpop.f32.mrb[0].mxu0
      %v5305 = vadd.f32 %v5144, %v5304
      %v5306 = vpop.f32.mrb[0].mxu0
      %v5307 = vpop.f32.mrb[0].mxu0
      %v5308 = vadd.f32 %v5147, %v5307
      %v5309 = vpop.f32.mrb[0].mxu0
      %5310 = vmatprep.mubr.bf16.mxu0 0
      %5311 = vmatmul.mubr.bf16.gmra.mrb[0].mxu0 %v3916
      %v5312 = vpop.f32.mrb[0].mxu0
      %v5313 = vadd.f32 %v5152, %v5312
      %v5314 = vpop.f32.mrb[0].mxu0
      %v5315 = vpop.f32.mrb[0].mxu0
      %v5316 = vadd.f32 %v5155, %v5315
      %v5317 = vpop.f32.mrb[0].mxu0
      %5318 = vmatprep.mubr.bf16.mxu0 0
      %5319 = vmatmul.mubr.bf16.gmra.mrb[0].mxu0 %v3925
      %v5320 = vpop.f32.mrb[0].mxu0
      %v5321 = vadd.f32 %v5160, %v5320
      %v5322 = vpop.f32.mrb[0].mxu0
      %v5323 = vpop.f32.mrb[0].mxu0
      %v5324 = vadd.f32 %v5163, %v5323
      %v5325 = vpop.f32.mrb[0].mxu0
      %5326 = vmatprep.mubr.bf16.mxu0 0
      %5327 = vmatmul.mubr.bf16.gmra.mrb[0].mxu0 %v3934
      %v5328 = vpop.f32.mrb[0].mxu0
      %v5329 = vadd.f32 %v5168, %v5328
      %v5330 = vpop.f32.mrb[0].mxu0
      %v5331 = vpop.f32.mrb[0].mxu0
      %v5332 = vadd.f32 %v5171, %v5331
      %v5333 = vpop.f32.mrb[0].mxu0
      %5334 = vmatprep.mubr.bf16.mxu0 0
      %5335 = vmatmul.mubr.bf16.gmra.mrb[0].mxu0 %v3943
      %v5336 = vpop.f32.mrb[0].mxu0
      %v5337 = vadd.f32 %v5176, %v5336
      %v5338 = vpop.f32.mrb[0].mxu0
      %v5339 = vpop.f32.mrb[0].mxu0
      %v5340 = vadd.f32 %v5179, %v5339
      %v5341 = vpop.f32.mrb[0].mxu0
      %5342 = vmatprep.mubr.bf16.mxu0 0
      %5343 = vmatmul.mubr.bf16.gmra.mrb[0].mxu0 %v3952
      %v5344 = vpop.f32.mrb[0].mxu0
      %v5345 = vadd.f32 %v5184, %v5344
      %v5346 = vpop.f32.mrb[0].mxu0
      %v5347 = vpop.f32.mrb[0].mxu0
      %v5348 = vadd.f32 %v5187, %v5347
      %v5349 = vpop.f32.mrb[0].mxu0
      %5350 = vmatprep.mubr.bf16.mxu0 0
      %5351 = vmatmul.mubr.bf16.gmra.mrb[0].mxu0 %v3961
      %v5352 = vpop.f32.mrb[0].mxu0
      %v5353 = vadd.f32 %v5192, %v5352
      %v5354 = vpop.f32.mrb[0].mxu0
      %v5355 = vpop.f32.mrb[0].mxu0
      %v5356 = vadd.f32 %v5195, %v5355
      %v5357 = vpop.f32.mrb[0].mxu0
      %5358 = vmatprep.mubr.bf16.mxu0 0
      %5359 = vmatmul.mubr.bf16.gmra.mrb[0].mxu0 %v3970
      %v5360 = vpop.f32.mrb[0].mxu0
      %v5361 = vadd.f32 %v5200, %v5360
      %v5362 = vpop.f32.mrb[0].mxu0
      %v5363 = vpop.f32.mrb[0].mxu0
      %v5364 = vadd.f32 %v5203, %v5363
      %v5365 = vpop.f32.mrb[0].mxu0
      %5366 = vmatprep.mubr.bf16.mxu0 0
      %5367 = vmatmul.mubr.bf16.gmra.mrb[0].mxu0 %v3979
      %v5368 = vpop.f32.mrb[0].mxu0
      %v5369 = vadd.f32 %v5208, %v5368
      %v5370 = vpop.f32.mrb[0].mxu0
      %v5371 = vpop.f32.mrb[0].mxu0
      %v5372 = vadd.f32 %v5211, %v5371
      %v5373 = vpop.f32.mrb[0].mxu0
      %5374 = vmatprep.mubr.bf16.mxu0 0
      %5375 = vmatmul.mubr.bf16.gmra.mrb[0].mxu0 %v3988
      %v5376 = vpop.f32.mrb[0].mxu0
      %v5377 = vadd.f32 %v5216, %v5376
      %v5378 = vpop.f32.mrb[0].mxu0
      %v5379 = vpop.f32.mrb[0].mxu0
      %v5380 = vadd.f32 %v5219, %v5379
      %v5381 = vpop.f32.mrb[0].mxu0
      %5382 = vmatprep.mubr.bf16.mxu0 0
      %5383 = vmatmul.mubr.bf16.gmra.mrb[0].mxu0 %v3997
      %v5384 = vpop.f32.mrb[0].mxu0
      %v5385 = vadd.f32 %v5224, %v5384
      %v5386 = vpop.f32.mrb[0].mxu0
      %v5387 = vpop.f32.mrb[0].mxu0
      %v5388 = vadd.f32 %v5227, %v5387
      %v5389 = vpop.f32.mrb[0].mxu0
      %5390 = vmatprep.mubr.bf16.mxu0 0
      %5391 = vmatmul.mubr.bf16.gmra.mrb[0].mxu0 %v4006
      %v5392 = vpop.f32.mrb[0].mxu0
      %v5393 = vadd.f32 %v5232, %v5392
      %v5394 = vpop.f32.mrb[0].mxu0
      %v5395 = vpop.f32.mrb[0].mxu0
      %v5396 = vadd.f32 %v5235, %v5395
      %v5397 = vpop.f32.mrb[0].mxu0
      %5398 = vmatprep.mubr.bf16.mxu0 0
      %5399 = vmatmul.mubr.bf16.gmra.mrb[0].mxu0 %v4015
      %v5400 = vpop.f32.mrb[0].mxu0
      %v5401 = vadd.f32 %v5240, %v5400
      %v5402 = vpop.f32.mrb[0].mxu0
      %v5403 = vpop.f32.mrb[0].mxu0
      %v5404 = vadd.f32 %v5243, %v5403
      %v5405 = vpop.f32.mrb[0].mxu0
      %5406 = vmatprep.mubr.bf16.mxu0 0
      %5407 = vmatmul.mubr.bf16.gmra.mrb[0].mxu0 %v4024
      %v5408 = vpop.f32.mrb[0].mxu0
      %v5409 = vadd.f32 %v5248, %v5408
      %v5410 = vpop.f32.mrb[0].mxu0
      %v5411 = vpop.f32.mrb[0].mxu0
      %v5412 = vadd.f32 %v5251, %v5411
      %v5413 = vpop.f32.mrb[0].mxu0
      %5414 = vmatprep.mubr.bf16.mxu0 0
      %5415 = vmatmul.mubr.bf16.gmra.mrb[0].mxu0 %v4033
      %v5416 = vpop.f32.mrb[0].mxu0
      %v5417 = vadd.f32 %v5256, %v5416
      %v5418 = vpop.f32.mrb[0].mxu0
      %v5419 = vpop.f32.mrb[0].mxu0
      %v5420 = vadd.f32 %v5259, %v5419
      %v5421 = vpop.f32.mrb[0].mxu0
      %5422 = vmatprep.mubr.bf16.mxu0 0
      %5423 = vmatmul.mubr.bf16.gmra.mrb[0].mxu0 %v4042
      %v5424 = vpop.f32.mrb[0].mxu0
      %v5425 = vadd.f32 %v5264, %v5424
      %v5426 = vpop.f32.mrb[0].mxu0
      %v5427 = vpop.f32.mrb[0].mxu0
      %v5428 = vadd.f32 %v5267, %v5427
      %v5429 = vpop.f32.mrb[0].mxu0
      %5430 = vdwg.mxu0
      %v5431 = vpack.c.bf16 %v5308, %v5305
      %v5432 = vpack.c.bf16 %v5316, %v5313
      %v5433 = vpack.c.bf16 %v5324, %v5321
      %v5434 = vpack.c.bf16 %v5332, %v5329
      %v5435 = vpack.c.bf16 %v5340, %v5337
      %v5436 = vpack.c.bf16 %v5348, %v5345
      %v5437 = vpack.c.bf16 %v5356, %v5353
      %v5438 = vpack.c.bf16 %v5364, %v5361
      %v5439 = vpack.c.bf16 %v5372, %v5369
      %v5440 = vpack.c.bf16 %v5380, %v5377
      %v5441 = vpack.c.bf16 %v5388, %v5385
      %v5442 = vpack.c.bf16 %v5396, %v5393
      %v5443 = vpack.c.bf16 %v5404, %v5401
      %v5444 = vpack.c.bf16 %v5412, %v5409
      %v5445 = vpack.c.bf16 %v5420, %v5417
      %v5446 = vpack.c.bf16 %v5428, %v5425
      %v5463 = vunpack.c.l.b16 %v5431
      %v5464 = vunpack.c.h.b16 %v5431
      %v5465 = vunpack.c.l.b16 %v5432
      %v5466 = vunpack.c.h.b16 %v5432
      %v5467 = vunpack.c.l.b16 %v5433
      %v5468 = vunpack.c.h.b16 %v5433
      %v5469 = vunpack.c.l.b16 %v5434
      %v5470 = vunpack.c.h.b16 %v5434
      %v5471 = vunpack.c.l.b16 %v5435
      %v5472 = vunpack.c.h.b16 %v5435
      %v5473 = vunpack.c.l.b16 %v5436
      %v5474 = vunpack.c.h.b16 %v5436
      %v5475 = vunpack.c.l.b16 %v5437
      %v5476 = vunpack.c.h.b16 %v5437
      %v5477 = vunpack.c.l.b16 %v5438
      %v5478 = vunpack.c.h.b16 %v5438
      %v5479 = vunpack.c.l.b16 %v5439
      %v5480 = vunpack.c.h.b16 %v5439
      %v5481 = vunpack.c.l.b16 %v5440
      %v5482 = vunpack.c.h.b16 %v5440
      %v5483 = vunpack.c.l.b16 %v5441
      %v5484 = vunpack.c.h.b16 %v5441
      %v5485 = vunpack.c.l.b16 %v5442
      %v5486 = vunpack.c.h.b16 %v5442
      %v5487 = vunpack.c.l.b16 %v5443
      %v5488 = vunpack.c.h.b16 %v5443
      %v5489 = vunpack.c.l.b16 %v5444
      %v5490 = vunpack.c.h.b16 %v5444
      %v5491 = vunpack.c.l.b16 %v5445
      %v5492 = vunpack.c.h.b16 %v5445
      %v5493 = vunpack.c.l.b16 %v5446
      %v5494 = vunpack.c.h.b16 %v5446
      %v5495 = vpack.c.b16 %v5463, %v5463
      %v5496 = vpack.c.b16 %v5464, %v5464
      %v5497 = vpack.c.b16 %v5465, %v5465
      %v5498 = vpack.c.b16 %v5466, %v5466
      %v5499 = vpack.c.b16 %v5467, %v5467
      %v5500 = vpack.c.b16 %v5468, %v5468
      %v5501 = vpack.c.b16 %v5469, %v5469
      %v5502 = vpack.c.b16 %v5470, %v5470
      %v5503 = vpack.c.b16 %v5471, %v5471
      %v5504 = vpack.c.b16 %v5472, %v5472
      %v5505 = vpack.c.b16 %v5473, %v5473
      %v5506 = vpack.c.b16 %v5474, %v5474
      %v5507 = vpack.c.b16 %v5475, %v5475
      %v5508 = vpack.c.b16 %v5476, %v5476
      %v5509 = vpack.c.b16 %v5477, %v5477
      %v5510 = vpack.c.b16 %v5478, %v5478
      %v5511 = vpack.c.b16 %v5479, %v5479
      %v5512 = vpack.c.b16 %v5480, %v5480
      %v5513 = vpack.c.b16 %v5481, %v5481
      %v5514 = vpack.c.b16 %v5482, %v5482
      %v5515 = vpack.c.b16 %v5483, %v5483
      %v5516 = vpack.c.b16 %v5484, %v5484
      %v5517 = vpack.c.b16 %v5485, %v5485
      %v5518 = vpack.c.b16 %v5486, %v5486
      %v5519 = vpack.c.b16 %v5487, %v5487
      %v5520 = vpack.c.b16 %v5488, %v5488
      %v5521 = vpack.c.b16 %v5489, %v5489
      %v5522 = vpack.c.b16 %v5490, %v5490
      %v5523 = vpack.c.b16 %v5491, %v5491
      %v5524 = vpack.c.b16 %v5492, %v5492
      %v5525 = vpack.c.b16 %v5493, %v5493
      %v5526 = vpack.c.b16 %v5494, %v5494
      %5559 = vst [vmem:[%s231] sm:$0xf] %v5495
      %5560 = vst [vmem:[%s231 + $0x4] sm:$0xf] %v5496
      %5561 = vst [vmem:[%s231 + $0x8] sm:$0xf] %v5497
      %5562 = vst [vmem:[%s231 + $0xc] sm:$0xf] %v5498
      %5563 = vst [vmem:[%s231 + $0x10] sm:$0xf] %v5499
      %5564 = vst [vmem:[%s231 + $0x14] sm:$0xf] %v5500
      %5565 = vst [vmem:[%s231 + $0x18] sm:$0xf] %v5501
      %5566 = vst [vmem:[%s231 + $0x1c] sm:$0xf] %v5502
      %5567 = vst [vmem:[%s231 + $0x20] sm:$0xf] %v5503
      %5568 = vst [vmem:[%s231 + $0x24] sm:$0xf] %v5504
      %5569 = vst [vmem:[%s231 + $0x28] sm:$0xf] %v5505
      %5570 = vst [vmem:[%s231 + $0x2c] sm:$0xf] %v5506
      %5571 = vst [vmem:[%s231 + $0x30] sm:$0xf] %v5507
      %5572 = vst [vmem:[%s231 + $0x34] sm:$0xf] %v5508
      %5573 = vst [vmem:[%s231 + $0x38] sm:$0xf] %v5509
      %5574 = vst [vmem:[%s231 + $0x3c] sm:$0xf] %v5510
      %5575 = vst [vmem:[%s231 + $0x40] sm:$0xf] %v5511
      %5576 = vst [vmem:[%s231 + $0x44] sm:$0xf] %v5512
      %5577 = vst [vmem:[%s231 + $0x48] sm:$0xf] %v5513
      %5578 = vst [vmem:[%s231 + $0x4c] sm:$0xf] %v5514
      %5579 = vst [vmem:[%s231 + $0x50] sm:$0xf] %v5515
      %5580 = vst [vmem:[%s231 + $0x54] sm:$0xf] %v5516
      %5581 = vst [vmem:[%s231 + $0x58] sm:$0xf] %v5517
      %5582 = vst [vmem:[%s231 + $0x5c] sm:$0xf] %v5518
      %5583 = vst [vmem:[%s231 + $0x60] sm:$0xf] %v5519
      %5584 = vst [vmem:[%s231 + $0x64] sm:$0xf] %v5520
      %5585 = vst [vmem:[%s231 + $0x68] sm:$0xf] %v5521
      %5586 = vst [vmem:[%s231 + $0x6c] sm:$0xf] %v5522
      %5587 = vst [vmem:[%s231 + $0x70] sm:$0xf] %v5523
      %5588 = vst [vmem:[%s231 + $0x74] sm:$0xf] %v5524
      %5589 = vst [vmem:[%s231 + $0x78] sm:$0xf] %v5525
      %5590 = vst [vmem:[%s231 + $0x7c] sm:$0xf] %v5526
      %v5591 = vadd.f32 %v5305, %v5308
      %v5592 = vadd.f32 %v5591, %v5313
      %v5593 = vadd.f32 %v5592, %v5316
      %v5594 = vadd.f32 %v5593, %v5321
      %v5595 = vadd.f32 %v5594, %v5324
      %v5596 = vadd.f32 %v5595, %v5329
      %v5597 = vadd.f32 %v5596, %v5332
      %v5598 = vadd.f32 %v5597, %v5337
      %v5599 = vadd.f32 %v5598, %v5340
      %v5600 = vadd.f32 %v5599, %v5345
      %v5601 = vadd.f32 %v5600, %v5348
      %v5602 = vadd.f32 %v5601, %v5353
      %v5603 = vadd.f32 %v5602, %v5356
      %v5604 = vadd.f32 %v5603, %v5361
      %v5605 = vadd.f32 %v5604, %v5364
      %v5606 = vadd.f32 %v5605, %v5369
      %v5607 = vadd.f32 %v5606, %v5372
      %v5608 = vadd.f32 %v5607, %v5377
      %v5609 = vadd.f32 %v5608, %v5380
      %v5610 = vadd.f32 %v5609, %v5385
      %v5611 = vadd.f32 %v5610, %v5388
      %v5612 = vadd.f32 %v5611, %v5393
      %v5613 = vadd.f32 %v5612, %v5396
      %v5614 = vadd.f32 %v5613, %v5401
      %v5615 = vadd.f32 %v5614, %v5404
      %v5616 = vadd.f32 %v5615, %v5409
      %v5617 = vadd.f32 %v5616, %v5412
      %v5618 = vadd.f32 %v5617, %v5417
      %v5619 = vadd.f32 %v5618, %v5420
      %v5620 = vadd.f32 %v5619, %v5425
      %v5621 = vadd.f32 %v5620, %v5428
      %v5622 = vrot.slane %v5621, 4
      %v5623 = vadd.f32 %v5621, %v5622
      %v5624 = vrot.slane %v5623, 2
      %v5625 = vadd.f32 %v5623, %v5624
      %v5626 = vrot.slane %v5625, 1
      %v5627 = vadd.f32 %v5625, %v5626
      %v5628 = vmul.f32 %v5305, %v5305
      %v5629 = vmul.f32 %v5308, %v5308
      %v5630 = vmul.f32 %v5313, %v5313
      %v5631 = vmul.f32 %v5316, %v5316
      %v5632 = vmul.f32 %v5321, %v5321
      %v5633 = vmul.f32 %v5324, %v5324
      %v5634 = vmul.f32 %v5329, %v5329
      %v5635 = vmul.f32 %v5332, %v5332
      %v5636 = vmul.f32 %v5337, %v5337
      %v5637 = vmul.f32 %v5340, %v5340
      %v5638 = vmul.f32 %v5345, %v5345
      %v5639 = vmul.f32 %v5348, %v5348
      %v5640 = vmul.f32 %v5353, %v5353
      %v5641 = vmul.f32 %v5356, %v5356
      %v5642 = vmul.f32 %v5361, %v5361
      %v5643 = vmul.f32 %v5364, %v5364
      %v5644 = vmul.f32 %v5369, %v5369
      %v5645 = vmul.f32 %v5372, %v5372
      %v5646 = vmul.f32 %v5377, %v5377
      %v5647 = vmul.f32 %v5380, %v5380
      %v5648 = vmul.f32 %v5385, %v5385
      %v5649 = vmul.f32 %v5388, %v5388
      %v5650 = vmul.f32 %v5393, %v5393
      %v5651 = vmul.f32 %v5396, %v5396
      %v5652 = vmul.f32 %v5401, %v5401
      %v5653 = vmul.f32 %v5404, %v5404
      %v5654 = vmul.f32 %v5409, %v5409
      %v5655 = vmul.f32 %v5412, %v5412
      %v5656 = vmul.f32 %v5417, %v5417
      %v5657 = vmul.f32 %v5420, %v5420
      %v5658 = vmul.f32 %v5425, %v5425
      %v5659 = vmul.f32 %v5428, %v5428
      %v5660 = vadd.f32 %v5628, %v5629
      %v5661 = vadd.f32 %v5660, %v5630
      %v5662 = vadd.f32 %v5661, %v5631
      %v5663 = vadd.f32 %v5662, %v5632
      %v5664 = vadd.f32 %v5663, %v5633
      %v5665 = vadd.f32 %v5664, %v5634
      %v5666 = vadd.f32 %v5665, %v5635
      %v5667 = vadd.f32 %v5666, %v5636
      %v5668 = vadd.f32 %v5667, %v5637
      %v5669 = vadd.f32 %v5668, %v5638
      %v5670 = vadd.f32 %v5669, %v5639
      %v5671 = vadd.f32 %v5670, %v5640
      %v5672 = vadd.f32 %v5671, %v5641
      %v5673 = vadd.f32 %v5672, %v5642
      %v5674 = vadd.f32 %v5673, %v5643
      %v5675 = vadd.f32 %v5674, %v5644
      %v5676 = vadd.f32 %v5675, %v5645
      %v5677 = vadd.f32 %v5676, %v5646
      %v5678 = vadd.f32 %v5677, %v5647
      %v5679 = vadd.f32 %v5678, %v5648
      %v5680 = vadd.f32 %v5679, %v5649
      %v5681 = vadd.f32 %v5680, %v5650
      %v5682 = vadd.f32 %v5681, %v5651
      %v5683 = vadd.f32 %v5682, %v5652
      %v5684 = vadd.f32 %v5683, %v5653
      %v5685 = vadd.f32 %v5684, %v5654
      %v5686 = vadd.f32 %v5685, %v5655
      %v5687 = vadd.f32 %v5686, %v5656
      %v5688 = vadd.f32 %v5687, %v5657
      %v5689 = vadd.f32 %v5688, %v5658
      %v5690 = vadd.f32 %v5689, %v5659
      %v5691 = vrot.slane %v5690, 4
      %v5692 = vadd.f32 %v5690, %v5691
      %v5693 = vrot.slane %v5692, 2
      %v5694 = vadd.f32 %v5692, %v5693
      %v5695 = vrot.slane %v5694, 1
      %v5696 = vadd.f32 %v5694, %v5695
      %vm5697 = vcmask 1040384
      %v5698 = vsel %vm5697, %v5627, %v5696
      %5699 = vst [vmem:[%s235] sm:$0x3] %v5698
      %p5700 = scmp.lt.s32.totalorder %s17, 1
      %s5701 = scalar_select %p5700, %s17, 1
      %s5702 = smul.addr %s5701, 32
      %s5703 = smul.addr %s5702, 4
      %s5704 = scalar_lea.vmem %s4, %s5703
      %p5705 = scmp.lt.s32.totalorder %s17, 1
      %s5706 = scalar_select %p5705, %s17, 1
      %s5707 = smul.addr %s5706, 2
      %s5708 = scalar_lea.vmem %s5, %s5707
      // Predicated region
      $region37: #{encoder_block_forward.4} parent=35 // pred_check
        %p5709 = pneg %p124
      $region38: #{encoder_block_forward.4} parent=35 // pred_check_branch
        %5711 = sbr.rel (%p5709) target = $region40
      $region39: #{encoder_block_forward.4} parent=35 // pred_region
        _
      $region40: #{encoder_block_forward.4} parent=35 // pred_fallthru
        _
      // Predicated region
      $region41: #{encoder_block_forward.4} parent=35 // pred_check
        %p5712 = pneg %p150
      $region42: #{encoder_block_forward.4} parent=35 // pred_check_branch
        %5714 = sbr.rel (%p5712) target = $region44
      $region43: #{encoder_block_forward.4} parent=35 // pred_region
        _
      $region44: #{encoder_block_forward.4} parent=35 // pred_fallthru
        _
    $region36: #{encoder_block_forward.4} parent=5 // pred_fallthru
      _
    %p5715 = scmp.le.s32.totalorder 2, %s12
    // Predicated region
    $region45: #{encoder_block_forward.4} parent=5 // pred_check
      %p5716 = pneg %p5715
    $region46: #{encoder_block_forward.4} parent=5 // pred_check_branch
      %5718 = sbr.rel (%p5716) target = $region48
    $region47: #{encoder_block_forward.4} parent=5 // pred_region
      %s5719 = ssub.s32 %s12, 2
      // Predicated region
      $region49: #{encoder_block_forward.4} parent=47 // pred_check
        %p5720 = pneg %p130
      $region50: #{encoder_block_forward.4} parent=47 // pred_check_branch
        %5722 = sbr.rel (%p5720) target = $region52
      $region51: #{encoder_block_forward.4} parent=47 // pred_region
        %p5723 = scmp.lt.s32.totalorder %s18, 1
        %s5724 = scalar_select %p5723, %s18, 1
        %s5725 = smul.addr %s5724, 32
        %s5726 = smul.addr %s5725, 4
        %s5727 = scalar_lea.vmem %s4, %s5726
      $region52: #{encoder_block_forward.4} parent=47 // pred_fallthru
        _
      // Predicated region
      $region53: #{encoder_block_forward.4} parent=47 // pred_check
        %p5728 = pneg %p156
      $region54: #{encoder_block_forward.4} parent=47 // pred_check_branch
        %5730 = sbr.rel (%p5728) target = $region56
      $region55: #{encoder_block_forward.4} parent=47 // pred_region
        %p5731 = scmp.lt.s32.totalorder %s18, 1
        %s5732 = scalar_select %p5731, %s18, 1
        %s5733 = smul.addr %s5732, 2
        %s5734 = scalar_lea.vmem %s5, %s5733
      $region56: #{encoder_block_forward.4} parent=47 // pred_fallthru
        _
    $region48: #{encoder_block_forward.4} parent=5 // pred_fallthru
      _
  $region6: #{encoder_block_forward.4} parent=0 // loop_footer
    %s16 = sadd.s32 1, %s12
  $region7: #{encoder_block_forward.4} parent=0 // loop_footer_branch
    %11 = sbr.rel target = $region3
  $region8: #{encoder_block_forward.4} parent=0 // loop_exit
    _

</llo_original>
